<compile_context>
chip_gen: v6e
topology: v6e:2x2x1
jax: 0.10.0
libtpu: 0.0.40
codegen_flags: <defaults>
</compile_context>

<pallas_src>
import functools
import math

import jax
import jax.numpy as jnp
from jax.experimental import pallas as pl
from jax.experimental.pallas import tpu as pltpu


# ----------------------------------------------------------------------------
# Fused forward kernel
# ----------------------------------------------------------------------------
def _fused_forward_kernel(*refs, T, H, latent, n_dec):
    (feat_ref,                                   # (T, B, F) time-major input
     e0_wih_ref, e0_whh_ref, e0_b_ref,           # encoder LSTM layer 0
     e1_wih_ref, e1_whh_ref, e1_b_ref,           # encoder LSTM layer 1
     z_w_ref, z_b_ref, eps_ref,                  # fused z_mean|z_sigma head
     d0_wih_ref, d0_whh_ref, d0_b_ref,           # hidden LSTM layer 0
     d1_wih_ref, d1_whh_ref, d1_b_ref,           # hidden LSTM layer 1
     h0_ref, c0_ref) = refs[:18]                 # (2, B, H) initial states
    dec_refs = refs[18:18 + 2 * n_dec]           # fused hi/lo decoder layers
    dec_out_ref, zmean_ref, zlog_ref = refs[18 + 2 * n_dec:]

    B = eps_ref.shape[0]

    # Load all weights once; they stay in vregs/VMEM for the whole kernel.
    e0_wih = e0_wih_ref[...]; e0_whh = e0_whh_ref[...]; e0_b = e0_b_ref[...]
    e1_wih = e1_wih_ref[...]; e1_whh = e1_whh_ref[...]; e1_b = e1_b_ref[...]
    d0_wih = d0_wih_ref[...]; d0_whh = d0_whh_ref[...]; d0_b = d0_b_ref[...]
    d1_wih = d1_wih_ref[...]; d1_whh = d1_whh_ref[...]; d1_b = d1_b_ref[...]

    def lstm_cell(pre_gates, h, c, whhT):
        # pre_gates = x @ W_ih^T + (b_ih + b_hh); gate order i, f, g, o.
        gates = pre_gates + jnp.dot(h, whhT, preferred_element_type=jnp.float32)
        # Full-vreg activations (4H == 128 lanes) + lane select, instead of
        # four masked 32-lane activations.
        sg = jax.nn.sigmoid(gates)
        th = jnp.tanh(gates)
        lane = jax.lax.broadcasted_iota(jnp.int32, gates.shape, 1)
        act = jnp.where((lane >= 2 * H) & (lane < 3 * H), th, sg)
        i_g = act[:, 0 * H:1 * H]
        f_g = act[:, 1 * H:2 * H]
        g_g = act[:, 2 * H:3 * H]
        o_g = act[:, 3 * H:4 * H]
        c_new = f_g * c + i_g * g_g
        h_new = o_g * jnp.tanh(c_new)
        return h_new, c_new

    zeros = jnp.zeros((B, H), jnp.float32)

    # ---------------- encoder LSTM (2 stacked layers, zero init state) ------
    h0, c0, h1, c1 = zeros, zeros, zeros, zeros
    for t in range(T):                                   # static unrolled loop
        x_t = feat_ref[t]                                # (B, F)
        g0 = jnp.dot(x_t, e0_wih, preferred_element_type=jnp.float32) + e0_b
        h0, c0 = lstm_cell(g0, h0, c0, e0_whh)
        g1 = jnp.dot(h0, e1_wih, preferred_element_type=jnp.float32) + e1_b
        h1, c1 = lstm_cell(g1, h1, c1, e1_whh)

    # tanh(encode_h)[:, -1, :]  ==  tanh(h1) (elementwise)
    h_last = jnp.tanh(h1)                                # (B, H)

    # ---------------- fused z_mean / z_sigma head + reparameterize ----------
    z_cat = jnp.dot(h_last, z_w_ref[...],
                    preferred_element_type=jnp.float32) + z_b_ref[...]
    z_cat = jnp.maximum(z_cat, 0.0)                      # ReLU (as in reference)
    z_mean = z_cat[:, :latent]
    z_log = z_cat[:, latent:]
    zmean_ref[...] = z_mean
    zlog_ref[...] = z_log
    z = z_mean + jnp.exp(z_log * 0.5) * eps_ref[...]     # (B, latent)

    # ---------------- hidden LSTM (input = z repeated over time) ------------
    # Input projection of layer 0 is constant across time -> compute once.
    g_hid0 = jnp.dot(z, d0_wih, preferred_element_type=jnp.float32) + d0_b
    hh0, cc0 = h0_ref[0], c0_ref[0]
    hh1, cc1 = h0_ref[1], c0_ref[1]
    for _ in range(T):
        hh0, cc0 = lstm_cell(g_hid0, hh0, cc0, d0_whh)
        g1 = jnp.dot(hh0, d1_wih, preferred_element_type=jnp.float32) + d1_b
        hh1, cc1 = lstm_cell(g1, hh1, cc1, d1_whh)

    out = jnp.tanh(hh1)                                  # (B, H)

    # ---------------- fused hi/lo decoder MLP --------------------------------
    # Layer 0 weights are concatenated along output dim; later layers are
    # block-diagonal, so each matmul computes hi and lo paths together.
    for li in range(n_dec):
        w = dec_refs[2 * li][...]
        b = dec_refs[2 * li + 1][...]
        out = jnp.dot(out, w, preferred_element_type=jnp.float32) + b
        if li == 0:
            pass                                         # restored: no act
        elif li < n_dec - 1:
            out = jnp.maximum(out, 0.0)                  # ReLU
        else:
            out = jax.nn.sigmoid(out)                    # final sigmoid
    dec_out_ref[...] = out                               # (B, 2*input_shape)


# ----------------------------------------------------------------------------
# Parameter construction (deterministic; weights pre-transposed for kernel)
# ----------------------------------------------------------------------------
def _uniform(key, shape, bound):
    return jax.random.uniform(key, shape, jnp.float32, -bound, bound)


def lstm_params(key, in_dim, hidden):
    k = jax.random.split(key, 4)
    bd = 1.0 / math.sqrt(hidden)
    wih = _uniform(k[0], (4 * hidden, in_dim), bd)
    whh = _uniform(k[1], (4 * hidden, hidden), bd)
    bih = _uniform(k[2], (4 * hidden,), bd)
    bhh = _uniform(k[3], (4 * hidden,), bd)
    return dict(wihT=jnp.transpose(wih),                 # (in, 4H)
                whhT=jnp.transpose(whh),                 # (H, 4H)
                b=(bih + bhh).reshape(1, 4 * hidden))    # pre-summed bias


def linear_params(key, in_dim, out_dim):
    k = jax.random.split(key, 2)
    bd = 1.0 / math.sqrt(in_dim)
    return dict(wT=jnp.transpose(_uniform(k[0], (out_dim, in_dim), bd)),
                b=_uniform(k[1], (out_dim,), bd).reshape(1, out_dim))


def decoder_params(key, output_shape, latent_dim, depth=2):
    keys = jax.random.split(key, depth + 1)
    layers = [linear_params(keys[0], latent_dim, output_shape // 2 ** depth)]
    for n, i in enumerate(reversed(range(depth))):
        layers.append(linear_params(keys[n + 1],
                                    output_shape // 2 ** (i + 1),
                                    output_shape // 2 ** i))
    return layers


def _block_diag(a, b):
    out = jnp.zeros((a.shape[0] + b.shape[0], a.shape[1] + b.shape[1]), a.dtype)
    out = out.at[:a.shape[0], :a.shape[1]].set(a)
    out = out.at[a.shape[0]:, a.shape[1]:].set(b)
    return out


def combine_decoders(hi_layers, lo_layers):
    """Fuse dec_hi and dec_lo into one stack of wider matmuls."""
    combined = []
    w0 = jnp.concatenate([hi_layers[0]["wT"], lo_layers[0]["wT"]], axis=1)
    b0 = jnp.concatenate([hi_layers[0]["b"], lo_layers[0]["b"]], axis=1)
    combined.append((w0, b0))
    for hi, lo in zip(hi_layers[1:], lo_layers[1:]):
        combined.append((_block_diag(hi["wT"], lo["wT"]),
                         jnp.concatenate([hi["b"], lo["b"]], axis=1)))
    return combined


def init_model(key, input_shape, latent_dim, hidden_size, max_features,
               decoder_depth=2, batch_size=2):
    keys = jax.random.split(key, 12)
    enc0 = lstm_params(keys[0], max_features, hidden_size)
    enc1 = lstm_params(keys[1], hidden_size, hidden_size)
    zm = linear_params(keys[2], hidden_size, latent_dim)
    zs = linear_params(keys[3], hidden_size, latent_dim)
    hid0 = lstm_params(keys[4], latent_dim, hidden_size)
    hid1 = lstm_params(keys[5], hidden_size, hidden_size)
    dec_hi = decoder_params(keys[6], input_shape, hidden_size, decoder_depth)
    dec_lo = decoder_params(keys[7], input_shape, hidden_size, decoder_depth)
    params = dict(
        enc0=enc0, enc1=enc1,
        z_wT=jnp.concatenate([zm["wT"], zs["wT"]], axis=1),   # (H, 2*latent)
        z_b=jnp.concatenate([zm["b"], zs["b"]], axis=1),      # (1, 2*latent)
        hid0=hid0, hid1=hid1,
        dec_cat=combine_decoders(dec_hi, dec_lo),
    )
    # TODO(synk): init_hidden() in PyTorch re-draws xavier_normal h0/c0 every
    # forward; deterministic xavier-scaled constants are used here instead.
    xav = math.sqrt(2.0 / (batch_size * hidden_size + 2 * hidden_size))
    params["h0"] = xav * jax.random.normal(keys[8], (2, batch_size, hidden_size),
                                           jnp.float32)
    params["c0"] = xav * jax.random.normal(keys[9], (2, batch_size, hidden_size),
                                           jnp.float32)
    # TODO(synk): np.random.choice(input_shape, size=max_features, replace=False)
    # replaced with a fixed deterministic index set.
    params["random_samples"] = jnp.array([3, 7, 12], dtype=jnp.int32)[:max_features]
    return params


# ----------------------------------------------------------------------------
# DivLstmVAE forward (single fused pallas_call)
# ----------------------------------------------------------------------------
def div_lstm_vae_forward(params, x, eps_key, hidden_size, latent_dim,
                         decoder_depth=2):
    B, T, input_shape = x.shape
    H = hidden_size

    # feature subsampling + time-major layout (glue, outside the kernel)
    feat = jnp.take(x, params["random_samples"], axis=2)          # (B, T, F)
    feat_t = jnp.transpose(feat, (1, 0, 2)).astype(jnp.float32)   # (T, B, F)
    eps = jax.random.normal(eps_key, (B, latent_dim), jnp.float32)

    n_dec = decoder_depth + 1
    kernel = functools.partial(_fused_forward_kernel,
                               T=T, H=H, latent=latent_dim, n_dec=n_dec)

    args = [feat_t,
            params["enc0"]["wihT"], params["enc0"]["whhT"], params["enc0"]["b"],
            params["enc1"]["wihT"], params["enc1"]["whhT"], params["enc1"]["b"],
            params["z_wT"], params["z_b"], eps,
            params["hid0"]["wihT"], params["hid0"]["whhT"], params["hid0"]["b"],
            params["hid1"]["wihT"], params["hid1"]["whhT"], params["hid1"]["b"],
            params["h0"], params["c0"]]
    for w, b in params["dec_cat"]:
        args += [w, b]

    out_dim = params["dec_cat"][-1][0].shape[1]          # 2 * input_shape
    vmem_spec = pl.BlockSpec(memory_space=pltpu.MemorySpace.VMEM)
    dec_out, z_mean, z_log = pl.pallas_call(
        kernel,
        out_shape=(jax.ShapeDtypeStruct((B, out_dim), jnp.float32),
                   jax.ShapeDtypeStruct((B, latent_dim), jnp.float32),
                   jax.ShapeDtypeStruct((B, latent_dim), jnp.float32)),
        in_specs=[vmem_spec] * len(args),
        out_specs=(vmem_spec, vmem_spec, vmem_spec),
    )(*args)

    half = out_dim // 2
    return dec_out[:, :half], dec_out[:, half:], z_mean, z_log


# ----------------------------------------------------------------------------
if __name__ == "__main__":
    B, T = 2, 8
    input_shape = 16        # per-timestep feature dim (and decoder output dim)
    latent_dim = 8
    hidden_size = 32
    max_features = 3
    decoder_depth = 2

    root = jax.random.PRNGKey(0)
    k_param, k_data, k_eps = jax.random.split(root, 3)

    params = init_model(k_param, input_shape, latent_dim, hidden_size,
                        max_features, decoder_depth, batch_size=B)
    x = jax.random.normal(k_data, (B, T, input_shape), jnp.float32)

    fwd = jax.jit(functools.partial(div_lstm_vae_forward,
                                    hidden_size=hidden_size,
                                    latent_dim=latent_dim,
                                    decoder_depth=decoder_depth))
    out_hi, out_lo, z_mean, z_log = fwd(params, x, k_eps)
    jax.block_until_ready((out_hi, out_lo, z_mean, z_log))

    assert out_hi.shape == (B, input_shape)
    assert out_lo.shape == (B, input_shape)
    assert z_mean.shape == (B, latent_dim)
    assert z_log.shape == (B, latent_dim)
    print("KERNEL_OK")
</pallas_src>

<mosaic_0001>
module attributes {stable_mosaic.version = 11 : i64} {
  func.func @_fused_forward_kernel(%arg0: memref<8x2x3xf32, #tpu.memory_space<vmem>>, %arg1: memref<3x128xf32, #tpu.memory_space<vmem>>, %arg2: memref<32x128xf32, #tpu.memory_space<vmem>>, %arg3: memref<1x128xf32, #tpu.memory_space<vmem>>, %arg4: memref<32x128xf32, #tpu.memory_space<vmem>>, %arg5: memref<32x128xf32, #tpu.memory_space<vmem>>, %arg6: memref<1x128xf32, #tpu.memory_space<vmem>>, %arg7: memref<32x16xf32, #tpu.memory_space<vmem>>, %arg8: memref<1x16xf32, #tpu.memory_space<vmem>>, %arg9: memref<2x8xf32, #tpu.memory_space<vmem>>, %arg10: memref<8x128xf32, #tpu.memory_space<vmem>>, %arg11: memref<32x128xf32, #tpu.memory_space<vmem>>, %arg12: memref<1x128xf32, #tpu.memory_space<vmem>>, %arg13: memref<32x128xf32, #tpu.memory_space<vmem>>, %arg14: memref<32x128xf32, #tpu.memory_space<vmem>>, %arg15: memref<1x128xf32, #tpu.memory_space<vmem>>, %arg16: memref<2x2x32xf32, #tpu.memory_space<vmem>>, %arg17: memref<2x2x32xf32, #tpu.memory_space<vmem>>, %arg18: memref<32x8xf32, #tpu.memory_space<vmem>>, %arg19: memref<1x8xf32, #tpu.memory_space<vmem>>, %arg20: memref<8x16xf32, #tpu.memory_space<vmem>>, %arg21: memref<1x16xf32, #tpu.memory_space<vmem>>, %arg22: memref<16x32xf32, #tpu.memory_space<vmem>>, %arg23: memref<1x32xf32, #tpu.memory_space<vmem>>, %arg24: memref<2x32xf32, #tpu.memory_space<vmem>>, %arg25: memref<2x8xf32, #tpu.memory_space<vmem>>, %arg26: memref<2x8xf32, #tpu.memory_space<vmem>>) attributes {dimension_semantics = [], scalar_prefetch = 0 : i64, scratch_operands = 0 : i64, tpu.core_type = #tpu.core_type<tc>} {
    %c0 = arith.constant 0 : index
    %c0_0 = arith.constant 0 : index
    %0 = vector.load %arg1[%c0, %c0_0] : memref<3x128xf32, #tpu.memory_space<vmem>>, vector<3x128xf32>
    %c0_1 = arith.constant 0 : index
    %c0_2 = arith.constant 0 : index
    %1 = vector.load %arg2[%c0_1, %c0_2] : memref<32x128xf32, #tpu.memory_space<vmem>>, vector<32x128xf32>
    %c0_3 = arith.constant 0 : index
    %c0_4 = arith.constant 0 : index
    %2 = vector.load %arg3[%c0_3, %c0_4] : memref<1x128xf32, #tpu.memory_space<vmem>>, vector<1x128xf32>
    %c0_5 = arith.constant 0 : index
    %c0_6 = arith.constant 0 : index
    %3 = vector.load %arg4[%c0_5, %c0_6] : memref<32x128xf32, #tpu.memory_space<vmem>>, vector<32x128xf32>
    %c0_7 = arith.constant 0 : index
    %c0_8 = arith.constant 0 : index
    %4 = vector.load %arg5[%c0_7, %c0_8] : memref<32x128xf32, #tpu.memory_space<vmem>>, vector<32x128xf32>
    %c0_9 = arith.constant 0 : index
    %c0_10 = arith.constant 0 : index
    %5 = vector.load %arg6[%c0_9, %c0_10] : memref<1x128xf32, #tpu.memory_space<vmem>>, vector<1x128xf32>
    %c0_11 = arith.constant 0 : index
    %c0_12 = arith.constant 0 : index
    %6 = vector.load %arg10[%c0_11, %c0_12] : memref<8x128xf32, #tpu.memory_space<vmem>>, vector<8x128xf32>
    %c0_13 = arith.constant 0 : index
    %c0_14 = arith.constant 0 : index
    %7 = vector.load %arg11[%c0_13, %c0_14] : memref<32x128xf32, #tpu.memory_space<vmem>>, vector<32x128xf32>
    %c0_15 = arith.constant 0 : index
    %c0_16 = arith.constant 0 : index
    %8 = vector.load %arg12[%c0_15, %c0_16] : memref<1x128xf32, #tpu.memory_space<vmem>>, vector<1x128xf32>
    %c0_17 = arith.constant 0 : index
    %c0_18 = arith.constant 0 : index
    %9 = vector.load %arg13[%c0_17, %c0_18] : memref<32x128xf32, #tpu.memory_space<vmem>>, vector<32x128xf32>
    %c0_19 = arith.constant 0 : index
    %c0_20 = arith.constant 0 : index
    %10 = vector.load %arg14[%c0_19, %c0_20] : memref<32x128xf32, #tpu.memory_space<vmem>>, vector<32x128xf32>
    %c0_21 = arith.constant 0 : index
    %c0_22 = arith.constant 0 : index
    %11 = vector.load %arg15[%c0_21, %c0_22] : memref<1x128xf32, #tpu.memory_space<vmem>>, vector<1x128xf32>
    %cst = arith.constant 0.000000e+00 : f32
    %12 = vector.broadcast %cst : f32 to vector<2x32xf32>
    %c0_23 = arith.constant 0 : index
    %c0_24 = arith.constant 0 : index
    %c0_25 = arith.constant 0 : index
    %13 = vector.load %arg0[%c0_23, %c0_24, %c0_25] : memref<8x2x3xf32, #tpu.memory_space<vmem>>, vector<1x2x3xf32>
    %14 = vector.shape_cast %13 : vector<1x2x3xf32> to vector<2x3xf32>
    %cst_26 = arith.constant dense<0.000000e+00> : vector<2x128xf32>
    %15 = tpu.matmul %14, %0, %cst_26 {dimension_numbers = #tpu.dot_dimension_numbers<[1], [0], [0], [1], [0, 0, 1, 1], [], []>} : vector<2x3xf32>, vector<3x128xf32>, vector<2x128xf32> -> vector<2x128xf32>
    %16 = vector.broadcast %2 : vector<1x128xf32> to vector<2x128xf32>
    %17 = arith.addf %15, %16 : vector<2x128xf32>
    %cst_27 = arith.constant dense<0.000000e+00> : vector<2x128xf32>
    %18 = tpu.matmul %12, %1, %cst_27 {dimension_numbers = #tpu.dot_dimension_numbers<[1], [0], [0], [1], [0, 0, 1, 1], [], []>} : vector<2x32xf32>, vector<32x128xf32>, vector<2x128xf32> -> vector<2x128xf32>
    %19 = arith.addf %17, %18 : vector<2x128xf32>
    %20 = arith.negf %19 : vector<2x128xf32>
    %21 = math.exp %20 : vector<2x128xf32>
    %cst_28 = arith.constant 1.000000e+00 : f32
    %22 = vector.broadcast %cst_28 : f32 to vector<2x128xf32>
    %23 = arith.addf %22, %21 : vector<2x128xf32>
    %24 = arith.divf %22, %23 : vector<2x128xf32>
    %25 = math.tanh %19 : vector<2x128xf32>
    %26 = tpu.iota {dimensions = array<i32: 1>} : vector<2x128xi32>
    %c64_i32 = arith.constant 64 : i32
    %27 = vector.broadcast %c64_i32 : i32 to vector<2x128xi32>
    %28 = arith.cmpi sge, %26, %27 : vector<2x128xi32>
    %c96_i32 = arith.constant 96 : i32
    %29 = vector.broadcast %c96_i32 : i32 to vector<2x128xi32>
    %30 = arith.cmpi slt, %26, %29 : vector<2x128xi32>
    %31 = arith.andi %28, %30 : vector<2x128xi1>
    %32 = arith.select %31, %25, %24 : vector<2x128xi1>, vector<2x128xf32>
    %33 = vector.extract_strided_slice %32 {offsets = [0, 0], sizes = [2, 32], strides = [1, 1]} : vector<2x128xf32> to vector<2x32xf32>
    %34 = vector.extract_strided_slice %32 {offsets = [0, 32], sizes = [2, 32], strides = [1, 1]} : vector<2x128xf32> to vector<2x32xf32>
    %35 = vector.extract_strided_slice %32 {offsets = [0, 64], sizes = [2, 32], strides = [1, 1]} : vector<2x128xf32> to vector<2x32xf32>
    %36 = vector.extract_strided_slice %32 {offsets = [0, 96], sizes = [2, 32], strides = [1, 1]} : vector<2x128xf32> to vector<2x32xf32>
    %37 = arith.mulf %34, %12 : vector<2x32xf32>
    %38 = arith.mulf %33, %35 : vector<2x32xf32>
    %39 = arith.addf %37, %38 : vector<2x32xf32>
    %40 = math.tanh %39 : vector<2x32xf32>
    %41 = arith.mulf %36, %40 : vector<2x32xf32>
    %cst_29 = arith.constant dense<0.000000e+00> : vector<2x128xf32>
    %42 = tpu.matmul %41, %3, %cst_29 {dimension_numbers = #tpu.dot_dimension_numbers<[1], [0], [0], [1], [0, 0, 1, 1], [], []>} : vector<2x32xf32>, vector<32x128xf32>, vector<2x128xf32> -> vector<2x128xf32>
    %43 = vector.broadcast %5 : vector<1x128xf32> to vector<2x128xf32>
    %44 = arith.addf %42, %43 : vector<2x128xf32>
    %cst_30 = arith.constant dense<0.000000e+00> : vector<2x128xf32>
    %45 = tpu.matmul %12, %4, %cst_30 {dimension_numbers = #tpu.dot_dimension_numbers<[1], [0], [0], [1], [0, 0, 1, 1], [], []>} : vector<2x32xf32>, vector<32x128xf32>, vector<2x128xf32> -> vector<2x128xf32>
    %46 = arith.addf %44, %45 : vector<2x128xf32>
    %47 = arith.negf %46 : vector<2x128xf32>
    %48 = math.exp %47 : vector<2x128xf32>
    %cst_31 = arith.constant 1.000000e+00 : f32
    %49 = vector.broadcast %cst_31 : f32 to vector<2x128xf32>
    %50 = arith.addf %49, %48 : vector<2x128xf32>
    %51 = arith.divf %49, %50 : vector<2x128xf32>
    %52 = math.tanh %46 : vector<2x128xf32>
    %53 = tpu.iota {dimensions = array<i32: 1>} : vector<2x128xi32>
    %c64_i32_32 = arith.constant 64 : i32
    %54 = vector.broadcast %c64_i32_32 : i32 to vector<2x128xi32>
    %55 = arith.cmpi sge, %53, %54 : vector<2x128xi32>
    %c96_i32_33 = arith.constant 96 : i32
    %56 = vector.broadcast %c96_i32_33 : i32 to vector<2x128xi32>
    %57 = arith.cmpi slt, %53, %56 : vector<2x128xi32>
    %58 = arith.andi %55, %57 : vector<2x128xi1>
    %59 = arith.select %58, %52, %51 : vector<2x128xi1>, vector<2x128xf32>
    %60 = vector.extract_strided_slice %59 {offsets = [0, 0], sizes = [2, 32], strides = [1, 1]} : vector<2x128xf32> to vector<2x32xf32>
    %61 = vector.extract_strided_slice %59 {offsets = [0, 32], sizes = [2, 32], strides = [1, 1]} : vector<2x128xf32> to vector<2x32xf32>
    %62 = vector.extract_strided_slice %59 {offsets = [0, 64], sizes = [2, 32], strides = [1, 1]} : vector<2x128xf32> to vector<2x32xf32>
    %63 = vector.extract_strided_slice %59 {offsets = [0, 96], sizes = [2, 32], strides = [1, 1]} : vector<2x128xf32> to vector<2x32xf32>
    %64 = arith.mulf %61, %12 : vector<2x32xf32>
    %65 = arith.mulf %60, %62 : vector<2x32xf32>
    %66 = arith.addf %64, %65 : vector<2x32xf32>
    %67 = math.tanh %66 : vector<2x32xf32>
    %68 = arith.mulf %63, %67 : vector<2x32xf32>
    %c1 = arith.constant 1 : index
    %c0_34 = arith.constant 0 : index
    %c0_35 = arith.constant 0 : index
    %69 = vector.load %arg0[%c1, %c0_34, %c0_35] : memref<8x2x3xf32, #tpu.memory_space<vmem>>, vector<1x2x3xf32>
    %70 = vector.shape_cast %69 : vector<1x2x3xf32> to vector<2x3xf32>
    %cst_36 = arith.constant dense<0.000000e+00> : vector<2x128xf32>
    %71 = tpu.matmul %70, %0, %cst_36 {dimension_numbers = #tpu.dot_dimension_numbers<[1], [0], [0], [1], [0, 0, 1, 1], [], []>} : vector<2x3xf32>, vector<3x128xf32>, vector<2x128xf32> -> vector<2x128xf32>
    %72 = vector.broadcast %2 : vector<1x128xf32> to vector<2x128xf32>
    %73 = arith.addf %71, %72 : vector<2x128xf32>
    %cst_37 = arith.constant dense<0.000000e+00> : vector<2x128xf32>
    %74 = tpu.matmul %41, %1, %cst_37 {dimension_numbers = #tpu.dot_dimension_numbers<[1], [0], [0], [1], [0, 0, 1, 1], [], []>} : vector<2x32xf32>, vector<32x128xf32>, vector<2x128xf32> -> vector<2x128xf32>
    %75 = arith.addf %73, %74 : vector<2x128xf32>
    %76 = arith.negf %75 : vector<2x128xf32>
    %77 = math.exp %76 : vector<2x128xf32>
    %cst_38 = arith.constant 1.000000e+00 : f32
    %78 = vector.broadcast %cst_38 : f32 to vector<2x128xf32>
    %79 = arith.addf %78, %77 : vector<2x128xf32>
    %80 = arith.divf %78, %79 : vector<2x128xf32>
    %81 = math.tanh %75 : vector<2x128xf32>
    %82 = tpu.iota {dimensions = array<i32: 1>} : vector<2x128xi32>
    %c64_i32_39 = arith.constant 64 : i32
    %83 = vector.broadcast %c64_i32_39 : i32 to vector<2x128xi32>
    %84 = arith.cmpi sge, %82, %83 : vector<2x128xi32>
    %c96_i32_40 = arith.constant 96 : i32
    %85 = vector.broadcast %c96_i32_40 : i32 to vector<2x128xi32>
    %86 = arith.cmpi slt, %82, %85 : vector<2x128xi32>
    %87 = arith.andi %84, %86 : vector<2x128xi1>
    %88 = arith.select %87, %81, %80 : vector<2x128xi1>, vector<2x128xf32>
    %89 = vector.extract_strided_slice %88 {offsets = [0, 0], sizes = [2, 32], strides = [1, 1]} : vector<2x128xf32> to vector<2x32xf32>
    %90 = vector.extract_strided_slice %88 {offsets = [0, 32], sizes = [2, 32], strides = [1, 1]} : vector<2x128xf32> to vector<2x32xf32>
    %91 = vector.extract_strided_slice %88 {offsets = [0, 64], sizes = [2, 32], strides = [1, 1]} : vector<2x128xf32> to vector<2x32xf32>
    %92 = vector.extract_strided_slice %88 {offsets = [0, 96], sizes = [2, 32], strides = [1, 1]} : vector<2x128xf32> to vector<2x32xf32>
    %93 = arith.mulf %90, %39 : vector<2x32xf32>
    %94 = arith.mulf %89, %91 : vector<2x32xf32>
    %95 = arith.addf %93, %94 : vector<2x32xf32>
    %96 = math.tanh %95 : vector<2x32xf32>
    %97 = arith.mulf %92, %96 : vector<2x32xf32>
    %cst_41 = arith.constant dense<0.000000e+00> : vector<2x128xf32>
    %98 = tpu.matmul %97, %3, %cst_41 {dimension_numbers = #tpu.dot_dimension_numbers<[1], [0], [0], [1], [0, 0, 1, 1], [], []>} : vector<2x32xf32>, vector<32x128xf32>, vector<2x128xf32> -> vector<2x128xf32>
    %99 = vector.broadcast %5 : vector<1x128xf32> to vector<2x128xf32>
    %100 = arith.addf %98, %99 : vector<2x128xf32>
    %cst_42 = arith.constant dense<0.000000e+00> : vector<2x128xf32>
    %101 = tpu.matmul %68, %4, %cst_42 {dimension_numbers = #tpu.dot_dimension_numbers<[1], [0], [0], [1], [0, 0, 1, 1], [], []>} : vector<2x32xf32>, vector<32x128xf32>, vector<2x128xf32> -> vector<2x128xf32>
    %102 = arith.addf %100, %101 : vector<2x128xf32>
    %103 = arith.negf %102 : vector<2x128xf32>
    %104 = math.exp %103 : vector<2x128xf32>
    %cst_43 = arith.constant 1.000000e+00 : f32
    %105 = vector.broadcast %cst_43 : f32 to vector<2x128xf32>
    %106 = arith.addf %105, %104 : vector<2x128xf32>
    %107 = arith.divf %105, %106 : vector<2x128xf32>
    %108 = math.tanh %102 : vector<2x128xf32>
    %109 = tpu.iota {dimensions = array<i32: 1>} : vector<2x128xi32>
    %c64_i32_44 = arith.constant 64 : i32
    %110 = vector.broadcast %c64_i32_44 : i32 to vector<2x128xi32>
    %111 = arith.cmpi sge, %109, %110 : vector<2x128xi32>
    %c96_i32_45 = arith.constant 96 : i32
    %112 = vector.broadcast %c96_i32_45 : i32 to vector<2x128xi32>
    %113 = arith.cmpi slt, %109, %112 : vector<2x128xi32>
    %114 = arith.andi %111, %113 : vector<2x128xi1>
    %115 = arith.select %114, %108, %107 : vector<2x128xi1>, vector<2x128xf32>
    %116 = vector.extract_strided_slice %115 {offsets = [0, 0], sizes = [2, 32], strides = [1, 1]} : vector<2x128xf32> to vector<2x32xf32>
    %117 = vector.extract_strided_slice %115 {offsets = [0, 32], sizes = [2, 32], strides = [1, 1]} : vector<2x128xf32> to vector<2x32xf32>
    %118 = vector.extract_strided_slice %115 {offsets = [0, 64], sizes = [2, 32], strides = [1, 1]} : vector<2x128xf32> to vector<2x32xf32>
    %119 = vector.extract_strided_slice %115 {offsets = [0, 96], sizes = [2, 32], strides = [1, 1]} : vector<2x128xf32> to vector<2x32xf32>
    %120 = arith.mulf %117, %66 : vector<2x32xf32>
    %121 = arith.mulf %116, %118 : vector<2x32xf32>
    %122 = arith.addf %120, %121 : vector<2x32xf32>
    %123 = math.tanh %122 : vector<2x32xf32>
    %124 = arith.mulf %119, %123 : vector<2x32xf32>
    %c2 = arith.constant 2 : index
    %c0_46 = arith.constant 0 : index
    %c0_47 = arith.constant 0 : index
    %125 = vector.load %arg0[%c2, %c0_46, %c0_47] : memref<8x2x3xf32, #tpu.memory_space<vmem>>, vector<1x2x3xf32>
    %126 = vector.shape_cast %125 : vector<1x2x3xf32> to vector<2x3xf32>
    %cst_48 = arith.constant dense<0.000000e+00> : vector<2x128xf32>
    %127 = tpu.matmul %126, %0, %cst_48 {dimension_numbers = #tpu.dot_dimension_numbers<[1], [0], [0], [1], [0, 0, 1, 1], [], []>} : vector<2x3xf32>, vector<3x128xf32>, vector<2x128xf32> -> vector<2x128xf32>
    %128 = vector.broadcast %2 : vector<1x128xf32> to vector<2x128xf32>
    %129 = arith.addf %127, %128 : vector<2x128xf32>
    %cst_49 = arith.constant dense<0.000000e+00> : vector<2x128xf32>
    %130 = tpu.matmul %97, %1, %cst_49 {dimension_numbers = #tpu.dot_dimension_numbers<[1], [0], [0], [1], [0, 0, 1, 1], [], []>} : vector<2x32xf32>, vector<32x128xf32>, vector<2x128xf32> -> vector<2x128xf32>
    %131 = arith.addf %129, %130 : vector<2x128xf32>
    %132 = arith.negf %131 : vector<2x128xf32>
    %133 = math.exp %132 : vector<2x128xf32>
    %cst_50 = arith.constant 1.000000e+00 : f32
    %134 = vector.broadcast %cst_50 : f32 to vector<2x128xf32>
    %135 = arith.addf %134, %133 : vector<2x128xf32>
    %136 = arith.divf %134, %135 : vector<2x128xf32>
    %137 = math.tanh %131 : vector<2x128xf32>
    %138 = tpu.iota {dimensions = array<i32: 1>} : vector<2x128xi32>
    %c64_i32_51 = arith.constant 64 : i32
    %139 = vector.broadcast %c64_i32_51 : i32 to vector<2x128xi32>
    %140 = arith.cmpi sge, %138, %139 : vector<2x128xi32>
    %c96_i32_52 = arith.constant 96 : i32
    %141 = vector.broadcast %c96_i32_52 : i32 to vector<2x128xi32>
    %142 = arith.cmpi slt, %138, %141 : vector<2x128xi32>
    %143 = arith.andi %140, %142 : vector<2x128xi1>
    %144 = arith.select %143, %137, %136 : vector<2x128xi1>, vector<2x128xf32>
    %145 = vector.extract_strided_slice %144 {offsets = [0, 0], sizes = [2, 32], strides = [1, 1]} : vector<2x128xf32> to vector<2x32xf32>
    %146 = vector.extract_strided_slice %144 {offsets = [0, 32], sizes = [2, 32], strides = [1, 1]} : vector<2x128xf32> to vector<2x32xf32>
    %147 = vector.extract_strided_slice %144 {offsets = [0, 64], sizes = [2, 32], strides = [1, 1]} : vector<2x128xf32> to vector<2x32xf32>
    %148 = vector.extract_strided_slice %144 {offsets = [0, 96], sizes = [2, 32], strides = [1, 1]} : vector<2x128xf32> to vector<2x32xf32>
    %149 = arith.mulf %146, %95 : vector<2x32xf32>
    %150 = arith.mulf %145, %147 : vector<2x32xf32>
    %151 = arith.addf %149, %150 : vector<2x32xf32>
    %152 = math.tanh %151 : vector<2x32xf32>
    %153 = arith.mulf %148, %152 : vector<2x32xf32>
    %cst_53 = arith.constant dense<0.000000e+00> : vector<2x128xf32>
    %154 = tpu.matmul %153, %3, %cst_53 {dimension_numbers = #tpu.dot_dimension_numbers<[1], [0], [0], [1], [0, 0, 1, 1], [], []>} : vector<2x32xf32>, vector<32x128xf32>, vector<2x128xf32> -> vector<2x128xf32>
    %155 = vector.broadcast %5 : vector<1x128xf32> to vector<2x128xf32>
    %156 = arith.addf %154, %155 : vector<2x128xf32>
    %cst_54 = arith.constant dense<0.000000e+00> : vector<2x128xf32>
    %157 = tpu.matmul %124, %4, %cst_54 {dimension_numbers = #tpu.dot_dimension_numbers<[1], [0], [0], [1], [0, 0, 1, 1], [], []>} : vector<2x32xf32>, vector<32x128xf32>, vector<2x128xf32> -> vector<2x128xf32>
    %158 = arith.addf %156, %157 : vector<2x128xf32>
    %159 = arith.negf %158 : vector<2x128xf32>
    %160 = math.exp %159 : vector<2x128xf32>
    %cst_55 = arith.constant 1.000000e+00 : f32
    %161 = vector.broadcast %cst_55 : f32 to vector<2x128xf32>
    %162 = arith.addf %161, %160 : vector<2x128xf32>
    %163 = arith.divf %161, %162 : vector<2x128xf32>
    %164 = math.tanh %158 : vector<2x128xf32>
    %165 = tpu.iota {dimensions = array<i32: 1>} : vector<2x128xi32>
    %c64_i32_56 = arith.constant 64 : i32
    %166 = vector.broadcast %c64_i32_56 : i32 to vector<2x128xi32>
    %167 = arith.cmpi sge, %165, %166 : vector<2x128xi32>
    %c96_i32_57 = arith.constant 96 : i32
    %168 = vector.broadcast %c96_i32_57 : i32 to vector<2x128xi32>
    %169 = arith.cmpi slt, %165, %168 : vector<2x128xi32>
    %170 = arith.andi %167, %169 : vector<2x128xi1>
    %171 = arith.select %170, %164, %163 : vector<2x128xi1>, vector<2x128xf32>
    %172 = vector.extract_strided_slice %171 {offsets = [0, 0], sizes = [2, 32], strides = [1, 1]} : vector<2x128xf32> to vector<2x32xf32>
    %173 = vector.extract_strided_slice %171 {offsets = [0, 32], sizes = [2, 32], strides = [1, 1]} : vector<2x128xf32> to vector<2x32xf32>
    %174 = vector.extract_strided_slice %171 {offsets = [0, 64], sizes = [2, 32], strides = [1, 1]} : vector<2x128xf32> to vector<2x32xf32>
    %175 = vector.extract_strided_slice %171 {offsets = [0, 96], sizes = [2, 32], strides = [1, 1]} : vector<2x128xf32> to vector<2x32xf32>
    %176 = arith.mulf %173, %122 : vector<2x32xf32>
    %177 = arith.mulf %172, %174 : vector<2x32xf32>
    %178 = arith.addf %176, %177 : vector<2x32xf32>
    %179 = math.tanh %178 : vector<2x32xf32>
    %180 = arith.mulf %175, %179 : vector<2x32xf32>
    %c3 = arith.constant 3 : index
    %c0_58 = arith.constant 0 : index
    %c0_59 = arith.constant 0 : index
    %181 = vector.load %arg0[%c3, %c0_58, %c0_59] : memref<8x2x3xf32, #tpu.memory_space<vmem>>, vector<1x2x3xf32>
    %182 = vector.shape_cast %181 : vector<1x2x3xf32> to vector<2x3xf32>
    %cst_60 = arith.constant dense<0.000000e+00> : vector<2x128xf32>
    %183 = tpu.matmul %182, %0, %cst_60 {dimension_numbers = #tpu.dot_dimension_numbers<[1], [0], [0], [1], [0, 0, 1, 1], [], []>} : vector<2x3xf32>, vector<3x128xf32>, vector<2x128xf32> -> vector<2x128xf32>
    %184 = vector.broadcast %2 : vector<1x128xf32> to vector<2x128xf32>
    %185 = arith.addf %183, %184 : vector<2x128xf32>
    %cst_61 = arith.constant dense<0.000000e+00> : vector<2x128xf32>
    %186 = tpu.matmul %153, %1, %cst_61 {dimension_numbers = #tpu.dot_dimension_numbers<[1], [0], [0], [1], [0, 0, 1, 1], [], []>} : vector<2x32xf32>, vector<32x128xf32>, vector<2x128xf32> -> vector<2x128xf32>
    %187 = arith.addf %185, %186 : vector<2x128xf32>
    %188 = arith.negf %187 : vector<2x128xf32>
    %189 = math.exp %188 : vector<2x128xf32>
    %cst_62 = arith.constant 1.000000e+00 : f32
    %190 = vector.broadcast %cst_62 : f32 to vector<2x128xf32>
    %191 = arith.addf %190, %189 : vector<2x128xf32>
    %192 = arith.divf %190, %191 : vector<2x128xf32>
    %193 = math.tanh %187 : vector<2x128xf32>
    %194 = tpu.iota {dimensions = array<i32: 1>} : vector<2x128xi32>
    %c64_i32_63 = arith.constant 64 : i32
    %195 = vector.broadcast %c64_i32_63 : i32 to vector<2x128xi32>
    %196 = arith.cmpi sge, %194, %195 : vector<2x128xi32>
    %c96_i32_64 = arith.constant 96 : i32
    %197 = vector.broadcast %c96_i32_64 : i32 to vector<2x128xi32>
    %198 = arith.cmpi slt, %194, %197 : vector<2x128xi32>
    %199 = arith.andi %196, %198 : vector<2x128xi1>
    %200 = arith.select %199, %193, %192 : vector<2x128xi1>, vector<2x128xf32>
    %201 = vector.extract_strided_slice %200 {offsets = [0, 0], sizes = [2, 32], strides = [1, 1]} : vector<2x128xf32> to vector<2x32xf32>
    %202 = vector.extract_strided_slice %200 {offsets = [0, 32], sizes = [2, 32], strides = [1, 1]} : vector<2x128xf32> to vector<2x32xf32>
    %203 = vector.extract_strided_slice %200 {offsets = [0, 64], sizes = [2, 32], strides = [1, 1]} : vector<2x128xf32> to vector<2x32xf32>
    %204 = vector.extract_strided_slice %200 {offsets = [0, 96], sizes = [2, 32], strides = [1, 1]} : vector<2x128xf32> to vector<2x32xf32>
    %205 = arith.mulf %202, %151 : vector<2x32xf32>
    %206 = arith.mulf %201, %203 : vector<2x32xf32>
    %207 = arith.addf %205, %206 : vector<2x32xf32>
    %208 = math.tanh %207 : vector<2x32xf32>
    %209 = arith.mulf %204, %208 : vector<2x32xf32>
    %cst_65 = arith.constant dense<0.000000e+00> : vector<2x128xf32>
    %210 = tpu.matmul %209, %3, %cst_65 {dimension_numbers = #tpu.dot_dimension_numbers<[1], [0], [0], [1], [0, 0, 1, 1], [], []>} : vector<2x32xf32>, vector<32x128xf32>, vector<2x128xf32> -> vector<2x128xf32>
    %211 = vector.broadcast %5 : vector<1x128xf32> to vector<2x128xf32>
    %212 = arith.addf %210, %211 : vector<2x128xf32>
    %cst_66 = arith.constant dense<0.000000e+00> : vector<2x128xf32>
    %213 = tpu.matmul %180, %4, %cst_66 {dimension_numbers = #tpu.dot_dimension_numbers<[1], [0], [0], [1], [0, 0, 1, 1], [], []>} : vector<2x32xf32>, vector<32x128xf32>, vector<2x128xf32> -> vector<2x128xf32>
    %214 = arith.addf %212, %213 : vector<2x128xf32>
    %215 = arith.negf %214 : vector<2x128xf32>
    %216 = math.exp %215 : vector<2x128xf32>
    %cst_67 = arith.constant 1.000000e+00 : f32
    %217 = vector.broadcast %cst_67 : f32 to vector<2x128xf32>
    %218 = arith.addf %217, %216 : vector<2x128xf32>
    %219 = arith.divf %217, %218 : vector<2x128xf32>
    %220 = math.tanh %214 : vector<2x128xf32>
    %221 = tpu.iota {dimensions = array<i32: 1>} : vector<2x128xi32>
    %c64_i32_68 = arith.constant 64 : i32
    %222 = vector.broadcast %c64_i32_68 : i32 to vector<2x128xi32>
    %223 = arith.cmpi sge, %221, %222 : vector<2x128xi32>
    %c96_i32_69 = arith.constant 96 : i32
    %224 = vector.broadcast %c96_i32_69 : i32 to vector<2x128xi32>
    %225 = arith.cmpi slt, %221, %224 : vector<2x128xi32>
    %226 = arith.andi %223, %225 : vector<2x128xi1>
    %227 = arith.select %226, %220, %219 : vector<2x128xi1>, vector<2x128xf32>
    %228 = vector.extract_strided_slice %227 {offsets = [0, 0], sizes = [2, 32], strides = [1, 1]} : vector<2x128xf32> to vector<2x32xf32>
    %229 = vector.extract_strided_slice %227 {offsets = [0, 32], sizes = [2, 32], strides = [1, 1]} : vector<2x128xf32> to vector<2x32xf32>
    %230 = vector.extract_strided_slice %227 {offsets = [0, 64], sizes = [2, 32], strides = [1, 1]} : vector<2x128xf32> to vector<2x32xf32>
    %231 = vector.extract_strided_slice %227 {offsets = [0, 96], sizes = [2, 32], strides = [1, 1]} : vector<2x128xf32> to vector<2x32xf32>
    %232 = arith.mulf %229, %178 : vector<2x32xf32>
    %233 = arith.mulf %228, %230 : vector<2x32xf32>
    %234 = arith.addf %232, %233 : vector<2x32xf32>
    %235 = math.tanh %234 : vector<2x32xf32>
    %236 = arith.mulf %231, %235 : vector<2x32xf32>
    %c4 = arith.constant 4 : index
    %c0_70 = arith.constant 0 : index
    %c0_71 = arith.constant 0 : index
    %237 = vector.load %arg0[%c4, %c0_70, %c0_71] : memref<8x2x3xf32, #tpu.memory_space<vmem>>, vector<1x2x3xf32>
    %238 = vector.shape_cast %237 : vector<1x2x3xf32> to vector<2x3xf32>
    %cst_72 = arith.constant dense<0.000000e+00> : vector<2x128xf32>
    %239 = tpu.matmul %238, %0, %cst_72 {dimension_numbers = #tpu.dot_dimension_numbers<[1], [0], [0], [1], [0, 0, 1, 1], [], []>} : vector<2x3xf32>, vector<3x128xf32>, vector<2x128xf32> -> vector<2x128xf32>
    %240 = vector.broadcast %2 : vector<1x128xf32> to vector<2x128xf32>
    %241 = arith.addf %239, %240 : vector<2x128xf32>
    %cst_73 = arith.constant dense<0.000000e+00> : vector<2x128xf32>
    %242 = tpu.matmul %209, %1, %cst_73 {dimension_numbers = #tpu.dot_dimension_numbers<[1], [0], [0], [1], [0, 0, 1, 1], [], []>} : vector<2x32xf32>, vector<32x128xf32>, vector<2x128xf32> -> vector<2x128xf32>
    %243 = arith.addf %241, %242 : vector<2x128xf32>
    %244 = arith.negf %243 : vector<2x128xf32>
    %245 = math.exp %244 : vector<2x128xf32>
    %cst_74 = arith.constant 1.000000e+00 : f32
    %246 = vector.broadcast %cst_74 : f32 to vector<2x128xf32>
    %247 = arith.addf %246, %245 : vector<2x128xf32>
    %248 = arith.divf %246, %247 : vector<2x128xf32>
    %249 = math.tanh %243 : vector<2x128xf32>
    %250 = tpu.iota {dimensions = array<i32: 1>} : vector<2x128xi32>
    %c64_i32_75 = arith.constant 64 : i32
    %251 = vector.broadcast %c64_i32_75 : i32 to vector<2x128xi32>
    %252 = arith.cmpi sge, %250, %251 : vector<2x128xi32>
    %c96_i32_76 = arith.constant 96 : i32
    %253 = vector.broadcast %c96_i32_76 : i32 to vector<2x128xi32>
    %254 = arith.cmpi slt, %250, %253 : vector<2x128xi32>
    %255 = arith.andi %252, %254 : vector<2x128xi1>
    %256 = arith.select %255, %249, %248 : vector<2x128xi1>, vector<2x128xf32>
    %257 = vector.extract_strided_slice %256 {offsets = [0, 0], sizes = [2, 32], strides = [1, 1]} : vector<2x128xf32> to vector<2x32xf32>
    %258 = vector.extract_strided_slice %256 {offsets = [0, 32], sizes = [2, 32], strides = [1, 1]} : vector<2x128xf32> to vector<2x32xf32>
    %259 = vector.extract_strided_slice %256 {offsets = [0, 64], sizes = [2, 32], strides = [1, 1]} : vector<2x128xf32> to vector<2x32xf32>
    %260 = vector.extract_strided_slice %256 {offsets = [0, 96], sizes = [2, 32], strides = [1, 1]} : vector<2x128xf32> to vector<2x32xf32>
    %261 = arith.mulf %258, %207 : vector<2x32xf32>
    %262 = arith.mulf %257, %259 : vector<2x32xf32>
    %263 = arith.addf %261, %262 : vector<2x32xf32>
    %264 = math.tanh %263 : vector<2x32xf32>
    %265 = arith.mulf %260, %264 : vector<2x32xf32>
    %cst_77 = arith.constant dense<0.000000e+00> : vector<2x128xf32>
    %266 = tpu.matmul %265, %3, %cst_77 {dimension_numbers = #tpu.dot_dimension_numbers<[1], [0], [0], [1], [0, 0, 1, 1], [], []>} : vector<2x32xf32>, vector<32x128xf32>, vector<2x128xf32> -> vector<2x128xf32>
    %267 = vector.broadcast %5 : vector<1x128xf32> to vector<2x128xf32>
    %268 = arith.addf %266, %267 : vector<2x128xf32>
    %cst_78 = arith.constant dense<0.000000e+00> : vector<2x128xf32>
    %269 = tpu.matmul %236, %4, %cst_78 {dimension_numbers = #tpu.dot_dimension_numbers<[1], [0], [0], [1], [0, 0, 1, 1], [], []>} : vector<2x32xf32>, vector<32x128xf32>, vector<2x128xf32> -> vector<2x128xf32>
    %270 = arith.addf %268, %269 : vector<2x128xf32>
    %271 = arith.negf %270 : vector<2x128xf32>
    %272 = math.exp %271 : vector<2x128xf32>
    %cst_79 = arith.constant 1.000000e+00 : f32
    %273 = vector.broadcast %cst_79 : f32 to vector<2x128xf32>
    %274 = arith.addf %273, %272 : vector<2x128xf32>
    %275 = arith.divf %273, %274 : vector<2x128xf32>
    %276 = math.tanh %270 : vector<2x128xf32>
    %277 = tpu.iota {dimensions = array<i32: 1>} : vector<2x128xi32>
    %c64_i32_80 = arith.constant 64 : i32
    %278 = vector.broadcast %c64_i32_80 : i32 to vector<2x128xi32>
    %279 = arith.cmpi sge, %277, %278 : vector<2x128xi32>
    %c96_i32_81 = arith.constant 96 : i32
    %280 = vector.broadcast %c96_i32_81 : i32 to vector<2x128xi32>
    %281 = arith.cmpi slt, %277, %280 : vector<2x128xi32>
    %282 = arith.andi %279, %281 : vector<2x128xi1>
    %283 = arith.select %282, %276, %275 : vector<2x128xi1>, vector<2x128xf32>
    %284 = vector.extract_strided_slice %283 {offsets = [0, 0], sizes = [2, 32], strides = [1, 1]} : vector<2x128xf32> to vector<2x32xf32>
    %285 = vector.extract_strided_slice %283 {offsets = [0, 32], sizes = [2, 32], strides = [1, 1]} : vector<2x128xf32> to vector<2x32xf32>
    %286 = vector.extract_strided_slice %283 {offsets = [0, 64], sizes = [2, 32], strides = [1, 1]} : vector<2x128xf32> to vector<2x32xf32>
    %287 = vector.extract_strided_slice %283 {offsets = [0, 96], sizes = [2, 32], strides = [1, 1]} : vector<2x128xf32> to vector<2x32xf32>
    %288 = arith.mulf %285, %234 : vector<2x32xf32>
    %289 = arith.mulf %284, %286 : vector<2x32xf32>
    %290 = arith.addf %288, %289 : vector<2x32xf32>
    %291 = math.tanh %290 : vector<2x32xf32>
    %292 = arith.mulf %287, %291 : vector<2x32xf32>
    %c5 = arith.constant 5 : index
    %c0_82 = arith.constant 0 : index
    %c0_83 = arith.constant 0 : index
    %293 = vector.load %arg0[%c5, %c0_82, %c0_83] : memref<8x2x3xf32, #tpu.memory_space<vmem>>, vector<1x2x3xf32>
    %294 = vector.shape_cast %293 : vector<1x2x3xf32> to vector<2x3xf32>
    %cst_84 = arith.constant dense<0.000000e+00> : vector<2x128xf32>
    %295 = tpu.matmul %294, %0, %cst_84 {dimension_numbers = #tpu.dot_dimension_numbers<[1], [0], [0], [1], [0, 0, 1, 1], [], []>} : vector<2x3xf32>, vector<3x128xf32>, vector<2x128xf32> -> vector<2x128xf32>
    %296 = vector.broadcast %2 : vector<1x128xf32> to vector<2x128xf32>
    %297 = arith.addf %295, %296 : vector<2x128xf32>
    %cst_85 = arith.constant dense<0.000000e+00> : vector<2x128xf32>
    %298 = tpu.matmul %265, %1, %cst_85 {dimension_numbers = #tpu.dot_dimension_numbers<[1], [0], [0], [1], [0, 0, 1, 1], [], []>} : vector<2x32xf32>, vector<32x128xf32>, vector<2x128xf32> -> vector<2x128xf32>
    %299 = arith.addf %297, %298 : vector<2x128xf32>
    %300 = arith.negf %299 : vector<2x128xf32>
    %301 = math.exp %300 : vector<2x128xf32>
    %cst_86 = arith.constant 1.000000e+00 : f32
    %302 = vector.broadcast %cst_86 : f32 to vector<2x128xf32>
    %303 = arith.addf %302, %301 : vector<2x128xf32>
    %304 = arith.divf %302, %303 : vector<2x128xf32>
    %305 = math.tanh %299 : vector<2x128xf32>
    %306 = tpu.iota {dimensions = array<i32: 1>} : vector<2x128xi32>
    %c64_i32_87 = arith.constant 64 : i32
    %307 = vector.broadcast %c64_i32_87 : i32 to vector<2x128xi32>
    %308 = arith.cmpi sge, %306, %307 : vector<2x128xi32>
    %c96_i32_88 = arith.constant 96 : i32
    %309 = vector.broadcast %c96_i32_88 : i32 to vector<2x128xi32>
    %310 = arith.cmpi slt, %306, %309 : vector<2x128xi32>
    %311 = arith.andi %308, %310 : vector<2x128xi1>
    %312 = arith.select %311, %305, %304 : vector<2x128xi1>, vector<2x128xf32>
    %313 = vector.extract_strided_slice %312 {offsets = [0, 0], sizes = [2, 32], strides = [1, 1]} : vector<2x128xf32> to vector<2x32xf32>
    %314 = vector.extract_strided_slice %312 {offsets = [0, 32], sizes = [2, 32], strides = [1, 1]} : vector<2x128xf32> to vector<2x32xf32>
    %315 = vector.extract_strided_slice %312 {offsets = [0, 64], sizes = [2, 32], strides = [1, 1]} : vector<2x128xf32> to vector<2x32xf32>
    %316 = vector.extract_strided_slice %312 {offsets = [0, 96], sizes = [2, 32], strides = [1, 1]} : vector<2x128xf32> to vector<2x32xf32>
    %317 = arith.mulf %314, %263 : vector<2x32xf32>
    %318 = arith.mulf %313, %315 : vector<2x32xf32>
    %319 = arith.addf %317, %318 : vector<2x32xf32>
    %320 = math.tanh %319 : vector<2x32xf32>
    %321 = arith.mulf %316, %320 : vector<2x32xf32>
    %cst_89 = arith.constant dense<0.000000e+00> : vector<2x128xf32>
    %322 = tpu.matmul %321, %3, %cst_89 {dimension_numbers = #tpu.dot_dimension_numbers<[1], [0], [0], [1], [0, 0, 1, 1], [], []>} : vector<2x32xf32>, vector<32x128xf32>, vector<2x128xf32> -> vector<2x128xf32>
    %323 = vector.broadcast %5 : vector<1x128xf32> to vector<2x128xf32>
    %324 = arith.addf %322, %323 : vector<2x128xf32>
    %cst_90 = arith.constant dense<0.000000e+00> : vector<2x128xf32>
    %325 = tpu.matmul %292, %4, %cst_90 {dimension_numbers = #tpu.dot_dimension_numbers<[1], [0], [0], [1], [0, 0, 1, 1], [], []>} : vector<2x32xf32>, vector<32x128xf32>, vector<2x128xf32> -> vector<2x128xf32>
    %326 = arith.addf %324, %325 : vector<2x128xf32>
    %327 = arith.negf %326 : vector<2x128xf32>
    %328 = math.exp %327 : vector<2x128xf32>
    %cst_91 = arith.constant 1.000000e+00 : f32
    %329 = vector.broadcast %cst_91 : f32 to vector<2x128xf32>
    %330 = arith.addf %329, %328 : vector<2x128xf32>
    %331 = arith.divf %329, %330 : vector<2x128xf32>
    %332 = math.tanh %326 : vector<2x128xf32>
    %333 = tpu.iota {dimensions = array<i32: 1>} : vector<2x128xi32>
    %c64_i32_92 = arith.constant 64 : i32
    %334 = vector.broadcast %c64_i32_92 : i32 to vector<2x128xi32>
    %335 = arith.cmpi sge, %333, %334 : vector<2x128xi32>
    %c96_i32_93 = arith.constant 96 : i32
    %336 = vector.broadcast %c96_i32_93 : i32 to vector<2x128xi32>
    %337 = arith.cmpi slt, %333, %336 : vector<2x128xi32>
    %338 = arith.andi %335, %337 : vector<2x128xi1>
    %339 = arith.select %338, %332, %331 : vector<2x128xi1>, vector<2x128xf32>
    %340 = vector.extract_strided_slice %339 {offsets = [0, 0], sizes = [2, 32], strides = [1, 1]} : vector<2x128xf32> to vector<2x32xf32>
    %341 = vector.extract_strided_slice %339 {offsets = [0, 32], sizes = [2, 32], strides = [1, 1]} : vector<2x128xf32> to vector<2x32xf32>
    %342 = vector.extract_strided_slice %339 {offsets = [0, 64], sizes = [2, 32], strides = [1, 1]} : vector<2x128xf32> to vector<2x32xf32>
    %343 = vector.extract_strided_slice %339 {offsets = [0, 96], sizes = [2, 32], strides = [1, 1]} : vector<2x128xf32> to vector<2x32xf32>
    %344 = arith.mulf %341, %290 : vector<2x32xf32>
    %345 = arith.mulf %340, %342 : vector<2x32xf32>
    %346 = arith.addf %344, %345 : vector<2x32xf32>
    %347 = math.tanh %346 : vector<2x32xf32>
    %348 = arith.mulf %343, %347 : vector<2x32xf32>
    %c6 = arith.constant 6 : index
    %c0_94 = arith.constant 0 : index
    %c0_95 = arith.constant 0 : index
    %349 = vector.load %arg0[%c6, %c0_94, %c0_95] : memref<8x2x3xf32, #tpu.memory_space<vmem>>, vector<1x2x3xf32>
    %350 = vector.shape_cast %349 : vector<1x2x3xf32> to vector<2x3xf32>
    %cst_96 = arith.constant dense<0.000000e+00> : vector<2x128xf32>
    %351 = tpu.matmul %350, %0, %cst_96 {dimension_numbers = #tpu.dot_dimension_numbers<[1], [0], [0], [1], [0, 0, 1, 1], [], []>} : vector<2x3xf32>, vector<3x128xf32>, vector<2x128xf32> -> vector<2x128xf32>
    %352 = vector.broadcast %2 : vector<1x128xf32> to vector<2x128xf32>
    %353 = arith.addf %351, %352 : vector<2x128xf32>
    %cst_97 = arith.constant dense<0.000000e+00> : vector<2x128xf32>
    %354 = tpu.matmul %321, %1, %cst_97 {dimension_numbers = #tpu.dot_dimension_numbers<[1], [0], [0], [1], [0, 0, 1, 1], [], []>} : vector<2x32xf32>, vector<32x128xf32>, vector<2x128xf32> -> vector<2x128xf32>
    %355 = arith.addf %353, %354 : vector<2x128xf32>
    %356 = arith.negf %355 : vector<2x128xf32>
    %357 = math.exp %356 : vector<2x128xf32>
    %cst_98 = arith.constant 1.000000e+00 : f32
    %358 = vector.broadcast %cst_98 : f32 to vector<2x128xf32>
    %359 = arith.addf %358, %357 : vector<2x128xf32>
    %360 = arith.divf %358, %359 : vector<2x128xf32>
    %361 = math.tanh %355 : vector<2x128xf32>
    %362 = tpu.iota {dimensions = array<i32: 1>} : vector<2x128xi32>
    %c64_i32_99 = arith.constant 64 : i32
    %363 = vector.broadcast %c64_i32_99 : i32 to vector<2x128xi32>
    %364 = arith.cmpi sge, %362, %363 : vector<2x128xi32>
    %c96_i32_100 = arith.constant 96 : i32
    %365 = vector.broadcast %c96_i32_100 : i32 to vector<2x128xi32>
    %366 = arith.cmpi slt, %362, %365 : vector<2x128xi32>
    %367 = arith.andi %364, %366 : vector<2x128xi1>
    %368 = arith.select %367, %361, %360 : vector<2x128xi1>, vector<2x128xf32>
    %369 = vector.extract_strided_slice %368 {offsets = [0, 0], sizes = [2, 32], strides = [1, 1]} : vector<2x128xf32> to vector<2x32xf32>
    %370 = vector.extract_strided_slice %368 {offsets = [0, 32], sizes = [2, 32], strides = [1, 1]} : vector<2x128xf32> to vector<2x32xf32>
    %371 = vector.extract_strided_slice %368 {offsets = [0, 64], sizes = [2, 32], strides = [1, 1]} : vector<2x128xf32> to vector<2x32xf32>
    %372 = vector.extract_strided_slice %368 {offsets = [0, 96], sizes = [2, 32], strides = [1, 1]} : vector<2x128xf32> to vector<2x32xf32>
    %373 = arith.mulf %370, %319 : vector<2x32xf32>
    %374 = arith.mulf %369, %371 : vector<2x32xf32>
    %375 = arith.addf %373, %374 : vector<2x32xf32>
    %376 = math.tanh %375 : vector<2x32xf32>
    %377 = arith.mulf %372, %376 : vector<2x32xf32>
    %cst_101 = arith.constant dense<0.000000e+00> : vector<2x128xf32>
    %378 = tpu.matmul %377, %3, %cst_101 {dimension_numbers = #tpu.dot_dimension_numbers<[1], [0], [0], [1], [0, 0, 1, 1], [], []>} : vector<2x32xf32>, vector<32x128xf32>, vector<2x128xf32> -> vector<2x128xf32>
    %379 = vector.broadcast %5 : vector<1x128xf32> to vector<2x128xf32>
    %380 = arith.addf %378, %379 : vector<2x128xf32>
    %cst_102 = arith.constant dense<0.000000e+00> : vector<2x128xf32>
    %381 = tpu.matmul %348, %4, %cst_102 {dimension_numbers = #tpu.dot_dimension_numbers<[1], [0], [0], [1], [0, 0, 1, 1], [], []>} : vector<2x32xf32>, vector<32x128xf32>, vector<2x128xf32> -> vector<2x128xf32>
    %382 = arith.addf %380, %381 : vector<2x128xf32>
    %383 = arith.negf %382 : vector<2x128xf32>
    %384 = math.exp %383 : vector<2x128xf32>
    %cst_103 = arith.constant 1.000000e+00 : f32
    %385 = vector.broadcast %cst_103 : f32 to vector<2x128xf32>
    %386 = arith.addf %385, %384 : vector<2x128xf32>
    %387 = arith.divf %385, %386 : vector<2x128xf32>
    %388 = math.tanh %382 : vector<2x128xf32>
    %389 = tpu.iota {dimensions = array<i32: 1>} : vector<2x128xi32>
    %c64_i32_104 = arith.constant 64 : i32
    %390 = vector.broadcast %c64_i32_104 : i32 to vector<2x128xi32>
    %391 = arith.cmpi sge, %389, %390 : vector<2x128xi32>
    %c96_i32_105 = arith.constant 96 : i32
    %392 = vector.broadcast %c96_i32_105 : i32 to vector<2x128xi32>
    %393 = arith.cmpi slt, %389, %392 : vector<2x128xi32>
    %394 = arith.andi %391, %393 : vector<2x128xi1>
    %395 = arith.select %394, %388, %387 : vector<2x128xi1>, vector<2x128xf32>
    %396 = vector.extract_strided_slice %395 {offsets = [0, 0], sizes = [2, 32], strides = [1, 1]} : vector<2x128xf32> to vector<2x32xf32>
    %397 = vector.extract_strided_slice %395 {offsets = [0, 32], sizes = [2, 32], strides = [1, 1]} : vector<2x128xf32> to vector<2x32xf32>
    %398 = vector.extract_strided_slice %395 {offsets = [0, 64], sizes = [2, 32], strides = [1, 1]} : vector<2x128xf32> to vector<2x32xf32>
    %399 = vector.extract_strided_slice %395 {offsets = [0, 96], sizes = [2, 32], strides = [1, 1]} : vector<2x128xf32> to vector<2x32xf32>
    %400 = arith.mulf %397, %346 : vector<2x32xf32>
    %401 = arith.mulf %396, %398 : vector<2x32xf32>
    %402 = arith.addf %400, %401 : vector<2x32xf32>
    %403 = math.tanh %402 : vector<2x32xf32>
    %404 = arith.mulf %399, %403 : vector<2x32xf32>
    %c7 = arith.constant 7 : index
    %c0_106 = arith.constant 0 : index
    %c0_107 = arith.constant 0 : index
    %405 = vector.load %arg0[%c7, %c0_106, %c0_107] : memref<8x2x3xf32, #tpu.memory_space<vmem>>, vector<1x2x3xf32>
    %406 = vector.shape_cast %405 : vector<1x2x3xf32> to vector<2x3xf32>
    %cst_108 = arith.constant dense<0.000000e+00> : vector<2x128xf32>
    %407 = tpu.matmul %406, %0, %cst_108 {dimension_numbers = #tpu.dot_dimension_numbers<[1], [0], [0], [1], [0, 0, 1, 1], [], []>} : vector<2x3xf32>, vector<3x128xf32>, vector<2x128xf32> -> vector<2x128xf32>
    %408 = vector.broadcast %2 : vector<1x128xf32> to vector<2x128xf32>
    %409 = arith.addf %407, %408 : vector<2x128xf32>
    %cst_109 = arith.constant dense<0.000000e+00> : vector<2x128xf32>
    %410 = tpu.matmul %377, %1, %cst_109 {dimension_numbers = #tpu.dot_dimension_numbers<[1], [0], [0], [1], [0, 0, 1, 1], [], []>} : vector<2x32xf32>, vector<32x128xf32>, vector<2x128xf32> -> vector<2x128xf32>
    %411 = arith.addf %409, %410 : vector<2x128xf32>
    %412 = arith.negf %411 : vector<2x128xf32>
    %413 = math.exp %412 : vector<2x128xf32>
    %cst_110 = arith.constant 1.000000e+00 : f32
    %414 = vector.broadcast %cst_110 : f32 to vector<2x128xf32>
    %415 = arith.addf %414, %413 : vector<2x128xf32>
    %416 = arith.divf %414, %415 : vector<2x128xf32>
    %417 = math.tanh %411 : vector<2x128xf32>
    %418 = tpu.iota {dimensions = array<i32: 1>} : vector<2x128xi32>
    %c64_i32_111 = arith.constant 64 : i32
    %419 = vector.broadcast %c64_i32_111 : i32 to vector<2x128xi32>
    %420 = arith.cmpi sge, %418, %419 : vector<2x128xi32>
    %c96_i32_112 = arith.constant 96 : i32
    %421 = vector.broadcast %c96_i32_112 : i32 to vector<2x128xi32>
    %422 = arith.cmpi slt, %418, %421 : vector<2x128xi32>
    %423 = arith.andi %420, %422 : vector<2x128xi1>
    %424 = arith.select %423, %417, %416 : vector<2x128xi1>, vector<2x128xf32>
    %425 = vector.extract_strided_slice %424 {offsets = [0, 0], sizes = [2, 32], strides = [1, 1]} : vector<2x128xf32> to vector<2x32xf32>
    %426 = vector.extract_strided_slice %424 {offsets = [0, 32], sizes = [2, 32], strides = [1, 1]} : vector<2x128xf32> to vector<2x32xf32>
    %427 = vector.extract_strided_slice %424 {offsets = [0, 64], sizes = [2, 32], strides = [1, 1]} : vector<2x128xf32> to vector<2x32xf32>
    %428 = vector.extract_strided_slice %424 {offsets = [0, 96], sizes = [2, 32], strides = [1, 1]} : vector<2x128xf32> to vector<2x32xf32>
    %429 = arith.mulf %426, %375 : vector<2x32xf32>
    %430 = arith.mulf %425, %427 : vector<2x32xf32>
    %431 = arith.addf %429, %430 : vector<2x32xf32>
    %432 = math.tanh %431 : vector<2x32xf32>
    %433 = arith.mulf %428, %432 : vector<2x32xf32>
    %cst_113 = arith.constant dense<0.000000e+00> : vector<2x128xf32>
    %434 = tpu.matmul %433, %3, %cst_113 {dimension_numbers = #tpu.dot_dimension_numbers<[1], [0], [0], [1], [0, 0, 1, 1], [], []>} : vector<2x32xf32>, vector<32x128xf32>, vector<2x128xf32> -> vector<2x128xf32>
    %435 = vector.broadcast %5 : vector<1x128xf32> to vector<2x128xf32>
    %436 = arith.addf %434, %435 : vector<2x128xf32>
    %cst_114 = arith.constant dense<0.000000e+00> : vector<2x128xf32>
    %437 = tpu.matmul %404, %4, %cst_114 {dimension_numbers = #tpu.dot_dimension_numbers<[1], [0], [0], [1], [0, 0, 1, 1], [], []>} : vector<2x32xf32>, vector<32x128xf32>, vector<2x128xf32> -> vector<2x128xf32>
    %438 = arith.addf %436, %437 : vector<2x128xf32>
    %439 = arith.negf %438 : vector<2x128xf32>
    %440 = math.exp %439 : vector<2x128xf32>
    %cst_115 = arith.constant 1.000000e+00 : f32
    %441 = vector.broadcast %cst_115 : f32 to vector<2x128xf32>
    %442 = arith.addf %441, %440 : vector<2x128xf32>
    %443 = arith.divf %441, %442 : vector<2x128xf32>
    %444 = math.tanh %438 : vector<2x128xf32>
    %445 = tpu.iota {dimensions = array<i32: 1>} : vector<2x128xi32>
    %c64_i32_116 = arith.constant 64 : i32
    %446 = vector.broadcast %c64_i32_116 : i32 to vector<2x128xi32>
    %447 = arith.cmpi sge, %445, %446 : vector<2x128xi32>
    %c96_i32_117 = arith.constant 96 : i32
    %448 = vector.broadcast %c96_i32_117 : i32 to vector<2x128xi32>
    %449 = arith.cmpi slt, %445, %448 : vector<2x128xi32>
    %450 = arith.andi %447, %449 : vector<2x128xi1>
    %451 = arith.select %450, %444, %443 : vector<2x128xi1>, vector<2x128xf32>
    %452 = vector.extract_strided_slice %451 {offsets = [0, 0], sizes = [2, 32], strides = [1, 1]} : vector<2x128xf32> to vector<2x32xf32>
    %453 = vector.extract_strided_slice %451 {offsets = [0, 32], sizes = [2, 32], strides = [1, 1]} : vector<2x128xf32> to vector<2x32xf32>
    %454 = vector.extract_strided_slice %451 {offsets = [0, 64], sizes = [2, 32], strides = [1, 1]} : vector<2x128xf32> to vector<2x32xf32>
    %455 = vector.extract_strided_slice %451 {offsets = [0, 96], sizes = [2, 32], strides = [1, 1]} : vector<2x128xf32> to vector<2x32xf32>
    %456 = arith.mulf %453, %402 : vector<2x32xf32>
    %457 = arith.mulf %452, %454 : vector<2x32xf32>
    %458 = arith.addf %456, %457 : vector<2x32xf32>
    %459 = math.tanh %458 : vector<2x32xf32>
    %460 = arith.mulf %455, %459 : vector<2x32xf32>
    %461 = math.tanh %460 : vector<2x32xf32>
    %c0_118 = arith.constant 0 : index
    %c0_119 = arith.constant 0 : index
    %462 = vector.load %arg7[%c0_118, %c0_119] : memref<32x16xf32, #tpu.memory_space<vmem>>, vector<32x16xf32>
    %cst_120 = arith.constant dense<0.000000e+00> : vector<2x16xf32>
    %463 = tpu.matmul %461, %462, %cst_120 {dimension_numbers = #tpu.dot_dimension_numbers<[1], [0], [0], [1], [0, 0, 1, 1], [], []>} : vector<2x32xf32>, vector<32x16xf32>, vector<2x16xf32> -> vector<2x16xf32>
    %c0_121 = arith.constant 0 : index
    %c0_122 = arith.constant 0 : index
    %464 = vector.load %arg8[%c0_121, %c0_122] : memref<1x16xf32, #tpu.memory_space<vmem>>, vector<1x16xf32>
    %465 = vector.broadcast %464 : vector<1x16xf32> to vector<2x16xf32>
    %466 = arith.addf %463, %465 : vector<2x16xf32>
    %cst_123 = arith.constant 0.000000e+00 : f32
    %467 = vector.broadcast %cst_123 : f32 to vector<2x16xf32>
    %468 = arith.maximumf %466, %467 : vector<2x16xf32>
    %469 = vector.extract_strided_slice %468 {offsets = [0, 0], sizes = [2, 8], strides = [1, 1]} : vector<2x16xf32> to vector<2x8xf32>
    %470 = vector.extract_strided_slice %468 {offsets = [0, 8], sizes = [2, 8], strides = [1, 1]} : vector<2x16xf32> to vector<2x8xf32>
    %c0_124 = arith.constant 0 : index
    %c0_125 = arith.constant 0 : index
    %471 = vector.load %arg25[%c0_124, %c0_125] : memref<2x8xf32, #tpu.memory_space<vmem>>, vector<2x8xf32>
    tpu.vector_store %arg25[%c0_124, %c0_125], %469 {strides = array<i32>} : memref<2x8xf32, #tpu.memory_space<vmem>>, vector<2x8xf32>,
    %c0_126 = arith.constant 0 : index
    %c0_127 = arith.constant 0 : index
    %472 = vector.load %arg26[%c0_126, %c0_127] : memref<2x8xf32, #tpu.memory_space<vmem>>, vector<2x8xf32>
    tpu.vector_store %arg26[%c0_126, %c0_127], %470 {strides = array<i32>} : memref<2x8xf32, #tpu.memory_space<vmem>>, vector<2x8xf32>,
    %cst_128 = arith.constant 5.000000e-01 : f32
    %473 = vector.broadcast %cst_128 : f32 to vector<2x8xf32>
    %474 = arith.mulf %470, %473 : vector<2x8xf32>
    %475 = math.exp %474 : vector<2x8xf32>
    %c0_129 = arith.constant 0 : index
    %c0_130 = arith.constant 0 : index
    %476 = vector.load %arg9[%c0_129, %c0_130] : memref<2x8xf32, #tpu.memory_space<vmem>>, vector<2x8xf32>
    %477 = arith.mulf %475, %476 : vector<2x8xf32>
    %478 = arith.addf %469, %477 : vector<2x8xf32>
    %cst_131 = arith.constant dense<0.000000e+00> : vector<2x128xf32>
    %479 = tpu.matmul %478, %6, %cst_131 {dimension_numbers = #tpu.dot_dimension_numbers<[1], [0], [0], [1], [0, 0, 1, 1], [], []>} : vector<2x8xf32>, vector<8x128xf32>, vector<2x128xf32> -> vector<2x128xf32>
    %480 = vector.broadcast %8 : vector<1x128xf32> to vector<2x128xf32>
    %481 = arith.addf %479, %480 : vector<2x128xf32>
    %c0_132 = arith.constant 0 : index
    %c0_133 = arith.constant 0 : index
    %c0_134 = arith.constant 0 : index
    %482 = vector.load %arg16[%c0_132, %c0_133, %c0_134] : memref<2x2x32xf32, #tpu.memory_space<vmem>>, vector<1x2x32xf32>
    %483 = vector.shape_cast %482 : vector<1x2x32xf32> to vector<2x32xf32>
    %c0_135 = arith.constant 0 : index
    %c0_136 = arith.constant 0 : index
    %c0_137 = arith.constant 0 : index
    %484 = vector.load %arg17[%c0_135, %c0_136, %c0_137] : memref<2x2x32xf32, #tpu.memory_space<vmem>>, vector<1x2x32xf32>
    %485 = vector.shape_cast %484 : vector<1x2x32xf32> to vector<2x32xf32>
    %c1_138 = arith.constant 1 : index
    %c0_139 = arith.constant 0 : index
    %c0_140 = arith.constant 0 : index
    %486 = vector.load %arg16[%c1_138, %c0_139, %c0_140] : memref<2x2x32xf32, #tpu.memory_space<vmem>>, vector<1x2x32xf32>
    %487 = vector.shape_cast %486 : vector<1x2x32xf32> to vector<2x32xf32>
    %c1_141 = arith.constant 1 : index
    %c0_142 = arith.constant 0 : index
    %c0_143 = arith.constant 0 : index
    %488 = vector.load %arg17[%c1_141, %c0_142, %c0_143] : memref<2x2x32xf32, #tpu.memory_space<vmem>>, vector<1x2x32xf32>
    %489 = vector.shape_cast %488 : vector<1x2x32xf32> to vector<2x32xf32>
    %cst_144 = arith.constant dense<0.000000e+00> : vector<2x128xf32>
    %490 = tpu.matmul %483, %7, %cst_144 {dimension_numbers = #tpu.dot_dimension_numbers<[1], [0], [0], [1], [0, 0, 1, 1], [], []>} : vector<2x32xf32>, vector<32x128xf32>, vector<2x128xf32> -> vector<2x128xf32>
    %491 = arith.addf %481, %490 : vector<2x128xf32>
    %492 = arith.negf %491 : vector<2x128xf32>
    %493 = math.exp %492 : vector<2x128xf32>
    %cst_145 = arith.constant 1.000000e+00 : f32
    %494 = vector.broadcast %cst_145 : f32 to vector<2x128xf32>
    %495 = arith.addf %494, %493 : vector<2x128xf32>
    %496 = arith.divf %494, %495 : vector<2x128xf32>
    %497 = math.tanh %491 : vector<2x128xf32>
    %498 = tpu.iota {dimensions = array<i32: 1>} : vector<2x128xi32>
    %c64_i32_146 = arith.constant 64 : i32
    %499 = vector.broadcast %c64_i32_146 : i32 to vector<2x128xi32>
    %500 = arith.cmpi sge, %498, %499 : vector<2x128xi32>
    %c96_i32_147 = arith.constant 96 : i32
    %501 = vector.broadcast %c96_i32_147 : i32 to vector<2x128xi32>
    %502 = arith.cmpi slt, %498, %501 : vector<2x128xi32>
    %503 = arith.andi %500, %502 : vector<2x128xi1>
    %504 = arith.select %503, %497, %496 : vector<2x128xi1>, vector<2x128xf32>
    %505 = vector.extract_strided_slice %504 {offsets = [0, 0], sizes = [2, 32], strides = [1, 1]} : vector<2x128xf32> to vector<2x32xf32>
    %506 = vector.extract_strided_slice %504 {offsets = [0, 32], sizes = [2, 32], strides = [1, 1]} : vector<2x128xf32> to vector<2x32xf32>
    %507 = vector.extract_strided_slice %504 {offsets = [0, 64], sizes = [2, 32], strides = [1, 1]} : vector<2x128xf32> to vector<2x32xf32>
    %508 = vector.extract_strided_slice %504 {offsets = [0, 96], sizes = [2, 32], strides = [1, 1]} : vector<2x128xf32> to vector<2x32xf32>
    %509 = arith.mulf %506, %485 : vector<2x32xf32>
    %510 = arith.mulf %505, %507 : vector<2x32xf32>
    %511 = arith.addf %509, %510 : vector<2x32xf32>
    %512 = math.tanh %511 : vector<2x32xf32>
    %513 = arith.mulf %508, %512 : vector<2x32xf32>
    %cst_148 = arith.constant dense<0.000000e+00> : vector<2x128xf32>
    %514 = tpu.matmul %513, %9, %cst_148 {dimension_numbers = #tpu.dot_dimension_numbers<[1], [0], [0], [1], [0, 0, 1, 1], [], []>} : vector<2x32xf32>, vector<32x128xf32>, vector<2x128xf32> -> vector<2x128xf32>
    %515 = vector.broadcast %11 : vector<1x128xf32> to vector<2x128xf32>
    %516 = arith.addf %514, %515 : vector<2x128xf32>
    %cst_149 = arith.constant dense<0.000000e+00> : vector<2x128xf32>
    %517 = tpu.matmul %487, %10, %cst_149 {dimension_numbers = #tpu.dot_dimension_numbers<[1], [0], [0], [1], [0, 0, 1, 1], [], []>} : vector<2x32xf32>, vector<32x128xf32>, vector<2x128xf32> -> vector<2x128xf32>
    %518 = arith.addf %516, %517 : vector<2x128xf32>
    %519 = arith.negf %518 : vector<2x128xf32>
    %520 = math.exp %519 : vector<2x128xf32>
    %cst_150 = arith.constant 1.000000e+00 : f32
    %521 = vector.broadcast %cst_150 : f32 to vector<2x128xf32>
    %522 = arith.addf %521, %520 : vector<2x128xf32>
    %523 = arith.divf %521, %522 : vector<2x128xf32>
    %524 = math.tanh %518 : vector<2x128xf32>
    %525 = tpu.iota {dimensions = array<i32: 1>} : vector<2x128xi32>
    %c64_i32_151 = arith.constant 64 : i32
    %526 = vector.broadcast %c64_i32_151 : i32 to vector<2x128xi32>
    %527 = arith.cmpi sge, %525, %526 : vector<2x128xi32>
    %c96_i32_152 = arith.constant 96 : i32
    %528 = vector.broadcast %c96_i32_152 : i32 to vector<2x128xi32>
    %529 = arith.cmpi slt, %525, %528 : vector<2x128xi32>
    %530 = arith.andi %527, %529 : vector<2x128xi1>
    %531 = arith.select %530, %524, %523 : vector<2x128xi1>, vector<2x128xf32>
    %532 = vector.extract_strided_slice %531 {offsets = [0, 0], sizes = [2, 32], strides = [1, 1]} : vector<2x128xf32> to vector<2x32xf32>
    %533 = vector.extract_strided_slice %531 {offsets = [0, 32], sizes = [2, 32], strides = [1, 1]} : vector<2x128xf32> to vector<2x32xf32>
    %534 = vector.extract_strided_slice %531 {offsets = [0, 64], sizes = [2, 32], strides = [1, 1]} : vector<2x128xf32> to vector<2x32xf32>
    %535 = vector.extract_strided_slice %531 {offsets = [0, 96], sizes = [2, 32], strides = [1, 1]} : vector<2x128xf32> to vector<2x32xf32>
    %536 = arith.mulf %533, %489 : vector<2x32xf32>
    %537 = arith.mulf %532, %534 : vector<2x32xf32>
    %538 = arith.addf %536, %537 : vector<2x32xf32>
    %539 = math.tanh %538 : vector<2x32xf32>
    %540 = arith.mulf %535, %539 : vector<2x32xf32>
    %cst_153 = arith.constant dense<0.000000e+00> : vector<2x128xf32>
    %541 = tpu.matmul %513, %7, %cst_153 {dimension_numbers = #tpu.dot_dimension_numbers<[1], [0], [0], [1], [0, 0, 1, 1], [], []>} : vector<2x32xf32>, vector<32x128xf32>, vector<2x128xf32> -> vector<2x128xf32>
    %542 = arith.addf %481, %541 : vector<2x128xf32>
    %543 = arith.negf %542 : vector<2x128xf32>
    %544 = math.exp %543 : vector<2x128xf32>
    %cst_154 = arith.constant 1.000000e+00 : f32
    %545 = vector.broadcast %cst_154 : f32 to vector<2x128xf32>
    %546 = arith.addf %545, %544 : vector<2x128xf32>
    %547 = arith.divf %545, %546 : vector<2x128xf32>
    %548 = math.tanh %542 : vector<2x128xf32>
    %549 = tpu.iota {dimensions = array<i32: 1>} : vector<2x128xi32>
    %c64_i32_155 = arith.constant 64 : i32
    %550 = vector.broadcast %c64_i32_155 : i32 to vector<2x128xi32>
    %551 = arith.cmpi sge, %549, %550 : vector<2x128xi32>
    %c96_i32_156 = arith.constant 96 : i32
    %552 = vector.broadcast %c96_i32_156 : i32 to vector<2x128xi32>
    %553 = arith.cmpi slt, %549, %552 : vector<2x128xi32>
    %554 = arith.andi %551, %553 : vector<2x128xi1>
    %555 = arith.select %554, %548, %547 : vector<2x128xi1>, vector<2x128xf32>
    %556 = vector.extract_strided_slice %555 {offsets = [0, 0], sizes = [2, 32], strides = [1, 1]} : vector<2x128xf32> to vector<2x32xf32>
    %557 = vector.extract_strided_slice %555 {offsets = [0, 32], sizes = [2, 32], strides = [1, 1]} : vector<2x128xf32> to vector<2x32xf32>
    %558 = vector.extract_strided_slice %555 {offsets = [0, 64], sizes = [2, 32], strides = [1, 1]} : vector<2x128xf32> to vector<2x32xf32>
    %559 = vector.extract_strided_slice %555 {offsets = [0, 96], sizes = [2, 32], strides = [1, 1]} : vector<2x128xf32> to vector<2x32xf32>
    %560 = arith.mulf %557, %511 : vector<2x32xf32>
    %561 = arith.mulf %556, %558 : vector<2x32xf32>
    %562 = arith.addf %560, %561 : vector<2x32xf32>
    %563 = math.tanh %562 : vector<2x32xf32>
    %564 = arith.mulf %559, %563 : vector<2x32xf32>
    %cst_157 = arith.constant dense<0.000000e+00> : vector<2x128xf32>
    %565 = tpu.matmul %564, %9, %cst_157 {dimension_numbers = #tpu.dot_dimension_numbers<[1], [0], [0], [1], [0, 0, 1, 1], [], []>} : vector<2x32xf32>, vector<32x128xf32>, vector<2x128xf32> -> vector<2x128xf32>
    %566 = vector.broadcast %11 : vector<1x128xf32> to vector<2x128xf32>
    %567 = arith.addf %565, %566 : vector<2x128xf32>
    %cst_158 = arith.constant dense<0.000000e+00> : vector<2x128xf32>
    %568 = tpu.matmul %540, %10, %cst_158 {dimension_numbers = #tpu.dot_dimension_numbers<[1], [0], [0], [1], [0, 0, 1, 1], [], []>} : vector<2x32xf32>, vector<32x128xf32>, vector<2x128xf32> -> vector<2x128xf32>
    %569 = arith.addf %567, %568 : vector<2x128xf32>
    %570 = arith.negf %569 : vector<2x128xf32>
    %571 = math.exp %570 : vector<2x128xf32>
    %cst_159 = arith.constant 1.000000e+00 : f32
    %572 = vector.broadcast %cst_159 : f32 to vector<2x128xf32>
    %573 = arith.addf %572, %571 : vector<2x128xf32>
    %574 = arith.divf %572, %573 : vector<2x128xf32>
    %575 = math.tanh %569 : vector<2x128xf32>
    %576 = tpu.iota {dimensions = array<i32: 1>} : vector<2x128xi32>
    %c64_i32_160 = arith.constant 64 : i32
    %577 = vector.broadcast %c64_i32_160 : i32 to vector<2x128xi32>
    %578 = arith.cmpi sge, %576, %577 : vector<2x128xi32>
    %c96_i32_161 = arith.constant 96 : i32
    %579 = vector.broadcast %c96_i32_161 : i32 to vector<2x128xi32>
    %580 = arith.cmpi slt, %576, %579 : vector<2x128xi32>
    %581 = arith.andi %578, %580 : vector<2x128xi1>
    %582 = arith.select %581, %575, %574 : vector<2x128xi1>, vector<2x128xf32>
    %583 = vector.extract_strided_slice %582 {offsets = [0, 0], sizes = [2, 32], strides = [1, 1]} : vector<2x128xf32> to vector<2x32xf32>
    %584 = vector.extract_strided_slice %582 {offsets = [0, 32], sizes = [2, 32], strides = [1, 1]} : vector<2x128xf32> to vector<2x32xf32>
    %585 = vector.extract_strided_slice %582 {offsets = [0, 64], sizes = [2, 32], strides = [1, 1]} : vector<2x128xf32> to vector<2x32xf32>
    %586 = vector.extract_strided_slice %582 {offsets = [0, 96], sizes = [2, 32], strides = [1, 1]} : vector<2x128xf32> to vector<2x32xf32>
    %587 = arith.mulf %584, %538 : vector<2x32xf32>
    %588 = arith.mulf %583, %585 : vector<2x32xf32>
    %589 = arith.addf %587, %588 : vector<2x32xf32>
    %590 = math.tanh %589 : vector<2x32xf32>
    %591 = arith.mulf %586, %590 : vector<2x32xf32>
    %cst_162 = arith.constant dense<0.000000e+00> : vector<2x128xf32>
    %592 = tpu.matmul %564, %7, %cst_162 {dimension_numbers = #tpu.dot_dimension_numbers<[1], [0], [0], [1], [0, 0, 1, 1], [], []>} : vector<2x32xf32>, vector<32x128xf32>, vector<2x128xf32> -> vector<2x128xf32>
    %593 = arith.addf %481, %592 : vector<2x128xf32>
    %594 = arith.negf %593 : vector<2x128xf32>
    %595 = math.exp %594 : vector<2x128xf32>
    %cst_163 = arith.constant 1.000000e+00 : f32
    %596 = vector.broadcast %cst_163 : f32 to vector<2x128xf32>
    %597 = arith.addf %596, %595 : vector<2x128xf32>
    %598 = arith.divf %596, %597 : vector<2x128xf32>
    %599 = math.tanh %593 : vector<2x128xf32>
    %600 = tpu.iota {dimensions = array<i32: 1>} : vector<2x128xi32>
    %c64_i32_164 = arith.constant 64 : i32
    %601 = vector.broadcast %c64_i32_164 : i32 to vector<2x128xi32>
    %602 = arith.cmpi sge, %600, %601 : vector<2x128xi32>
    %c96_i32_165 = arith.constant 96 : i32
    %603 = vector.broadcast %c96_i32_165 : i32 to vector<2x128xi32>
    %604 = arith.cmpi slt, %600, %603 : vector<2x128xi32>
    %605 = arith.andi %602, %604 : vector<2x128xi1>
    %606 = arith.select %605, %599, %598 : vector<2x128xi1>, vector<2x128xf32>
    %607 = vector.extract_strided_slice %606 {offsets = [0, 0], sizes = [2, 32], strides = [1, 1]} : vector<2x128xf32> to vector<2x32xf32>
    %608 = vector.extract_strided_slice %606 {offsets = [0, 32], sizes = [2, 32], strides = [1, 1]} : vector<2x128xf32> to vector<2x32xf32>
    %609 = vector.extract_strided_slice %606 {offsets = [0, 64], sizes = [2, 32], strides = [1, 1]} : vector<2x128xf32> to vector<2x32xf32>
    %610 = vector.extract_strided_slice %606 {offsets = [0, 96], sizes = [2, 32], strides = [1, 1]} : vector<2x128xf32> to vector<2x32xf32>
    %611 = arith.mulf %608, %562 : vector<2x32xf32>
    %612 = arith.mulf %607, %609 : vector<2x32xf32>
    %613 = arith.addf %611, %612 : vector<2x32xf32>
    %614 = math.tanh %613 : vector<2x32xf32>
    %615 = arith.mulf %610, %614 : vector<2x32xf32>
    %cst_166 = arith.constant dense<0.000000e+00> : vector<2x128xf32>
    %616 = tpu.matmul %615, %9, %cst_166 {dimension_numbers = #tpu.dot_dimension_numbers<[1], [0], [0], [1], [0, 0, 1, 1], [], []>} : vector<2x32xf32>, vector<32x128xf32>, vector<2x128xf32> -> vector<2x128xf32>
    %617 = vector.broadcast %11 : vector<1x128xf32> to vector<2x128xf32>
    %618 = arith.addf %616, %617 : vector<2x128xf32>
    %cst_167 = arith.constant dense<0.000000e+00> : vector<2x128xf32>
    %619 = tpu.matmul %591, %10, %cst_167 {dimension_numbers = #tpu.dot_dimension_numbers<[1], [0], [0], [1], [0, 0, 1, 1], [], []>} : vector<2x32xf32>, vector<32x128xf32>, vector<2x128xf32> -> vector<2x128xf32>
    %620 = arith.addf %618, %619 : vector<2x128xf32>
    %621 = arith.negf %620 : vector<2x128xf32>
    %622 = math.exp %621 : vector<2x128xf32>
    %cst_168 = arith.constant 1.000000e+00 : f32
    %623 = vector.broadcast %cst_168 : f32 to vector<2x128xf32>
    %624 = arith.addf %623, %622 : vector<2x128xf32>
    %625 = arith.divf %623, %624 : vector<2x128xf32>
    %626 = math.tanh %620 : vector<2x128xf32>
    %627 = tpu.iota {dimensions = array<i32: 1>} : vector<2x128xi32>
    %c64_i32_169 = arith.constant 64 : i32
    %628 = vector.broadcast %c64_i32_169 : i32 to vector<2x128xi32>
    %629 = arith.cmpi sge, %627, %628 : vector<2x128xi32>
    %c96_i32_170 = arith.constant 96 : i32
    %630 = vector.broadcast %c96_i32_170 : i32 to vector<2x128xi32>
    %631 = arith.cmpi slt, %627, %630 : vector<2x128xi32>
    %632 = arith.andi %629, %631 : vector<2x128xi1>
    %633 = arith.select %632, %626, %625 : vector<2x128xi1>, vector<2x128xf32>
    %634 = vector.extract_strided_slice %633 {offsets = [0, 0], sizes = [2, 32], strides = [1, 1]} : vector<2x128xf32> to vector<2x32xf32>
    %635 = vector.extract_strided_slice %633 {offsets = [0, 32], sizes = [2, 32], strides = [1, 1]} : vector<2x128xf32> to vector<2x32xf32>
    %636 = vector.extract_strided_slice %633 {offsets = [0, 64], sizes = [2, 32], strides = [1, 1]} : vector<2x128xf32> to vector<2x32xf32>
    %637 = vector.extract_strided_slice %633 {offsets = [0, 96], sizes = [2, 32], strides = [1, 1]} : vector<2x128xf32> to vector<2x32xf32>
    %638 = arith.mulf %635, %589 : vector<2x32xf32>
    %639 = arith.mulf %634, %636 : vector<2x32xf32>
    %640 = arith.addf %638, %639 : vector<2x32xf32>
    %641 = math.tanh %640 : vector<2x32xf32>
    %642 = arith.mulf %637, %641 : vector<2x32xf32>
    %cst_171 = arith.constant dense<0.000000e+00> : vector<2x128xf32>
    %643 = tpu.matmul %615, %7, %cst_171 {dimension_numbers = #tpu.dot_dimension_numbers<[1], [0], [0], [1], [0, 0, 1, 1], [], []>} : vector<2x32xf32>, vector<32x128xf32>, vector<2x128xf32> -> vector<2x128xf32>
    %644 = arith.addf %481, %643 : vector<2x128xf32>
    %645 = arith.negf %644 : vector<2x128xf32>
    %646 = math.exp %645 : vector<2x128xf32>
    %cst_172 = arith.constant 1.000000e+00 : f32
    %647 = vector.broadcast %cst_172 : f32 to vector<2x128xf32>
    %648 = arith.addf %647, %646 : vector<2x128xf32>
    %649 = arith.divf %647, %648 : vector<2x128xf32>
    %650 = math.tanh %644 : vector<2x128xf32>
    %651 = tpu.iota {dimensions = array<i32: 1>} : vector<2x128xi32>
    %c64_i32_173 = arith.constant 64 : i32
    %652 = vector.broadcast %c64_i32_173 : i32 to vector<2x128xi32>
    %653 = arith.cmpi sge, %651, %652 : vector<2x128xi32>
    %c96_i32_174 = arith.constant 96 : i32
    %654 = vector.broadcast %c96_i32_174 : i32 to vector<2x128xi32>
    %655 = arith.cmpi slt, %651, %654 : vector<2x128xi32>
    %656 = arith.andi %653, %655 : vector<2x128xi1>
    %657 = arith.select %656, %650, %649 : vector<2x128xi1>, vector<2x128xf32>
    %658 = vector.extract_strided_slice %657 {offsets = [0, 0], sizes = [2, 32], strides = [1, 1]} : vector<2x128xf32> to vector<2x32xf32>
    %659 = vector.extract_strided_slice %657 {offsets = [0, 32], sizes = [2, 32], strides = [1, 1]} : vector<2x128xf32> to vector<2x32xf32>
    %660 = vector.extract_strided_slice %657 {offsets = [0, 64], sizes = [2, 32], strides = [1, 1]} : vector<2x128xf32> to vector<2x32xf32>
    %661 = vector.extract_strided_slice %657 {offsets = [0, 96], sizes = [2, 32], strides = [1, 1]} : vector<2x128xf32> to vector<2x32xf32>
    %662 = arith.mulf %659, %613 : vector<2x32xf32>
    %663 = arith.mulf %658, %660 : vector<2x32xf32>
    %664 = arith.addf %662, %663 : vector<2x32xf32>
    %665 = math.tanh %664 : vector<2x32xf32>
    %666 = arith.mulf %661, %665 : vector<2x32xf32>
    %cst_175 = arith.constant dense<0.000000e+00> : vector<2x128xf32>
    %667 = tpu.matmul %666, %9, %cst_175 {dimension_numbers = #tpu.dot_dimension_numbers<[1], [0], [0], [1], [0, 0, 1, 1], [], []>} : vector<2x32xf32>, vector<32x128xf32>, vector<2x128xf32> -> vector<2x128xf32>
    %668 = vector.broadcast %11 : vector<1x128xf32> to vector<2x128xf32>
    %669 = arith.addf %667, %668 : vector<2x128xf32>
    %cst_176 = arith.constant dense<0.000000e+00> : vector<2x128xf32>
    %670 = tpu.matmul %642, %10, %cst_176 {dimension_numbers = #tpu.dot_dimension_numbers<[1], [0], [0], [1], [0, 0, 1, 1], [], []>} : vector<2x32xf32>, vector<32x128xf32>, vector<2x128xf32> -> vector<2x128xf32>
    %671 = arith.addf %669, %670 : vector<2x128xf32>
    %672 = arith.negf %671 : vector<2x128xf32>
    %673 = math.exp %672 : vector<2x128xf32>
    %cst_177 = arith.constant 1.000000e+00 : f32
    %674 = vector.broadcast %cst_177 : f32 to vector<2x128xf32>
    %675 = arith.addf %674, %673 : vector<2x128xf32>
    %676 = arith.divf %674, %675 : vector<2x128xf32>
    %677 = math.tanh %671 : vector<2x128xf32>
    %678 = tpu.iota {dimensions = array<i32: 1>} : vector<2x128xi32>
    %c64_i32_178 = arith.constant 64 : i32
    %679 = vector.broadcast %c64_i32_178 : i32 to vector<2x128xi32>
    %680 = arith.cmpi sge, %678, %679 : vector<2x128xi32>
    %c96_i32_179 = arith.constant 96 : i32
    %681 = vector.broadcast %c96_i32_179 : i32 to vector<2x128xi32>
    %682 = arith.cmpi slt, %678, %681 : vector<2x128xi32>
    %683 = arith.andi %680, %682 : vector<2x128xi1>
    %684 = arith.select %683, %677, %676 : vector<2x128xi1>, vector<2x128xf32>
    %685 = vector.extract_strided_slice %684 {offsets = [0, 0], sizes = [2, 32], strides = [1, 1]} : vector<2x128xf32> to vector<2x32xf32>
    %686 = vector.extract_strided_slice %684 {offsets = [0, 32], sizes = [2, 32], strides = [1, 1]} : vector<2x128xf32> to vector<2x32xf32>
    %687 = vector.extract_strided_slice %684 {offsets = [0, 64], sizes = [2, 32], strides = [1, 1]} : vector<2x128xf32> to vector<2x32xf32>
    %688 = vector.extract_strided_slice %684 {offsets = [0, 96], sizes = [2, 32], strides = [1, 1]} : vector<2x128xf32> to vector<2x32xf32>
    %689 = arith.mulf %686, %640 : vector<2x32xf32>
    %690 = arith.mulf %685, %687 : vector<2x32xf32>
    %691 = arith.addf %689, %690 : vector<2x32xf32>
    %692 = math.tanh %691 : vector<2x32xf32>
    %693 = arith.mulf %688, %692 : vector<2x32xf32>
    %cst_180 = arith.constant dense<0.000000e+00> : vector<2x128xf32>
    %694 = tpu.matmul %666, %7, %cst_180 {dimension_numbers = #tpu.dot_dimension_numbers<[1], [0], [0], [1], [0, 0, 1, 1], [], []>} : vector<2x32xf32>, vector<32x128xf32>, vector<2x128xf32> -> vector<2x128xf32>
    %695 = arith.addf %481, %694 : vector<2x128xf32>
    %696 = arith.negf %695 : vector<2x128xf32>
    %697 = math.exp %696 : vector<2x128xf32>
    %cst_181 = arith.constant 1.000000e+00 : f32
    %698 = vector.broadcast %cst_181 : f32 to vector<2x128xf32>
    %699 = arith.addf %698, %697 : vector<2x128xf32>
    %700 = arith.divf %698, %699 : vector<2x128xf32>
    %701 = math.tanh %695 : vector<2x128xf32>
    %702 = tpu.iota {dimensions = array<i32: 1>} : vector<2x128xi32>
    %c64_i32_182 = arith.constant 64 : i32
    %703 = vector.broadcast %c64_i32_182 : i32 to vector<2x128xi32>
    %704 = arith.cmpi sge, %702, %703 : vector<2x128xi32>
    %c96_i32_183 = arith.constant 96 : i32
    %705 = vector.broadcast %c96_i32_183 : i32 to vector<2x128xi32>
    %706 = arith.cmpi slt, %702, %705 : vector<2x128xi32>
    %707 = arith.andi %704, %706 : vector<2x128xi1>
    %708 = arith.select %707, %701, %700 : vector<2x128xi1>, vector<2x128xf32>
    %709 = vector.extract_strided_slice %708 {offsets = [0, 0], sizes = [2, 32], strides = [1, 1]} : vector<2x128xf32> to vector<2x32xf32>
    %710 = vector.extract_strided_slice %708 {offsets = [0, 32], sizes = [2, 32], strides = [1, 1]} : vector<2x128xf32> to vector<2x32xf32>
    %711 = vector.extract_strided_slice %708 {offsets = [0, 64], sizes = [2, 32], strides = [1, 1]} : vector<2x128xf32> to vector<2x32xf32>
    %712 = vector.extract_strided_slice %708 {offsets = [0, 96], sizes = [2, 32], strides = [1, 1]} : vector<2x128xf32> to vector<2x32xf32>
    %713 = arith.mulf %710, %664 : vector<2x32xf32>
    %714 = arith.mulf %709, %711 : vector<2x32xf32>
    %715 = arith.addf %713, %714 : vector<2x32xf32>
    %716 = math.tanh %715 : vector<2x32xf32>
    %717 = arith.mulf %712, %716 : vector<2x32xf32>
    %cst_184 = arith.constant dense<0.000000e+00> : vector<2x128xf32>
    %718 = tpu.matmul %717, %9, %cst_184 {dimension_numbers = #tpu.dot_dimension_numbers<[1], [0], [0], [1], [0, 0, 1, 1], [], []>} : vector<2x32xf32>, vector<32x128xf32>, vector<2x128xf32> -> vector<2x128xf32>
    %719 = vector.broadcast %11 : vector<1x128xf32> to vector<2x128xf32>
    %720 = arith.addf %718, %719 : vector<2x128xf32>
    %cst_185 = arith.constant dense<0.000000e+00> : vector<2x128xf32>
    %721 = tpu.matmul %693, %10, %cst_185 {dimension_numbers = #tpu.dot_dimension_numbers<[1], [0], [0], [1], [0, 0, 1, 1], [], []>} : vector<2x32xf32>, vector<32x128xf32>, vector<2x128xf32> -> vector<2x128xf32>
    %722 = arith.addf %720, %721 : vector<2x128xf32>
    %723 = arith.negf %722 : vector<2x128xf32>
    %724 = math.exp %723 : vector<2x128xf32>
    %cst_186 = arith.constant 1.000000e+00 : f32
    %725 = vector.broadcast %cst_186 : f32 to vector<2x128xf32>
    %726 = arith.addf %725, %724 : vector<2x128xf32>
    %727 = arith.divf %725, %726 : vector<2x128xf32>
    %728 = math.tanh %722 : vector<2x128xf32>
    %729 = tpu.iota {dimensions = array<i32: 1>} : vector<2x128xi32>
    %c64_i32_187 = arith.constant 64 : i32
    %730 = vector.broadcast %c64_i32_187 : i32 to vector<2x128xi32>
    %731 = arith.cmpi sge, %729, %730 : vector<2x128xi32>
    %c96_i32_188 = arith.constant 96 : i32
    %732 = vector.broadcast %c96_i32_188 : i32 to vector<2x128xi32>
    %733 = arith.cmpi slt, %729, %732 : vector<2x128xi32>
    %734 = arith.andi %731, %733 : vector<2x128xi1>
    %735 = arith.select %734, %728, %727 : vector<2x128xi1>, vector<2x128xf32>
    %736 = vector.extract_strided_slice %735 {offsets = [0, 0], sizes = [2, 32], strides = [1, 1]} : vector<2x128xf32> to vector<2x32xf32>
    %737 = vector.extract_strided_slice %735 {offsets = [0, 32], sizes = [2, 32], strides = [1, 1]} : vector<2x128xf32> to vector<2x32xf32>
    %738 = vector.extract_strided_slice %735 {offsets = [0, 64], sizes = [2, 32], strides = [1, 1]} : vector<2x128xf32> to vector<2x32xf32>
    %739 = vector.extract_strided_slice %735 {offsets = [0, 96], sizes = [2, 32], strides = [1, 1]} : vector<2x128xf32> to vector<2x32xf32>
    %740 = arith.mulf %737, %691 : vector<2x32xf32>
    %741 = arith.mulf %736, %738 : vector<2x32xf32>
    %742 = arith.addf %740, %741 : vector<2x32xf32>
    %743 = math.tanh %742 : vector<2x32xf32>
    %744 = arith.mulf %739, %743 : vector<2x32xf32>
    %cst_189 = arith.constant dense<0.000000e+00> : vector<2x128xf32>
    %745 = tpu.matmul %717, %7, %cst_189 {dimension_numbers = #tpu.dot_dimension_numbers<[1], [0], [0], [1], [0, 0, 1, 1], [], []>} : vector<2x32xf32>, vector<32x128xf32>, vector<2x128xf32> -> vector<2x128xf32>
    %746 = arith.addf %481, %745 : vector<2x128xf32>
    %747 = arith.negf %746 : vector<2x128xf32>
    %748 = math.exp %747 : vector<2x128xf32>
    %cst_190 = arith.constant 1.000000e+00 : f32
    %749 = vector.broadcast %cst_190 : f32 to vector<2x128xf32>
    %750 = arith.addf %749, %748 : vector<2x128xf32>
    %751 = arith.divf %749, %750 : vector<2x128xf32>
    %752 = math.tanh %746 : vector<2x128xf32>
    %753 = tpu.iota {dimensions = array<i32: 1>} : vector<2x128xi32>
    %c64_i32_191 = arith.constant 64 : i32
    %754 = vector.broadcast %c64_i32_191 : i32 to vector<2x128xi32>
    %755 = arith.cmpi sge, %753, %754 : vector<2x128xi32>
    %c96_i32_192 = arith.constant 96 : i32
    %756 = vector.broadcast %c96_i32_192 : i32 to vector<2x128xi32>
    %757 = arith.cmpi slt, %753, %756 : vector<2x128xi32>
    %758 = arith.andi %755, %757 : vector<2x128xi1>
    %759 = arith.select %758, %752, %751 : vector<2x128xi1>, vector<2x128xf32>
    %760 = vector.extract_strided_slice %759 {offsets = [0, 0], sizes = [2, 32], strides = [1, 1]} : vector<2x128xf32> to vector<2x32xf32>
    %761 = vector.extract_strided_slice %759 {offsets = [0, 32], sizes = [2, 32], strides = [1, 1]} : vector<2x128xf32> to vector<2x32xf32>
    %762 = vector.extract_strided_slice %759 {offsets = [0, 64], sizes = [2, 32], strides = [1, 1]} : vector<2x128xf32> to vector<2x32xf32>
    %763 = vector.extract_strided_slice %759 {offsets = [0, 96], sizes = [2, 32], strides = [1, 1]} : vector<2x128xf32> to vector<2x32xf32>
    %764 = arith.mulf %761, %715 : vector<2x32xf32>
    %765 = arith.mulf %760, %762 : vector<2x32xf32>
    %766 = arith.addf %764, %765 : vector<2x32xf32>
    %767 = math.tanh %766 : vector<2x32xf32>
    %768 = arith.mulf %763, %767 : vector<2x32xf32>
    %cst_193 = arith.constant dense<0.000000e+00> : vector<2x128xf32>
    %769 = tpu.matmul %768, %9, %cst_193 {dimension_numbers = #tpu.dot_dimension_numbers<[1], [0], [0], [1], [0, 0, 1, 1], [], []>} : vector<2x32xf32>, vector<32x128xf32>, vector<2x128xf32> -> vector<2x128xf32>
    %770 = vector.broadcast %11 : vector<1x128xf32> to vector<2x128xf32>
    %771 = arith.addf %769, %770 : vector<2x128xf32>
    %cst_194 = arith.constant dense<0.000000e+00> : vector<2x128xf32>
    %772 = tpu.matmul %744, %10, %cst_194 {dimension_numbers = #tpu.dot_dimension_numbers<[1], [0], [0], [1], [0, 0, 1, 1], [], []>} : vector<2x32xf32>, vector<32x128xf32>, vector<2x128xf32> -> vector<2x128xf32>
    %773 = arith.addf %771, %772 : vector<2x128xf32>
    %774 = arith.negf %773 : vector<2x128xf32>
    %775 = math.exp %774 : vector<2x128xf32>
    %cst_195 = arith.constant 1.000000e+00 : f32
    %776 = vector.broadcast %cst_195 : f32 to vector<2x128xf32>
    %777 = arith.addf %776, %775 : vector<2x128xf32>
    %778 = arith.divf %776, %777 : vector<2x128xf32>
    %779 = math.tanh %773 : vector<2x128xf32>
    %780 = tpu.iota {dimensions = array<i32: 1>} : vector<2x128xi32>
    %c64_i32_196 = arith.constant 64 : i32
    %781 = vector.broadcast %c64_i32_196 : i32 to vector<2x128xi32>
    %782 = arith.cmpi sge, %780, %781 : vector<2x128xi32>
    %c96_i32_197 = arith.constant 96 : i32
    %783 = vector.broadcast %c96_i32_197 : i32 to vector<2x128xi32>
    %784 = arith.cmpi slt, %780, %783 : vector<2x128xi32>
    %785 = arith.andi %782, %784 : vector<2x128xi1>
    %786 = arith.select %785, %779, %778 : vector<2x128xi1>, vector<2x128xf32>
    %787 = vector.extract_strided_slice %786 {offsets = [0, 0], sizes = [2, 32], strides = [1, 1]} : vector<2x128xf32> to vector<2x32xf32>
    %788 = vector.extract_strided_slice %786 {offsets = [0, 32], sizes = [2, 32], strides = [1, 1]} : vector<2x128xf32> to vector<2x32xf32>
    %789 = vector.extract_strided_slice %786 {offsets = [0, 64], sizes = [2, 32], strides = [1, 1]} : vector<2x128xf32> to vector<2x32xf32>
    %790 = vector.extract_strided_slice %786 {offsets = [0, 96], sizes = [2, 32], strides = [1, 1]} : vector<2x128xf32> to vector<2x32xf32>
    %791 = arith.mulf %788, %742 : vector<2x32xf32>
    %792 = arith.mulf %787, %789 : vector<2x32xf32>
    %793 = arith.addf %791, %792 : vector<2x32xf32>
    %794 = math.tanh %793 : vector<2x32xf32>
    %795 = arith.mulf %790, %794 : vector<2x32xf32>
    %cst_198 = arith.constant dense<0.000000e+00> : vector<2x128xf32>
    %796 = tpu.matmul %768, %7, %cst_198 {dimension_numbers = #tpu.dot_dimension_numbers<[1], [0], [0], [1], [0, 0, 1, 1], [], []>} : vector<2x32xf32>, vector<32x128xf32>, vector<2x128xf32> -> vector<2x128xf32>
    %797 = arith.addf %481, %796 : vector<2x128xf32>
    %798 = arith.negf %797 : vector<2x128xf32>
    %799 = math.exp %798 : vector<2x128xf32>
    %cst_199 = arith.constant 1.000000e+00 : f32
    %800 = vector.broadcast %cst_199 : f32 to vector<2x128xf32>
    %801 = arith.addf %800, %799 : vector<2x128xf32>
    %802 = arith.divf %800, %801 : vector<2x128xf32>
    %803 = math.tanh %797 : vector<2x128xf32>
    %804 = tpu.iota {dimensions = array<i32: 1>} : vector<2x128xi32>
    %c64_i32_200 = arith.constant 64 : i32
    %805 = vector.broadcast %c64_i32_200 : i32 to vector<2x128xi32>
    %806 = arith.cmpi sge, %804, %805 : vector<2x128xi32>
    %c96_i32_201 = arith.constant 96 : i32
    %807 = vector.broadcast %c96_i32_201 : i32 to vector<2x128xi32>
    %808 = arith.cmpi slt, %804, %807 : vector<2x128xi32>
    %809 = arith.andi %806, %808 : vector<2x128xi1>
    %810 = arith.select %809, %803, %802 : vector<2x128xi1>, vector<2x128xf32>
    %811 = vector.extract_strided_slice %810 {offsets = [0, 0], sizes = [2, 32], strides = [1, 1]} : vector<2x128xf32> to vector<2x32xf32>
    %812 = vector.extract_strided_slice %810 {offsets = [0, 32], sizes = [2, 32], strides = [1, 1]} : vector<2x128xf32> to vector<2x32xf32>
    %813 = vector.extract_strided_slice %810 {offsets = [0, 64], sizes = [2, 32], strides = [1, 1]} : vector<2x128xf32> to vector<2x32xf32>
    %814 = vector.extract_strided_slice %810 {offsets = [0, 96], sizes = [2, 32], strides = [1, 1]} : vector<2x128xf32> to vector<2x32xf32>
    %815 = arith.mulf %812, %766 : vector<2x32xf32>
    %816 = arith.mulf %811, %813 : vector<2x32xf32>
    %817 = arith.addf %815, %816 : vector<2x32xf32>
    %818 = math.tanh %817 : vector<2x32xf32>
    %819 = arith.mulf %814, %818 : vector<2x32xf32>
    %cst_202 = arith.constant dense<0.000000e+00> : vector<2x128xf32>
    %820 = tpu.matmul %819, %9, %cst_202 {dimension_numbers = #tpu.dot_dimension_numbers<[1], [0], [0], [1], [0, 0, 1, 1], [], []>} : vector<2x32xf32>, vector<32x128xf32>, vector<2x128xf32> -> vector<2x128xf32>
    %821 = vector.broadcast %11 : vector<1x128xf32> to vector<2x128xf32>
    %822 = arith.addf %820, %821 : vector<2x128xf32>
    %cst_203 = arith.constant dense<0.000000e+00> : vector<2x128xf32>
    %823 = tpu.matmul %795, %10, %cst_203 {dimension_numbers = #tpu.dot_dimension_numbers<[1], [0], [0], [1], [0, 0, 1, 1], [], []>} : vector<2x32xf32>, vector<32x128xf32>, vector<2x128xf32> -> vector<2x128xf32>
    %824 = arith.addf %822, %823 : vector<2x128xf32>
    %825 = arith.negf %824 : vector<2x128xf32>
    %826 = math.exp %825 : vector<2x128xf32>
    %cst_204 = arith.constant 1.000000e+00 : f32
    %827 = vector.broadcast %cst_204 : f32 to vector<2x128xf32>
    %828 = arith.addf %827, %826 : vector<2x128xf32>
    %829 = arith.divf %827, %828 : vector<2x128xf32>
    %830 = math.tanh %824 : vector<2x128xf32>
    %831 = tpu.iota {dimensions = array<i32: 1>} : vector<2x128xi32>
    %c64_i32_205 = arith.constant 64 : i32
    %832 = vector.broadcast %c64_i32_205 : i32 to vector<2x128xi32>
    %833 = arith.cmpi sge, %831, %832 : vector<2x128xi32>
    %c96_i32_206 = arith.constant 96 : i32
    %834 = vector.broadcast %c96_i32_206 : i32 to vector<2x128xi32>
    %835 = arith.cmpi slt, %831, %834 : vector<2x128xi32>
    %836 = arith.andi %833, %835 : vector<2x128xi1>
    %837 = arith.select %836, %830, %829 : vector<2x128xi1>, vector<2x128xf32>
    %838 = vector.extract_strided_slice %837 {offsets = [0, 0], sizes = [2, 32], strides = [1, 1]} : vector<2x128xf32> to vector<2x32xf32>
    %839 = vector.extract_strided_slice %837 {offsets = [0, 32], sizes = [2, 32], strides = [1, 1]} : vector<2x128xf32> to vector<2x32xf32>
    %840 = vector.extract_strided_slice %837 {offsets = [0, 64], sizes = [2, 32], strides = [1, 1]} : vector<2x128xf32> to vector<2x32xf32>
    %841 = vector.extract_strided_slice %837 {offsets = [0, 96], sizes = [2, 32], strides = [1, 1]} : vector<2x128xf32> to vector<2x32xf32>
    %842 = arith.mulf %839, %793 : vector<2x32xf32>
    %843 = arith.mulf %838, %840 : vector<2x32xf32>
    %844 = arith.addf %842, %843 : vector<2x32xf32>
    %845 = math.tanh %844 : vector<2x32xf32>
    %846 = arith.mulf %841, %845 : vector<2x32xf32>
    %cst_207 = arith.constant dense<0.000000e+00> : vector<2x128xf32>
    %847 = tpu.matmul %819, %7, %cst_207 {dimension_numbers = #tpu.dot_dimension_numbers<[1], [0], [0], [1], [0, 0, 1, 1], [], []>} : vector<2x32xf32>, vector<32x128xf32>, vector<2x128xf32> -> vector<2x128xf32>
    %848 = arith.addf %481, %847 : vector<2x128xf32>
    %849 = arith.negf %848 : vector<2x128xf32>
    %850 = math.exp %849 : vector<2x128xf32>
    %cst_208 = arith.constant 1.000000e+00 : f32
    %851 = vector.broadcast %cst_208 : f32 to vector<2x128xf32>
    %852 = arith.addf %851, %850 : vector<2x128xf32>
    %853 = arith.divf %851, %852 : vector<2x128xf32>
    %854 = math.tanh %848 : vector<2x128xf32>
    %855 = tpu.iota {dimensions = array<i32: 1>} : vector<2x128xi32>
    %c64_i32_209 = arith.constant 64 : i32
    %856 = vector.broadcast %c64_i32_209 : i32 to vector<2x128xi32>
    %857 = arith.cmpi sge, %855, %856 : vector<2x128xi32>
    %c96_i32_210 = arith.constant 96 : i32
    %858 = vector.broadcast %c96_i32_210 : i32 to vector<2x128xi32>
    %859 = arith.cmpi slt, %855, %858 : vector<2x128xi32>
    %860 = arith.andi %857, %859 : vector<2x128xi1>
    %861 = arith.select %860, %854, %853 : vector<2x128xi1>, vector<2x128xf32>
    %862 = vector.extract_strided_slice %861 {offsets = [0, 0], sizes = [2, 32], strides = [1, 1]} : vector<2x128xf32> to vector<2x32xf32>
    %863 = vector.extract_strided_slice %861 {offsets = [0, 32], sizes = [2, 32], strides = [1, 1]} : vector<2x128xf32> to vector<2x32xf32>
    %864 = vector.extract_strided_slice %861 {offsets = [0, 64], sizes = [2, 32], strides = [1, 1]} : vector<2x128xf32> to vector<2x32xf32>
    %865 = vector.extract_strided_slice %861 {offsets = [0, 96], sizes = [2, 32], strides = [1, 1]} : vector<2x128xf32> to vector<2x32xf32>
    %866 = arith.mulf %863, %817 : vector<2x32xf32>
    %867 = arith.mulf %862, %864 : vector<2x32xf32>
    %868 = arith.addf %866, %867 : vector<2x32xf32>
    %869 = math.tanh %868 : vector<2x32xf32>
    %870 = arith.mulf %865, %869 : vector<2x32xf32>
    %cst_211 = arith.constant dense<0.000000e+00> : vector<2x128xf32>
    %871 = tpu.matmul %870, %9, %cst_211 {dimension_numbers = #tpu.dot_dimension_numbers<[1], [0], [0], [1], [0, 0, 1, 1], [], []>} : vector<2x32xf32>, vector<32x128xf32>, vector<2x128xf32> -> vector<2x128xf32>
    %872 = vector.broadcast %11 : vector<1x128xf32> to vector<2x128xf32>
    %873 = arith.addf %871, %872 : vector<2x128xf32>
    %cst_212 = arith.constant dense<0.000000e+00> : vector<2x128xf32>
    %874 = tpu.matmul %846, %10, %cst_212 {dimension_numbers = #tpu.dot_dimension_numbers<[1], [0], [0], [1], [0, 0, 1, 1], [], []>} : vector<2x32xf32>, vector<32x128xf32>, vector<2x128xf32> -> vector<2x128xf32>
    %875 = arith.addf %873, %874 : vector<2x128xf32>
    %876 = arith.negf %875 : vector<2x128xf32>
    %877 = math.exp %876 : vector<2x128xf32>
    %cst_213 = arith.constant 1.000000e+00 : f32
    %878 = vector.broadcast %cst_213 : f32 to vector<2x128xf32>
    %879 = arith.addf %878, %877 : vector<2x128xf32>
    %880 = arith.divf %878, %879 : vector<2x128xf32>
    %881 = math.tanh %875 : vector<2x128xf32>
    %882 = tpu.iota {dimensions = array<i32: 1>} : vector<2x128xi32>
    %c64_i32_214 = arith.constant 64 : i32
    %883 = vector.broadcast %c64_i32_214 : i32 to vector<2x128xi32>
    %884 = arith.cmpi sge, %882, %883 : vector<2x128xi32>
    %c96_i32_215 = arith.constant 96 : i32
    %885 = vector.broadcast %c96_i32_215 : i32 to vector<2x128xi32>
    %886 = arith.cmpi slt, %882, %885 : vector<2x128xi32>
    %887 = arith.andi %884, %886 : vector<2x128xi1>
    %888 = arith.select %887, %881, %880 : vector<2x128xi1>, vector<2x128xf32>
    %889 = vector.extract_strided_slice %888 {offsets = [0, 0], sizes = [2, 32], strides = [1, 1]} : vector<2x128xf32> to vector<2x32xf32>
    %890 = vector.extract_strided_slice %888 {offsets = [0, 32], sizes = [2, 32], strides = [1, 1]} : vector<2x128xf32> to vector<2x32xf32>
    %891 = vector.extract_strided_slice %888 {offsets = [0, 64], sizes = [2, 32], strides = [1, 1]} : vector<2x128xf32> to vector<2x32xf32>
    %892 = vector.extract_strided_slice %888 {offsets = [0, 96], sizes = [2, 32], strides = [1, 1]} : vector<2x128xf32> to vector<2x32xf32>
    %893 = arith.mulf %890, %844 : vector<2x32xf32>
    %894 = arith.mulf %889, %891 : vector<2x32xf32>
    %895 = arith.addf %893, %894 : vector<2x32xf32>
    %896 = math.tanh %895 : vector<2x32xf32>
    %897 = arith.mulf %892, %896 : vector<2x32xf32>
    %898 = math.tanh %897 : vector<2x32xf32>
    %c0_216 = arith.constant 0 : index
    %c0_217 = arith.constant 0 : index
    %899 = vector.load %arg18[%c0_216, %c0_217] : memref<32x8xf32, #tpu.memory_space<vmem>>, vector<32x8xf32>
    %c0_218 = arith.constant 0 : index
    %c0_219 = arith.constant 0 : index
    %900 = vector.load %arg19[%c0_218, %c0_219] : memref<1x8xf32, #tpu.memory_space<vmem>>, vector<1x8xf32>
    %cst_220 = arith.constant dense<0.000000e+00> : vector<2x8xf32>
    %901 = tpu.matmul %898, %899, %cst_220 {dimension_numbers = #tpu.dot_dimension_numbers<[1], [0], [0], [1], [0, 0, 1, 1], [], []>} : vector<2x32xf32>, vector<32x8xf32>, vector<2x8xf32> -> vector<2x8xf32>
    %902 = vector.broadcast %900 : vector<1x8xf32> to vector<2x8xf32>
    %903 = arith.addf %901, %902 : vector<2x8xf32>
    %c0_221 = arith.constant 0 : index
    %c0_222 = arith.constant 0 : index
    %904 = vector.load %arg20[%c0_221, %c0_222] : memref<8x16xf32, #tpu.memory_space<vmem>>, vector<8x16xf32>
    %c0_223 = arith.constant 0 : index
    %c0_224 = arith.constant 0 : index
    %905 = vector.load %arg21[%c0_223, %c0_224] : memref<1x16xf32, #tpu.memory_space<vmem>>, vector<1x16xf32>
    %cst_225 = arith.constant dense<0.000000e+00> : vector<2x16xf32>
    %906 = tpu.matmul %903, %904, %cst_225 {dimension_numbers = #tpu.dot_dimension_numbers<[1], [0], [0], [1], [0, 0, 1, 1], [], []>} : vector<2x8xf32>, vector<8x16xf32>, vector<2x16xf32> -> vector<2x16xf32>
    %907 = vector.broadcast %905 : vector<1x16xf32> to vector<2x16xf32>
    %908 = arith.addf %906, %907 : vector<2x16xf32>
    %cst_226 = arith.constant 0.000000e+00 : f32
    %909 = vector.broadcast %cst_226 : f32 to vector<2x16xf32>
    %910 = arith.maximumf %908, %909 : vector<2x16xf32>
    %c0_227 = arith.constant 0 : index
    %c0_228 = arith.constant 0 : index
    %911 = vector.load %arg22[%c0_227, %c0_228] : memref<16x32xf32, #tpu.memory_space<vmem>>, vector<16x32xf32>
    %c0_229 = arith.constant 0 : index
    %c0_230 = arith.constant 0 : index
    %912 = vector.load %arg23[%c0_229, %c0_230] : memref<1x32xf32, #tpu.memory_space<vmem>>, vector<1x32xf32>
    %cst_231 = arith.constant dense<0.000000e+00> : vector<2x32xf32>
    %913 = tpu.matmul %910, %911, %cst_231 {dimension_numbers = #tpu.dot_dimension_numbers<[1], [0], [0], [1], [0, 0, 1, 1], [], []>} : vector<2x16xf32>, vector<16x32xf32>, vector<2x32xf32> -> vector<2x32xf32>
    %914 = vector.broadcast %912 : vector<1x32xf32> to vector<2x32xf32>
    %915 = arith.addf %913, %914 : vector<2x32xf32>
    %916 = arith.negf %915 : vector<2x32xf32>
    %917 = math.exp %916 : vector<2x32xf32>
    %cst_232 = arith.constant 1.000000e+00 : f32
    %918 = vector.broadcast %cst_232 : f32 to vector<2x32xf32>
    %919 = arith.addf %918, %917 : vector<2x32xf32>
    %920 = arith.divf %918, %919 : vector<2x32xf32>
    %c0_233 = arith.constant 0 : index
    %c0_234 = arith.constant 0 : index
    %921 = vector.load %arg24[%c0_233, %c0_234] : memref<2x32xf32, #tpu.memory_space<vmem>>, vector<2x32xf32>
    tpu.vector_store %arg24[%c0_233, %c0_234], %920 {strides = array<i32>} : memref<2x32xf32, #tpu.memory_space<vmem>>, vector<2x32xf32>,
    return
  }
}

</mosaic_0001>

<llo_original>
// kernel: div_lstm_vae_forward.1
$region0: #{div_lstm_vae_forward.1}
  #allocation0 [shape = 'u32[]', space=smem, size = 0x4, offset = 0x4, fixed_abs, tag = 'smem constant byte address 0x4 - core index']
  #allocation1 [shape = 'u32[144,128]{1,0:T(1,128)}', space=vmem, size = 0x12000, scoped, tag = 'internal scratch']
  %s0 = inlined_call_operand.vmem [shape: f32[8,2,3], index: 0, kind: input, shape index: {}]
  %s1 = inlined_call_operand.vmem [shape: f32[3,128], index: 1, kind: input, shape index: {}]
  %s2 = inlined_call_operand.vmem [shape: f32[32,128], index: 2, kind: input, shape index: {}]
  %s3 = inlined_call_operand.hbm [shape: f32[1,128], index: 3, kind: input, shape index: {}]
  %s4 = inlined_call_operand.vmem [shape: f32[32,128], index: 4, kind: input, shape index: {}]
  %s5 = inlined_call_operand.vmem [shape: f32[32,128], index: 5, kind: input, shape index: {}]
  %s6 = inlined_call_operand.hbm [shape: f32[1,128], index: 6, kind: input, shape index: {}]
  %s7 = inlined_call_operand.vmem [shape: f32[32,16], index: 7, kind: input, shape index: {}]
  %s8 = inlined_call_operand.vmem [shape: f32[1,16], index: 8, kind: input, shape index: {}]
  %s9 = inlined_call_operand.vmem [shape: f32[2,8], index: 9, kind: input, shape index: {}]
  %s10 = inlined_call_operand.vmem [shape: f32[8,128], index: 10, kind: input, shape index: {}]
  %s11 = inlined_call_operand.vmem [shape: f32[32,128], index: 11, kind: input, shape index: {}]
  %s12 = inlined_call_operand.vmem [shape: f32[1,128], index: 12, kind: input, shape index: {}]
  %s13 = inlined_call_operand.vmem [shape: f32[32,128], index: 13, kind: input, shape index: {}]
  %s14 = inlined_call_operand.vmem [shape: f32[32,128], index: 14, kind: input, shape index: {}]
  %s15 = inlined_call_operand.vmem [shape: f32[1,128], index: 15, kind: input, shape index: {}]
  %s16 = inlined_call_operand.vmem [shape: f32[2,2,32], index: 16, kind: input, shape index: {}]
  %s17 = inlined_call_operand.vmem [shape: f32[2,2,32], index: 17, kind: input, shape index: {}]
  %s18 = inlined_call_operand.vmem [shape: f32[32,8], index: 18, kind: input, shape index: {}]
  %s19 = inlined_call_operand.vmem [shape: f32[1,8], index: 19, kind: input, shape index: {}]
  %s20 = inlined_call_operand.vmem [shape: f32[8,16], index: 20, kind: input, shape index: {}]
  %s21 = inlined_call_operand.vmem [shape: f32[1,16], index: 21, kind: input, shape index: {}]
  %s22 = inlined_call_operand.vmem [shape: f32[16,32], index: 22, kind: input, shape index: {}]
  %s23 = inlined_call_operand.vmem [shape: f32[1,32], index: 23, kind: input, shape index: {}]
  %s24 = inlined_call_operand.vmem [shape: f32[2,32], index: 24, kind: output, shape index: {0}]
  %s25 = inlined_call_operand.hbm [shape: f32[2,8], index: 25, kind: output, shape index: {1}]
  %s26 = inlined_call_operand.hbm [shape: f32[2,8], index: 26, kind: output, shape index: {2}]
  %27 = xla_tuple %s24, %s25, %s26
  %s28 = sld [smem:[#allocation0]]
  $region130: #{div_lstm_vae_forward.1} parent=0
    _
  %s30 = ssub.s32 1, %s28
  %s31 = scalar_select 0, %s30, %s28
  $region1: #{div_lstm_vae_forward.1} parent=0
    #allocation2 [shape = 'u8[512]{0}', space=vmem, size = 0x400, scoped, tag = 'input window, operand 3, single buffered']
    #allocation3 [shape = 's32[1]{0}', space=sflag, size = 0x4, scoped, tag = 'scoped memory for div_lstm_vae_forward.1']
    #allocation4 [shape = 's32[1]{0}', space=sflag, size = 0x4, scoped, tag = 'scoped memory for div_lstm_vae_forward.1']
    #allocation5 [shape = 'u8[512]{0}', space=vmem, size = 0x400, scoped, tag = 'input window, operand 6, single buffered']
    #allocation6 [shape = 's32[1]{0}', space=sflag, size = 0x4, scoped, tag = 'scoped memory for div_lstm_vae_forward.1']
    #allocation7 [shape = 'u8[1024]{0}', space=vmem, size = 0x400, scoped, tag = 'output window, operand 1, single buffered']
    #allocation8 [shape = 'u8[1024]{0}', space=vmem, size = 0x400, scoped, tag = 'output window, operand 2, single buffered']
    #allocation9 [shape = 's32[1]{0}', space=sflag, size = 0x4, scoped, tag = 'scoped memory for div_lstm_vae_forward.1']
    %32 = vsyncpa [#allocation3], 0
    %33 = vsyncpa [#allocation6], 0
    %34 = vsyncpa [#allocation4], 0
    %35 = vsyncpa [#allocation9], 0
    // Predicated region
    $region2: #{div_lstm_vae_forward.1} parent=1 // pred_check
      _
    $region3: #{div_lstm_vae_forward.1} parent=1 // pred_check_branch
      %37 = sbr.rel (0) target = $region5
    $region4: #{div_lstm_vae_forward.1} parent=1 // pred_region
      _
    $region5: #{div_lstm_vae_forward.1} parent=1 // pred_fallthru
      _
    // Predicated region
    $region6: #{div_lstm_vae_forward.1} parent=1 // pred_check
      _
    $region7: #{div_lstm_vae_forward.1} parent=1 // pred_check_branch
      %39 = sbr.rel (0) target = $region9
    $region8: #{div_lstm_vae_forward.1} parent=1 // pred_region
      _
    $region9: #{div_lstm_vae_forward.1} parent=1 // pred_fallthru
      _
    // Predicated region
    $region10: #{div_lstm_vae_forward.1} parent=1 // pred_check
      _
    $region11: #{div_lstm_vae_forward.1} parent=1 // pred_check_branch
      %41 = sbr.rel (0) target = $region13
    $region12: #{div_lstm_vae_forward.1} parent=1 // pred_region
      _
    $region13: #{div_lstm_vae_forward.1} parent=1 // pred_fallthru
      _
    // Predicated region
    $region14: #{div_lstm_vae_forward.1} parent=1 // pred_check
      _
    $region15: #{div_lstm_vae_forward.1} parent=1 // pred_check_branch
      %43 = sbr.rel (0) target = $region17
    $region16: #{div_lstm_vae_forward.1} parent=1 // pred_region
      %s45 = ssub.s32 16, 16
      %46 = vsyncadd [#allocation3], %s45
      %s48 = sshll.u32 [#allocation2], 4
      %s49 = int_to_ptr.vmem [resolvable:$true] %s48
      %51 = dma.hbm_to_vmem [thread:$0]  %s3, 16, %s49, [#allocation3]
    $region17: #{div_lstm_vae_forward.1} parent=1 // pred_fallthru
      _
    // Predicated region
    $region18: #{div_lstm_vae_forward.1} parent=1 // pred_check
      _
    $region19: #{div_lstm_vae_forward.1} parent=1 // pred_check_branch
      %53 = sbr.rel (0) target = $region21
    $region20: #{div_lstm_vae_forward.1} parent=1 // pred_region
      _
    $region21: #{div_lstm_vae_forward.1} parent=1 // pred_fallthru
      _
    // Predicated region
    $region22: #{div_lstm_vae_forward.1} parent=1 // pred_check
      _
    $region23: #{div_lstm_vae_forward.1} parent=1 // pred_check_branch
      %55 = sbr.rel (0) target = $region25
    $region24: #{div_lstm_vae_forward.1} parent=1 // pred_region
      _
    $region25: #{div_lstm_vae_forward.1} parent=1 // pred_fallthru
      _
    // Predicated region
    $region26: #{div_lstm_vae_forward.1} parent=1 // pred_check
      _
    $region27: #{div_lstm_vae_forward.1} parent=1 // pred_check_branch
      %57 = sbr.rel (0) target = $region29
    $region28: #{div_lstm_vae_forward.1} parent=1 // pred_region
      %s59 = ssub.s32 16, 16
      %60 = vsyncadd [#allocation6], %s59
      %s62 = sshll.u32 [#allocation5], 4
      %s63 = int_to_ptr.vmem [resolvable:$true] %s62
      %65 = dma.hbm_to_vmem [thread:$0]  %s6, 16, %s63, [#allocation6]
    $region29: #{div_lstm_vae_forward.1} parent=1 // pred_fallthru
      _
    // Predicated region
    $region30: #{div_lstm_vae_forward.1} parent=1 // pred_check
      _
    $region31: #{div_lstm_vae_forward.1} parent=1 // pred_check_branch
      %67 = sbr.rel (0) target = $region33
    $region32: #{div_lstm_vae_forward.1} parent=1 // pred_region
      _
    $region33: #{div_lstm_vae_forward.1} parent=1 // pred_fallthru
      _
    // Predicated region
    $region34: #{div_lstm_vae_forward.1} parent=1 // pred_check
      _
    $region35: #{div_lstm_vae_forward.1} parent=1 // pred_check_branch
      %69 = sbr.rel (0) target = $region37
    $region36: #{div_lstm_vae_forward.1} parent=1 // pred_region
      _
    $region37: #{div_lstm_vae_forward.1} parent=1 // pred_fallthru
      _
    // Predicated region
    $region38: #{div_lstm_vae_forward.1} parent=1 // pred_check
      _
    $region39: #{div_lstm_vae_forward.1} parent=1 // pred_check_branch
      %71 = sbr.rel (0) target = $region41
    $region40: #{div_lstm_vae_forward.1} parent=1 // pred_region
      _
    $region41: #{div_lstm_vae_forward.1} parent=1 // pred_fallthru
      _
    // Predicated region
    $region42: #{div_lstm_vae_forward.1} parent=1 // pred_check
      _
    $region43: #{div_lstm_vae_forward.1} parent=1 // pred_check_branch
      %73 = sbr.rel (0) target = $region45
    $region44: #{div_lstm_vae_forward.1} parent=1 // pred_region
      _
    $region45: #{div_lstm_vae_forward.1} parent=1 // pred_fallthru
      _
    // Predicated region
    $region46: #{div_lstm_vae_forward.1} parent=1 // pred_check
      _
    $region47: #{div_lstm_vae_forward.1} parent=1 // pred_check_branch
      %75 = sbr.rel (0) target = $region49
    $region48: #{div_lstm_vae_forward.1} parent=1 // pred_region
      _
    $region49: #{div_lstm_vae_forward.1} parent=1 // pred_fallthru
      _
    // Predicated region
    $region50: #{div_lstm_vae_forward.1} parent=1 // pred_check
      _
    $region51: #{div_lstm_vae_forward.1} parent=1 // pred_check_branch
      %77 = sbr.rel (0) target = $region53
    $region52: #{div_lstm_vae_forward.1} parent=1 // pred_region
      _
    $region53: #{div_lstm_vae_forward.1} parent=1 // pred_fallthru
      _
    // Predicated region
    $region54: #{div_lstm_vae_forward.1} parent=1 // pred_check
      _
    $region55: #{div_lstm_vae_forward.1} parent=1 // pred_check_branch
      %79 = sbr.rel (0) target = $region57
    $region56: #{div_lstm_vae_forward.1} parent=1 // pred_region
      _
    $region57: #{div_lstm_vae_forward.1} parent=1 // pred_fallthru
      _
    // Predicated region
    $region58: #{div_lstm_vae_forward.1} parent=1 // pred_check
      _
    $region59: #{div_lstm_vae_forward.1} parent=1 // pred_check_branch
      %81 = sbr.rel (0) target = $region61
    $region60: #{div_lstm_vae_forward.1} parent=1 // pred_region
      _
    $region61: #{div_lstm_vae_forward.1} parent=1 // pred_fallthru
      _
    // Predicated region
    $region62: #{div_lstm_vae_forward.1} parent=1 // pred_check
      _
    $region63: #{div_lstm_vae_forward.1} parent=1 // pred_check_branch
      %83 = sbr.rel (0) target = $region65
    $region64: #{div_lstm_vae_forward.1} parent=1 // pred_region
      _
    $region65: #{div_lstm_vae_forward.1} parent=1 // pred_fallthru
      _
    // Predicated region
    $region66: #{div_lstm_vae_forward.1} parent=1 // pred_check
      _
    $region67: #{div_lstm_vae_forward.1} parent=1 // pred_check_branch
      %85 = sbr.rel (0) target = $region69
    $region68: #{div_lstm_vae_forward.1} parent=1 // pred_region
      _
    $region69: #{div_lstm_vae_forward.1} parent=1 // pred_fallthru
      _
    // Predicated region
    $region70: #{div_lstm_vae_forward.1} parent=1 // pred_check
      _
    $region71: #{div_lstm_vae_forward.1} parent=1 // pred_check_branch
      %87 = sbr.rel (0) target = $region73
    $region72: #{div_lstm_vae_forward.1} parent=1 // pred_region
      _
    $region73: #{div_lstm_vae_forward.1} parent=1 // pred_fallthru
      _
    // Predicated region
    $region74: #{div_lstm_vae_forward.1} parent=1 // pred_check
      _
    $region75: #{div_lstm_vae_forward.1} parent=1 // pred_check_branch
      %89 = sbr.rel (0) target = $region77
    $region76: #{div_lstm_vae_forward.1} parent=1 // pred_region
      _
    $region77: #{div_lstm_vae_forward.1} parent=1 // pred_fallthru
      _
    // Predicated region
    $region78: #{div_lstm_vae_forward.1} parent=1 // pred_check
      _
    $region79: #{div_lstm_vae_forward.1} parent=1 // pred_check_branch
      %91 = sbr.rel (0) target = $region81
    $region80: #{div_lstm_vae_forward.1} parent=1 // pred_region
      _
    $region81: #{div_lstm_vae_forward.1} parent=1 // pred_fallthru
      _
    // Predicated region
    $region82: #{div_lstm_vae_forward.1} parent=1 // pred_check
      _
    $region83: #{div_lstm_vae_forward.1} parent=1 // pred_check_branch
      %93 = sbr.rel (0) target = $region85
    $region84: #{div_lstm_vae_forward.1} parent=1 // pred_region
      _
    $region85: #{div_lstm_vae_forward.1} parent=1 // pred_fallthru
      _
    // Predicated region
    $region86: #{div_lstm_vae_forward.1} parent=1 // pred_check
      _
    $region87: #{div_lstm_vae_forward.1} parent=1 // pred_check_branch
      %95 = sbr.rel (0) target = $region89
    $region88: #{div_lstm_vae_forward.1} parent=1 // pred_region
      _
    $region89: #{div_lstm_vae_forward.1} parent=1 // pred_fallthru
      _
    // Predicated region
    $region90: #{div_lstm_vae_forward.1} parent=1 // pred_check
      _
    $region91: #{div_lstm_vae_forward.1} parent=1 // pred_check_branch
      %97 = sbr.rel (0) target = $region93
    $region92: #{div_lstm_vae_forward.1} parent=1 // pred_region
      _
    $region93: #{div_lstm_vae_forward.1} parent=1 // pred_fallthru
      _
    // Predicated region
    $region94: #{div_lstm_vae_forward.1} parent=1 // pred_check
      _
    $region95: #{div_lstm_vae_forward.1} parent=1 // pred_check_branch
      %99 = sbr.rel (0) target = $region97
    $region96: #{div_lstm_vae_forward.1} parent=1 // pred_region
      _
    $region97: #{div_lstm_vae_forward.1} parent=1 // pred_fallthru
      _
    // Predicated region
    $region98: #{div_lstm_vae_forward.1} parent=1 // pred_check
      _
    $region99: #{div_lstm_vae_forward.1} parent=1 // pred_check_branch
      %101 = sbr.rel (0) target = $region101
    $region100: #{div_lstm_vae_forward.1} parent=1 // pred_region
      %102 = dma.done [#allocation3], 16
    $region101: #{div_lstm_vae_forward.1} parent=1 // pred_fallthru
      _
    // Predicated region
    $region102: #{div_lstm_vae_forward.1} parent=1 // pred_check
      _
    $region103: #{div_lstm_vae_forward.1} parent=1 // pred_check_branch
      %104 = sbr.rel (0) target = $region105
    $region104: #{div_lstm_vae_forward.1} parent=1 // pred_region
      %105 = dma.done [#allocation6], 16
    $region105: #{div_lstm_vae_forward.1} parent=1 // pred_fallthru
      _
    %v106 = vld [vmem:[%s1] sm:$0x7]
    %v107 = vld [vmem:[%s2] sm:$0xff]
    %v108 = vld [vmem:[%s2 + $0x8] sm:$0xff]
    %v109 = vld [vmem:[%s2 + $0x10] sm:$0xff]
    %v110 = vld [vmem:[%s2 + $0x18] sm:$0xff]
    %v111 = vld [vmem:[#allocation2] sm:$0x1]
    %v112 = vld [vmem:[%s4] sm:$0xff]
    %v113 = vld [vmem:[%s4 + $0x8] sm:$0xff]
    %v114 = vld [vmem:[%s4 + $0x10] sm:$0xff]
    %v115 = vld [vmem:[%s4 + $0x18] sm:$0xff]
    %v116 = vld [vmem:[%s5] sm:$0xff]
    %v117 = vld [vmem:[%s5 + $0x8] sm:$0xff]
    %v118 = vld [vmem:[%s5 + $0x10] sm:$0xff]
    %v119 = vld [vmem:[%s5 + $0x18] sm:$0xff]
    %v120 = vld [vmem:[#allocation5] sm:$0x1]
    %v121 = vld [vmem:[%s10] sm:$0xff]
    %v122 = vld [vmem:[%s11] sm:$0xff]
    %v123 = vld [vmem:[%s11 + $0x8] sm:$0xff]
    %v124 = vld [vmem:[%s11 + $0x10] sm:$0xff]
    %v125 = vld [vmem:[%s11 + $0x18] sm:$0xff]
    %v126 = vld [vmem:[%s12] sm:$0x1]
    %v127 = vld [vmem:[%s13] sm:$0xff]
    %v128 = vld [vmem:[%s13 + $0x8] sm:$0xff]
    %v129 = vld [vmem:[%s13 + $0x10] sm:$0xff]
    %v130 = vld [vmem:[%s13 + $0x18] sm:$0xff]
    %v131 = vld [vmem:[%s14] sm:$0xff]
    %v132 = vld [vmem:[%s14 + $0x8] sm:$0xff]
    %v133 = vld [vmem:[%s14 + $0x10] sm:$0xff]
    %v134 = vld [vmem:[%s14 + $0x18] sm:$0xff]
    %v135 = vld [vmem:[%s15] sm:$0x1]
    %v136 = vld [vmem:[%s0] sm:$0x3]
    %v138 = vlaneseq
    %v139 = vshrl.u32 %v138, 7
    %v140 = vsub.s32 0, %v139
    %v141 = vrot.slane %v111, %v140
    %vm143 = vcmask 23552
    %v145 = vsel %vm143, %v136, 0
    %vm147 = vcmask 1042432
    %v149 = vsel %vm147, %v106, 0
    %151 = vmatprep.subr.mxu0 0.0
    %152 = vmatpush1.msra.mxu0 0.0
    %153 = vmatprep.subr.mxu0 0.0
    %154 = vmatpush1.msra.mxu0 0.0
    %155 = vmatprep.subr.mxu0 0.0
    %156 = vmatpush1.msra.mxu0 0.0
    %157 = vmatprep.subr.mxu0 0.0
    %158 = vmatpush1.msra.mxu0 0.0
    %159 = vmatprep.subr.mxu0 0.0
    %160 = vmatpush1.msra.mxu0 0.0
    %161 = vmatprep.subr.mxu0 0.0
    %162 = vmatpush1.msra.mxu0 0.0
    %163 = vmatprep.subr.mxu0 0.0
    %164 = vmatpush1.msra.mxu0 0.0
    %165 = vmatprep.subr.mxu0 0.0
    %166 = vmatpush1.msra.mxu0 0.0
    %167 = vmatprep.subr.mxu0 0.0
    %168 = vmatpush1.msra.mxu0 0.0
    %169 = vmatprep.subr.mxu0 0.0
    %170 = vmatpush1.msra.mxu0 0.0
    %171 = vmatprep.subr.mxu0 0.0
    %172 = vmatpush1.msra.mxu0 0.0
    %173 = vmatprep.subr.mxu0 0.0
    %174 = vmatpush1.msra.mxu0 0.0
    %175 = vmatprep.subr.mxu0 0.0
    %176 = vmatpush1.msra.mxu0 0.0
    %177 = vmatprep.subr.mxu0 0.0
    %178 = vmatpush1.msra.mxu0 0.0
    %179 = vmatprep.subr.mxu0 0.0
    %180 = vmatpush1.msra.mxu0 0.0
    %181 = vmatprep.subr.mxu0 0.0
    %182 = vmatpush1.msra.mxu0 %v149
    %183 = vmatprep.subr.mxu0 0.0
    %184 = vmatpush2.msra.mxu0 0.0
    %185 = vmatprep.subr.mxu0 0.0
    %186 = vmatpush2.msra.mxu0 0.0
    %187 = vmatprep.subr.mxu0 0.0
    %188 = vmatpush2.msra.mxu0 0.0
    %189 = vmatprep.subr.mxu0 0.0
    %190 = vmatpush2.msra.mxu0 0.0
    %191 = vmatprep.subr.mxu0 0.0
    %192 = vmatpush2.msra.mxu0 0.0
    %193 = vmatprep.subr.mxu0 0.0
    %194 = vmatpush2.msra.mxu0 0.0
    %195 = vmatprep.subr.mxu0 0.0
    %196 = vmatpush2.msra.mxu0 0.0
    %197 = vmatprep.subr.mxu0 0.0
    %198 = vmatpush2.msra.mxu0 0.0
    %199 = vmatprep.subr.mxu0 0.0
    %200 = vmatpush2.msra.mxu0 0.0
    %201 = vmatprep.subr.mxu0 0.0
    %202 = vmatpush2.msra.mxu0 0.0
    %203 = vmatprep.subr.mxu0 0.0
    %204 = vmatpush2.msra.mxu0 0.0
    %205 = vmatprep.subr.mxu0 0.0
    %206 = vmatpush2.msra.mxu0 0.0
    %207 = vmatprep.subr.mxu0 0.0
    %208 = vmatpush2.msra.mxu0 0.0
    %209 = vmatprep.subr.mxu0 0.0
    %210 = vmatpush2.msra.mxu0 0.0
    %211 = vmatprep.subr.mxu0 0.0
    %212 = vmatpush2.msra.mxu0 0.0
    %213 = vmatprep.subr.mxu0 0.0
    %214 = vmatpush2.msra.mxu0 0.0
    %215 = vmatprep.mubr.f32.mxu0 0.0
    %216 = vmatmul.mubr.f32.gmra.mxu0 %v145
    %v217 = vpop.f32.mrf.mxu0
    %v218 = vadd.f32 %v141, %v217
    %v219 = vpop.f32.mrf.mxu0
    %220 = vdwg.mxu0
    %vm221 = vcmask 261120
    %v223 = vsel %vm221, 0.0, 0
    %225 = vmatprep.subr.mxu0 0.0
    %226 = vmatpush1.msra.mxu0 0.0
    %227 = vmatprep.subr.mxu0 0.0
    %228 = vmatpush1.msra.mxu0 0.0
    %229 = vmatprep.subr.mxu0 0.0
    %230 = vmatpush1.msra.mxu0 0.0
    %231 = vmatprep.subr.mxu0 0.0
    %232 = vmatpush1.msra.mxu0 0.0
    %233 = vmatprep.subr.mxu0 0.0
    %234 = vmatpush1.msra.mxu0 0.0
    %235 = vmatprep.subr.mxu0 0.0
    %236 = vmatpush1.msra.mxu0 0.0
    %237 = vmatprep.subr.mxu0 0.0
    %238 = vmatpush1.msra.mxu0 0.0
    %239 = vmatprep.subr.mxu0 0.0
    %240 = vmatpush1.msra.mxu0 0.0
    %241 = vmatprep.subr.mxu0 0.0
    %242 = vmatpush1.msra.mxu0 0.0
    %243 = vmatprep.subr.mxu0 0.0
    %244 = vmatpush1.msra.mxu0 0.0
    %245 = vmatprep.subr.mxu0 0.0
    %246 = vmatpush1.msra.mxu0 0.0
    %247 = vmatprep.subr.mxu0 0.0
    %248 = vmatpush1.msra.mxu0 0.0
    %249 = vmatprep.subr.mxu0 0.0
    %250 = vmatpush1.msra.mxu0 %v110
    %251 = vmatprep.subr.mxu0 0.0
    %252 = vmatpush1.msra.mxu0 %v109
    %253 = vmatprep.subr.mxu0 0.0
    %254 = vmatpush1.msra.mxu0 %v108
    %255 = vmatprep.subr.mxu0 0.0
    %256 = vmatpush1.msra.mxu0 %v107
    %257 = vmatprep.subr.mxu0 0.0
    %258 = vmatpush2.msra.mxu0 0.0
    %259 = vmatprep.subr.mxu0 0.0
    %260 = vmatpush2.msra.mxu0 0.0
    %261 = vmatprep.subr.mxu0 0.0
    %262 = vmatpush2.msra.mxu0 0.0
    %263 = vmatprep.subr.mxu0 0.0
    %264 = vmatpush2.msra.mxu0 0.0
    %265 = vmatprep.subr.mxu0 0.0
    %266 = vmatpush2.msra.mxu0 0.0
    %267 = vmatprep.subr.mxu0 0.0
    %268 = vmatpush2.msra.mxu0 0.0
    %269 = vmatprep.subr.mxu0 0.0
    %270 = vmatpush2.msra.mxu0 0.0
    %271 = vmatprep.subr.mxu0 0.0
    %272 = vmatpush2.msra.mxu0 0.0
    %273 = vmatprep.subr.mxu0 0.0
    %274 = vmatpush2.msra.mxu0 0.0
    %275 = vmatprep.subr.mxu0 0.0
    %276 = vmatpush2.msra.mxu0 0.0
    %277 = vmatprep.subr.mxu0 0.0
    %278 = vmatpush2.msra.mxu0 0.0
    %279 = vmatprep.subr.mxu0 0.0
    %280 = vmatpush2.msra.mxu0 0.0
    %281 = vmatprep.subr.mxu0 0.0
    %282 = vmatpush2.msra.mxu0 0.0
    %283 = vmatprep.subr.mxu0 0.0
    %284 = vmatpush2.msra.mxu0 0.0
    %285 = vmatprep.subr.mxu0 0.0
    %286 = vmatpush2.msra.mxu0 0.0
    %287 = vmatprep.subr.mxu0 0.0
    %288 = vmatpush2.msra.mxu0 0.0
    %289 = vmatprep.mubr.f32.mxu0 0.0
    %290 = vmatmul.mubr.f32.gmra.mxu0 %v223
    %v291 = vpop.f32.mrf.mxu0
    %v292 = vadd.f32 0.0, %v291
    %v293 = vpop.f32.mrf.mxu0
    %294 = vdwg.mxu0
    %v295 = vadd.f32 %v218, %v292
    %v296 = vxor.u32 %v295, 2147483648
    %v297 = vmul.f32 %v296, 1.442695
    %v298 = vpow.pop %v297
    %v299 = vadd.f32 %v298, 1.0
    %v300 = vrcp.pop %v299
    %v301 = vmul.f32 1.0, %v300
    %v302 = vtanh.pop %v295
    %v303 = vlaneseq
    %v304 = vand.u32 %v303, 127
    %vm305 = vcmp.ge.s32.totalorder %v304, 64
    %vm306 = vcmp.lt.s32.totalorder %v304, 96
    %vm307 = vmand %vm305, %vm306
    %v308 = vsel %vm307, %v302, %v301
    %v309 = vmul.f32 %v308, 0.0
    %311 = vrot.lane.b32.xlu0 %v308, 64
    %v312 = vpop.permute.xlu0 %311
    %v314 = vmul.f32 %v308, %v312
    %316 = vrot.lane.b32.xlu0 %v314, 32
    %v317 = vpop.permute.xlu0 %316
    %v319 = vadd.f32 %v309, %v317
    %v320 = vtanh.pop %v319
    %322 = vrot.lane.b32.xlu0 %v320, 64
    %v323 = vpop.permute.xlu0 %322
    %v325 = vmul.f32 %v308, %v323
    %v327 = vlaneseq
    %v328 = vshrl.u32 %v327, 7
    %v329 = vsub.s32 0, %v328
    %v330 = vrot.slane %v120, %v329
    %333 = vrot.lane.b32.xlu0 %v325, 32
    %v334 = vpop.permute.xlu0 %333
    %v335 = vsel %vm221, %v334, 0
    %337 = vmatprep.subr.mxu0 0.0
    %338 = vmatpush1.msra.mxu0 0.0
    %339 = vmatprep.subr.mxu0 0.0
    %340 = vmatpush1.msra.mxu0 0.0
    %341 = vmatprep.subr.mxu0 0.0
    %342 = vmatpush1.msra.mxu0 0.0
    %343 = vmatprep.subr.mxu0 0.0
    %344 = vmatpush1.msra.mxu0 0.0
    %345 = vmatprep.subr.mxu0 0.0
    %346 = vmatpush1.msra.mxu0 0.0
    %347 = vmatprep.subr.mxu0 0.0
    %348 = vmatpush1.msra.mxu0 0.0
    %349 = vmatprep.subr.mxu0 0.0
    %350 = vmatpush1.msra.mxu0 0.0
    %351 = vmatprep.subr.mxu0 0.0
    %352 = vmatpush1.msra.mxu0 0.0
    %353 = vmatprep.subr.mxu0 0.0
    %354 = vmatpush1.msra.mxu0 0.0
    %355 = vmatprep.subr.mxu0 0.0
    %356 = vmatpush1.msra.mxu0 0.0
    %357 = vmatprep.subr.mxu0 0.0
    %358 = vmatpush1.msra.mxu0 0.0
    %359 = vmatprep.subr.mxu0 0.0
    %360 = vmatpush1.msra.mxu0 0.0
    %361 = vmatprep.subr.mxu0 0.0
    %362 = vmatpush1.msra.mxu0 %v115
    %363 = vmatprep.subr.mxu0 0.0
    %364 = vmatpush1.msra.mxu0 %v114
    %365 = vmatprep.subr.mxu0 0.0
    %366 = vmatpush1.msra.mxu0 %v113
    %367 = vmatprep.subr.mxu0 0.0
    %368 = vmatpush1.msra.mxu0 %v112
    %369 = vmatprep.subr.mxu0 0.0
    %370 = vmatpush2.msra.mxu0 0.0
    %371 = vmatprep.subr.mxu0 0.0
    %372 = vmatpush2.msra.mxu0 0.0
    %373 = vmatprep.subr.mxu0 0.0
    %374 = vmatpush2.msra.mxu0 0.0
    %375 = vmatprep.subr.mxu0 0.0
    %376 = vmatpush2.msra.mxu0 0.0
    %377 = vmatprep.subr.mxu0 0.0
    %378 = vmatpush2.msra.mxu0 0.0
    %379 = vmatprep.subr.mxu0 0.0
    %380 = vmatpush2.msra.mxu0 0.0
    %381 = vmatprep.subr.mxu0 0.0
    %382 = vmatpush2.msra.mxu0 0.0
    %383 = vmatprep.subr.mxu0 0.0
    %384 = vmatpush2.msra.mxu0 0.0
    %385 = vmatprep.subr.mxu0 0.0
    %386 = vmatpush2.msra.mxu0 0.0
    %387 = vmatprep.subr.mxu0 0.0
    %388 = vmatpush2.msra.mxu0 0.0
    %389 = vmatprep.subr.mxu0 0.0
    %390 = vmatpush2.msra.mxu0 0.0
    %391 = vmatprep.subr.mxu0 0.0
    %392 = vmatpush2.msra.mxu0 0.0
    %393 = vmatprep.subr.mxu0 0.0
    %394 = vmatpush2.msra.mxu0 0.0
    %395 = vmatprep.subr.mxu0 0.0
    %396 = vmatpush2.msra.mxu0 0.0
    %397 = vmatprep.subr.mxu0 0.0
    %398 = vmatpush2.msra.mxu0 0.0
    %399 = vmatprep.subr.mxu0 0.0
    %400 = vmatpush2.msra.mxu0 0.0
    %401 = vmatprep.mubr.f32.mxu0 0.0
    %402 = vmatmul.mubr.f32.gmra.mxu0 %v335
    %v403 = vpop.f32.mrf.mxu0
    %v404 = vadd.f32 %v330, %v403
    %v405 = vpop.f32.mrf.mxu0
    %406 = vdwg.mxu0
    %407 = vmatprep.subr.mxu0 0.0
    %408 = vmatpush1.msra.mxu0 0.0
    %409 = vmatprep.subr.mxu0 0.0
    %410 = vmatpush1.msra.mxu0 0.0
    %411 = vmatprep.subr.mxu0 0.0
    %412 = vmatpush1.msra.mxu0 0.0
    %413 = vmatprep.subr.mxu0 0.0
    %414 = vmatpush1.msra.mxu0 0.0
    %415 = vmatprep.subr.mxu0 0.0
    %416 = vmatpush1.msra.mxu0 0.0
    %417 = vmatprep.subr.mxu0 0.0
    %418 = vmatpush1.msra.mxu0 0.0
    %419 = vmatprep.subr.mxu0 0.0
    %420 = vmatpush1.msra.mxu0 0.0
    %421 = vmatprep.subr.mxu0 0.0
    %422 = vmatpush1.msra.mxu0 0.0
    %423 = vmatprep.subr.mxu0 0.0
    %424 = vmatpush1.msra.mxu0 0.0
    %425 = vmatprep.subr.mxu0 0.0
    %426 = vmatpush1.msra.mxu0 0.0
    %427 = vmatprep.subr.mxu0 0.0
    %428 = vmatpush1.msra.mxu0 0.0
    %429 = vmatprep.subr.mxu0 0.0
    %430 = vmatpush1.msra.mxu0 0.0
    %431 = vmatprep.subr.mxu0 0.0
    %432 = vmatpush1.msra.mxu0 %v119
    %433 = vmatprep.subr.mxu0 0.0
    %434 = vmatpush1.msra.mxu0 %v118
    %435 = vmatprep.subr.mxu0 0.0
    %436 = vmatpush1.msra.mxu0 %v117
    %437 = vmatprep.subr.mxu0 0.0
    %438 = vmatpush1.msra.mxu0 %v116
    %439 = vmatprep.subr.mxu0 0.0
    %440 = vmatpush2.msra.mxu0 0.0
    %441 = vmatprep.subr.mxu0 0.0
    %442 = vmatpush2.msra.mxu0 0.0
    %443 = vmatprep.subr.mxu0 0.0
    %444 = vmatpush2.msra.mxu0 0.0
    %445 = vmatprep.subr.mxu0 0.0
    %446 = vmatpush2.msra.mxu0 0.0
    %447 = vmatprep.subr.mxu0 0.0
    %448 = vmatpush2.msra.mxu0 0.0
    %449 = vmatprep.subr.mxu0 0.0
    %450 = vmatpush2.msra.mxu0 0.0
    %451 = vmatprep.subr.mxu0 0.0
    %452 = vmatpush2.msra.mxu0 0.0
    %453 = vmatprep.subr.mxu0 0.0
    %454 = vmatpush2.msra.mxu0 0.0
    %455 = vmatprep.subr.mxu0 0.0
    %456 = vmatpush2.msra.mxu0 0.0
    %457 = vmatprep.subr.mxu0 0.0
    %458 = vmatpush2.msra.mxu0 0.0
    %459 = vmatprep.subr.mxu0 0.0
    %460 = vmatpush2.msra.mxu0 0.0
    %461 = vmatprep.subr.mxu0 0.0
    %462 = vmatpush2.msra.mxu0 0.0
    %463 = vmatprep.subr.mxu0 0.0
    %464 = vmatpush2.msra.mxu0 0.0
    %465 = vmatprep.subr.mxu0 0.0
    %466 = vmatpush2.msra.mxu0 0.0
    %467 = vmatprep.subr.mxu0 0.0
    %468 = vmatpush2.msra.mxu0 0.0
    %469 = vmatprep.subr.mxu0 0.0
    %470 = vmatpush2.msra.mxu0 0.0
    %471 = vmatprep.mubr.f32.mxu0 0.0
    %472 = vmatmul.mubr.f32.gmra.mxu0 %v223
    %v473 = vpop.f32.mrf.mxu0
    %v474 = vadd.f32 0.0, %v473
    %v475 = vpop.f32.mrf.mxu0
    %476 = vdwg.mxu0
    %v477 = vadd.f32 %v404, %v474
    %v478 = vxor.u32 %v477, 2147483648
    %v479 = vmul.f32 %v478, 1.442695
    %v480 = vpow.pop %v479
    %v481 = vadd.f32 %v480, 1.0
    %v482 = vrcp.pop %v481
    %v483 = vmul.f32 1.0, %v482
    %v484 = vtanh.pop %v477
    %v485 = vsel %vm307, %v484, %v483
    %v486 = vmul.f32 %v485, 0.0
    %488 = vrot.lane.b32.xlu0 %v485, 64
    %v489 = vpop.permute.xlu0 %488
    %v491 = vmul.f32 %v485, %v489
    %493 = vrot.lane.b32.xlu0 %v491, 32
    %v494 = vpop.permute.xlu0 %493
    %v496 = vadd.f32 %v486, %v494
    %v497 = vtanh.pop %v496
    %499 = vrot.lane.b32.xlu0 %v497, 64
    %v500 = vpop.permute.xlu0 %499
    %v502 = vmul.f32 %v485, %v500
    %s503 = scalar_lea.vmem %s0, 2
    %v504 = vld [vmem:[%s503] sm:$0x3]
    %v506 = vsel %vm143, %v504, 0
    %508 = vmatprep.subr.mxu0 0.0
    %509 = vmatpush1.msra.mxu0 0.0
    %510 = vmatprep.subr.mxu0 0.0
    %511 = vmatpush1.msra.mxu0 0.0
    %512 = vmatprep.subr.mxu0 0.0
    %513 = vmatpush1.msra.mxu0 0.0
    %514 = vmatprep.subr.mxu0 0.0
    %515 = vmatpush1.msra.mxu0 0.0
    %516 = vmatprep.subr.mxu0 0.0
    %517 = vmatpush1.msra.mxu0 0.0
    %518 = vmatprep.subr.mxu0 0.0
    %519 = vmatpush1.msra.mxu0 0.0
    %520 = vmatprep.subr.mxu0 0.0
    %521 = vmatpush1.msra.mxu0 0.0
    %522 = vmatprep.subr.mxu0 0.0
    %523 = vmatpush1.msra.mxu0 0.0
    %524 = vmatprep.subr.mxu0 0.0
    %525 = vmatpush1.msra.mxu0 0.0
    %526 = vmatprep.subr.mxu0 0.0
    %527 = vmatpush1.msra.mxu0 0.0
    %528 = vmatprep.subr.mxu0 0.0
    %529 = vmatpush1.msra.mxu0 0.0
    %530 = vmatprep.subr.mxu0 0.0
    %531 = vmatpush1.msra.mxu0 0.0
    %532 = vmatprep.subr.mxu0 0.0
    %533 = vmatpush1.msra.mxu0 0.0
    %534 = vmatprep.subr.mxu0 0.0
    %535 = vmatpush1.msra.mxu0 0.0
    %536 = vmatprep.subr.mxu0 0.0
    %537 = vmatpush1.msra.mxu0 0.0
    %538 = vmatprep.subr.mxu0 0.0
    %539 = vmatpush1.msra.mxu0 %v149
    %540 = vmatprep.subr.mxu0 0.0
    %541 = vmatpush2.msra.mxu0 0.0
    %542 = vmatprep.subr.mxu0 0.0
    %543 = vmatpush2.msra.mxu0 0.0
    %544 = vmatprep.subr.mxu0 0.0
    %545 = vmatpush2.msra.mxu0 0.0
    %546 = vmatprep.subr.mxu0 0.0
    %547 = vmatpush2.msra.mxu0 0.0
    %548 = vmatprep.subr.mxu0 0.0
    %549 = vmatpush2.msra.mxu0 0.0
    %550 = vmatprep.subr.mxu0 0.0
    %551 = vmatpush2.msra.mxu0 0.0
    %552 = vmatprep.subr.mxu0 0.0
    %553 = vmatpush2.msra.mxu0 0.0
    %554 = vmatprep.subr.mxu0 0.0
    %555 = vmatpush2.msra.mxu0 0.0
    %556 = vmatprep.subr.mxu0 0.0
    %557 = vmatpush2.msra.mxu0 0.0
    %558 = vmatprep.subr.mxu0 0.0
    %559 = vmatpush2.msra.mxu0 0.0
    %560 = vmatprep.subr.mxu0 0.0
    %561 = vmatpush2.msra.mxu0 0.0
    %562 = vmatprep.subr.mxu0 0.0
    %563 = vmatpush2.msra.mxu0 0.0
    %564 = vmatprep.subr.mxu0 0.0
    %565 = vmatpush2.msra.mxu0 0.0
    %566 = vmatprep.subr.mxu0 0.0
    %567 = vmatpush2.msra.mxu0 0.0
    %568 = vmatprep.subr.mxu0 0.0
    %569 = vmatpush2.msra.mxu0 0.0
    %570 = vmatprep.subr.mxu0 0.0
    %571 = vmatpush2.msra.mxu0 0.0
    %572 = vmatprep.mubr.f32.mxu0 0.0
    %573 = vmatmul.mubr.f32.gmra.mxu0 %v506
    %v574 = vpop.f32.mrf.mxu0
    %v575 = vadd.f32 %v141, %v574
    %v576 = vpop.f32.mrf.mxu0
    %577 = vdwg.mxu0
    %578 = vmatprep.subr.mxu0 0.0
    %579 = vmatpush1.msra.mxu0 0.0
    %580 = vmatprep.subr.mxu0 0.0
    %581 = vmatpush1.msra.mxu0 0.0
    %582 = vmatprep.subr.mxu0 0.0
    %583 = vmatpush1.msra.mxu0 0.0
    %584 = vmatprep.subr.mxu0 0.0
    %585 = vmatpush1.msra.mxu0 0.0
    %586 = vmatprep.subr.mxu0 0.0
    %587 = vmatpush1.msra.mxu0 0.0
    %588 = vmatprep.subr.mxu0 0.0
    %589 = vmatpush1.msra.mxu0 0.0
    %590 = vmatprep.subr.mxu0 0.0
    %591 = vmatpush1.msra.mxu0 0.0
    %592 = vmatprep.subr.mxu0 0.0
    %593 = vmatpush1.msra.mxu0 0.0
    %594 = vmatprep.subr.mxu0 0.0
    %595 = vmatpush1.msra.mxu0 0.0
    %596 = vmatprep.subr.mxu0 0.0
    %597 = vmatpush1.msra.mxu0 0.0
    %598 = vmatprep.subr.mxu0 0.0
    %599 = vmatpush1.msra.mxu0 0.0
    %600 = vmatprep.subr.mxu0 0.0
    %601 = vmatpush1.msra.mxu0 0.0
    %602 = vmatprep.subr.mxu0 0.0
    %603 = vmatpush1.msra.mxu0 %v110
    %604 = vmatprep.subr.mxu0 0.0
    %605 = vmatpush1.msra.mxu0 %v109
    %606 = vmatprep.subr.mxu0 0.0
    %607 = vmatpush1.msra.mxu0 %v108
    %608 = vmatprep.subr.mxu0 0.0
    %609 = vmatpush1.msra.mxu0 %v107
    %610 = vmatprep.subr.mxu0 0.0
    %611 = vmatpush2.msra.mxu0 0.0
    %612 = vmatprep.subr.mxu0 0.0
    %613 = vmatpush2.msra.mxu0 0.0
    %614 = vmatprep.subr.mxu0 0.0
    %615 = vmatpush2.msra.mxu0 0.0
    %616 = vmatprep.subr.mxu0 0.0
    %617 = vmatpush2.msra.mxu0 0.0
    %618 = vmatprep.subr.mxu0 0.0
    %619 = vmatpush2.msra.mxu0 0.0
    %620 = vmatprep.subr.mxu0 0.0
    %621 = vmatpush2.msra.mxu0 0.0
    %622 = vmatprep.subr.mxu0 0.0
    %623 = vmatpush2.msra.mxu0 0.0
    %624 = vmatprep.subr.mxu0 0.0
    %625 = vmatpush2.msra.mxu0 0.0
    %626 = vmatprep.subr.mxu0 0.0
    %627 = vmatpush2.msra.mxu0 0.0
    %628 = vmatprep.subr.mxu0 0.0
    %629 = vmatpush2.msra.mxu0 0.0
    %630 = vmatprep.subr.mxu0 0.0
    %631 = vmatpush2.msra.mxu0 0.0
    %632 = vmatprep.subr.mxu0 0.0
    %633 = vmatpush2.msra.mxu0 0.0
    %634 = vmatprep.subr.mxu0 0.0
    %635 = vmatpush2.msra.mxu0 0.0
    %636 = vmatprep.subr.mxu0 0.0
    %637 = vmatpush2.msra.mxu0 0.0
    %638 = vmatprep.subr.mxu0 0.0
    %639 = vmatpush2.msra.mxu0 0.0
    %640 = vmatprep.subr.mxu0 0.0
    %641 = vmatpush2.msra.mxu0 0.0
    %642 = vmatprep.mubr.f32.mxu0 0.0
    %643 = vmatmul.mubr.f32.gmra.mxu0 %v335
    %v644 = vpop.f32.mrf.mxu0
    %v645 = vadd.f32 0.0, %v644
    %v646 = vpop.f32.mrf.mxu0
    %647 = vdwg.mxu0
    %v648 = vadd.f32 %v575, %v645
    %v649 = vxor.u32 %v648, 2147483648
    %v650 = vmul.f32 %v649, 1.442695
    %v651 = vpow.pop %v650
    %v652 = vadd.f32 %v651, 1.0
    %v653 = vrcp.pop %v652
    %v654 = vmul.f32 1.0, %v653
    %v655 = vtanh.pop %v648
    %v656 = vsel %vm307, %v655, %v654
    %v657 = vmul.f32 %v656, %v319
    %659 = vrot.lane.b32.xlu0 %v656, 64
    %v660 = vpop.permute.xlu0 %659
    %v662 = vmul.f32 %v656, %v660
    %664 = vrot.lane.b32.xlu0 %v662, 32
    %v665 = vpop.permute.xlu0 %664
    %v667 = vadd.f32 %v657, %v665
    %v668 = vtanh.pop %v667
    %670 = vrot.lane.b32.xlu0 %v668, 64
    %v671 = vpop.permute.xlu0 %670
    %v673 = vmul.f32 %v656, %v671
    %675 = vrot.lane.b32.xlu0 %v673, 32
    %v676 = vpop.permute.xlu0 %675
    %v677 = vsel %vm221, %v676, 0
    %679 = vmatprep.subr.mxu0 0.0
    %680 = vmatpush1.msra.mxu0 0.0
    %681 = vmatprep.subr.mxu0 0.0
    %682 = vmatpush1.msra.mxu0 0.0
    %683 = vmatprep.subr.mxu0 0.0
    %684 = vmatpush1.msra.mxu0 0.0
    %685 = vmatprep.subr.mxu0 0.0
    %686 = vmatpush1.msra.mxu0 0.0
    %687 = vmatprep.subr.mxu0 0.0
    %688 = vmatpush1.msra.mxu0 0.0
    %689 = vmatprep.subr.mxu0 0.0
    %690 = vmatpush1.msra.mxu0 0.0
    %691 = vmatprep.subr.mxu0 0.0
    %692 = vmatpush1.msra.mxu0 0.0
    %693 = vmatprep.subr.mxu0 0.0
    %694 = vmatpush1.msra.mxu0 0.0
    %695 = vmatprep.subr.mxu0 0.0
    %696 = vmatpush1.msra.mxu0 0.0
    %697 = vmatprep.subr.mxu0 0.0
    %698 = vmatpush1.msra.mxu0 0.0
    %699 = vmatprep.subr.mxu0 0.0
    %700 = vmatpush1.msra.mxu0 0.0
    %701 = vmatprep.subr.mxu0 0.0
    %702 = vmatpush1.msra.mxu0 0.0
    %703 = vmatprep.subr.mxu0 0.0
    %704 = vmatpush1.msra.mxu0 %v115
    %705 = vmatprep.subr.mxu0 0.0
    %706 = vmatpush1.msra.mxu0 %v114
    %707 = vmatprep.subr.mxu0 0.0
    %708 = vmatpush1.msra.mxu0 %v113
    %709 = vmatprep.subr.mxu0 0.0
    %710 = vmatpush1.msra.mxu0 %v112
    %711 = vmatprep.subr.mxu0 0.0
    %712 = vmatpush2.msra.mxu0 0.0
    %713 = vmatprep.subr.mxu0 0.0
    %714 = vmatpush2.msra.mxu0 0.0
    %715 = vmatprep.subr.mxu0 0.0
    %716 = vmatpush2.msra.mxu0 0.0
    %717 = vmatprep.subr.mxu0 0.0
    %718 = vmatpush2.msra.mxu0 0.0
    %719 = vmatprep.subr.mxu0 0.0
    %720 = vmatpush2.msra.mxu0 0.0
    %721 = vmatprep.subr.mxu0 0.0
    %722 = vmatpush2.msra.mxu0 0.0
    %723 = vmatprep.subr.mxu0 0.0
    %724 = vmatpush2.msra.mxu0 0.0
    %725 = vmatprep.subr.mxu0 0.0
    %726 = vmatpush2.msra.mxu0 0.0
    %727 = vmatprep.subr.mxu0 0.0
    %728 = vmatpush2.msra.mxu0 0.0
    %729 = vmatprep.subr.mxu0 0.0
    %730 = vmatpush2.msra.mxu0 0.0
    %731 = vmatprep.subr.mxu0 0.0
    %732 = vmatpush2.msra.mxu0 0.0
    %733 = vmatprep.subr.mxu0 0.0
    %734 = vmatpush2.msra.mxu0 0.0
    %735 = vmatprep.subr.mxu0 0.0
    %736 = vmatpush2.msra.mxu0 0.0
    %737 = vmatprep.subr.mxu0 0.0
    %738 = vmatpush2.msra.mxu0 0.0
    %739 = vmatprep.subr.mxu0 0.0
    %740 = vmatpush2.msra.mxu0 0.0
    %741 = vmatprep.subr.mxu0 0.0
    %742 = vmatpush2.msra.mxu0 0.0
    %743 = vmatprep.mubr.f32.mxu0 0.0
    %744 = vmatmul.mubr.f32.gmra.mxu0 %v677
    %v745 = vpop.f32.mrf.mxu0
    %v746 = vadd.f32 %v330, %v745
    %v747 = vpop.f32.mrf.mxu0
    %748 = vdwg.mxu0
    %750 = vrot.lane.b32.xlu0 %v502, 32
    %v751 = vpop.permute.xlu0 %750
    %v752 = vsel %vm221, %v751, 0
    %754 = vmatprep.subr.mxu0 0.0
    %755 = vmatpush1.msra.mxu0 0.0
    %756 = vmatprep.subr.mxu0 0.0
    %757 = vmatpush1.msra.mxu0 0.0
    %758 = vmatprep.subr.mxu0 0.0
    %759 = vmatpush1.msra.mxu0 0.0
    %760 = vmatprep.subr.mxu0 0.0
    %761 = vmatpush1.msra.mxu0 0.0
    %762 = vmatprep.subr.mxu0 0.0
    %763 = vmatpush1.msra.mxu0 0.0
    %764 = vmatprep.subr.mxu0 0.0
    %765 = vmatpush1.msra.mxu0 0.0
    %766 = vmatprep.subr.mxu0 0.0
    %767 = vmatpush1.msra.mxu0 0.0
    %768 = vmatprep.subr.mxu0 0.0
    %769 = vmatpush1.msra.mxu0 0.0
    %770 = vmatprep.subr.mxu0 0.0
    %771 = vmatpush1.msra.mxu0 0.0
    %772 = vmatprep.subr.mxu0 0.0
    %773 = vmatpush1.msra.mxu0 0.0
    %774 = vmatprep.subr.mxu0 0.0
    %775 = vmatpush1.msra.mxu0 0.0
    %776 = vmatprep.subr.mxu0 0.0
    %777 = vmatpush1.msra.mxu0 0.0
    %778 = vmatprep.subr.mxu0 0.0
    %779 = vmatpush1.msra.mxu0 %v119
    %780 = vmatprep.subr.mxu0 0.0
    %781 = vmatpush1.msra.mxu0 %v118
    %782 = vmatprep.subr.mxu0 0.0
    %783 = vmatpush1.msra.mxu0 %v117
    %784 = vmatprep.subr.mxu0 0.0
    %785 = vmatpush1.msra.mxu0 %v116
    %786 = vmatprep.subr.mxu0 0.0
    %787 = vmatpush2.msra.mxu0 0.0
    %788 = vmatprep.subr.mxu0 0.0
    %789 = vmatpush2.msra.mxu0 0.0
    %790 = vmatprep.subr.mxu0 0.0
    %791 = vmatpush2.msra.mxu0 0.0
    %792 = vmatprep.subr.mxu0 0.0
    %793 = vmatpush2.msra.mxu0 0.0
    %794 = vmatprep.subr.mxu0 0.0
    %795 = vmatpush2.msra.mxu0 0.0
    %796 = vmatprep.subr.mxu0 0.0
    %797 = vmatpush2.msra.mxu0 0.0
    %798 = vmatprep.subr.mxu0 0.0
    %799 = vmatpush2.msra.mxu0 0.0
    %800 = vmatprep.subr.mxu0 0.0
    %801 = vmatpush2.msra.mxu0 0.0
    %802 = vmatprep.subr.mxu0 0.0
    %803 = vmatpush2.msra.mxu0 0.0
    %804 = vmatprep.subr.mxu0 0.0
    %805 = vmatpush2.msra.mxu0 0.0
    %806 = vmatprep.subr.mxu0 0.0
    %807 = vmatpush2.msra.mxu0 0.0
    %808 = vmatprep.subr.mxu0 0.0
    %809 = vmatpush2.msra.mxu0 0.0
    %810 = vmatprep.subr.mxu0 0.0
    %811 = vmatpush2.msra.mxu0 0.0
    %812 = vmatprep.subr.mxu0 0.0
    %813 = vmatpush2.msra.mxu0 0.0
    %814 = vmatprep.subr.mxu0 0.0
    %815 = vmatpush2.msra.mxu0 0.0
    %816 = vmatprep.subr.mxu0 0.0
    %817 = vmatpush2.msra.mxu0 0.0
    %818 = vmatprep.mubr.f32.mxu0 0.0
    %819 = vmatmul.mubr.f32.gmra.mxu0 %v752
    %v820 = vpop.f32.mrf.mxu0
    %v821 = vadd.f32 0.0, %v820
    %v822 = vpop.f32.mrf.mxu0
    %823 = vdwg.mxu0
    %v824 = vadd.f32 %v746, %v821
    %v825 = vxor.u32 %v824, 2147483648
    %v826 = vmul.f32 %v825, 1.442695
    %v827 = vpow.pop %v826
    %v828 = vadd.f32 %v827, 1.0
    %v829 = vrcp.pop %v828
    %v830 = vmul.f32 1.0, %v829
    %v831 = vtanh.pop %v824
    %v832 = vsel %vm307, %v831, %v830
    %v833 = vmul.f32 %v832, %v496
    %835 = vrot.lane.b32.xlu0 %v832, 64
    %v836 = vpop.permute.xlu0 %835
    %v838 = vmul.f32 %v832, %v836
    %840 = vrot.lane.b32.xlu0 %v838, 32
    %v841 = vpop.permute.xlu0 %840
    %v843 = vadd.f32 %v833, %v841
    %v844 = vtanh.pop %v843
    %846 = vrot.lane.b32.xlu0 %v844, 64
    %v847 = vpop.permute.xlu0 %846
    %v849 = vmul.f32 %v832, %v847
    %s850 = scalar_lea.vmem %s0, 4
    %v851 = vld [vmem:[%s850] sm:$0x3]
    %v853 = vsel %vm143, %v851, 0
    %855 = vmatprep.subr.mxu0 0.0
    %856 = vmatpush1.msra.mxu0 0.0
    %857 = vmatprep.subr.mxu0 0.0
    %858 = vmatpush1.msra.mxu0 0.0
    %859 = vmatprep.subr.mxu0 0.0
    %860 = vmatpush1.msra.mxu0 0.0
    %861 = vmatprep.subr.mxu0 0.0
    %862 = vmatpush1.msra.mxu0 0.0
    %863 = vmatprep.subr.mxu0 0.0
    %864 = vmatpush1.msra.mxu0 0.0
    %865 = vmatprep.subr.mxu0 0.0
    %866 = vmatpush1.msra.mxu0 0.0
    %867 = vmatprep.subr.mxu0 0.0
    %868 = vmatpush1.msra.mxu0 0.0
    %869 = vmatprep.subr.mxu0 0.0
    %870 = vmatpush1.msra.mxu0 0.0
    %871 = vmatprep.subr.mxu0 0.0
    %872 = vmatpush1.msra.mxu0 0.0
    %873 = vmatprep.subr.mxu0 0.0
    %874 = vmatpush1.msra.mxu0 0.0
    %875 = vmatprep.subr.mxu0 0.0
    %876 = vmatpush1.msra.mxu0 0.0
    %877 = vmatprep.subr.mxu0 0.0
    %878 = vmatpush1.msra.mxu0 0.0
    %879 = vmatprep.subr.mxu0 0.0
    %880 = vmatpush1.msra.mxu0 0.0
    %881 = vmatprep.subr.mxu0 0.0
    %882 = vmatpush1.msra.mxu0 0.0
    %883 = vmatprep.subr.mxu0 0.0
    %884 = vmatpush1.msra.mxu0 0.0
    %885 = vmatprep.subr.mxu0 0.0
    %886 = vmatpush1.msra.mxu0 %v149
    %887 = vmatprep.subr.mxu0 0.0
    %888 = vmatpush2.msra.mxu0 0.0
    %889 = vmatprep.subr.mxu0 0.0
    %890 = vmatpush2.msra.mxu0 0.0
    %891 = vmatprep.subr.mxu0 0.0
    %892 = vmatpush2.msra.mxu0 0.0
    %893 = vmatprep.subr.mxu0 0.0
    %894 = vmatpush2.msra.mxu0 0.0
    %895 = vmatprep.subr.mxu0 0.0
    %896 = vmatpush2.msra.mxu0 0.0
    %897 = vmatprep.subr.mxu0 0.0
    %898 = vmatpush2.msra.mxu0 0.0
    %899 = vmatprep.subr.mxu0 0.0
    %900 = vmatpush2.msra.mxu0 0.0
    %901 = vmatprep.subr.mxu0 0.0
    %902 = vmatpush2.msra.mxu0 0.0
    %903 = vmatprep.subr.mxu0 0.0
    %904 = vmatpush2.msra.mxu0 0.0
    %905 = vmatprep.subr.mxu0 0.0
    %906 = vmatpush2.msra.mxu0 0.0
    %907 = vmatprep.subr.mxu0 0.0
    %908 = vmatpush2.msra.mxu0 0.0
    %909 = vmatprep.subr.mxu0 0.0
    %910 = vmatpush2.msra.mxu0 0.0
    %911 = vmatprep.subr.mxu0 0.0
    %912 = vmatpush2.msra.mxu0 0.0
    %913 = vmatprep.subr.mxu0 0.0
    %914 = vmatpush2.msra.mxu0 0.0
    %915 = vmatprep.subr.mxu0 0.0
    %916 = vmatpush2.msra.mxu0 0.0
    %917 = vmatprep.subr.mxu0 0.0
    %918 = vmatpush2.msra.mxu0 0.0
    %919 = vmatprep.mubr.f32.mxu0 0.0
    %920 = vmatmul.mubr.f32.gmra.mxu0 %v853
    %v921 = vpop.f32.mrf.mxu0
    %v922 = vadd.f32 %v141, %v921
    %v923 = vpop.f32.mrf.mxu0
    %924 = vdwg.mxu0
    %925 = vmatprep.subr.mxu0 0.0
    %926 = vmatpush1.msra.mxu0 0.0
    %927 = vmatprep.subr.mxu0 0.0
    %928 = vmatpush1.msra.mxu0 0.0
    %929 = vmatprep.subr.mxu0 0.0
    %930 = vmatpush1.msra.mxu0 0.0
    %931 = vmatprep.subr.mxu0 0.0
    %932 = vmatpush1.msra.mxu0 0.0
    %933 = vmatprep.subr.mxu0 0.0
    %934 = vmatpush1.msra.mxu0 0.0
    %935 = vmatprep.subr.mxu0 0.0
    %936 = vmatpush1.msra.mxu0 0.0
    %937 = vmatprep.subr.mxu0 0.0
    %938 = vmatpush1.msra.mxu0 0.0
    %939 = vmatprep.subr.mxu0 0.0
    %940 = vmatpush1.msra.mxu0 0.0
    %941 = vmatprep.subr.mxu0 0.0
    %942 = vmatpush1.msra.mxu0 0.0
    %943 = vmatprep.subr.mxu0 0.0
    %944 = vmatpush1.msra.mxu0 0.0
    %945 = vmatprep.subr.mxu0 0.0
    %946 = vmatpush1.msra.mxu0 0.0
    %947 = vmatprep.subr.mxu0 0.0
    %948 = vmatpush1.msra.mxu0 0.0
    %949 = vmatprep.subr.mxu0 0.0
    %950 = vmatpush1.msra.mxu0 %v110
    %951 = vmatprep.subr.mxu0 0.0
    %952 = vmatpush1.msra.mxu0 %v109
    %953 = vmatprep.subr.mxu0 0.0
    %954 = vmatpush1.msra.mxu0 %v108
    %955 = vmatprep.subr.mxu0 0.0
    %956 = vmatpush1.msra.mxu0 %v107
    %957 = vmatprep.subr.mxu0 0.0
    %958 = vmatpush2.msra.mxu0 0.0
    %959 = vmatprep.subr.mxu0 0.0
    %960 = vmatpush2.msra.mxu0 0.0
    %961 = vmatprep.subr.mxu0 0.0
    %962 = vmatpush2.msra.mxu0 0.0
    %963 = vmatprep.subr.mxu0 0.0
    %964 = vmatpush2.msra.mxu0 0.0
    %965 = vmatprep.subr.mxu0 0.0
    %966 = vmatpush2.msra.mxu0 0.0
    %967 = vmatprep.subr.mxu0 0.0
    %968 = vmatpush2.msra.mxu0 0.0
    %969 = vmatprep.subr.mxu0 0.0
    %970 = vmatpush2.msra.mxu0 0.0
    %971 = vmatprep.subr.mxu0 0.0
    %972 = vmatpush2.msra.mxu0 0.0
    %973 = vmatprep.subr.mxu0 0.0
    %974 = vmatpush2.msra.mxu0 0.0
    %975 = vmatprep.subr.mxu0 0.0
    %976 = vmatpush2.msra.mxu0 0.0
    %977 = vmatprep.subr.mxu0 0.0
    %978 = vmatpush2.msra.mxu0 0.0
    %979 = vmatprep.subr.mxu0 0.0
    %980 = vmatpush2.msra.mxu0 0.0
    %981 = vmatprep.subr.mxu0 0.0
    %982 = vmatpush2.msra.mxu0 0.0
    %983 = vmatprep.subr.mxu0 0.0
    %984 = vmatpush2.msra.mxu0 0.0
    %985 = vmatprep.subr.mxu0 0.0
    %986 = vmatpush2.msra.mxu0 0.0
    %987 = vmatprep.subr.mxu0 0.0
    %988 = vmatpush2.msra.mxu0 0.0
    %989 = vmatprep.mubr.f32.mxu0 0.0
    %990 = vmatmul.mubr.f32.gmra.mxu0 %v677
    %v991 = vpop.f32.mrf.mxu0
    %v992 = vadd.f32 0.0, %v991
    %v993 = vpop.f32.mrf.mxu0
    %994 = vdwg.mxu0
    %v995 = vadd.f32 %v922, %v992
    %v996 = vxor.u32 %v995, 2147483648
    %v997 = vmul.f32 %v996, 1.442695
    %v998 = vpow.pop %v997
    %v999 = vadd.f32 %v998, 1.0
    %v1000 = vrcp.pop %v999
    %v1001 = vmul.f32 1.0, %v1000
    %v1002 = vtanh.pop %v995
    %v1003 = vsel %vm307, %v1002, %v1001
    %v1004 = vmul.f32 %v1003, %v667
    %1006 = vrot.lane.b32.xlu0 %v1003, 64
    %v1007 = vpop.permute.xlu0 %1006
    %v1009 = vmul.f32 %v1003, %v1007
    %1011 = vrot.lane.b32.xlu0 %v1009, 32
    %v1012 = vpop.permute.xlu0 %1011
    %v1014 = vadd.f32 %v1004, %v1012
    %v1015 = vtanh.pop %v1014
    %1017 = vrot.lane.b32.xlu0 %v1015, 64
    %v1018 = vpop.permute.xlu0 %1017
    %v1020 = vmul.f32 %v1003, %v1018
    %1022 = vrot.lane.b32.xlu0 %v1020, 32
    %v1023 = vpop.permute.xlu0 %1022
    %v1024 = vsel %vm221, %v1023, 0
    %1026 = vmatprep.subr.mxu0 0.0
    %1027 = vmatpush1.msra.mxu0 0.0
    %1028 = vmatprep.subr.mxu0 0.0
    %1029 = vmatpush1.msra.mxu0 0.0
    %1030 = vmatprep.subr.mxu0 0.0
    %1031 = vmatpush1.msra.mxu0 0.0
    %1032 = vmatprep.subr.mxu0 0.0
    %1033 = vmatpush1.msra.mxu0 0.0
    %1034 = vmatprep.subr.mxu0 0.0
    %1035 = vmatpush1.msra.mxu0 0.0
    %1036 = vmatprep.subr.mxu0 0.0
    %1037 = vmatpush1.msra.mxu0 0.0
    %1038 = vmatprep.subr.mxu0 0.0
    %1039 = vmatpush1.msra.mxu0 0.0
    %1040 = vmatprep.subr.mxu0 0.0
    %1041 = vmatpush1.msra.mxu0 0.0
    %1042 = vmatprep.subr.mxu0 0.0
    %1043 = vmatpush1.msra.mxu0 0.0
    %1044 = vmatprep.subr.mxu0 0.0
    %1045 = vmatpush1.msra.mxu0 0.0
    %1046 = vmatprep.subr.mxu0 0.0
    %1047 = vmatpush1.msra.mxu0 0.0
    %1048 = vmatprep.subr.mxu0 0.0
    %1049 = vmatpush1.msra.mxu0 0.0
    %1050 = vmatprep.subr.mxu0 0.0
    %1051 = vmatpush1.msra.mxu0 %v115
    %1052 = vmatprep.subr.mxu0 0.0
    %1053 = vmatpush1.msra.mxu0 %v114
    %1054 = vmatprep.subr.mxu0 0.0
    %1055 = vmatpush1.msra.mxu0 %v113
    %1056 = vmatprep.subr.mxu0 0.0
    %1057 = vmatpush1.msra.mxu0 %v112
    %1058 = vmatprep.subr.mxu0 0.0
    %1059 = vmatpush2.msra.mxu0 0.0
    %1060 = vmatprep.subr.mxu0 0.0
    %1061 = vmatpush2.msra.mxu0 0.0
    %1062 = vmatprep.subr.mxu0 0.0
    %1063 = vmatpush2.msra.mxu0 0.0
    %1064 = vmatprep.subr.mxu0 0.0
    %1065 = vmatpush2.msra.mxu0 0.0
    %1066 = vmatprep.subr.mxu0 0.0
    %1067 = vmatpush2.msra.mxu0 0.0
    %1068 = vmatprep.subr.mxu0 0.0
    %1069 = vmatpush2.msra.mxu0 0.0
    %1070 = vmatprep.subr.mxu0 0.0
    %1071 = vmatpush2.msra.mxu0 0.0
    %1072 = vmatprep.subr.mxu0 0.0
    %1073 = vmatpush2.msra.mxu0 0.0
    %1074 = vmatprep.subr.mxu0 0.0
    %1075 = vmatpush2.msra.mxu0 0.0
    %1076 = vmatprep.subr.mxu0 0.0
    %1077 = vmatpush2.msra.mxu0 0.0
    %1078 = vmatprep.subr.mxu0 0.0
    %1079 = vmatpush2.msra.mxu0 0.0
    %1080 = vmatprep.subr.mxu0 0.0
    %1081 = vmatpush2.msra.mxu0 0.0
    %1082 = vmatprep.subr.mxu0 0.0
    %1083 = vmatpush2.msra.mxu0 0.0
    %1084 = vmatprep.subr.mxu0 0.0
    %1085 = vmatpush2.msra.mxu0 0.0
    %1086 = vmatprep.subr.mxu0 0.0
    %1087 = vmatpush2.msra.mxu0 0.0
    %1088 = vmatprep.subr.mxu0 0.0
    %1089 = vmatpush2.msra.mxu0 0.0
    %1090 = vmatprep.mubr.f32.mxu0 0.0
    %1091 = vmatmul.mubr.f32.gmra.mxu0 %v1024
    %v1092 = vpop.f32.mrf.mxu0
    %v1093 = vadd.f32 %v330, %v1092
    %v1094 = vpop.f32.mrf.mxu0
    %1095 = vdwg.mxu0
    %1097 = vrot.lane.b32.xlu0 %v849, 32
    %v1098 = vpop.permute.xlu0 %1097
    %v1099 = vsel %vm221, %v1098, 0
    %1101 = vmatprep.subr.mxu0 0.0
    %1102 = vmatpush1.msra.mxu0 0.0
    %1103 = vmatprep.subr.mxu0 0.0
    %1104 = vmatpush1.msra.mxu0 0.0
    %1105 = vmatprep.subr.mxu0 0.0
    %1106 = vmatpush1.msra.mxu0 0.0
    %1107 = vmatprep.subr.mxu0 0.0
    %1108 = vmatpush1.msra.mxu0 0.0
    %1109 = vmatprep.subr.mxu0 0.0
    %1110 = vmatpush1.msra.mxu0 0.0
    %1111 = vmatprep.subr.mxu0 0.0
    %1112 = vmatpush1.msra.mxu0 0.0
    %1113 = vmatprep.subr.mxu0 0.0
    %1114 = vmatpush1.msra.mxu0 0.0
    %1115 = vmatprep.subr.mxu0 0.0
    %1116 = vmatpush1.msra.mxu0 0.0
    %1117 = vmatprep.subr.mxu0 0.0
    %1118 = vmatpush1.msra.mxu0 0.0
    %1119 = vmatprep.subr.mxu0 0.0
    %1120 = vmatpush1.msra.mxu0 0.0
    %1121 = vmatprep.subr.mxu0 0.0
    %1122 = vmatpush1.msra.mxu0 0.0
    %1123 = vmatprep.subr.mxu0 0.0
    %1124 = vmatpush1.msra.mxu0 0.0
    %1125 = vmatprep.subr.mxu0 0.0
    %1126 = vmatpush1.msra.mxu0 %v119
    %1127 = vmatprep.subr.mxu0 0.0
    %1128 = vmatpush1.msra.mxu0 %v118
    %1129 = vmatprep.subr.mxu0 0.0
    %1130 = vmatpush1.msra.mxu0 %v117
    %1131 = vmatprep.subr.mxu0 0.0
    %1132 = vmatpush1.msra.mxu0 %v116
    %1133 = vmatprep.subr.mxu0 0.0
    %1134 = vmatpush2.msra.mxu0 0.0
    %1135 = vmatprep.subr.mxu0 0.0
    %1136 = vmatpush2.msra.mxu0 0.0
    %1137 = vmatprep.subr.mxu0 0.0
    %1138 = vmatpush2.msra.mxu0 0.0
    %1139 = vmatprep.subr.mxu0 0.0
    %1140 = vmatpush2.msra.mxu0 0.0
    %1141 = vmatprep.subr.mxu0 0.0
    %1142 = vmatpush2.msra.mxu0 0.0
    %1143 = vmatprep.subr.mxu0 0.0
    %1144 = vmatpush2.msra.mxu0 0.0
    %1145 = vmatprep.subr.mxu0 0.0
    %1146 = vmatpush2.msra.mxu0 0.0
    %1147 = vmatprep.subr.mxu0 0.0
    %1148 = vmatpush2.msra.mxu0 0.0
    %1149 = vmatprep.subr.mxu0 0.0
    %1150 = vmatpush2.msra.mxu0 0.0
    %1151 = vmatprep.subr.mxu0 0.0
    %1152 = vmatpush2.msra.mxu0 0.0
    %1153 = vmatprep.subr.mxu0 0.0
    %1154 = vmatpush2.msra.mxu0 0.0
    %1155 = vmatprep.subr.mxu0 0.0
    %1156 = vmatpush2.msra.mxu0 0.0
    %1157 = vmatprep.subr.mxu0 0.0
    %1158 = vmatpush2.msra.mxu0 0.0
    %1159 = vmatprep.subr.mxu0 0.0
    %1160 = vmatpush2.msra.mxu0 0.0
    %1161 = vmatprep.subr.mxu0 0.0
    %1162 = vmatpush2.msra.mxu0 0.0
    %1163 = vmatprep.subr.mxu0 0.0
    %1164 = vmatpush2.msra.mxu0 0.0
    %1165 = vmatprep.mubr.f32.mxu0 0.0
    %1166 = vmatmul.mubr.f32.gmra.mxu0 %v1099
    %v1167 = vpop.f32.mrf.mxu0
    %v1168 = vadd.f32 0.0, %v1167
    %v1169 = vpop.f32.mrf.mxu0
    %1170 = vdwg.mxu0
    %v1171 = vadd.f32 %v1093, %v1168
    %v1172 = vxor.u32 %v1171, 2147483648
    %v1173 = vmul.f32 %v1172, 1.442695
    %v1174 = vpow.pop %v1173
    %v1175 = vadd.f32 %v1174, 1.0
    %v1176 = vrcp.pop %v1175
    %v1177 = vmul.f32 1.0, %v1176
    %v1178 = vtanh.pop %v1171
    %v1179 = vsel %vm307, %v1178, %v1177
    %v1180 = vmul.f32 %v1179, %v843
    %1182 = vrot.lane.b32.xlu0 %v1179, 64
    %v1183 = vpop.permute.xlu0 %1182
    %v1185 = vmul.f32 %v1179, %v1183
    %1187 = vrot.lane.b32.xlu0 %v1185, 32
    %v1188 = vpop.permute.xlu0 %1187
    %v1190 = vadd.f32 %v1180, %v1188
    %v1191 = vtanh.pop %v1190
    %1193 = vrot.lane.b32.xlu0 %v1191, 64
    %v1194 = vpop.permute.xlu0 %1193
    %v1196 = vmul.f32 %v1179, %v1194
    %s1197 = scalar_lea.vmem %s0, 6
    %v1198 = vld [vmem:[%s1197] sm:$0x3]
    %v1200 = vsel %vm143, %v1198, 0
    %1202 = vmatprep.subr.mxu0 0.0
    %1203 = vmatpush1.msra.mxu0 0.0
    %1204 = vmatprep.subr.mxu0 0.0
    %1205 = vmatpush1.msra.mxu0 0.0
    %1206 = vmatprep.subr.mxu0 0.0
    %1207 = vmatpush1.msra.mxu0 0.0
    %1208 = vmatprep.subr.mxu0 0.0
    %1209 = vmatpush1.msra.mxu0 0.0
    %1210 = vmatprep.subr.mxu0 0.0
    %1211 = vmatpush1.msra.mxu0 0.0
    %1212 = vmatprep.subr.mxu0 0.0
    %1213 = vmatpush1.msra.mxu0 0.0
    %1214 = vmatprep.subr.mxu0 0.0
    %1215 = vmatpush1.msra.mxu0 0.0
    %1216 = vmatprep.subr.mxu0 0.0
    %1217 = vmatpush1.msra.mxu0 0.0
    %1218 = vmatprep.subr.mxu0 0.0
    %1219 = vmatpush1.msra.mxu0 0.0
    %1220 = vmatprep.subr.mxu0 0.0
    %1221 = vmatpush1.msra.mxu0 0.0
    %1222 = vmatprep.subr.mxu0 0.0
    %1223 = vmatpush1.msra.mxu0 0.0
    %1224 = vmatprep.subr.mxu0 0.0
    %1225 = vmatpush1.msra.mxu0 0.0
    %1226 = vmatprep.subr.mxu0 0.0
    %1227 = vmatpush1.msra.mxu0 0.0
    %1228 = vmatprep.subr.mxu0 0.0
    %1229 = vmatpush1.msra.mxu0 0.0
    %1230 = vmatprep.subr.mxu0 0.0
    %1231 = vmatpush1.msra.mxu0 0.0
    %1232 = vmatprep.subr.mxu0 0.0
    %1233 = vmatpush1.msra.mxu0 %v149
    %1234 = vmatprep.subr.mxu0 0.0
    %1235 = vmatpush2.msra.mxu0 0.0
    %1236 = vmatprep.subr.mxu0 0.0
    %1237 = vmatpush2.msra.mxu0 0.0
    %1238 = vmatprep.subr.mxu0 0.0
    %1239 = vmatpush2.msra.mxu0 0.0
    %1240 = vmatprep.subr.mxu0 0.0
    %1241 = vmatpush2.msra.mxu0 0.0
    %1242 = vmatprep.subr.mxu0 0.0
    %1243 = vmatpush2.msra.mxu0 0.0
    %1244 = vmatprep.subr.mxu0 0.0
    %1245 = vmatpush2.msra.mxu0 0.0
    %1246 = vmatprep.subr.mxu0 0.0
    %1247 = vmatpush2.msra.mxu0 0.0
    %1248 = vmatprep.subr.mxu0 0.0
    %1249 = vmatpush2.msra.mxu0 0.0
    %1250 = vmatprep.subr.mxu0 0.0
    %1251 = vmatpush2.msra.mxu0 0.0
    %1252 = vmatprep.subr.mxu0 0.0
    %1253 = vmatpush2.msra.mxu0 0.0
    %1254 = vmatprep.subr.mxu0 0.0
    %1255 = vmatpush2.msra.mxu0 0.0
    %1256 = vmatprep.subr.mxu0 0.0
    %1257 = vmatpush2.msra.mxu0 0.0
    %1258 = vmatprep.subr.mxu0 0.0
    %1259 = vmatpush2.msra.mxu0 0.0
    %1260 = vmatprep.subr.mxu0 0.0
    %1261 = vmatpush2.msra.mxu0 0.0
    %1262 = vmatprep.subr.mxu0 0.0
    %1263 = vmatpush2.msra.mxu0 0.0
    %1264 = vmatprep.subr.mxu0 0.0
    %1265 = vmatpush2.msra.mxu0 0.0
    %1266 = vmatprep.mubr.f32.mxu0 0.0
    %1267 = vmatmul.mubr.f32.gmra.mxu0 %v1200
    %v1268 = vpop.f32.mrf.mxu0
    %v1269 = vadd.f32 %v141, %v1268
    %v1270 = vpop.f32.mrf.mxu0
    %1271 = vdwg.mxu0
    %1272 = vmatprep.subr.mxu0 0.0
    %1273 = vmatpush1.msra.mxu0 0.0
    %1274 = vmatprep.subr.mxu0 0.0
    %1275 = vmatpush1.msra.mxu0 0.0
    %1276 = vmatprep.subr.mxu0 0.0
    %1277 = vmatpush1.msra.mxu0 0.0
    %1278 = vmatprep.subr.mxu0 0.0
    %1279 = vmatpush1.msra.mxu0 0.0
    %1280 = vmatprep.subr.mxu0 0.0
    %1281 = vmatpush1.msra.mxu0 0.0
    %1282 = vmatprep.subr.mxu0 0.0
    %1283 = vmatpush1.msra.mxu0 0.0
    %1284 = vmatprep.subr.mxu0 0.0
    %1285 = vmatpush1.msra.mxu0 0.0
    %1286 = vmatprep.subr.mxu0 0.0
    %1287 = vmatpush1.msra.mxu0 0.0
    %1288 = vmatprep.subr.mxu0 0.0
    %1289 = vmatpush1.msra.mxu0 0.0
    %1290 = vmatprep.subr.mxu0 0.0
    %1291 = vmatpush1.msra.mxu0 0.0
    %1292 = vmatprep.subr.mxu0 0.0
    %1293 = vmatpush1.msra.mxu0 0.0
    %1294 = vmatprep.subr.mxu0 0.0
    %1295 = vmatpush1.msra.mxu0 0.0
    %1296 = vmatprep.subr.mxu0 0.0
    %1297 = vmatpush1.msra.mxu0 %v110
    %1298 = vmatprep.subr.mxu0 0.0
    %1299 = vmatpush1.msra.mxu0 %v109
    %1300 = vmatprep.subr.mxu0 0.0
    %1301 = vmatpush1.msra.mxu0 %v108
    %1302 = vmatprep.subr.mxu0 0.0
    %1303 = vmatpush1.msra.mxu0 %v107
    %1304 = vmatprep.subr.mxu0 0.0
    %1305 = vmatpush2.msra.mxu0 0.0
    %1306 = vmatprep.subr.mxu0 0.0
    %1307 = vmatpush2.msra.mxu0 0.0
    %1308 = vmatprep.subr.mxu0 0.0
    %1309 = vmatpush2.msra.mxu0 0.0
    %1310 = vmatprep.subr.mxu0 0.0
    %1311 = vmatpush2.msra.mxu0 0.0
    %1312 = vmatprep.subr.mxu0 0.0
    %1313 = vmatpush2.msra.mxu0 0.0
    %1314 = vmatprep.subr.mxu0 0.0
    %1315 = vmatpush2.msra.mxu0 0.0
    %1316 = vmatprep.subr.mxu0 0.0
    %1317 = vmatpush2.msra.mxu0 0.0
    %1318 = vmatprep.subr.mxu0 0.0
    %1319 = vmatpush2.msra.mxu0 0.0
    %1320 = vmatprep.subr.mxu0 0.0
    %1321 = vmatpush2.msra.mxu0 0.0
    %1322 = vmatprep.subr.mxu0 0.0
    %1323 = vmatpush2.msra.mxu0 0.0
    %1324 = vmatprep.subr.mxu0 0.0
    %1325 = vmatpush2.msra.mxu0 0.0
    %1326 = vmatprep.subr.mxu0 0.0
    %1327 = vmatpush2.msra.mxu0 0.0
    %1328 = vmatprep.subr.mxu0 0.0
    %1329 = vmatpush2.msra.mxu0 0.0
    %1330 = vmatprep.subr.mxu0 0.0
    %1331 = vmatpush2.msra.mxu0 0.0
    %1332 = vmatprep.subr.mxu0 0.0
    %1333 = vmatpush2.msra.mxu0 0.0
    %1334 = vmatprep.subr.mxu0 0.0
    %1335 = vmatpush2.msra.mxu0 0.0
    %1336 = vmatprep.mubr.f32.mxu0 0.0
    %1337 = vmatmul.mubr.f32.gmra.mxu0 %v1024
    %v1338 = vpop.f32.mrf.mxu0
    %v1339 = vadd.f32 0.0, %v1338
    %v1340 = vpop.f32.mrf.mxu0
    %1341 = vdwg.mxu0
    %v1342 = vadd.f32 %v1269, %v1339
    %v1343 = vxor.u32 %v1342, 2147483648
    %v1344 = vmul.f32 %v1343, 1.442695
    %v1345 = vpow.pop %v1344
    %v1346 = vadd.f32 %v1345, 1.0
    %v1347 = vrcp.pop %v1346
    %v1348 = vmul.f32 1.0, %v1347
    %v1349 = vtanh.pop %v1342
    %v1350 = vsel %vm307, %v1349, %v1348
    %v1351 = vmul.f32 %v1350, %v1014
    %1353 = vrot.lane.b32.xlu0 %v1350, 64
    %v1354 = vpop.permute.xlu0 %1353
    %v1356 = vmul.f32 %v1350, %v1354
    %1358 = vrot.lane.b32.xlu0 %v1356, 32
    %v1359 = vpop.permute.xlu0 %1358
    %v1361 = vadd.f32 %v1351, %v1359
    %v1362 = vtanh.pop %v1361
    %1364 = vrot.lane.b32.xlu0 %v1362, 64
    %v1365 = vpop.permute.xlu0 %1364
    %v1367 = vmul.f32 %v1350, %v1365
    %1369 = vrot.lane.b32.xlu0 %v1367, 32
    %v1370 = vpop.permute.xlu0 %1369
    %v1371 = vsel %vm221, %v1370, 0
    %1373 = vmatprep.subr.mxu0 0.0
    %1374 = vmatpush1.msra.mxu0 0.0
    %1375 = vmatprep.subr.mxu0 0.0
    %1376 = vmatpush1.msra.mxu0 0.0
    %1377 = vmatprep.subr.mxu0 0.0
    %1378 = vmatpush1.msra.mxu0 0.0
    %1379 = vmatprep.subr.mxu0 0.0
    %1380 = vmatpush1.msra.mxu0 0.0
    %1381 = vmatprep.subr.mxu0 0.0
    %1382 = vmatpush1.msra.mxu0 0.0
    %1383 = vmatprep.subr.mxu0 0.0
    %1384 = vmatpush1.msra.mxu0 0.0
    %1385 = vmatprep.subr.mxu0 0.0
    %1386 = vmatpush1.msra.mxu0 0.0
    %1387 = vmatprep.subr.mxu0 0.0
    %1388 = vmatpush1.msra.mxu0 0.0
    %1389 = vmatprep.subr.mxu0 0.0
    %1390 = vmatpush1.msra.mxu0 0.0
    %1391 = vmatprep.subr.mxu0 0.0
    %1392 = vmatpush1.msra.mxu0 0.0
    %1393 = vmatprep.subr.mxu0 0.0
    %1394 = vmatpush1.msra.mxu0 0.0
    %1395 = vmatprep.subr.mxu0 0.0
    %1396 = vmatpush1.msra.mxu0 0.0
    %1397 = vmatprep.subr.mxu0 0.0
    %1398 = vmatpush1.msra.mxu0 %v115
    %1399 = vmatprep.subr.mxu0 0.0
    %1400 = vmatpush1.msra.mxu0 %v114
    %1401 = vmatprep.subr.mxu0 0.0
    %1402 = vmatpush1.msra.mxu0 %v113
    %1403 = vmatprep.subr.mxu0 0.0
    %1404 = vmatpush1.msra.mxu0 %v112
    %1405 = vmatprep.subr.mxu0 0.0
    %1406 = vmatpush2.msra.mxu0 0.0
    %1407 = vmatprep.subr.mxu0 0.0
    %1408 = vmatpush2.msra.mxu0 0.0
    %1409 = vmatprep.subr.mxu0 0.0
    %1410 = vmatpush2.msra.mxu0 0.0
    %1411 = vmatprep.subr.mxu0 0.0
    %1412 = vmatpush2.msra.mxu0 0.0
    %1413 = vmatprep.subr.mxu0 0.0
    %1414 = vmatpush2.msra.mxu0 0.0
    %1415 = vmatprep.subr.mxu0 0.0
    %1416 = vmatpush2.msra.mxu0 0.0
    %1417 = vmatprep.subr.mxu0 0.0
    %1418 = vmatpush2.msra.mxu0 0.0
    %1419 = vmatprep.subr.mxu0 0.0
    %1420 = vmatpush2.msra.mxu0 0.0
    %1421 = vmatprep.subr.mxu0 0.0
    %1422 = vmatpush2.msra.mxu0 0.0
    %1423 = vmatprep.subr.mxu0 0.0
    %1424 = vmatpush2.msra.mxu0 0.0
    %1425 = vmatprep.subr.mxu0 0.0
    %1426 = vmatpush2.msra.mxu0 0.0
    %1427 = vmatprep.subr.mxu0 0.0
    %1428 = vmatpush2.msra.mxu0 0.0
    %1429 = vmatprep.subr.mxu0 0.0
    %1430 = vmatpush2.msra.mxu0 0.0
    %1431 = vmatprep.subr.mxu0 0.0
    %1432 = vmatpush2.msra.mxu0 0.0
    %1433 = vmatprep.subr.mxu0 0.0
    %1434 = vmatpush2.msra.mxu0 0.0
    %1435 = vmatprep.subr.mxu0 0.0
    %1436 = vmatpush2.msra.mxu0 0.0
    %1437 = vmatprep.mubr.f32.mxu0 0.0
    %1438 = vmatmul.mubr.f32.gmra.mxu0 %v1371
    %v1439 = vpop.f32.mrf.mxu0
    %v1440 = vadd.f32 %v330, %v1439
    %v1441 = vpop.f32.mrf.mxu0
    %1442 = vdwg.mxu0
    %1444 = vrot.lane.b32.xlu0 %v1196, 32
    %v1445 = vpop.permute.xlu0 %1444
    %v1446 = vsel %vm221, %v1445, 0
    %1448 = vmatprep.subr.mxu0 0.0
    %1449 = vmatpush1.msra.mxu0 0.0
    %1450 = vmatprep.subr.mxu0 0.0
    %1451 = vmatpush1.msra.mxu0 0.0
    %1452 = vmatprep.subr.mxu0 0.0
    %1453 = vmatpush1.msra.mxu0 0.0
    %1454 = vmatprep.subr.mxu0 0.0
    %1455 = vmatpush1.msra.mxu0 0.0
    %1456 = vmatprep.subr.mxu0 0.0
    %1457 = vmatpush1.msra.mxu0 0.0
    %1458 = vmatprep.subr.mxu0 0.0
    %1459 = vmatpush1.msra.mxu0 0.0
    %1460 = vmatprep.subr.mxu0 0.0
    %1461 = vmatpush1.msra.mxu0 0.0
    %1462 = vmatprep.subr.mxu0 0.0
    %1463 = vmatpush1.msra.mxu0 0.0
    %1464 = vmatprep.subr.mxu0 0.0
    %1465 = vmatpush1.msra.mxu0 0.0
    %1466 = vmatprep.subr.mxu0 0.0
    %1467 = vmatpush1.msra.mxu0 0.0
    %1468 = vmatprep.subr.mxu0 0.0
    %1469 = vmatpush1.msra.mxu0 0.0
    %1470 = vmatprep.subr.mxu0 0.0
    %1471 = vmatpush1.msra.mxu0 0.0
    %1472 = vmatprep.subr.mxu0 0.0
    %1473 = vmatpush1.msra.mxu0 %v119
    %1474 = vmatprep.subr.mxu0 0.0
    %1475 = vmatpush1.msra.mxu0 %v118
    %1476 = vmatprep.subr.mxu0 0.0
    %1477 = vmatpush1.msra.mxu0 %v117
    %1478 = vmatprep.subr.mxu0 0.0
    %1479 = vmatpush1.msra.mxu0 %v116
    %1480 = vmatprep.subr.mxu0 0.0
    %1481 = vmatpush2.msra.mxu0 0.0
    %1482 = vmatprep.subr.mxu0 0.0
    %1483 = vmatpush2.msra.mxu0 0.0
    %1484 = vmatprep.subr.mxu0 0.0
    %1485 = vmatpush2.msra.mxu0 0.0
    %1486 = vmatprep.subr.mxu0 0.0
    %1487 = vmatpush2.msra.mxu0 0.0
    %1488 = vmatprep.subr.mxu0 0.0
    %1489 = vmatpush2.msra.mxu0 0.0
    %1490 = vmatprep.subr.mxu0 0.0
    %1491 = vmatpush2.msra.mxu0 0.0
    %1492 = vmatprep.subr.mxu0 0.0
    %1493 = vmatpush2.msra.mxu0 0.0
    %1494 = vmatprep.subr.mxu0 0.0
    %1495 = vmatpush2.msra.mxu0 0.0
    %1496 = vmatprep.subr.mxu0 0.0
    %1497 = vmatpush2.msra.mxu0 0.0
    %1498 = vmatprep.subr.mxu0 0.0
    %1499 = vmatpush2.msra.mxu0 0.0
    %1500 = vmatprep.subr.mxu0 0.0
    %1501 = vmatpush2.msra.mxu0 0.0
    %1502 = vmatprep.subr.mxu0 0.0
    %1503 = vmatpush2.msra.mxu0 0.0
    %1504 = vmatprep.subr.mxu0 0.0
    %1505 = vmatpush2.msra.mxu0 0.0
    %1506 = vmatprep.subr.mxu0 0.0
    %1507 = vmatpush2.msra.mxu0 0.0
    %1508 = vmatprep.subr.mxu0 0.0
    %1509 = vmatpush2.msra.mxu0 0.0
    %1510 = vmatprep.subr.mxu0 0.0
    %1511 = vmatpush2.msra.mxu0 0.0
    %1512 = vmatprep.mubr.f32.mxu0 0.0
    %1513 = vmatmul.mubr.f32.gmra.mxu0 %v1446
    %v1514 = vpop.f32.mrf.mxu0
    %v1515 = vadd.f32 0.0, %v1514
    %v1516 = vpop.f32.mrf.mxu0
    %1517 = vdwg.mxu0
    %v1518 = vadd.f32 %v1440, %v1515
    %v1519 = vxor.u32 %v1518, 2147483648
    %v1520 = vmul.f32 %v1519, 1.442695
    %v1521 = vpow.pop %v1520
    %v1522 = vadd.f32 %v1521, 1.0
    %v1523 = vrcp.pop %v1522
    %v1524 = vmul.f32 1.0, %v1523
    %v1525 = vtanh.pop %v1518
    %v1526 = vsel %vm307, %v1525, %v1524
    %v1527 = vmul.f32 %v1526, %v1190
    %1529 = vrot.lane.b32.xlu0 %v1526, 64
    %v1530 = vpop.permute.xlu0 %1529
    %v1532 = vmul.f32 %v1526, %v1530
    %1534 = vrot.lane.b32.xlu0 %v1532, 32
    %v1535 = vpop.permute.xlu0 %1534
    %v1537 = vadd.f32 %v1527, %v1535
    %v1538 = vtanh.pop %v1537
    %1540 = vrot.lane.b32.xlu0 %v1538, 64
    %v1541 = vpop.permute.xlu0 %1540
    %v1543 = vmul.f32 %v1526, %v1541
    %s1544 = scalar_lea.vmem %s0, 8
    %v1545 = vld [vmem:[%s1544] sm:$0x3]
    %v1547 = vsel %vm143, %v1545, 0
    %1549 = vmatprep.subr.mxu0 0.0
    %1550 = vmatpush1.msra.mxu0 0.0
    %1551 = vmatprep.subr.mxu0 0.0
    %1552 = vmatpush1.msra.mxu0 0.0
    %1553 = vmatprep.subr.mxu0 0.0
    %1554 = vmatpush1.msra.mxu0 0.0
    %1555 = vmatprep.subr.mxu0 0.0
    %1556 = vmatpush1.msra.mxu0 0.0
    %1557 = vmatprep.subr.mxu0 0.0
    %1558 = vmatpush1.msra.mxu0 0.0
    %1559 = vmatprep.subr.mxu0 0.0
    %1560 = vmatpush1.msra.mxu0 0.0
    %1561 = vmatprep.subr.mxu0 0.0
    %1562 = vmatpush1.msra.mxu0 0.0
    %1563 = vmatprep.subr.mxu0 0.0
    %1564 = vmatpush1.msra.mxu0 0.0
    %1565 = vmatprep.subr.mxu0 0.0
    %1566 = vmatpush1.msra.mxu0 0.0
    %1567 = vmatprep.subr.mxu0 0.0
    %1568 = vmatpush1.msra.mxu0 0.0
    %1569 = vmatprep.subr.mxu0 0.0
    %1570 = vmatpush1.msra.mxu0 0.0
    %1571 = vmatprep.subr.mxu0 0.0
    %1572 = vmatpush1.msra.mxu0 0.0
    %1573 = vmatprep.subr.mxu0 0.0
    %1574 = vmatpush1.msra.mxu0 0.0
    %1575 = vmatprep.subr.mxu0 0.0
    %1576 = vmatpush1.msra.mxu0 0.0
    %1577 = vmatprep.subr.mxu0 0.0
    %1578 = vmatpush1.msra.mxu0 0.0
    %1579 = vmatprep.subr.mxu0 0.0
    %1580 = vmatpush1.msra.mxu0 %v149
    %1581 = vmatprep.subr.mxu0 0.0
    %1582 = vmatpush2.msra.mxu0 0.0
    %1583 = vmatprep.subr.mxu0 0.0
    %1584 = vmatpush2.msra.mxu0 0.0
    %1585 = vmatprep.subr.mxu0 0.0
    %1586 = vmatpush2.msra.mxu0 0.0
    %1587 = vmatprep.subr.mxu0 0.0
    %1588 = vmatpush2.msra.mxu0 0.0
    %1589 = vmatprep.subr.mxu0 0.0
    %1590 = vmatpush2.msra.mxu0 0.0
    %1591 = vmatprep.subr.mxu0 0.0
    %1592 = vmatpush2.msra.mxu0 0.0
    %1593 = vmatprep.subr.mxu0 0.0
    %1594 = vmatpush2.msra.mxu0 0.0
    %1595 = vmatprep.subr.mxu0 0.0
    %1596 = vmatpush2.msra.mxu0 0.0
    %1597 = vmatprep.subr.mxu0 0.0
    %1598 = vmatpush2.msra.mxu0 0.0
    %1599 = vmatprep.subr.mxu0 0.0
    %1600 = vmatpush2.msra.mxu0 0.0
    %1601 = vmatprep.subr.mxu0 0.0
    %1602 = vmatpush2.msra.mxu0 0.0
    %1603 = vmatprep.subr.mxu0 0.0
    %1604 = vmatpush2.msra.mxu0 0.0
    %1605 = vmatprep.subr.mxu0 0.0
    %1606 = vmatpush2.msra.mxu0 0.0
    %1607 = vmatprep.subr.mxu0 0.0
    %1608 = vmatpush2.msra.mxu0 0.0
    %1609 = vmatprep.subr.mxu0 0.0
    %1610 = vmatpush2.msra.mxu0 0.0
    %1611 = vmatprep.subr.mxu0 0.0
    %1612 = vmatpush2.msra.mxu0 0.0
    %1613 = vmatprep.mubr.f32.mxu0 0.0
    %1614 = vmatmul.mubr.f32.gmra.mxu0 %v1547
    %v1615 = vpop.f32.mrf.mxu0
    %v1616 = vadd.f32 %v141, %v1615
    %v1617 = vpop.f32.mrf.mxu0
    %1618 = vdwg.mxu0
    %1619 = vmatprep.subr.mxu0 0.0
    %1620 = vmatpush1.msra.mxu0 0.0
    %1621 = vmatprep.subr.mxu0 0.0
    %1622 = vmatpush1.msra.mxu0 0.0
    %1623 = vmatprep.subr.mxu0 0.0
    %1624 = vmatpush1.msra.mxu0 0.0
    %1625 = vmatprep.subr.mxu0 0.0
    %1626 = vmatpush1.msra.mxu0 0.0
    %1627 = vmatprep.subr.mxu0 0.0
    %1628 = vmatpush1.msra.mxu0 0.0
    %1629 = vmatprep.subr.mxu0 0.0
    %1630 = vmatpush1.msra.mxu0 0.0
    %1631 = vmatprep.subr.mxu0 0.0
    %1632 = vmatpush1.msra.mxu0 0.0
    %1633 = vmatprep.subr.mxu0 0.0
    %1634 = vmatpush1.msra.mxu0 0.0
    %1635 = vmatprep.subr.mxu0 0.0
    %1636 = vmatpush1.msra.mxu0 0.0
    %1637 = vmatprep.subr.mxu0 0.0
    %1638 = vmatpush1.msra.mxu0 0.0
    %1639 = vmatprep.subr.mxu0 0.0
    %1640 = vmatpush1.msra.mxu0 0.0
    %1641 = vmatprep.subr.mxu0 0.0
    %1642 = vmatpush1.msra.mxu0 0.0
    %1643 = vmatprep.subr.mxu0 0.0
    %1644 = vmatpush1.msra.mxu0 %v110
    %1645 = vmatprep.subr.mxu0 0.0
    %1646 = vmatpush1.msra.mxu0 %v109
    %1647 = vmatprep.subr.mxu0 0.0
    %1648 = vmatpush1.msra.mxu0 %v108
    %1649 = vmatprep.subr.mxu0 0.0
    %1650 = vmatpush1.msra.mxu0 %v107
    %1651 = vmatprep.subr.mxu0 0.0
    %1652 = vmatpush2.msra.mxu0 0.0
    %1653 = vmatprep.subr.mxu0 0.0
    %1654 = vmatpush2.msra.mxu0 0.0
    %1655 = vmatprep.subr.mxu0 0.0
    %1656 = vmatpush2.msra.mxu0 0.0
    %1657 = vmatprep.subr.mxu0 0.0
    %1658 = vmatpush2.msra.mxu0 0.0
    %1659 = vmatprep.subr.mxu0 0.0
    %1660 = vmatpush2.msra.mxu0 0.0
    %1661 = vmatprep.subr.mxu0 0.0
    %1662 = vmatpush2.msra.mxu0 0.0
    %1663 = vmatprep.subr.mxu0 0.0
    %1664 = vmatpush2.msra.mxu0 0.0
    %1665 = vmatprep.subr.mxu0 0.0
    %1666 = vmatpush2.msra.mxu0 0.0
    %1667 = vmatprep.subr.mxu0 0.0
    %1668 = vmatpush2.msra.mxu0 0.0
    %1669 = vmatprep.subr.mxu0 0.0
    %1670 = vmatpush2.msra.mxu0 0.0
    %1671 = vmatprep.subr.mxu0 0.0
    %1672 = vmatpush2.msra.mxu0 0.0
    %1673 = vmatprep.subr.mxu0 0.0
    %1674 = vmatpush2.msra.mxu0 0.0
    %1675 = vmatprep.subr.mxu0 0.0
    %1676 = vmatpush2.msra.mxu0 0.0
    %1677 = vmatprep.subr.mxu0 0.0
    %1678 = vmatpush2.msra.mxu0 0.0
    %1679 = vmatprep.subr.mxu0 0.0
    %1680 = vmatpush2.msra.mxu0 0.0
    %1681 = vmatprep.subr.mxu0 0.0
    %1682 = vmatpush2.msra.mxu0 0.0
    %1683 = vmatprep.mubr.f32.mxu0 0.0
    %1684 = vmatmul.mubr.f32.gmra.mxu0 %v1371
    %v1685 = vpop.f32.mrf.mxu0
    %v1686 = vadd.f32 0.0, %v1685
    %v1687 = vpop.f32.mrf.mxu0
    %1688 = vdwg.mxu0
    %v1689 = vadd.f32 %v1616, %v1686
    %v1690 = vxor.u32 %v1689, 2147483648
    %v1691 = vmul.f32 %v1690, 1.442695
    %v1692 = vpow.pop %v1691
    %v1693 = vadd.f32 %v1692, 1.0
    %v1694 = vrcp.pop %v1693
    %v1695 = vmul.f32 1.0, %v1694
    %v1696 = vtanh.pop %v1689
    %v1697 = vsel %vm307, %v1696, %v1695
    %v1698 = vmul.f32 %v1697, %v1361
    %1700 = vrot.lane.b32.xlu0 %v1697, 64
    %v1701 = vpop.permute.xlu0 %1700
    %v1703 = vmul.f32 %v1697, %v1701
    %1705 = vrot.lane.b32.xlu0 %v1703, 32
    %v1706 = vpop.permute.xlu0 %1705
    %v1708 = vadd.f32 %v1698, %v1706
    %v1709 = vtanh.pop %v1708
    %1711 = vrot.lane.b32.xlu0 %v1709, 64
    %v1712 = vpop.permute.xlu0 %1711
    %v1714 = vmul.f32 %v1697, %v1712
    %1716 = vrot.lane.b32.xlu0 %v1714, 32
    %v1717 = vpop.permute.xlu0 %1716
    %v1718 = vsel %vm221, %v1717, 0
    %1720 = vmatprep.subr.mxu0 0.0
    %1721 = vmatpush1.msra.mxu0 0.0
    %1722 = vmatprep.subr.mxu0 0.0
    %1723 = vmatpush1.msra.mxu0 0.0
    %1724 = vmatprep.subr.mxu0 0.0
    %1725 = vmatpush1.msra.mxu0 0.0
    %1726 = vmatprep.subr.mxu0 0.0
    %1727 = vmatpush1.msra.mxu0 0.0
    %1728 = vmatprep.subr.mxu0 0.0
    %1729 = vmatpush1.msra.mxu0 0.0
    %1730 = vmatprep.subr.mxu0 0.0
    %1731 = vmatpush1.msra.mxu0 0.0
    %1732 = vmatprep.subr.mxu0 0.0
    %1733 = vmatpush1.msra.mxu0 0.0
    %1734 = vmatprep.subr.mxu0 0.0
    %1735 = vmatpush1.msra.mxu0 0.0
    %1736 = vmatprep.subr.mxu0 0.0
    %1737 = vmatpush1.msra.mxu0 0.0
    %1738 = vmatprep.subr.mxu0 0.0
    %1739 = vmatpush1.msra.mxu0 0.0
    %1740 = vmatprep.subr.mxu0 0.0
    %1741 = vmatpush1.msra.mxu0 0.0
    %1742 = vmatprep.subr.mxu0 0.0
    %1743 = vmatpush1.msra.mxu0 0.0
    %1744 = vmatprep.subr.mxu0 0.0
    %1745 = vmatpush1.msra.mxu0 %v115
    %1746 = vmatprep.subr.mxu0 0.0
    %1747 = vmatpush1.msra.mxu0 %v114
    %1748 = vmatprep.subr.mxu0 0.0
    %1749 = vmatpush1.msra.mxu0 %v113
    %1750 = vmatprep.subr.mxu0 0.0
    %1751 = vmatpush1.msra.mxu0 %v112
    %1752 = vmatprep.subr.mxu0 0.0
    %1753 = vmatpush2.msra.mxu0 0.0
    %1754 = vmatprep.subr.mxu0 0.0
    %1755 = vmatpush2.msra.mxu0 0.0
    %1756 = vmatprep.subr.mxu0 0.0
    %1757 = vmatpush2.msra.mxu0 0.0
    %1758 = vmatprep.subr.mxu0 0.0
    %1759 = vmatpush2.msra.mxu0 0.0
    %1760 = vmatprep.subr.mxu0 0.0
    %1761 = vmatpush2.msra.mxu0 0.0
    %1762 = vmatprep.subr.mxu0 0.0
    %1763 = vmatpush2.msra.mxu0 0.0
    %1764 = vmatprep.subr.mxu0 0.0
    %1765 = vmatpush2.msra.mxu0 0.0
    %1766 = vmatprep.subr.mxu0 0.0
    %1767 = vmatpush2.msra.mxu0 0.0
    %1768 = vmatprep.subr.mxu0 0.0
    %1769 = vmatpush2.msra.mxu0 0.0
    %1770 = vmatprep.subr.mxu0 0.0
    %1771 = vmatpush2.msra.mxu0 0.0
    %1772 = vmatprep.subr.mxu0 0.0
    %1773 = vmatpush2.msra.mxu0 0.0
    %1774 = vmatprep.subr.mxu0 0.0
    %1775 = vmatpush2.msra.mxu0 0.0
    %1776 = vmatprep.subr.mxu0 0.0
    %1777 = vmatpush2.msra.mxu0 0.0
    %1778 = vmatprep.subr.mxu0 0.0
    %1779 = vmatpush2.msra.mxu0 0.0
    %1780 = vmatprep.subr.mxu0 0.0
    %1781 = vmatpush2.msra.mxu0 0.0
    %1782 = vmatprep.subr.mxu0 0.0
    %1783 = vmatpush2.msra.mxu0 0.0
    %1784 = vmatprep.mubr.f32.mxu0 0.0
    %1785 = vmatmul.mubr.f32.gmra.mxu0 %v1718
    %v1786 = vpop.f32.mrf.mxu0
    %v1787 = vadd.f32 %v330, %v1786
    %v1788 = vpop.f32.mrf.mxu0
    %1789 = vdwg.mxu0
    %1791 = vrot.lane.b32.xlu0 %v1543, 32
    %v1792 = vpop.permute.xlu0 %1791
    %v1793 = vsel %vm221, %v1792, 0
    %1795 = vmatprep.subr.mxu0 0.0
    %1796 = vmatpush1.msra.mxu0 0.0
    %1797 = vmatprep.subr.mxu0 0.0
    %1798 = vmatpush1.msra.mxu0 0.0
    %1799 = vmatprep.subr.mxu0 0.0
    %1800 = vmatpush1.msra.mxu0 0.0
    %1801 = vmatprep.subr.mxu0 0.0
    %1802 = vmatpush1.msra.mxu0 0.0
    %1803 = vmatprep.subr.mxu0 0.0
    %1804 = vmatpush1.msra.mxu0 0.0
    %1805 = vmatprep.subr.mxu0 0.0
    %1806 = vmatpush1.msra.mxu0 0.0
    %1807 = vmatprep.subr.mxu0 0.0
    %1808 = vmatpush1.msra.mxu0 0.0
    %1809 = vmatprep.subr.mxu0 0.0
    %1810 = vmatpush1.msra.mxu0 0.0
    %1811 = vmatprep.subr.mxu0 0.0
    %1812 = vmatpush1.msra.mxu0 0.0
    %1813 = vmatprep.subr.mxu0 0.0
    %1814 = vmatpush1.msra.mxu0 0.0
    %1815 = vmatprep.subr.mxu0 0.0
    %1816 = vmatpush1.msra.mxu0 0.0
    %1817 = vmatprep.subr.mxu0 0.0
    %1818 = vmatpush1.msra.mxu0 0.0
    %1819 = vmatprep.subr.mxu0 0.0
    %1820 = vmatpush1.msra.mxu0 %v119
    %1821 = vmatprep.subr.mxu0 0.0
    %1822 = vmatpush1.msra.mxu0 %v118
    %1823 = vmatprep.subr.mxu0 0.0
    %1824 = vmatpush1.msra.mxu0 %v117
    %1825 = vmatprep.subr.mxu0 0.0
    %1826 = vmatpush1.msra.mxu0 %v116
    %1827 = vmatprep.subr.mxu0 0.0
    %1828 = vmatpush2.msra.mxu0 0.0
    %1829 = vmatprep.subr.mxu0 0.0
    %1830 = vmatpush2.msra.mxu0 0.0
    %1831 = vmatprep.subr.mxu0 0.0
    %1832 = vmatpush2.msra.mxu0 0.0
    %1833 = vmatprep.subr.mxu0 0.0
    %1834 = vmatpush2.msra.mxu0 0.0
    %1835 = vmatprep.subr.mxu0 0.0
    %1836 = vmatpush2.msra.mxu0 0.0
    %1837 = vmatprep.subr.mxu0 0.0
    %1838 = vmatpush2.msra.mxu0 0.0
    %1839 = vmatprep.subr.mxu0 0.0
    %1840 = vmatpush2.msra.mxu0 0.0
    %1841 = vmatprep.subr.mxu0 0.0
    %1842 = vmatpush2.msra.mxu0 0.0
    %1843 = vmatprep.subr.mxu0 0.0
    %1844 = vmatpush2.msra.mxu0 0.0
    %1845 = vmatprep.subr.mxu0 0.0
    %1846 = vmatpush2.msra.mxu0 0.0
    %1847 = vmatprep.subr.mxu0 0.0
    %1848 = vmatpush2.msra.mxu0 0.0
    %1849 = vmatprep.subr.mxu0 0.0
    %1850 = vmatpush2.msra.mxu0 0.0
    %1851 = vmatprep.subr.mxu0 0.0
    %1852 = vmatpush2.msra.mxu0 0.0
    %1853 = vmatprep.subr.mxu0 0.0
    %1854 = vmatpush2.msra.mxu0 0.0
    %1855 = vmatprep.subr.mxu0 0.0
    %1856 = vmatpush2.msra.mxu0 0.0
    %1857 = vmatprep.subr.mxu0 0.0
    %1858 = vmatpush2.msra.mxu0 0.0
    %1859 = vmatprep.mubr.f32.mxu0 0.0
    %1860 = vmatmul.mubr.f32.gmra.mxu0 %v1793
    %v1861 = vpop.f32.mrf.mxu0
    %v1862 = vadd.f32 0.0, %v1861
    %v1863 = vpop.f32.mrf.mxu0
    %1864 = vdwg.mxu0
    %v1865 = vadd.f32 %v1787, %v1862
    %v1866 = vxor.u32 %v1865, 2147483648
    %v1867 = vmul.f32 %v1866, 1.442695
    %v1868 = vpow.pop %v1867
    %v1869 = vadd.f32 %v1868, 1.0
    %v1870 = vrcp.pop %v1869
    %v1871 = vmul.f32 1.0, %v1870
    %v1872 = vtanh.pop %v1865
    %v1873 = vsel %vm307, %v1872, %v1871
    %v1874 = vmul.f32 %v1873, %v1537
    %1876 = vrot.lane.b32.xlu0 %v1873, 64
    %v1877 = vpop.permute.xlu0 %1876
    %v1879 = vmul.f32 %v1873, %v1877
    %1881 = vrot.lane.b32.xlu0 %v1879, 32
    %v1882 = vpop.permute.xlu0 %1881
    %v1884 = vadd.f32 %v1874, %v1882
    %v1885 = vtanh.pop %v1884
    %1887 = vrot.lane.b32.xlu0 %v1885, 64
    %v1888 = vpop.permute.xlu0 %1887
    %v1890 = vmul.f32 %v1873, %v1888
    %s1891 = scalar_lea.vmem %s0, 10
    %v1892 = vld [vmem:[%s1891] sm:$0x3]
    %v1894 = vsel %vm143, %v1892, 0
    %1896 = vmatprep.subr.mxu0 0.0
    %1897 = vmatpush1.msra.mxu0 0.0
    %1898 = vmatprep.subr.mxu0 0.0
    %1899 = vmatpush1.msra.mxu0 0.0
    %1900 = vmatprep.subr.mxu0 0.0
    %1901 = vmatpush1.msra.mxu0 0.0
    %1902 = vmatprep.subr.mxu0 0.0
    %1903 = vmatpush1.msra.mxu0 0.0
    %1904 = vmatprep.subr.mxu0 0.0
    %1905 = vmatpush1.msra.mxu0 0.0
    %1906 = vmatprep.subr.mxu0 0.0
    %1907 = vmatpush1.msra.mxu0 0.0
    %1908 = vmatprep.subr.mxu0 0.0
    %1909 = vmatpush1.msra.mxu0 0.0
    %1910 = vmatprep.subr.mxu0 0.0
    %1911 = vmatpush1.msra.mxu0 0.0
    %1912 = vmatprep.subr.mxu0 0.0
    %1913 = vmatpush1.msra.mxu0 0.0
    %1914 = vmatprep.subr.mxu0 0.0
    %1915 = vmatpush1.msra.mxu0 0.0
    %1916 = vmatprep.subr.mxu0 0.0
    %1917 = vmatpush1.msra.mxu0 0.0
    %1918 = vmatprep.subr.mxu0 0.0
    %1919 = vmatpush1.msra.mxu0 0.0
    %1920 = vmatprep.subr.mxu0 0.0
    %1921 = vmatpush1.msra.mxu0 0.0
    %1922 = vmatprep.subr.mxu0 0.0
    %1923 = vmatpush1.msra.mxu0 0.0
    %1924 = vmatprep.subr.mxu0 0.0
    %1925 = vmatpush1.msra.mxu0 0.0
    %1926 = vmatprep.subr.mxu0 0.0
    %1927 = vmatpush1.msra.mxu0 %v149
    %1928 = vmatprep.subr.mxu0 0.0
    %1929 = vmatpush2.msra.mxu0 0.0
    %1930 = vmatprep.subr.mxu0 0.0
    %1931 = vmatpush2.msra.mxu0 0.0
    %1932 = vmatprep.subr.mxu0 0.0
    %1933 = vmatpush2.msra.mxu0 0.0
    %1934 = vmatprep.subr.mxu0 0.0
    %1935 = vmatpush2.msra.mxu0 0.0
    %1936 = vmatprep.subr.mxu0 0.0
    %1937 = vmatpush2.msra.mxu0 0.0
    %1938 = vmatprep.subr.mxu0 0.0
    %1939 = vmatpush2.msra.mxu0 0.0
    %1940 = vmatprep.subr.mxu0 0.0
    %1941 = vmatpush2.msra.mxu0 0.0
    %1942 = vmatprep.subr.mxu0 0.0
    %1943 = vmatpush2.msra.mxu0 0.0
    %1944 = vmatprep.subr.mxu0 0.0
    %1945 = vmatpush2.msra.mxu0 0.0
    %1946 = vmatprep.subr.mxu0 0.0
    %1947 = vmatpush2.msra.mxu0 0.0
    %1948 = vmatprep.subr.mxu0 0.0
    %1949 = vmatpush2.msra.mxu0 0.0
    %1950 = vmatprep.subr.mxu0 0.0
    %1951 = vmatpush2.msra.mxu0 0.0
    %1952 = vmatprep.subr.mxu0 0.0
    %1953 = vmatpush2.msra.mxu0 0.0
    %1954 = vmatprep.subr.mxu0 0.0
    %1955 = vmatpush2.msra.mxu0 0.0
    %1956 = vmatprep.subr.mxu0 0.0
    %1957 = vmatpush2.msra.mxu0 0.0
    %1958 = vmatprep.subr.mxu0 0.0
    %1959 = vmatpush2.msra.mxu0 0.0
    %1960 = vmatprep.mubr.f32.mxu0 0.0
    %1961 = vmatmul.mubr.f32.gmra.mxu0 %v1894
    %v1962 = vpop.f32.mrf.mxu0
    %v1963 = vadd.f32 %v141, %v1962
    %v1964 = vpop.f32.mrf.mxu0
    %1965 = vdwg.mxu0
    %1966 = vmatprep.subr.mxu0 0.0
    %1967 = vmatpush1.msra.mxu0 0.0
    %1968 = vmatprep.subr.mxu0 0.0
    %1969 = vmatpush1.msra.mxu0 0.0
    %1970 = vmatprep.subr.mxu0 0.0
    %1971 = vmatpush1.msra.mxu0 0.0
    %1972 = vmatprep.subr.mxu0 0.0
    %1973 = vmatpush1.msra.mxu0 0.0
    %1974 = vmatprep.subr.mxu0 0.0
    %1975 = vmatpush1.msra.mxu0 0.0
    %1976 = vmatprep.subr.mxu0 0.0
    %1977 = vmatpush1.msra.mxu0 0.0
    %1978 = vmatprep.subr.mxu0 0.0
    %1979 = vmatpush1.msra.mxu0 0.0
    %1980 = vmatprep.subr.mxu0 0.0
    %1981 = vmatpush1.msra.mxu0 0.0
    %1982 = vmatprep.subr.mxu0 0.0
    %1983 = vmatpush1.msra.mxu0 0.0
    %1984 = vmatprep.subr.mxu0 0.0
    %1985 = vmatpush1.msra.mxu0 0.0
    %1986 = vmatprep.subr.mxu0 0.0
    %1987 = vmatpush1.msra.mxu0 0.0
    %1988 = vmatprep.subr.mxu0 0.0
    %1989 = vmatpush1.msra.mxu0 0.0
    %1990 = vmatprep.subr.mxu0 0.0
    %1991 = vmatpush1.msra.mxu0 %v110
    %1992 = vmatprep.subr.mxu0 0.0
    %1993 = vmatpush1.msra.mxu0 %v109
    %1994 = vmatprep.subr.mxu0 0.0
    %1995 = vmatpush1.msra.mxu0 %v108
    %1996 = vmatprep.subr.mxu0 0.0
    %1997 = vmatpush1.msra.mxu0 %v107
    %1998 = vmatprep.subr.mxu0 0.0
    %1999 = vmatpush2.msra.mxu0 0.0
    %2000 = vmatprep.subr.mxu0 0.0
    %2001 = vmatpush2.msra.mxu0 0.0
    %2002 = vmatprep.subr.mxu0 0.0
    %2003 = vmatpush2.msra.mxu0 0.0
    %2004 = vmatprep.subr.mxu0 0.0
    %2005 = vmatpush2.msra.mxu0 0.0
    %2006 = vmatprep.subr.mxu0 0.0
    %2007 = vmatpush2.msra.mxu0 0.0
    %2008 = vmatprep.subr.mxu0 0.0
    %2009 = vmatpush2.msra.mxu0 0.0
    %2010 = vmatprep.subr.mxu0 0.0
    %2011 = vmatpush2.msra.mxu0 0.0
    %2012 = vmatprep.subr.mxu0 0.0
    %2013 = vmatpush2.msra.mxu0 0.0
    %2014 = vmatprep.subr.mxu0 0.0
    %2015 = vmatpush2.msra.mxu0 0.0
    %2016 = vmatprep.subr.mxu0 0.0
    %2017 = vmatpush2.msra.mxu0 0.0
    %2018 = vmatprep.subr.mxu0 0.0
    %2019 = vmatpush2.msra.mxu0 0.0
    %2020 = vmatprep.subr.mxu0 0.0
    %2021 = vmatpush2.msra.mxu0 0.0
    %2022 = vmatprep.subr.mxu0 0.0
    %2023 = vmatpush2.msra.mxu0 0.0
    %2024 = vmatprep.subr.mxu0 0.0
    %2025 = vmatpush2.msra.mxu0 0.0
    %2026 = vmatprep.subr.mxu0 0.0
    %2027 = vmatpush2.msra.mxu0 0.0
    %2028 = vmatprep.subr.mxu0 0.0
    %2029 = vmatpush2.msra.mxu0 0.0
    %2030 = vmatprep.mubr.f32.mxu0 0.0
    %2031 = vmatmul.mubr.f32.gmra.mxu0 %v1718
    %v2032 = vpop.f32.mrf.mxu0
    %v2033 = vadd.f32 0.0, %v2032
    %v2034 = vpop.f32.mrf.mxu0
    %2035 = vdwg.mxu0
    %v2036 = vadd.f32 %v1963, %v2033
    %v2037 = vxor.u32 %v2036, 2147483648
    %v2038 = vmul.f32 %v2037, 1.442695
    %v2039 = vpow.pop %v2038
    %v2040 = vadd.f32 %v2039, 1.0
    %v2041 = vrcp.pop %v2040
    %v2042 = vmul.f32 1.0, %v2041
    %v2043 = vtanh.pop %v2036
    %v2044 = vsel %vm307, %v2043, %v2042
    %v2045 = vmul.f32 %v2044, %v1708
    %2047 = vrot.lane.b32.xlu0 %v2044, 64
    %v2048 = vpop.permute.xlu0 %2047
    %v2050 = vmul.f32 %v2044, %v2048
    %2052 = vrot.lane.b32.xlu0 %v2050, 32
    %v2053 = vpop.permute.xlu0 %2052
    %v2055 = vadd.f32 %v2045, %v2053
    %v2056 = vtanh.pop %v2055
    %2058 = vrot.lane.b32.xlu0 %v2056, 64
    %v2059 = vpop.permute.xlu0 %2058
    %v2061 = vmul.f32 %v2044, %v2059
    %2063 = vrot.lane.b32.xlu0 %v2061, 32
    %v2064 = vpop.permute.xlu0 %2063
    %v2065 = vsel %vm221, %v2064, 0
    %2067 = vmatprep.subr.mxu0 0.0
    %2068 = vmatpush1.msra.mxu0 0.0
    %2069 = vmatprep.subr.mxu0 0.0
    %2070 = vmatpush1.msra.mxu0 0.0
    %2071 = vmatprep.subr.mxu0 0.0
    %2072 = vmatpush1.msra.mxu0 0.0
    %2073 = vmatprep.subr.mxu0 0.0
    %2074 = vmatpush1.msra.mxu0 0.0
    %2075 = vmatprep.subr.mxu0 0.0
    %2076 = vmatpush1.msra.mxu0 0.0
    %2077 = vmatprep.subr.mxu0 0.0
    %2078 = vmatpush1.msra.mxu0 0.0
    %2079 = vmatprep.subr.mxu0 0.0
    %2080 = vmatpush1.msra.mxu0 0.0
    %2081 = vmatprep.subr.mxu0 0.0
    %2082 = vmatpush1.msra.mxu0 0.0
    %2083 = vmatprep.subr.mxu0 0.0
    %2084 = vmatpush1.msra.mxu0 0.0
    %2085 = vmatprep.subr.mxu0 0.0
    %2086 = vmatpush1.msra.mxu0 0.0
    %2087 = vmatprep.subr.mxu0 0.0
    %2088 = vmatpush1.msra.mxu0 0.0
    %2089 = vmatprep.subr.mxu0 0.0
    %2090 = vmatpush1.msra.mxu0 0.0
    %2091 = vmatprep.subr.mxu0 0.0
    %2092 = vmatpush1.msra.mxu0 %v115
    %2093 = vmatprep.subr.mxu0 0.0
    %2094 = vmatpush1.msra.mxu0 %v114
    %2095 = vmatprep.subr.mxu0 0.0
    %2096 = vmatpush1.msra.mxu0 %v113
    %2097 = vmatprep.subr.mxu0 0.0
    %2098 = vmatpush1.msra.mxu0 %v112
    %2099 = vmatprep.subr.mxu0 0.0
    %2100 = vmatpush2.msra.mxu0 0.0
    %2101 = vmatprep.subr.mxu0 0.0
    %2102 = vmatpush2.msra.mxu0 0.0
    %2103 = vmatprep.subr.mxu0 0.0
    %2104 = vmatpush2.msra.mxu0 0.0
    %2105 = vmatprep.subr.mxu0 0.0
    %2106 = vmatpush2.msra.mxu0 0.0
    %2107 = vmatprep.subr.mxu0 0.0
    %2108 = vmatpush2.msra.mxu0 0.0
    %2109 = vmatprep.subr.mxu0 0.0
    %2110 = vmatpush2.msra.mxu0 0.0
    %2111 = vmatprep.subr.mxu0 0.0
    %2112 = vmatpush2.msra.mxu0 0.0
    %2113 = vmatprep.subr.mxu0 0.0
    %2114 = vmatpush2.msra.mxu0 0.0
    %2115 = vmatprep.subr.mxu0 0.0
    %2116 = vmatpush2.msra.mxu0 0.0
    %2117 = vmatprep.subr.mxu0 0.0
    %2118 = vmatpush2.msra.mxu0 0.0
    %2119 = vmatprep.subr.mxu0 0.0
    %2120 = vmatpush2.msra.mxu0 0.0
    %2121 = vmatprep.subr.mxu0 0.0
    %2122 = vmatpush2.msra.mxu0 0.0
    %2123 = vmatprep.subr.mxu0 0.0
    %2124 = vmatpush2.msra.mxu0 0.0
    %2125 = vmatprep.subr.mxu0 0.0
    %2126 = vmatpush2.msra.mxu0 0.0
    %2127 = vmatprep.subr.mxu0 0.0
    %2128 = vmatpush2.msra.mxu0 0.0
    %2129 = vmatprep.subr.mxu0 0.0
    %2130 = vmatpush2.msra.mxu0 0.0
    %2131 = vmatprep.mubr.f32.mxu0 0.0
    %2132 = vmatmul.mubr.f32.gmra.mxu0 %v2065
    %v2133 = vpop.f32.mrf.mxu0
    %v2134 = vadd.f32 %v330, %v2133
    %v2135 = vpop.f32.mrf.mxu0
    %2136 = vdwg.mxu0
    %2138 = vrot.lane.b32.xlu0 %v1890, 32
    %v2139 = vpop.permute.xlu0 %2138
    %v2140 = vsel %vm221, %v2139, 0
    %2142 = vmatprep.subr.mxu0 0.0
    %2143 = vmatpush1.msra.mxu0 0.0
    %2144 = vmatprep.subr.mxu0 0.0
    %2145 = vmatpush1.msra.mxu0 0.0
    %2146 = vmatprep.subr.mxu0 0.0
    %2147 = vmatpush1.msra.mxu0 0.0
    %2148 = vmatprep.subr.mxu0 0.0
    %2149 = vmatpush1.msra.mxu0 0.0
    %2150 = vmatprep.subr.mxu0 0.0
    %2151 = vmatpush1.msra.mxu0 0.0
    %2152 = vmatprep.subr.mxu0 0.0
    %2153 = vmatpush1.msra.mxu0 0.0
    %2154 = vmatprep.subr.mxu0 0.0
    %2155 = vmatpush1.msra.mxu0 0.0
    %2156 = vmatprep.subr.mxu0 0.0
    %2157 = vmatpush1.msra.mxu0 0.0
    %2158 = vmatprep.subr.mxu0 0.0
    %2159 = vmatpush1.msra.mxu0 0.0
    %2160 = vmatprep.subr.mxu0 0.0
    %2161 = vmatpush1.msra.mxu0 0.0
    %2162 = vmatprep.subr.mxu0 0.0
    %2163 = vmatpush1.msra.mxu0 0.0
    %2164 = vmatprep.subr.mxu0 0.0
    %2165 = vmatpush1.msra.mxu0 0.0
    %2166 = vmatprep.subr.mxu0 0.0
    %2167 = vmatpush1.msra.mxu0 %v119
    %2168 = vmatprep.subr.mxu0 0.0
    %2169 = vmatpush1.msra.mxu0 %v118
    %2170 = vmatprep.subr.mxu0 0.0
    %2171 = vmatpush1.msra.mxu0 %v117
    %2172 = vmatprep.subr.mxu0 0.0
    %2173 = vmatpush1.msra.mxu0 %v116
    %2174 = vmatprep.subr.mxu0 0.0
    %2175 = vmatpush2.msra.mxu0 0.0
    %2176 = vmatprep.subr.mxu0 0.0
    %2177 = vmatpush2.msra.mxu0 0.0
    %2178 = vmatprep.subr.mxu0 0.0
    %2179 = vmatpush2.msra.mxu0 0.0
    %2180 = vmatprep.subr.mxu0 0.0
    %2181 = vmatpush2.msra.mxu0 0.0
    %2182 = vmatprep.subr.mxu0 0.0
    %2183 = vmatpush2.msra.mxu0 0.0
    %2184 = vmatprep.subr.mxu0 0.0
    %2185 = vmatpush2.msra.mxu0 0.0
    %2186 = vmatprep.subr.mxu0 0.0
    %2187 = vmatpush2.msra.mxu0 0.0
    %2188 = vmatprep.subr.mxu0 0.0
    %2189 = vmatpush2.msra.mxu0 0.0
    %2190 = vmatprep.subr.mxu0 0.0
    %2191 = vmatpush2.msra.mxu0 0.0
    %2192 = vmatprep.subr.mxu0 0.0
    %2193 = vmatpush2.msra.mxu0 0.0
    %2194 = vmatprep.subr.mxu0 0.0
    %2195 = vmatpush2.msra.mxu0 0.0
    %2196 = vmatprep.subr.mxu0 0.0
    %2197 = vmatpush2.msra.mxu0 0.0
    %2198 = vmatprep.subr.mxu0 0.0
    %2199 = vmatpush2.msra.mxu0 0.0
    %2200 = vmatprep.subr.mxu0 0.0
    %2201 = vmatpush2.msra.mxu0 0.0
    %2202 = vmatprep.subr.mxu0 0.0
    %2203 = vmatpush2.msra.mxu0 0.0
    %2204 = vmatprep.subr.mxu0 0.0
    %2205 = vmatpush2.msra.mxu0 0.0
    %2206 = vmatprep.mubr.f32.mxu0 0.0
    %2207 = vmatmul.mubr.f32.gmra.mxu0 %v2140
    %v2208 = vpop.f32.mrf.mxu0
    %v2209 = vadd.f32 0.0, %v2208
    %v2210 = vpop.f32.mrf.mxu0
    %2211 = vdwg.mxu0
    %v2212 = vadd.f32 %v2134, %v2209
    %v2213 = vxor.u32 %v2212, 2147483648
    %v2214 = vmul.f32 %v2213, 1.442695
    %v2215 = vpow.pop %v2214
    %v2216 = vadd.f32 %v2215, 1.0
    %v2217 = vrcp.pop %v2216
    %v2218 = vmul.f32 1.0, %v2217
    %v2219 = vtanh.pop %v2212
    %v2220 = vsel %vm307, %v2219, %v2218
    %v2221 = vmul.f32 %v2220, %v1884
    %2223 = vrot.lane.b32.xlu0 %v2220, 64
    %v2224 = vpop.permute.xlu0 %2223
    %v2226 = vmul.f32 %v2220, %v2224
    %2228 = vrot.lane.b32.xlu0 %v2226, 32
    %v2229 = vpop.permute.xlu0 %2228
    %v2231 = vadd.f32 %v2221, %v2229
    %v2232 = vtanh.pop %v2231
    %2234 = vrot.lane.b32.xlu0 %v2232, 64
    %v2235 = vpop.permute.xlu0 %2234
    %v2237 = vmul.f32 %v2220, %v2235
    %s2238 = scalar_lea.vmem %s0, 12
    %v2239 = vld [vmem:[%s2238] sm:$0x3]
    %v2241 = vsel %vm143, %v2239, 0
    %2243 = vmatprep.subr.mxu0 0.0
    %2244 = vmatpush1.msra.mxu0 0.0
    %2245 = vmatprep.subr.mxu0 0.0
    %2246 = vmatpush1.msra.mxu0 0.0
    %2247 = vmatprep.subr.mxu0 0.0
    %2248 = vmatpush1.msra.mxu0 0.0
    %2249 = vmatprep.subr.mxu0 0.0
    %2250 = vmatpush1.msra.mxu0 0.0
    %2251 = vmatprep.subr.mxu0 0.0
    %2252 = vmatpush1.msra.mxu0 0.0
    %2253 = vmatprep.subr.mxu0 0.0
    %2254 = vmatpush1.msra.mxu0 0.0
    %2255 = vmatprep.subr.mxu0 0.0
    %2256 = vmatpush1.msra.mxu0 0.0
    %2257 = vmatprep.subr.mxu0 0.0
    %2258 = vmatpush1.msra.mxu0 0.0
    %2259 = vmatprep.subr.mxu0 0.0
    %2260 = vmatpush1.msra.mxu0 0.0
    %2261 = vmatprep.subr.mxu0 0.0
    %2262 = vmatpush1.msra.mxu0 0.0
    %2263 = vmatprep.subr.mxu0 0.0
    %2264 = vmatpush1.msra.mxu0 0.0
    %2265 = vmatprep.subr.mxu0 0.0
    %2266 = vmatpush1.msra.mxu0 0.0
    %2267 = vmatprep.subr.mxu0 0.0
    %2268 = vmatpush1.msra.mxu0 0.0
    %2269 = vmatprep.subr.mxu0 0.0
    %2270 = vmatpush1.msra.mxu0 0.0
    %2271 = vmatprep.subr.mxu0 0.0
    %2272 = vmatpush1.msra.mxu0 0.0
    %2273 = vmatprep.subr.mxu0 0.0
    %2274 = vmatpush1.msra.mxu0 %v149
    %2275 = vmatprep.subr.mxu0 0.0
    %2276 = vmatpush2.msra.mxu0 0.0
    %2277 = vmatprep.subr.mxu0 0.0
    %2278 = vmatpush2.msra.mxu0 0.0
    %2279 = vmatprep.subr.mxu0 0.0
    %2280 = vmatpush2.msra.mxu0 0.0
    %2281 = vmatprep.subr.mxu0 0.0
    %2282 = vmatpush2.msra.mxu0 0.0
    %2283 = vmatprep.subr.mxu0 0.0
    %2284 = vmatpush2.msra.mxu0 0.0
    %2285 = vmatprep.subr.mxu0 0.0
    %2286 = vmatpush2.msra.mxu0 0.0
    %2287 = vmatprep.subr.mxu0 0.0
    %2288 = vmatpush2.msra.mxu0 0.0
    %2289 = vmatprep.subr.mxu0 0.0
    %2290 = vmatpush2.msra.mxu0 0.0
    %2291 = vmatprep.subr.mxu0 0.0
    %2292 = vmatpush2.msra.mxu0 0.0
    %2293 = vmatprep.subr.mxu0 0.0
    %2294 = vmatpush2.msra.mxu0 0.0
    %2295 = vmatprep.subr.mxu0 0.0
    %2296 = vmatpush2.msra.mxu0 0.0
    %2297 = vmatprep.subr.mxu0 0.0
    %2298 = vmatpush2.msra.mxu0 0.0
    %2299 = vmatprep.subr.mxu0 0.0
    %2300 = vmatpush2.msra.mxu0 0.0
    %2301 = vmatprep.subr.mxu0 0.0
    %2302 = vmatpush2.msra.mxu0 0.0
    %2303 = vmatprep.subr.mxu0 0.0
    %2304 = vmatpush2.msra.mxu0 0.0
    %2305 = vmatprep.subr.mxu0 0.0
    %2306 = vmatpush2.msra.mxu0 0.0
    %2307 = vmatprep.mubr.f32.mxu0 0.0
    %2308 = vmatmul.mubr.f32.gmra.mxu0 %v2241
    %v2309 = vpop.f32.mrf.mxu0
    %v2310 = vadd.f32 %v141, %v2309
    %v2311 = vpop.f32.mrf.mxu0
    %2312 = vdwg.mxu0
    %2313 = vmatprep.subr.mxu0 0.0
    %2314 = vmatpush1.msra.mxu0 0.0
    %2315 = vmatprep.subr.mxu0 0.0
    %2316 = vmatpush1.msra.mxu0 0.0
    %2317 = vmatprep.subr.mxu0 0.0
    %2318 = vmatpush1.msra.mxu0 0.0
    %2319 = vmatprep.subr.mxu0 0.0
    %2320 = vmatpush1.msra.mxu0 0.0
    %2321 = vmatprep.subr.mxu0 0.0
    %2322 = vmatpush1.msra.mxu0 0.0
    %2323 = vmatprep.subr.mxu0 0.0
    %2324 = vmatpush1.msra.mxu0 0.0
    %2325 = vmatprep.subr.mxu0 0.0
    %2326 = vmatpush1.msra.mxu0 0.0
    %2327 = vmatprep.subr.mxu0 0.0
    %2328 = vmatpush1.msra.mxu0 0.0
    %2329 = vmatprep.subr.mxu0 0.0
    %2330 = vmatpush1.msra.mxu0 0.0
    %2331 = vmatprep.subr.mxu0 0.0
    %2332 = vmatpush1.msra.mxu0 0.0
    %2333 = vmatprep.subr.mxu0 0.0
    %2334 = vmatpush1.msra.mxu0 0.0
    %2335 = vmatprep.subr.mxu0 0.0
    %2336 = vmatpush1.msra.mxu0 0.0
    %2337 = vmatprep.subr.mxu0 0.0
    %2338 = vmatpush1.msra.mxu0 %v110
    %2339 = vmatprep.subr.mxu0 0.0
    %2340 = vmatpush1.msra.mxu0 %v109
    %2341 = vmatprep.subr.mxu0 0.0
    %2342 = vmatpush1.msra.mxu0 %v108
    %2343 = vmatprep.subr.mxu0 0.0
    %2344 = vmatpush1.msra.mxu0 %v107
    %2345 = vmatprep.subr.mxu0 0.0
    %2346 = vmatpush2.msra.mxu0 0.0
    %2347 = vmatprep.subr.mxu0 0.0
    %2348 = vmatpush2.msra.mxu0 0.0
    %2349 = vmatprep.subr.mxu0 0.0
    %2350 = vmatpush2.msra.mxu0 0.0
    %2351 = vmatprep.subr.mxu0 0.0
    %2352 = vmatpush2.msra.mxu0 0.0
    %2353 = vmatprep.subr.mxu0 0.0
    %2354 = vmatpush2.msra.mxu0 0.0
    %2355 = vmatprep.subr.mxu0 0.0
    %2356 = vmatpush2.msra.mxu0 0.0
    %2357 = vmatprep.subr.mxu0 0.0
    %2358 = vmatpush2.msra.mxu0 0.0
    %2359 = vmatprep.subr.mxu0 0.0
    %2360 = vmatpush2.msra.mxu0 0.0
    %2361 = vmatprep.subr.mxu0 0.0
    %2362 = vmatpush2.msra.mxu0 0.0
    %2363 = vmatprep.subr.mxu0 0.0
    %2364 = vmatpush2.msra.mxu0 0.0
    %2365 = vmatprep.subr.mxu0 0.0
    %2366 = vmatpush2.msra.mxu0 0.0
    %2367 = vmatprep.subr.mxu0 0.0
    %2368 = vmatpush2.msra.mxu0 0.0
    %2369 = vmatprep.subr.mxu0 0.0
    %2370 = vmatpush2.msra.mxu0 0.0
    %2371 = vmatprep.subr.mxu0 0.0
    %2372 = vmatpush2.msra.mxu0 0.0
    %2373 = vmatprep.subr.mxu0 0.0
    %2374 = vmatpush2.msra.mxu0 0.0
    %2375 = vmatprep.subr.mxu0 0.0
    %2376 = vmatpush2.msra.mxu0 0.0
    %2377 = vmatprep.mubr.f32.mxu0 0.0
    %2378 = vmatmul.mubr.f32.gmra.mxu0 %v2065
    %v2379 = vpop.f32.mrf.mxu0
    %v2380 = vadd.f32 0.0, %v2379
    %v2381 = vpop.f32.mrf.mxu0
    %2382 = vdwg.mxu0
    %v2383 = vadd.f32 %v2310, %v2380
    %v2384 = vxor.u32 %v2383, 2147483648
    %v2385 = vmul.f32 %v2384, 1.442695
    %v2386 = vpow.pop %v2385
    %v2387 = vadd.f32 %v2386, 1.0
    %v2388 = vrcp.pop %v2387
    %v2389 = vmul.f32 1.0, %v2388
    %v2390 = vtanh.pop %v2383
    %v2391 = vsel %vm307, %v2390, %v2389
    %v2392 = vmul.f32 %v2391, %v2055
    %2394 = vrot.lane.b32.xlu0 %v2391, 64
    %v2395 = vpop.permute.xlu0 %2394
    %v2397 = vmul.f32 %v2391, %v2395
    %2399 = vrot.lane.b32.xlu0 %v2397, 32
    %v2400 = vpop.permute.xlu0 %2399
    %v2402 = vadd.f32 %v2392, %v2400
    %v2403 = vtanh.pop %v2402
    %2405 = vrot.lane.b32.xlu0 %v2403, 64
    %v2406 = vpop.permute.xlu0 %2405
    %v2408 = vmul.f32 %v2391, %v2406
    %2410 = vrot.lane.b32.xlu0 %v2408, 32
    %v2411 = vpop.permute.xlu0 %2410
    %v2412 = vsel %vm221, %v2411, 0
    %2414 = vmatprep.subr.mxu0 0.0
    %2415 = vmatpush1.msra.mxu0 0.0
    %2416 = vmatprep.subr.mxu0 0.0
    %2417 = vmatpush1.msra.mxu0 0.0
    %2418 = vmatprep.subr.mxu0 0.0
    %2419 = vmatpush1.msra.mxu0 0.0
    %2420 = vmatprep.subr.mxu0 0.0
    %2421 = vmatpush1.msra.mxu0 0.0
    %2422 = vmatprep.subr.mxu0 0.0
    %2423 = vmatpush1.msra.mxu0 0.0
    %2424 = vmatprep.subr.mxu0 0.0
    %2425 = vmatpush1.msra.mxu0 0.0
    %2426 = vmatprep.subr.mxu0 0.0
    %2427 = vmatpush1.msra.mxu0 0.0
    %2428 = vmatprep.subr.mxu0 0.0
    %2429 = vmatpush1.msra.mxu0 0.0
    %2430 = vmatprep.subr.mxu0 0.0
    %2431 = vmatpush1.msra.mxu0 0.0
    %2432 = vmatprep.subr.mxu0 0.0
    %2433 = vmatpush1.msra.mxu0 0.0
    %2434 = vmatprep.subr.mxu0 0.0
    %2435 = vmatpush1.msra.mxu0 0.0
    %2436 = vmatprep.subr.mxu0 0.0
    %2437 = vmatpush1.msra.mxu0 0.0
    %2438 = vmatprep.subr.mxu0 0.0
    %2439 = vmatpush1.msra.mxu0 %v115
    %2440 = vmatprep.subr.mxu0 0.0
    %2441 = vmatpush1.msra.mxu0 %v114
    %2442 = vmatprep.subr.mxu0 0.0
    %2443 = vmatpush1.msra.mxu0 %v113
    %2444 = vmatprep.subr.mxu0 0.0
    %2445 = vmatpush1.msra.mxu0 %v112
    %2446 = vmatprep.subr.mxu0 0.0
    %2447 = vmatpush2.msra.mxu0 0.0
    %2448 = vmatprep.subr.mxu0 0.0
    %2449 = vmatpush2.msra.mxu0 0.0
    %2450 = vmatprep.subr.mxu0 0.0
    %2451 = vmatpush2.msra.mxu0 0.0
    %2452 = vmatprep.subr.mxu0 0.0
    %2453 = vmatpush2.msra.mxu0 0.0
    %2454 = vmatprep.subr.mxu0 0.0
    %2455 = vmatpush2.msra.mxu0 0.0
    %2456 = vmatprep.subr.mxu0 0.0
    %2457 = vmatpush2.msra.mxu0 0.0
    %2458 = vmatprep.subr.mxu0 0.0
    %2459 = vmatpush2.msra.mxu0 0.0
    %2460 = vmatprep.subr.mxu0 0.0
    %2461 = vmatpush2.msra.mxu0 0.0
    %2462 = vmatprep.subr.mxu0 0.0
    %2463 = vmatpush2.msra.mxu0 0.0
    %2464 = vmatprep.subr.mxu0 0.0
    %2465 = vmatpush2.msra.mxu0 0.0
    %2466 = vmatprep.subr.mxu0 0.0
    %2467 = vmatpush2.msra.mxu0 0.0
    %2468 = vmatprep.subr.mxu0 0.0
    %2469 = vmatpush2.msra.mxu0 0.0
    %2470 = vmatprep.subr.mxu0 0.0
    %2471 = vmatpush2.msra.mxu0 0.0
    %2472 = vmatprep.subr.mxu0 0.0
    %2473 = vmatpush2.msra.mxu0 0.0
    %2474 = vmatprep.subr.mxu0 0.0
    %2475 = vmatpush2.msra.mxu0 0.0
    %2476 = vmatprep.subr.mxu0 0.0
    %2477 = vmatpush2.msra.mxu0 0.0
    %2478 = vmatprep.mubr.f32.mxu0 0.0
    %2479 = vmatmul.mubr.f32.gmra.mxu0 %v2412
    %v2480 = vpop.f32.mrf.mxu0
    %v2481 = vadd.f32 %v330, %v2480
    %v2482 = vpop.f32.mrf.mxu0
    %2483 = vdwg.mxu0
    %2485 = vrot.lane.b32.xlu0 %v2237, 32
    %v2486 = vpop.permute.xlu0 %2485
    %v2487 = vsel %vm221, %v2486, 0
    %2489 = vmatprep.subr.mxu0 0.0
    %2490 = vmatpush1.msra.mxu0 0.0
    %2491 = vmatprep.subr.mxu0 0.0
    %2492 = vmatpush1.msra.mxu0 0.0
    %2493 = vmatprep.subr.mxu0 0.0
    %2494 = vmatpush1.msra.mxu0 0.0
    %2495 = vmatprep.subr.mxu0 0.0
    %2496 = vmatpush1.msra.mxu0 0.0
    %2497 = vmatprep.subr.mxu0 0.0
    %2498 = vmatpush1.msra.mxu0 0.0
    %2499 = vmatprep.subr.mxu0 0.0
    %2500 = vmatpush1.msra.mxu0 0.0
    %2501 = vmatprep.subr.mxu0 0.0
    %2502 = vmatpush1.msra.mxu0 0.0
    %2503 = vmatprep.subr.mxu0 0.0
    %2504 = vmatpush1.msra.mxu0 0.0
    %2505 = vmatprep.subr.mxu0 0.0
    %2506 = vmatpush1.msra.mxu0 0.0
    %2507 = vmatprep.subr.mxu0 0.0
    %2508 = vmatpush1.msra.mxu0 0.0
    %2509 = vmatprep.subr.mxu0 0.0
    %2510 = vmatpush1.msra.mxu0 0.0
    %2511 = vmatprep.subr.mxu0 0.0
    %2512 = vmatpush1.msra.mxu0 0.0
    %2513 = vmatprep.subr.mxu0 0.0
    %2514 = vmatpush1.msra.mxu0 %v119
    %2515 = vmatprep.subr.mxu0 0.0
    %2516 = vmatpush1.msra.mxu0 %v118
    %2517 = vmatprep.subr.mxu0 0.0
    %2518 = vmatpush1.msra.mxu0 %v117
    %2519 = vmatprep.subr.mxu0 0.0
    %2520 = vmatpush1.msra.mxu0 %v116
    %2521 = vmatprep.subr.mxu0 0.0
    %2522 = vmatpush2.msra.mxu0 0.0
    %2523 = vmatprep.subr.mxu0 0.0
    %2524 = vmatpush2.msra.mxu0 0.0
    %2525 = vmatprep.subr.mxu0 0.0
    %2526 = vmatpush2.msra.mxu0 0.0
    %2527 = vmatprep.subr.mxu0 0.0
    %2528 = vmatpush2.msra.mxu0 0.0
    %2529 = vmatprep.subr.mxu0 0.0
    %2530 = vmatpush2.msra.mxu0 0.0
    %2531 = vmatprep.subr.mxu0 0.0
    %2532 = vmatpush2.msra.mxu0 0.0
    %2533 = vmatprep.subr.mxu0 0.0
    %2534 = vmatpush2.msra.mxu0 0.0
    %2535 = vmatprep.subr.mxu0 0.0
    %2536 = vmatpush2.msra.mxu0 0.0
    %2537 = vmatprep.subr.mxu0 0.0
    %2538 = vmatpush2.msra.mxu0 0.0
    %2539 = vmatprep.subr.mxu0 0.0
    %2540 = vmatpush2.msra.mxu0 0.0
    %2541 = vmatprep.subr.mxu0 0.0
    %2542 = vmatpush2.msra.mxu0 0.0
    %2543 = vmatprep.subr.mxu0 0.0
    %2544 = vmatpush2.msra.mxu0 0.0
    %2545 = vmatprep.subr.mxu0 0.0
    %2546 = vmatpush2.msra.mxu0 0.0
    %2547 = vmatprep.subr.mxu0 0.0
    %2548 = vmatpush2.msra.mxu0 0.0
    %2549 = vmatprep.subr.mxu0 0.0
    %2550 = vmatpush2.msra.mxu0 0.0
    %2551 = vmatprep.subr.mxu0 0.0
    %2552 = vmatpush2.msra.mxu0 0.0
    %2553 = vmatprep.mubr.f32.mxu0 0.0
    %2554 = vmatmul.mubr.f32.gmra.mxu0 %v2487
    %v2555 = vpop.f32.mrf.mxu0
    %v2556 = vadd.f32 0.0, %v2555
    %v2557 = vpop.f32.mrf.mxu0
    %2558 = vdwg.mxu0
    %v2559 = vadd.f32 %v2481, %v2556
    %v2560 = vxor.u32 %v2559, 2147483648
    %v2561 = vmul.f32 %v2560, 1.442695
    %v2562 = vpow.pop %v2561
    %v2563 = vadd.f32 %v2562, 1.0
    %v2564 = vrcp.pop %v2563
    %v2565 = vmul.f32 1.0, %v2564
    %v2566 = vtanh.pop %v2559
    %v2567 = vsel %vm307, %v2566, %v2565
    %v2568 = vmul.f32 %v2567, %v2231
    %2570 = vrot.lane.b32.xlu0 %v2567, 64
    %v2571 = vpop.permute.xlu0 %2570
    %v2573 = vmul.f32 %v2567, %v2571
    %2575 = vrot.lane.b32.xlu0 %v2573, 32
    %v2576 = vpop.permute.xlu0 %2575
    %v2578 = vadd.f32 %v2568, %v2576
    %v2579 = vtanh.pop %v2578
    %2581 = vrot.lane.b32.xlu0 %v2579, 64
    %v2582 = vpop.permute.xlu0 %2581
    %v2584 = vmul.f32 %v2567, %v2582
    %s2585 = scalar_lea.vmem %s0, 14
    %v2586 = vld [vmem:[%s2585] sm:$0x3]
    %v2588 = vsel %vm143, %v2586, 0
    %2590 = vmatprep.subr.mxu0 0.0
    %2591 = vmatpush1.msra.mxu0 0.0
    %2592 = vmatprep.subr.mxu0 0.0
    %2593 = vmatpush1.msra.mxu0 0.0
    %2594 = vmatprep.subr.mxu0 0.0
    %2595 = vmatpush1.msra.mxu0 0.0
    %2596 = vmatprep.subr.mxu0 0.0
    %2597 = vmatpush1.msra.mxu0 0.0
    %2598 = vmatprep.subr.mxu0 0.0
    %2599 = vmatpush1.msra.mxu0 0.0
    %2600 = vmatprep.subr.mxu0 0.0
    %2601 = vmatpush1.msra.mxu0 0.0
    %2602 = vmatprep.subr.mxu0 0.0
    %2603 = vmatpush1.msra.mxu0 0.0
    %2604 = vmatprep.subr.mxu0 0.0
    %2605 = vmatpush1.msra.mxu0 0.0
    %2606 = vmatprep.subr.mxu0 0.0
    %2607 = vmatpush1.msra.mxu0 0.0
    %2608 = vmatprep.subr.mxu0 0.0
    %2609 = vmatpush1.msra.mxu0 0.0
    %2610 = vmatprep.subr.mxu0 0.0
    %2611 = vmatpush1.msra.mxu0 0.0
    %2612 = vmatprep.subr.mxu0 0.0
    %2613 = vmatpush1.msra.mxu0 0.0
    %2614 = vmatprep.subr.mxu0 0.0
    %2615 = vmatpush1.msra.mxu0 0.0
    %2616 = vmatprep.subr.mxu0 0.0
    %2617 = vmatpush1.msra.mxu0 0.0
    %2618 = vmatprep.subr.mxu0 0.0
    %2619 = vmatpush1.msra.mxu0 0.0
    %2620 = vmatprep.subr.mxu0 0.0
    %2621 = vmatpush1.msra.mxu0 %v149
    %2622 = vmatprep.subr.mxu0 0.0
    %2623 = vmatpush2.msra.mxu0 0.0
    %2624 = vmatprep.subr.mxu0 0.0
    %2625 = vmatpush2.msra.mxu0 0.0
    %2626 = vmatprep.subr.mxu0 0.0
    %2627 = vmatpush2.msra.mxu0 0.0
    %2628 = vmatprep.subr.mxu0 0.0
    %2629 = vmatpush2.msra.mxu0 0.0
    %2630 = vmatprep.subr.mxu0 0.0
    %2631 = vmatpush2.msra.mxu0 0.0
    %2632 = vmatprep.subr.mxu0 0.0
    %2633 = vmatpush2.msra.mxu0 0.0
    %2634 = vmatprep.subr.mxu0 0.0
    %2635 = vmatpush2.msra.mxu0 0.0
    %2636 = vmatprep.subr.mxu0 0.0
    %2637 = vmatpush2.msra.mxu0 0.0
    %2638 = vmatprep.subr.mxu0 0.0
    %2639 = vmatpush2.msra.mxu0 0.0
    %2640 = vmatprep.subr.mxu0 0.0
    %2641 = vmatpush2.msra.mxu0 0.0
    %2642 = vmatprep.subr.mxu0 0.0
    %2643 = vmatpush2.msra.mxu0 0.0
    %2644 = vmatprep.subr.mxu0 0.0
    %2645 = vmatpush2.msra.mxu0 0.0
    %2646 = vmatprep.subr.mxu0 0.0
    %2647 = vmatpush2.msra.mxu0 0.0
    %2648 = vmatprep.subr.mxu0 0.0
    %2649 = vmatpush2.msra.mxu0 0.0
    %2650 = vmatprep.subr.mxu0 0.0
    %2651 = vmatpush2.msra.mxu0 0.0
    %2652 = vmatprep.subr.mxu0 0.0
    %2653 = vmatpush2.msra.mxu0 0.0
    %2654 = vmatprep.mubr.f32.mxu0 0.0
    %2655 = vmatmul.mubr.f32.gmra.mxu0 %v2588
    %v2656 = vpop.f32.mrf.mxu0
    %v2657 = vadd.f32 %v141, %v2656
    %v2658 = vpop.f32.mrf.mxu0
    %2659 = vdwg.mxu0
    %2660 = vmatprep.subr.mxu0 0.0
    %2661 = vmatpush1.msra.mxu0 0.0
    %2662 = vmatprep.subr.mxu0 0.0
    %2663 = vmatpush1.msra.mxu0 0.0
    %2664 = vmatprep.subr.mxu0 0.0
    %2665 = vmatpush1.msra.mxu0 0.0
    %2666 = vmatprep.subr.mxu0 0.0
    %2667 = vmatpush1.msra.mxu0 0.0
    %2668 = vmatprep.subr.mxu0 0.0
    %2669 = vmatpush1.msra.mxu0 0.0
    %2670 = vmatprep.subr.mxu0 0.0
    %2671 = vmatpush1.msra.mxu0 0.0
    %2672 = vmatprep.subr.mxu0 0.0
    %2673 = vmatpush1.msra.mxu0 0.0
    %2674 = vmatprep.subr.mxu0 0.0
    %2675 = vmatpush1.msra.mxu0 0.0
    %2676 = vmatprep.subr.mxu0 0.0
    %2677 = vmatpush1.msra.mxu0 0.0
    %2678 = vmatprep.subr.mxu0 0.0
    %2679 = vmatpush1.msra.mxu0 0.0
    %2680 = vmatprep.subr.mxu0 0.0
    %2681 = vmatpush1.msra.mxu0 0.0
    %2682 = vmatprep.subr.mxu0 0.0
    %2683 = vmatpush1.msra.mxu0 0.0
    %2684 = vmatprep.subr.mxu0 0.0
    %2685 = vmatpush1.msra.mxu0 %v110
    %2686 = vmatprep.subr.mxu0 0.0
    %2687 = vmatpush1.msra.mxu0 %v109
    %2688 = vmatprep.subr.mxu0 0.0
    %2689 = vmatpush1.msra.mxu0 %v108
    %2690 = vmatprep.subr.mxu0 0.0
    %2691 = vmatpush1.msra.mxu0 %v107
    %2692 = vmatprep.subr.mxu0 0.0
    %2693 = vmatpush2.msra.mxu0 0.0
    %2694 = vmatprep.subr.mxu0 0.0
    %2695 = vmatpush2.msra.mxu0 0.0
    %2696 = vmatprep.subr.mxu0 0.0
    %2697 = vmatpush2.msra.mxu0 0.0
    %2698 = vmatprep.subr.mxu0 0.0
    %2699 = vmatpush2.msra.mxu0 0.0
    %2700 = vmatprep.subr.mxu0 0.0
    %2701 = vmatpush2.msra.mxu0 0.0
    %2702 = vmatprep.subr.mxu0 0.0
    %2703 = vmatpush2.msra.mxu0 0.0
    %2704 = vmatprep.subr.mxu0 0.0
    %2705 = vmatpush2.msra.mxu0 0.0
    %2706 = vmatprep.subr.mxu0 0.0
    %2707 = vmatpush2.msra.mxu0 0.0
    %2708 = vmatprep.subr.mxu0 0.0
    %2709 = vmatpush2.msra.mxu0 0.0
    %2710 = vmatprep.subr.mxu0 0.0
    %2711 = vmatpush2.msra.mxu0 0.0
    %2712 = vmatprep.subr.mxu0 0.0
    %2713 = vmatpush2.msra.mxu0 0.0
    %2714 = vmatprep.subr.mxu0 0.0
    %2715 = vmatpush2.msra.mxu0 0.0
    %2716 = vmatprep.subr.mxu0 0.0
    %2717 = vmatpush2.msra.mxu0 0.0
    %2718 = vmatprep.subr.mxu0 0.0
    %2719 = vmatpush2.msra.mxu0 0.0
    %2720 = vmatprep.subr.mxu0 0.0
    %2721 = vmatpush2.msra.mxu0 0.0
    %2722 = vmatprep.subr.mxu0 0.0
    %2723 = vmatpush2.msra.mxu0 0.0
    %2724 = vmatprep.mubr.f32.mxu0 0.0
    %2725 = vmatmul.mubr.f32.gmra.mxu0 %v2412
    %v2726 = vpop.f32.mrf.mxu0
    %v2727 = vadd.f32 0.0, %v2726
    %v2728 = vpop.f32.mrf.mxu0
    %2729 = vdwg.mxu0
    %v2730 = vadd.f32 %v2657, %v2727
    %v2731 = vxor.u32 %v2730, 2147483648
    %v2732 = vmul.f32 %v2731, 1.442695
    %v2733 = vpow.pop %v2732
    %v2734 = vadd.f32 %v2733, 1.0
    %v2735 = vrcp.pop %v2734
    %v2736 = vmul.f32 1.0, %v2735
    %v2737 = vtanh.pop %v2730
    %v2738 = vsel %vm307, %v2737, %v2736
    %v2739 = vmul.f32 %v2738, %v2402
    %2741 = vrot.lane.b32.xlu0 %v2738, 64
    %v2742 = vpop.permute.xlu0 %2741
    %v2744 = vmul.f32 %v2738, %v2742
    %2746 = vrot.lane.b32.xlu0 %v2744, 32
    %v2747 = vpop.permute.xlu0 %2746
    %v2749 = vadd.f32 %v2739, %v2747
    %v2750 = vtanh.pop %v2749
    %2752 = vrot.lane.b32.xlu0 %v2750, 64
    %v2753 = vpop.permute.xlu0 %2752
    %v2755 = vmul.f32 %v2738, %v2753
    %2757 = vrot.lane.b32.xlu0 %v2755, 32
    %v2758 = vpop.permute.xlu0 %2757
    %v2759 = vsel %vm221, %v2758, 0
    %2761 = vmatprep.subr.mxu0 0.0
    %2762 = vmatpush1.msra.mxu0 0.0
    %2763 = vmatprep.subr.mxu0 0.0
    %2764 = vmatpush1.msra.mxu0 0.0
    %2765 = vmatprep.subr.mxu0 0.0
    %2766 = vmatpush1.msra.mxu0 0.0
    %2767 = vmatprep.subr.mxu0 0.0
    %2768 = vmatpush1.msra.mxu0 0.0
    %2769 = vmatprep.subr.mxu0 0.0
    %2770 = vmatpush1.msra.mxu0 0.0
    %2771 = vmatprep.subr.mxu0 0.0
    %2772 = vmatpush1.msra.mxu0 0.0
    %2773 = vmatprep.subr.mxu0 0.0
    %2774 = vmatpush1.msra.mxu0 0.0
    %2775 = vmatprep.subr.mxu0 0.0
    %2776 = vmatpush1.msra.mxu0 0.0
    %2777 = vmatprep.subr.mxu0 0.0
    %2778 = vmatpush1.msra.mxu0 0.0
    %2779 = vmatprep.subr.mxu0 0.0
    %2780 = vmatpush1.msra.mxu0 0.0
    %2781 = vmatprep.subr.mxu0 0.0
    %2782 = vmatpush1.msra.mxu0 0.0
    %2783 = vmatprep.subr.mxu0 0.0
    %2784 = vmatpush1.msra.mxu0 0.0
    %2785 = vmatprep.subr.mxu0 0.0
    %2786 = vmatpush1.msra.mxu0 %v115
    %2787 = vmatprep.subr.mxu0 0.0
    %2788 = vmatpush1.msra.mxu0 %v114
    %2789 = vmatprep.subr.mxu0 0.0
    %2790 = vmatpush1.msra.mxu0 %v113
    %2791 = vmatprep.subr.mxu0 0.0
    %2792 = vmatpush1.msra.mxu0 %v112
    %2793 = vmatprep.subr.mxu0 0.0
    %2794 = vmatpush2.msra.mxu0 0.0
    %2795 = vmatprep.subr.mxu0 0.0
    %2796 = vmatpush2.msra.mxu0 0.0
    %2797 = vmatprep.subr.mxu0 0.0
    %2798 = vmatpush2.msra.mxu0 0.0
    %2799 = vmatprep.subr.mxu0 0.0
    %2800 = vmatpush2.msra.mxu0 0.0
    %2801 = vmatprep.subr.mxu0 0.0
    %2802 = vmatpush2.msra.mxu0 0.0
    %2803 = vmatprep.subr.mxu0 0.0
    %2804 = vmatpush2.msra.mxu0 0.0
    %2805 = vmatprep.subr.mxu0 0.0
    %2806 = vmatpush2.msra.mxu0 0.0
    %2807 = vmatprep.subr.mxu0 0.0
    %2808 = vmatpush2.msra.mxu0 0.0
    %2809 = vmatprep.subr.mxu0 0.0
    %2810 = vmatpush2.msra.mxu0 0.0
    %2811 = vmatprep.subr.mxu0 0.0
    %2812 = vmatpush2.msra.mxu0 0.0
    %2813 = vmatprep.subr.mxu0 0.0
    %2814 = vmatpush2.msra.mxu0 0.0
    %2815 = vmatprep.subr.mxu0 0.0
    %2816 = vmatpush2.msra.mxu0 0.0
    %2817 = vmatprep.subr.mxu0 0.0
    %2818 = vmatpush2.msra.mxu0 0.0
    %2819 = vmatprep.subr.mxu0 0.0
    %2820 = vmatpush2.msra.mxu0 0.0
    %2821 = vmatprep.subr.mxu0 0.0
    %2822 = vmatpush2.msra.mxu0 0.0
    %2823 = vmatprep.subr.mxu0 0.0
    %2824 = vmatpush2.msra.mxu0 0.0
    %2825 = vmatprep.mubr.f32.mxu0 0.0
    %2826 = vmatmul.mubr.f32.gmra.mxu0 %v2759
    %v2827 = vpop.f32.mrf.mxu0
    %v2828 = vadd.f32 %v330, %v2827
    %v2829 = vpop.f32.mrf.mxu0
    %2830 = vdwg.mxu0
    %2832 = vrot.lane.b32.xlu0 %v2584, 32
    %v2833 = vpop.permute.xlu0 %2832
    %v2834 = vsel %vm221, %v2833, 0
    %2836 = vmatprep.subr.mxu0 0.0
    %2837 = vmatpush1.msra.mxu0 0.0
    %2838 = vmatprep.subr.mxu0 0.0
    %2839 = vmatpush1.msra.mxu0 0.0
    %2840 = vmatprep.subr.mxu0 0.0
    %2841 = vmatpush1.msra.mxu0 0.0
    %2842 = vmatprep.subr.mxu0 0.0
    %2843 = vmatpush1.msra.mxu0 0.0
    %2844 = vmatprep.subr.mxu0 0.0
    %2845 = vmatpush1.msra.mxu0 0.0
    %2846 = vmatprep.subr.mxu0 0.0
    %2847 = vmatpush1.msra.mxu0 0.0
    %2848 = vmatprep.subr.mxu0 0.0
    %2849 = vmatpush1.msra.mxu0 0.0
    %2850 = vmatprep.subr.mxu0 0.0
    %2851 = vmatpush1.msra.mxu0 0.0
    %2852 = vmatprep.subr.mxu0 0.0
    %2853 = vmatpush1.msra.mxu0 0.0
    %2854 = vmatprep.subr.mxu0 0.0
    %2855 = vmatpush1.msra.mxu0 0.0
    %2856 = vmatprep.subr.mxu0 0.0
    %2857 = vmatpush1.msra.mxu0 0.0
    %2858 = vmatprep.subr.mxu0 0.0
    %2859 = vmatpush1.msra.mxu0 0.0
    %2860 = vmatprep.subr.mxu0 0.0
    %2861 = vmatpush1.msra.mxu0 %v119
    %2862 = vmatprep.subr.mxu0 0.0
    %2863 = vmatpush1.msra.mxu0 %v118
    %2864 = vmatprep.subr.mxu0 0.0
    %2865 = vmatpush1.msra.mxu0 %v117
    %2866 = vmatprep.subr.mxu0 0.0
    %2867 = vmatpush1.msra.mxu0 %v116
    %2868 = vmatprep.subr.mxu0 0.0
    %2869 = vmatpush2.msra.mxu0 0.0
    %2870 = vmatprep.subr.mxu0 0.0
    %2871 = vmatpush2.msra.mxu0 0.0
    %2872 = vmatprep.subr.mxu0 0.0
    %2873 = vmatpush2.msra.mxu0 0.0
    %2874 = vmatprep.subr.mxu0 0.0
    %2875 = vmatpush2.msra.mxu0 0.0
    %2876 = vmatprep.subr.mxu0 0.0
    %2877 = vmatpush2.msra.mxu0 0.0
    %2878 = vmatprep.subr.mxu0 0.0
    %2879 = vmatpush2.msra.mxu0 0.0
    %2880 = vmatprep.subr.mxu0 0.0
    %2881 = vmatpush2.msra.mxu0 0.0
    %2882 = vmatprep.subr.mxu0 0.0
    %2883 = vmatpush2.msra.mxu0 0.0
    %2884 = vmatprep.subr.mxu0 0.0
    %2885 = vmatpush2.msra.mxu0 0.0
    %2886 = vmatprep.subr.mxu0 0.0
    %2887 = vmatpush2.msra.mxu0 0.0
    %2888 = vmatprep.subr.mxu0 0.0
    %2889 = vmatpush2.msra.mxu0 0.0
    %2890 = vmatprep.subr.mxu0 0.0
    %2891 = vmatpush2.msra.mxu0 0.0
    %2892 = vmatprep.subr.mxu0 0.0
    %2893 = vmatpush2.msra.mxu0 0.0
    %2894 = vmatprep.subr.mxu0 0.0
    %2895 = vmatpush2.msra.mxu0 0.0
    %2896 = vmatprep.subr.mxu0 0.0
    %2897 = vmatpush2.msra.mxu0 0.0
    %2898 = vmatprep.subr.mxu0 0.0
    %2899 = vmatpush2.msra.mxu0 0.0
    %2900 = vmatprep.mubr.f32.mxu0 0.0
    %2901 = vmatmul.mubr.f32.gmra.mxu0 %v2834
    %v2902 = vpop.f32.mrf.mxu0
    %v2903 = vadd.f32 0.0, %v2902
    %v2904 = vpop.f32.mrf.mxu0
    %2905 = vdwg.mxu0
    %v2906 = vadd.f32 %v2828, %v2903
    %v2907 = vxor.u32 %v2906, 2147483648
    %v2908 = vmul.f32 %v2907, 1.442695
    %v2909 = vpow.pop %v2908
    %v2910 = vadd.f32 %v2909, 1.0
    %v2911 = vrcp.pop %v2910
    %v2912 = vmul.f32 1.0, %v2911
    %v2913 = vtanh.pop %v2906
    %v2914 = vsel %vm307, %v2913, %v2912
    %v2915 = vmul.f32 %v2914, %v2578
    %2917 = vrot.lane.b32.xlu0 %v2914, 64
    %v2918 = vpop.permute.xlu0 %2917
    %v2920 = vmul.f32 %v2914, %v2918
    %2922 = vrot.lane.b32.xlu0 %v2920, 32
    %v2923 = vpop.permute.xlu0 %2922
    %v2925 = vadd.f32 %v2915, %v2923
    %v2926 = vtanh.pop %v2925
    %2928 = vrot.lane.b32.xlu0 %v2926, 64
    %v2929 = vpop.permute.xlu0 %2928
    %v2931 = vmul.f32 %v2914, %v2929
    %v2932 = vtanh.pop %v2931
    %v2933 = vld [vmem:[%s7] sm:$0xff]
    %v2934 = vld [vmem:[%s7 + $0x8] sm:$0xff]
    %v2935 = vld [vmem:[%s7 + $0x10] sm:$0xff]
    %v2936 = vld [vmem:[%s7 + $0x18] sm:$0xff]
    %v2937 = vld [vmem:[%s8] sm:$0x1]
    %v2939 = vlaneseq
    %v2940 = vshrl.u32 %v2939, 7
    %v2941 = vsub.s32 0, %v2940
    %v2942 = vrot.slane %v2937, %v2941
    %2945 = vrot.lane.b32.xlu0 %v2932, 32
    %v2946 = vpop.permute.xlu0 %2945
    %v2947 = vsel %vm221, %v2946, 0
    %2949 = vmatprep.subr.mxu0 0.0
    %2950 = vmatpush1.msra.mxu0 0.0
    %2951 = vmatprep.subr.mxu0 0.0
    %2952 = vmatpush1.msra.mxu0 0.0
    %2953 = vmatprep.subr.mxu0 0.0
    %2954 = vmatpush1.msra.mxu0 0.0
    %2955 = vmatprep.subr.mxu0 0.0
    %2956 = vmatpush1.msra.mxu0 0.0
    %2957 = vmatprep.subr.mxu0 0.0
    %2958 = vmatpush1.msra.mxu0 0.0
    %2959 = vmatprep.subr.mxu0 0.0
    %2960 = vmatpush1.msra.mxu0 0.0
    %2961 = vmatprep.subr.mxu0 0.0
    %2962 = vmatpush1.msra.mxu0 0.0
    %2963 = vmatprep.subr.mxu0 0.0
    %2964 = vmatpush1.msra.mxu0 0.0
    %2965 = vmatprep.subr.mxu0 0.0
    %2966 = vmatpush1.msra.mxu0 0.0
    %2967 = vmatprep.subr.mxu0 0.0
    %2968 = vmatpush1.msra.mxu0 0.0
    %2969 = vmatprep.subr.mxu0 0.0
    %2970 = vmatpush1.msra.mxu0 0.0
    %2971 = vmatprep.subr.mxu0 0.0
    %2972 = vmatpush1.msra.mxu0 0.0
    %2973 = vmatprep.subr.mxu0 0.0
    %2974 = vmatpush1.msra.mxu0 %v2936
    %2975 = vmatprep.subr.mxu0 0.0
    %2976 = vmatpush1.msra.mxu0 %v2935
    %2977 = vmatprep.subr.mxu0 0.0
    %2978 = vmatpush1.msra.mxu0 %v2934
    %2979 = vmatprep.subr.mxu0 0.0
    %2980 = vmatpush1.msra.mxu0 %v2933
    %2981 = vmatprep.subr.mxu0 0.0
    %2982 = vmatpush2.msra.mxu0 0.0
    %2983 = vmatprep.subr.mxu0 0.0
    %2984 = vmatpush2.msra.mxu0 0.0
    %2985 = vmatprep.subr.mxu0 0.0
    %2986 = vmatpush2.msra.mxu0 0.0
    %2987 = vmatprep.subr.mxu0 0.0
    %2988 = vmatpush2.msra.mxu0 0.0
    %2989 = vmatprep.subr.mxu0 0.0
    %2990 = vmatpush2.msra.mxu0 0.0
    %2991 = vmatprep.subr.mxu0 0.0
    %2992 = vmatpush2.msra.mxu0 0.0
    %2993 = vmatprep.subr.mxu0 0.0
    %2994 = vmatpush2.msra.mxu0 0.0
    %2995 = vmatprep.subr.mxu0 0.0
    %2996 = vmatpush2.msra.mxu0 0.0
    %2997 = vmatprep.subr.mxu0 0.0
    %2998 = vmatpush2.msra.mxu0 0.0
    %2999 = vmatprep.subr.mxu0 0.0
    %3000 = vmatpush2.msra.mxu0 0.0
    %3001 = vmatprep.subr.mxu0 0.0
    %3002 = vmatpush2.msra.mxu0 0.0
    %3003 = vmatprep.subr.mxu0 0.0
    %3004 = vmatpush2.msra.mxu0 0.0
    %3005 = vmatprep.subr.mxu0 0.0
    %3006 = vmatpush2.msra.mxu0 0.0
    %3007 = vmatprep.subr.mxu0 0.0
    %3008 = vmatpush2.msra.mxu0 0.0
    %3009 = vmatprep.subr.mxu0 0.0
    %3010 = vmatpush2.msra.mxu0 0.0
    %3011 = vmatprep.subr.mxu0 0.0
    %3012 = vmatpush2.msra.mxu0 0.0
    %3013 = vmatprep.mubr.f32.mxu0 0.0
    %3014 = vmatmul.mubr.f32.gmra.mxu0 %v2947
    %v3015 = vpop.f32.mrf.mxu0
    %v3016 = vadd.f32 %v2942, %v3015
    %v3017 = vpop.f32.mrf.mxu0
    %3018 = vdwg.mxu0
    %v3019 = vmax.f32 %v3016, 0.0
    %vm3020 = vcmask 58368
    %3021 = vst.msk [vmem:[#allocation7] sm:$0x3] %vm3020, %v3019
    %3023 = vrot.lane.b32.xlu0 %v3019, 120
    %v3024 = vpop.permute.xlu0 %3023
    %3026 = vst.msk [vmem:[#allocation8] sm:$0x3] %vm3020, %v3024
    %v3027 = vmul.f32 %v3019, 0.5
    %v3028 = vmul.f32 %v3027, 1.442695
    %v3029 = vpow.pop %v3028
    %v3030 = vld [vmem:[%s9] sm:$0x3]
    %3032 = vrot.lane.b32.xlu0 %v3030, 8
    %v3033 = vpop.permute.xlu0 %3032
    %v3035 = vmul.f32 %v3029, %v3033
    %3037 = vrot.lane.b32.xlu0 %v3035, 120
    %v3038 = vpop.permute.xlu0 %3037
    %v3040 = vadd.f32 %v3019, %v3038
    %v3042 = vlaneseq
    %v3043 = vshrl.u32 %v3042, 7
    %v3044 = vsub.s32 0, %v3043
    %v3045 = vrot.slane %v126, %v3044
    %vm3047 = vcmask 64512
    %v3049 = vsel %vm3047, %v3040, 0
    %3051 = vmatprep.subr.mxu0 0.0
    %3052 = vmatpush1.msra.mxu0 0.0
    %3053 = vmatprep.subr.mxu0 0.0
    %3054 = vmatpush1.msra.mxu0 0.0
    %3055 = vmatprep.subr.mxu0 0.0
    %3056 = vmatpush1.msra.mxu0 0.0
    %3057 = vmatprep.subr.mxu0 0.0
    %3058 = vmatpush1.msra.mxu0 0.0
    %3059 = vmatprep.subr.mxu0 0.0
    %3060 = vmatpush1.msra.mxu0 0.0
    %3061 = vmatprep.subr.mxu0 0.0
    %3062 = vmatpush1.msra.mxu0 0.0
    %3063 = vmatprep.subr.mxu0 0.0
    %3064 = vmatpush1.msra.mxu0 0.0
    %3065 = vmatprep.subr.mxu0 0.0
    %3066 = vmatpush1.msra.mxu0 0.0
    %3067 = vmatprep.subr.mxu0 0.0
    %3068 = vmatpush1.msra.mxu0 0.0
    %3069 = vmatprep.subr.mxu0 0.0
    %3070 = vmatpush1.msra.mxu0 0.0
    %3071 = vmatprep.subr.mxu0 0.0
    %3072 = vmatpush1.msra.mxu0 0.0
    %3073 = vmatprep.subr.mxu0 0.0
    %3074 = vmatpush1.msra.mxu0 0.0
    %3075 = vmatprep.subr.mxu0 0.0
    %3076 = vmatpush1.msra.mxu0 0.0
    %3077 = vmatprep.subr.mxu0 0.0
    %3078 = vmatpush1.msra.mxu0 0.0
    %3079 = vmatprep.subr.mxu0 0.0
    %3080 = vmatpush1.msra.mxu0 0.0
    %3081 = vmatprep.subr.mxu0 0.0
    %3082 = vmatpush1.msra.mxu0 %v121
    %3083 = vmatprep.subr.mxu0 0.0
    %3084 = vmatpush2.msra.mxu0 0.0
    %3085 = vmatprep.subr.mxu0 0.0
    %3086 = vmatpush2.msra.mxu0 0.0
    %3087 = vmatprep.subr.mxu0 0.0
    %3088 = vmatpush2.msra.mxu0 0.0
    %3089 = vmatprep.subr.mxu0 0.0
    %3090 = vmatpush2.msra.mxu0 0.0
    %3091 = vmatprep.subr.mxu0 0.0
    %3092 = vmatpush2.msra.mxu0 0.0
    %3093 = vmatprep.subr.mxu0 0.0
    %3094 = vmatpush2.msra.mxu0 0.0
    %3095 = vmatprep.subr.mxu0 0.0
    %3096 = vmatpush2.msra.mxu0 0.0
    %3097 = vmatprep.subr.mxu0 0.0
    %3098 = vmatpush2.msra.mxu0 0.0
    %3099 = vmatprep.subr.mxu0 0.0
    %3100 = vmatpush2.msra.mxu0 0.0
    %3101 = vmatprep.subr.mxu0 0.0
    %3102 = vmatpush2.msra.mxu0 0.0
    %3103 = vmatprep.subr.mxu0 0.0
    %3104 = vmatpush2.msra.mxu0 0.0
    %3105 = vmatprep.subr.mxu0 0.0
    %3106 = vmatpush2.msra.mxu0 0.0
    %3107 = vmatprep.subr.mxu0 0.0
    %3108 = vmatpush2.msra.mxu0 0.0
    %3109 = vmatprep.subr.mxu0 0.0
    %3110 = vmatpush2.msra.mxu0 0.0
    %3111 = vmatprep.subr.mxu0 0.0
    %3112 = vmatpush2.msra.mxu0 0.0
    %3113 = vmatprep.subr.mxu0 0.0
    %3114 = vmatpush2.msra.mxu0 0.0
    %3115 = vmatprep.mubr.f32.mxu0 0.0
    %3116 = vmatmul.mubr.f32.gmra.mxu0 %v3049
    %v3117 = vpop.f32.mrf.mxu0
    %v3118 = vadd.f32 %v3045, %v3117
    %v3119 = vpop.f32.mrf.mxu0
    %3120 = vdwg.mxu0
    %v3121 = vld [vmem:[%s16] sm:$0x3]
    %v3122 = vld [vmem:[%s17] sm:$0x3]
    %s3123 = scalar_lea.vmem %s16, 2
    %v3124 = vld [vmem:[%s3123] sm:$0x3]
    %s3125 = scalar_lea.vmem %s17, 2
    %v3126 = vld [vmem:[%s3125] sm:$0x3]
    %v3128 = vsel %vm221, %v3121, 0
    %3130 = vmatprep.subr.mxu0 0.0
    %3131 = vmatpush1.msra.mxu0 0.0
    %3132 = vmatprep.subr.mxu0 0.0
    %3133 = vmatpush1.msra.mxu0 0.0
    %3134 = vmatprep.subr.mxu0 0.0
    %3135 = vmatpush1.msra.mxu0 0.0
    %3136 = vmatprep.subr.mxu0 0.0
    %3137 = vmatpush1.msra.mxu0 0.0
    %3138 = vmatprep.subr.mxu0 0.0
    %3139 = vmatpush1.msra.mxu0 0.0
    %3140 = vmatprep.subr.mxu0 0.0
    %3141 = vmatpush1.msra.mxu0 0.0
    %3142 = vmatprep.subr.mxu0 0.0
    %3143 = vmatpush1.msra.mxu0 0.0
    %3144 = vmatprep.subr.mxu0 0.0
    %3145 = vmatpush1.msra.mxu0 0.0
    %3146 = vmatprep.subr.mxu0 0.0
    %3147 = vmatpush1.msra.mxu0 0.0
    %3148 = vmatprep.subr.mxu0 0.0
    %3149 = vmatpush1.msra.mxu0 0.0
    %3150 = vmatprep.subr.mxu0 0.0
    %3151 = vmatpush1.msra.mxu0 0.0
    %3152 = vmatprep.subr.mxu0 0.0
    %3153 = vmatpush1.msra.mxu0 0.0
    %3154 = vmatprep.subr.mxu0 0.0
    %3155 = vmatpush1.msra.mxu0 %v125
    %3156 = vmatprep.subr.mxu0 0.0
    %3157 = vmatpush1.msra.mxu0 %v124
    %3158 = vmatprep.subr.mxu0 0.0
    %3159 = vmatpush1.msra.mxu0 %v123
    %3160 = vmatprep.subr.mxu0 0.0
    %3161 = vmatpush1.msra.mxu0 %v122
    %3162 = vmatprep.subr.mxu0 0.0
    %3163 = vmatpush2.msra.mxu0 0.0
    %3164 = vmatprep.subr.mxu0 0.0
    %3165 = vmatpush2.msra.mxu0 0.0
    %3166 = vmatprep.subr.mxu0 0.0
    %3167 = vmatpush2.msra.mxu0 0.0
    %3168 = vmatprep.subr.mxu0 0.0
    %3169 = vmatpush2.msra.mxu0 0.0
    %3170 = vmatprep.subr.mxu0 0.0
    %3171 = vmatpush2.msra.mxu0 0.0
    %3172 = vmatprep.subr.mxu0 0.0
    %3173 = vmatpush2.msra.mxu0 0.0
    %3174 = vmatprep.subr.mxu0 0.0
    %3175 = vmatpush2.msra.mxu0 0.0
    %3176 = vmatprep.subr.mxu0 0.0
    %3177 = vmatpush2.msra.mxu0 0.0
    %3178 = vmatprep.subr.mxu0 0.0
    %3179 = vmatpush2.msra.mxu0 0.0
    %3180 = vmatprep.subr.mxu0 0.0
    %3181 = vmatpush2.msra.mxu0 0.0
    %3182 = vmatprep.subr.mxu0 0.0
    %3183 = vmatpush2.msra.mxu0 0.0
    %3184 = vmatprep.subr.mxu0 0.0
    %3185 = vmatpush2.msra.mxu0 0.0
    %3186 = vmatprep.subr.mxu0 0.0
    %3187 = vmatpush2.msra.mxu0 0.0
    %3188 = vmatprep.subr.mxu0 0.0
    %3189 = vmatpush2.msra.mxu0 0.0
    %3190 = vmatprep.subr.mxu0 0.0
    %3191 = vmatpush2.msra.mxu0 0.0
    %3192 = vmatprep.subr.mxu0 0.0
    %3193 = vmatpush2.msra.mxu0 0.0
    %3194 = vmatprep.mubr.f32.mxu0 0.0
    %3195 = vmatmul.mubr.f32.gmra.mxu0 %v3128
    %v3196 = vpop.f32.mrf.mxu0
    %v3197 = vadd.f32 0.0, %v3196
    %v3198 = vpop.f32.mrf.mxu0
    %3199 = vdwg.mxu0
    %v3200 = vadd.f32 %v3118, %v3197
    %v3201 = vxor.u32 %v3200, 2147483648
    %v3202 = vmul.f32 %v3201, 1.442695
    %v3203 = vpow.pop %v3202
    %v3204 = vadd.f32 %v3203, 1.0
    %v3205 = vrcp.pop %v3204
    %v3206 = vmul.f32 1.0, %v3205
    %v3207 = vtanh.pop %v3200
    %v3208 = vsel %vm307, %v3207, %v3206
    %3210 = vrot.lane.b32.xlu0 %v3122, 32
    %v3211 = vpop.permute.xlu0 %3210
    %v3213 = vmul.f32 %v3208, %v3211
    %3215 = vrot.lane.b32.xlu0 %v3208, 64
    %v3216 = vpop.permute.xlu0 %3215
    %v3218 = vmul.f32 %v3208, %v3216
    %3220 = vrot.lane.b32.xlu0 %v3218, 32
    %v3221 = vpop.permute.xlu0 %3220
    %v3223 = vadd.f32 %v3213, %v3221
    %v3224 = vtanh.pop %v3223
    %3226 = vrot.lane.b32.xlu0 %v3224, 64
    %v3227 = vpop.permute.xlu0 %3226
    %v3229 = vmul.f32 %v3208, %v3227
    %v3231 = vlaneseq
    %v3232 = vshrl.u32 %v3231, 7
    %v3233 = vsub.s32 0, %v3232
    %v3234 = vrot.slane %v135, %v3233
    %3237 = vrot.lane.b32.xlu0 %v3229, 32
    %v3238 = vpop.permute.xlu0 %3237
    %v3239 = vsel %vm221, %v3238, 0
    %3241 = vmatprep.subr.mxu0 0.0
    %3242 = vmatpush1.msra.mxu0 0.0
    %3243 = vmatprep.subr.mxu0 0.0
    %3244 = vmatpush1.msra.mxu0 0.0
    %3245 = vmatprep.subr.mxu0 0.0
    %3246 = vmatpush1.msra.mxu0 0.0
    %3247 = vmatprep.subr.mxu0 0.0
    %3248 = vmatpush1.msra.mxu0 0.0
    %3249 = vmatprep.subr.mxu0 0.0
    %3250 = vmatpush1.msra.mxu0 0.0
    %3251 = vmatprep.subr.mxu0 0.0
    %3252 = vmatpush1.msra.mxu0 0.0
    %3253 = vmatprep.subr.mxu0 0.0
    %3254 = vmatpush1.msra.mxu0 0.0
    %3255 = vmatprep.subr.mxu0 0.0
    %3256 = vmatpush1.msra.mxu0 0.0
    %3257 = vmatprep.subr.mxu0 0.0
    %3258 = vmatpush1.msra.mxu0 0.0
    %3259 = vmatprep.subr.mxu0 0.0
    %3260 = vmatpush1.msra.mxu0 0.0
    %3261 = vmatprep.subr.mxu0 0.0
    %3262 = vmatpush1.msra.mxu0 0.0
    %3263 = vmatprep.subr.mxu0 0.0
    %3264 = vmatpush1.msra.mxu0 0.0
    %3265 = vmatprep.subr.mxu0 0.0
    %3266 = vmatpush1.msra.mxu0 %v130
    %3267 = vmatprep.subr.mxu0 0.0
    %3268 = vmatpush1.msra.mxu0 %v129
    %3269 = vmatprep.subr.mxu0 0.0
    %3270 = vmatpush1.msra.mxu0 %v128
    %3271 = vmatprep.subr.mxu0 0.0
    %3272 = vmatpush1.msra.mxu0 %v127
    %3273 = vmatprep.subr.mxu0 0.0
    %3274 = vmatpush2.msra.mxu0 0.0
    %3275 = vmatprep.subr.mxu0 0.0
    %3276 = vmatpush2.msra.mxu0 0.0
    %3277 = vmatprep.subr.mxu0 0.0
    %3278 = vmatpush2.msra.mxu0 0.0
    %3279 = vmatprep.subr.mxu0 0.0
    %3280 = vmatpush2.msra.mxu0 0.0
    %3281 = vmatprep.subr.mxu0 0.0
    %3282 = vmatpush2.msra.mxu0 0.0
    %3283 = vmatprep.subr.mxu0 0.0
    %3284 = vmatpush2.msra.mxu0 0.0
    %3285 = vmatprep.subr.mxu0 0.0
    %3286 = vmatpush2.msra.mxu0 0.0
    %3287 = vmatprep.subr.mxu0 0.0
    %3288 = vmatpush2.msra.mxu0 0.0
    %3289 = vmatprep.subr.mxu0 0.0
    %3290 = vmatpush2.msra.mxu0 0.0
    %3291 = vmatprep.subr.mxu0 0.0
    %3292 = vmatpush2.msra.mxu0 0.0
    %3293 = vmatprep.subr.mxu0 0.0
    %3294 = vmatpush2.msra.mxu0 0.0
    %3295 = vmatprep.subr.mxu0 0.0
    %3296 = vmatpush2.msra.mxu0 0.0
    %3297 = vmatprep.subr.mxu0 0.0
    %3298 = vmatpush2.msra.mxu0 0.0
    %3299 = vmatprep.subr.mxu0 0.0
    %3300 = vmatpush2.msra.mxu0 0.0
    %3301 = vmatprep.subr.mxu0 0.0
    %3302 = vmatpush2.msra.mxu0 0.0
    %3303 = vmatprep.subr.mxu0 0.0
    %3304 = vmatpush2.msra.mxu0 0.0
    %3305 = vmatprep.mubr.f32.mxu0 0.0
    %3306 = vmatmul.mubr.f32.gmra.mxu0 %v3239
    %v3307 = vpop.f32.mrf.mxu0
    %v3308 = vadd.f32 %v3234, %v3307
    %v3309 = vpop.f32.mrf.mxu0
    %3310 = vdwg.mxu0
    %v3312 = vsel %vm221, %v3124, 0
    %3314 = vmatprep.subr.mxu0 0.0
    %3315 = vmatpush1.msra.mxu0 0.0
    %3316 = vmatprep.subr.mxu0 0.0
    %3317 = vmatpush1.msra.mxu0 0.0
    %3318 = vmatprep.subr.mxu0 0.0
    %3319 = vmatpush1.msra.mxu0 0.0
    %3320 = vmatprep.subr.mxu0 0.0
    %3321 = vmatpush1.msra.mxu0 0.0
    %3322 = vmatprep.subr.mxu0 0.0
    %3323 = vmatpush1.msra.mxu0 0.0
    %3324 = vmatprep.subr.mxu0 0.0
    %3325 = vmatpush1.msra.mxu0 0.0
    %3326 = vmatprep.subr.mxu0 0.0
    %3327 = vmatpush1.msra.mxu0 0.0
    %3328 = vmatprep.subr.mxu0 0.0
    %3329 = vmatpush1.msra.mxu0 0.0
    %3330 = vmatprep.subr.mxu0 0.0
    %3331 = vmatpush1.msra.mxu0 0.0
    %3332 = vmatprep.subr.mxu0 0.0
    %3333 = vmatpush1.msra.mxu0 0.0
    %3334 = vmatprep.subr.mxu0 0.0
    %3335 = vmatpush1.msra.mxu0 0.0
    %3336 = vmatprep.subr.mxu0 0.0
    %3337 = vmatpush1.msra.mxu0 0.0
    %3338 = vmatprep.subr.mxu0 0.0
    %3339 = vmatpush1.msra.mxu0 %v134
    %3340 = vmatprep.subr.mxu0 0.0
    %3341 = vmatpush1.msra.mxu0 %v133
    %3342 = vmatprep.subr.mxu0 0.0
    %3343 = vmatpush1.msra.mxu0 %v132
    %3344 = vmatprep.subr.mxu0 0.0
    %3345 = vmatpush1.msra.mxu0 %v131
    %3346 = vmatprep.subr.mxu0 0.0
    %3347 = vmatpush2.msra.mxu0 0.0
    %3348 = vmatprep.subr.mxu0 0.0
    %3349 = vmatpush2.msra.mxu0 0.0
    %3350 = vmatprep.subr.mxu0 0.0
    %3351 = vmatpush2.msra.mxu0 0.0
    %3352 = vmatprep.subr.mxu0 0.0
    %3353 = vmatpush2.msra.mxu0 0.0
    %3354 = vmatprep.subr.mxu0 0.0
    %3355 = vmatpush2.msra.mxu0 0.0
    %3356 = vmatprep.subr.mxu0 0.0
    %3357 = vmatpush2.msra.mxu0 0.0
    %3358 = vmatprep.subr.mxu0 0.0
    %3359 = vmatpush2.msra.mxu0 0.0
    %3360 = vmatprep.subr.mxu0 0.0
    %3361 = vmatpush2.msra.mxu0 0.0
    %3362 = vmatprep.subr.mxu0 0.0
    %3363 = vmatpush2.msra.mxu0 0.0
    %3364 = vmatprep.subr.mxu0 0.0
    %3365 = vmatpush2.msra.mxu0 0.0
    %3366 = vmatprep.subr.mxu0 0.0
    %3367 = vmatpush2.msra.mxu0 0.0
    %3368 = vmatprep.subr.mxu0 0.0
    %3369 = vmatpush2.msra.mxu0 0.0
    %3370 = vmatprep.subr.mxu0 0.0
    %3371 = vmatpush2.msra.mxu0 0.0
    %3372 = vmatprep.subr.mxu0 0.0
    %3373 = vmatpush2.msra.mxu0 0.0
    %3374 = vmatprep.subr.mxu0 0.0
    %3375 = vmatpush2.msra.mxu0 0.0
    %3376 = vmatprep.subr.mxu0 0.0
    %3377 = vmatpush2.msra.mxu0 0.0
    %3378 = vmatprep.mubr.f32.mxu0 0.0
    %3379 = vmatmul.mubr.f32.gmra.mxu0 %v3312
    %v3380 = vpop.f32.mrf.mxu0
    %v3381 = vadd.f32 0.0, %v3380
    %v3382 = vpop.f32.mrf.mxu0
    %3383 = vdwg.mxu0
    %v3384 = vadd.f32 %v3308, %v3381
    %v3385 = vxor.u32 %v3384, 2147483648
    %v3386 = vmul.f32 %v3385, 1.442695
    %v3387 = vpow.pop %v3386
    %v3388 = vadd.f32 %v3387, 1.0
    %v3389 = vrcp.pop %v3388
    %v3390 = vmul.f32 1.0, %v3389
    %v3391 = vtanh.pop %v3384
    %v3392 = vsel %vm307, %v3391, %v3390
    %3394 = vrot.lane.b32.xlu0 %v3126, 32
    %v3395 = vpop.permute.xlu0 %3394
    %v3397 = vmul.f32 %v3392, %v3395
    %3399 = vrot.lane.b32.xlu0 %v3392, 64
    %v3400 = vpop.permute.xlu0 %3399
    %v3402 = vmul.f32 %v3392, %v3400
    %3404 = vrot.lane.b32.xlu0 %v3402, 32
    %v3405 = vpop.permute.xlu0 %3404
    %v3407 = vadd.f32 %v3397, %v3405
    %v3408 = vtanh.pop %v3407
    %3410 = vrot.lane.b32.xlu0 %v3408, 64
    %v3411 = vpop.permute.xlu0 %3410
    %v3413 = vmul.f32 %v3392, %v3411
    %3414 = vmatprep.subr.mxu0 0.0
    %3415 = vmatpush1.msra.mxu0 0.0
    %3416 = vmatprep.subr.mxu0 0.0
    %3417 = vmatpush1.msra.mxu0 0.0
    %3418 = vmatprep.subr.mxu0 0.0
    %3419 = vmatpush1.msra.mxu0 0.0
    %3420 = vmatprep.subr.mxu0 0.0
    %3421 = vmatpush1.msra.mxu0 0.0
    %3422 = vmatprep.subr.mxu0 0.0
    %3423 = vmatpush1.msra.mxu0 0.0
    %3424 = vmatprep.subr.mxu0 0.0
    %3425 = vmatpush1.msra.mxu0 0.0
    %3426 = vmatprep.subr.mxu0 0.0
    %3427 = vmatpush1.msra.mxu0 0.0
    %3428 = vmatprep.subr.mxu0 0.0
    %3429 = vmatpush1.msra.mxu0 0.0
    %3430 = vmatprep.subr.mxu0 0.0
    %3431 = vmatpush1.msra.mxu0 0.0
    %3432 = vmatprep.subr.mxu0 0.0
    %3433 = vmatpush1.msra.mxu0 0.0
    %3434 = vmatprep.subr.mxu0 0.0
    %3435 = vmatpush1.msra.mxu0 0.0
    %3436 = vmatprep.subr.mxu0 0.0
    %3437 = vmatpush1.msra.mxu0 0.0
    %3438 = vmatprep.subr.mxu0 0.0
    %3439 = vmatpush1.msra.mxu0 %v125
    %3440 = vmatprep.subr.mxu0 0.0
    %3441 = vmatpush1.msra.mxu0 %v124
    %3442 = vmatprep.subr.mxu0 0.0
    %3443 = vmatpush1.msra.mxu0 %v123
    %3444 = vmatprep.subr.mxu0 0.0
    %3445 = vmatpush1.msra.mxu0 %v122
    %3446 = vmatprep.subr.mxu0 0.0
    %3447 = vmatpush2.msra.mxu0 0.0
    %3448 = vmatprep.subr.mxu0 0.0
    %3449 = vmatpush2.msra.mxu0 0.0
    %3450 = vmatprep.subr.mxu0 0.0
    %3451 = vmatpush2.msra.mxu0 0.0
    %3452 = vmatprep.subr.mxu0 0.0
    %3453 = vmatpush2.msra.mxu0 0.0
    %3454 = vmatprep.subr.mxu0 0.0
    %3455 = vmatpush2.msra.mxu0 0.0
    %3456 = vmatprep.subr.mxu0 0.0
    %3457 = vmatpush2.msra.mxu0 0.0
    %3458 = vmatprep.subr.mxu0 0.0
    %3459 = vmatpush2.msra.mxu0 0.0
    %3460 = vmatprep.subr.mxu0 0.0
    %3461 = vmatpush2.msra.mxu0 0.0
    %3462 = vmatprep.subr.mxu0 0.0
    %3463 = vmatpush2.msra.mxu0 0.0
    %3464 = vmatprep.subr.mxu0 0.0
    %3465 = vmatpush2.msra.mxu0 0.0
    %3466 = vmatprep.subr.mxu0 0.0
    %3467 = vmatpush2.msra.mxu0 0.0
    %3468 = vmatprep.subr.mxu0 0.0
    %3469 = vmatpush2.msra.mxu0 0.0
    %3470 = vmatprep.subr.mxu0 0.0
    %3471 = vmatpush2.msra.mxu0 0.0
    %3472 = vmatprep.subr.mxu0 0.0
    %3473 = vmatpush2.msra.mxu0 0.0
    %3474 = vmatprep.subr.mxu0 0.0
    %3475 = vmatpush2.msra.mxu0 0.0
    %3476 = vmatprep.subr.mxu0 0.0
    %3477 = vmatpush2.msra.mxu0 0.0
    %3478 = vmatprep.mubr.f32.mxu0 0.0
    %3479 = vmatmul.mubr.f32.gmra.mxu0 %v3239
    %v3480 = vpop.f32.mrf.mxu0
    %v3481 = vadd.f32 0.0, %v3480
    %v3482 = vpop.f32.mrf.mxu0
    %3483 = vdwg.mxu0
    %v3484 = vadd.f32 %v3118, %v3481
    %v3485 = vxor.u32 %v3484, 2147483648
    %v3486 = vmul.f32 %v3485, 1.442695
    %v3487 = vpow.pop %v3486
    %v3488 = vadd.f32 %v3487, 1.0
    %v3489 = vrcp.pop %v3488
    %v3490 = vmul.f32 1.0, %v3489
    %v3491 = vtanh.pop %v3484
    %v3492 = vsel %vm307, %v3491, %v3490
    %v3493 = vmul.f32 %v3492, %v3223
    %3495 = vrot.lane.b32.xlu0 %v3492, 64
    %v3496 = vpop.permute.xlu0 %3495
    %v3498 = vmul.f32 %v3492, %v3496
    %3500 = vrot.lane.b32.xlu0 %v3498, 32
    %v3501 = vpop.permute.xlu0 %3500
    %v3503 = vadd.f32 %v3493, %v3501
    %v3504 = vtanh.pop %v3503
    %3506 = vrot.lane.b32.xlu0 %v3504, 64
    %v3507 = vpop.permute.xlu0 %3506
    %v3509 = vmul.f32 %v3492, %v3507
    %3511 = vrot.lane.b32.xlu0 %v3509, 32
    %v3512 = vpop.permute.xlu0 %3511
    %v3513 = vsel %vm221, %v3512, 0
    %3515 = vmatprep.subr.mxu0 0.0
    %3516 = vmatpush1.msra.mxu0 0.0
    %3517 = vmatprep.subr.mxu0 0.0
    %3518 = vmatpush1.msra.mxu0 0.0
    %3519 = vmatprep.subr.mxu0 0.0
    %3520 = vmatpush1.msra.mxu0 0.0
    %3521 = vmatprep.subr.mxu0 0.0
    %3522 = vmatpush1.msra.mxu0 0.0
    %3523 = vmatprep.subr.mxu0 0.0
    %3524 = vmatpush1.msra.mxu0 0.0
    %3525 = vmatprep.subr.mxu0 0.0
    %3526 = vmatpush1.msra.mxu0 0.0
    %3527 = vmatprep.subr.mxu0 0.0
    %3528 = vmatpush1.msra.mxu0 0.0
    %3529 = vmatprep.subr.mxu0 0.0
    %3530 = vmatpush1.msra.mxu0 0.0
    %3531 = vmatprep.subr.mxu0 0.0
    %3532 = vmatpush1.msra.mxu0 0.0
    %3533 = vmatprep.subr.mxu0 0.0
    %3534 = vmatpush1.msra.mxu0 0.0
    %3535 = vmatprep.subr.mxu0 0.0
    %3536 = vmatpush1.msra.mxu0 0.0
    %3537 = vmatprep.subr.mxu0 0.0
    %3538 = vmatpush1.msra.mxu0 0.0
    %3539 = vmatprep.subr.mxu0 0.0
    %3540 = vmatpush1.msra.mxu0 %v130
    %3541 = vmatprep.subr.mxu0 0.0
    %3542 = vmatpush1.msra.mxu0 %v129
    %3543 = vmatprep.subr.mxu0 0.0
    %3544 = vmatpush1.msra.mxu0 %v128
    %3545 = vmatprep.subr.mxu0 0.0
    %3546 = vmatpush1.msra.mxu0 %v127
    %3547 = vmatprep.subr.mxu0 0.0
    %3548 = vmatpush2.msra.mxu0 0.0
    %3549 = vmatprep.subr.mxu0 0.0
    %3550 = vmatpush2.msra.mxu0 0.0
    %3551 = vmatprep.subr.mxu0 0.0
    %3552 = vmatpush2.msra.mxu0 0.0
    %3553 = vmatprep.subr.mxu0 0.0
    %3554 = vmatpush2.msra.mxu0 0.0
    %3555 = vmatprep.subr.mxu0 0.0
    %3556 = vmatpush2.msra.mxu0 0.0
    %3557 = vmatprep.subr.mxu0 0.0
    %3558 = vmatpush2.msra.mxu0 0.0
    %3559 = vmatprep.subr.mxu0 0.0
    %3560 = vmatpush2.msra.mxu0 0.0
    %3561 = vmatprep.subr.mxu0 0.0
    %3562 = vmatpush2.msra.mxu0 0.0
    %3563 = vmatprep.subr.mxu0 0.0
    %3564 = vmatpush2.msra.mxu0 0.0
    %3565 = vmatprep.subr.mxu0 0.0
    %3566 = vmatpush2.msra.mxu0 0.0
    %3567 = vmatprep.subr.mxu0 0.0
    %3568 = vmatpush2.msra.mxu0 0.0
    %3569 = vmatprep.subr.mxu0 0.0
    %3570 = vmatpush2.msra.mxu0 0.0
    %3571 = vmatprep.subr.mxu0 0.0
    %3572 = vmatpush2.msra.mxu0 0.0
    %3573 = vmatprep.subr.mxu0 0.0
    %3574 = vmatpush2.msra.mxu0 0.0
    %3575 = vmatprep.subr.mxu0 0.0
    %3576 = vmatpush2.msra.mxu0 0.0
    %3577 = vmatprep.subr.mxu0 0.0
    %3578 = vmatpush2.msra.mxu0 0.0
    %3579 = vmatprep.mubr.f32.mxu0 0.0
    %3580 = vmatmul.mubr.f32.gmra.mxu0 %v3513
    %v3581 = vpop.f32.mrf.mxu0
    %v3582 = vadd.f32 %v3234, %v3581
    %v3583 = vpop.f32.mrf.mxu0
    %3584 = vdwg.mxu0
    %3586 = vrot.lane.b32.xlu0 %v3413, 32
    %v3587 = vpop.permute.xlu0 %3586
    %v3588 = vsel %vm221, %v3587, 0
    %3590 = vmatprep.subr.mxu0 0.0
    %3591 = vmatpush1.msra.mxu0 0.0
    %3592 = vmatprep.subr.mxu0 0.0
    %3593 = vmatpush1.msra.mxu0 0.0
    %3594 = vmatprep.subr.mxu0 0.0
    %3595 = vmatpush1.msra.mxu0 0.0
    %3596 = vmatprep.subr.mxu0 0.0
    %3597 = vmatpush1.msra.mxu0 0.0
    %3598 = vmatprep.subr.mxu0 0.0
    %3599 = vmatpush1.msra.mxu0 0.0
    %3600 = vmatprep.subr.mxu0 0.0
    %3601 = vmatpush1.msra.mxu0 0.0
    %3602 = vmatprep.subr.mxu0 0.0
    %3603 = vmatpush1.msra.mxu0 0.0
    %3604 = vmatprep.subr.mxu0 0.0
    %3605 = vmatpush1.msra.mxu0 0.0
    %3606 = vmatprep.subr.mxu0 0.0
    %3607 = vmatpush1.msra.mxu0 0.0
    %3608 = vmatprep.subr.mxu0 0.0
    %3609 = vmatpush1.msra.mxu0 0.0
    %3610 = vmatprep.subr.mxu0 0.0
    %3611 = vmatpush1.msra.mxu0 0.0
    %3612 = vmatprep.subr.mxu0 0.0
    %3613 = vmatpush1.msra.mxu0 0.0
    %3614 = vmatprep.subr.mxu0 0.0
    %3615 = vmatpush1.msra.mxu0 %v134
    %3616 = vmatprep.subr.mxu0 0.0
    %3617 = vmatpush1.msra.mxu0 %v133
    %3618 = vmatprep.subr.mxu0 0.0
    %3619 = vmatpush1.msra.mxu0 %v132
    %3620 = vmatprep.subr.mxu0 0.0
    %3621 = vmatpush1.msra.mxu0 %v131
    %3622 = vmatprep.subr.mxu0 0.0
    %3623 = vmatpush2.msra.mxu0 0.0
    %3624 = vmatprep.subr.mxu0 0.0
    %3625 = vmatpush2.msra.mxu0 0.0
    %3626 = vmatprep.subr.mxu0 0.0
    %3627 = vmatpush2.msra.mxu0 0.0
    %3628 = vmatprep.subr.mxu0 0.0
    %3629 = vmatpush2.msra.mxu0 0.0
    %3630 = vmatprep.subr.mxu0 0.0
    %3631 = vmatpush2.msra.mxu0 0.0
    %3632 = vmatprep.subr.mxu0 0.0
    %3633 = vmatpush2.msra.mxu0 0.0
    %3634 = vmatprep.subr.mxu0 0.0
    %3635 = vmatpush2.msra.mxu0 0.0
    %3636 = vmatprep.subr.mxu0 0.0
    %3637 = vmatpush2.msra.mxu0 0.0
    %3638 = vmatprep.subr.mxu0 0.0
    %3639 = vmatpush2.msra.mxu0 0.0
    %3640 = vmatprep.subr.mxu0 0.0
    %3641 = vmatpush2.msra.mxu0 0.0
    %3642 = vmatprep.subr.mxu0 0.0
    %3643 = vmatpush2.msra.mxu0 0.0
    %3644 = vmatprep.subr.mxu0 0.0
    %3645 = vmatpush2.msra.mxu0 0.0
    %3646 = vmatprep.subr.mxu0 0.0
    %3647 = vmatpush2.msra.mxu0 0.0
    %3648 = vmatprep.subr.mxu0 0.0
    %3649 = vmatpush2.msra.mxu0 0.0
    %3650 = vmatprep.subr.mxu0 0.0
    %3651 = vmatpush2.msra.mxu0 0.0
    %3652 = vmatprep.subr.mxu0 0.0
    %3653 = vmatpush2.msra.mxu0 0.0
    %3654 = vmatprep.mubr.f32.mxu0 0.0
    %3655 = vmatmul.mubr.f32.gmra.mxu0 %v3588
    %v3656 = vpop.f32.mrf.mxu0
    %v3657 = vadd.f32 0.0, %v3656
    %v3658 = vpop.f32.mrf.mxu0
    %3659 = vdwg.mxu0
    %v3660 = vadd.f32 %v3582, %v3657
    %v3661 = vxor.u32 %v3660, 2147483648
    %v3662 = vmul.f32 %v3661, 1.442695
    %v3663 = vpow.pop %v3662
    %v3664 = vadd.f32 %v3663, 1.0
    %v3665 = vrcp.pop %v3664
    %v3666 = vmul.f32 1.0, %v3665
    %v3667 = vtanh.pop %v3660
    %v3668 = vsel %vm307, %v3667, %v3666
    %v3669 = vmul.f32 %v3668, %v3407
    %3671 = vrot.lane.b32.xlu0 %v3668, 64
    %v3672 = vpop.permute.xlu0 %3671
    %v3674 = vmul.f32 %v3668, %v3672
    %3676 = vrot.lane.b32.xlu0 %v3674, 32
    %v3677 = vpop.permute.xlu0 %3676
    %v3679 = vadd.f32 %v3669, %v3677
    %v3680 = vtanh.pop %v3679
    %3682 = vrot.lane.b32.xlu0 %v3680, 64
    %v3683 = vpop.permute.xlu0 %3682
    %v3685 = vmul.f32 %v3668, %v3683
    %3686 = vmatprep.subr.mxu0 0.0
    %3687 = vmatpush1.msra.mxu0 0.0
    %3688 = vmatprep.subr.mxu0 0.0
    %3689 = vmatpush1.msra.mxu0 0.0
    %3690 = vmatprep.subr.mxu0 0.0
    %3691 = vmatpush1.msra.mxu0 0.0
    %3692 = vmatprep.subr.mxu0 0.0
    %3693 = vmatpush1.msra.mxu0 0.0
    %3694 = vmatprep.subr.mxu0 0.0
    %3695 = vmatpush1.msra.mxu0 0.0
    %3696 = vmatprep.subr.mxu0 0.0
    %3697 = vmatpush1.msra.mxu0 0.0
    %3698 = vmatprep.subr.mxu0 0.0
    %3699 = vmatpush1.msra.mxu0 0.0
    %3700 = vmatprep.subr.mxu0 0.0
    %3701 = vmatpush1.msra.mxu0 0.0
    %3702 = vmatprep.subr.mxu0 0.0
    %3703 = vmatpush1.msra.mxu0 0.0
    %3704 = vmatprep.subr.mxu0 0.0
    %3705 = vmatpush1.msra.mxu0 0.0
    %3706 = vmatprep.subr.mxu0 0.0
    %3707 = vmatpush1.msra.mxu0 0.0
    %3708 = vmatprep.subr.mxu0 0.0
    %3709 = vmatpush1.msra.mxu0 0.0
    %3710 = vmatprep.subr.mxu0 0.0
    %3711 = vmatpush1.msra.mxu0 %v125
    %3712 = vmatprep.subr.mxu0 0.0
    %3713 = vmatpush1.msra.mxu0 %v124
    %3714 = vmatprep.subr.mxu0 0.0
    %3715 = vmatpush1.msra.mxu0 %v123
    %3716 = vmatprep.subr.mxu0 0.0
    %3717 = vmatpush1.msra.mxu0 %v122
    %3718 = vmatprep.subr.mxu0 0.0
    %3719 = vmatpush2.msra.mxu0 0.0
    %3720 = vmatprep.subr.mxu0 0.0
    %3721 = vmatpush2.msra.mxu0 0.0
    %3722 = vmatprep.subr.mxu0 0.0
    %3723 = vmatpush2.msra.mxu0 0.0
    %3724 = vmatprep.subr.mxu0 0.0
    %3725 = vmatpush2.msra.mxu0 0.0
    %3726 = vmatprep.subr.mxu0 0.0
    %3727 = vmatpush2.msra.mxu0 0.0
    %3728 = vmatprep.subr.mxu0 0.0
    %3729 = vmatpush2.msra.mxu0 0.0
    %3730 = vmatprep.subr.mxu0 0.0
    %3731 = vmatpush2.msra.mxu0 0.0
    %3732 = vmatprep.subr.mxu0 0.0
    %3733 = vmatpush2.msra.mxu0 0.0
    %3734 = vmatprep.subr.mxu0 0.0
    %3735 = vmatpush2.msra.mxu0 0.0
    %3736 = vmatprep.subr.mxu0 0.0
    %3737 = vmatpush2.msra.mxu0 0.0
    %3738 = vmatprep.subr.mxu0 0.0
    %3739 = vmatpush2.msra.mxu0 0.0
    %3740 = vmatprep.subr.mxu0 0.0
    %3741 = vmatpush2.msra.mxu0 0.0
    %3742 = vmatprep.subr.mxu0 0.0
    %3743 = vmatpush2.msra.mxu0 0.0
    %3744 = vmatprep.subr.mxu0 0.0
    %3745 = vmatpush2.msra.mxu0 0.0
    %3746 = vmatprep.subr.mxu0 0.0
    %3747 = vmatpush2.msra.mxu0 0.0
    %3748 = vmatprep.subr.mxu0 0.0
    %3749 = vmatpush2.msra.mxu0 0.0
    %3750 = vmatprep.mubr.f32.mxu0 0.0
    %3751 = vmatmul.mubr.f32.gmra.mxu0 %v3513
    %v3752 = vpop.f32.mrf.mxu0
    %v3753 = vadd.f32 0.0, %v3752
    %v3754 = vpop.f32.mrf.mxu0
    %3755 = vdwg.mxu0
    %v3756 = vadd.f32 %v3118, %v3753
    %v3757 = vxor.u32 %v3756, 2147483648
    %v3758 = vmul.f32 %v3757, 1.442695
    %v3759 = vpow.pop %v3758
    %v3760 = vadd.f32 %v3759, 1.0
    %v3761 = vrcp.pop %v3760
    %v3762 = vmul.f32 1.0, %v3761
    %v3763 = vtanh.pop %v3756
    %v3764 = vsel %vm307, %v3763, %v3762
    %v3765 = vmul.f32 %v3764, %v3503
    %3767 = vrot.lane.b32.xlu0 %v3764, 64
    %v3768 = vpop.permute.xlu0 %3767
    %v3770 = vmul.f32 %v3764, %v3768
    %3772 = vrot.lane.b32.xlu0 %v3770, 32
    %v3773 = vpop.permute.xlu0 %3772
    %v3775 = vadd.f32 %v3765, %v3773
    %v3776 = vtanh.pop %v3775
    %3778 = vrot.lane.b32.xlu0 %v3776, 64
    %v3779 = vpop.permute.xlu0 %3778
    %v3781 = vmul.f32 %v3764, %v3779
    %3783 = vrot.lane.b32.xlu0 %v3781, 32
    %v3784 = vpop.permute.xlu0 %3783
    %v3785 = vsel %vm221, %v3784, 0
    %3787 = vmatprep.subr.mxu0 0.0
    %3788 = vmatpush1.msra.mxu0 0.0
    %3789 = vmatprep.subr.mxu0 0.0
    %3790 = vmatpush1.msra.mxu0 0.0
    %3791 = vmatprep.subr.mxu0 0.0
    %3792 = vmatpush1.msra.mxu0 0.0
    %3793 = vmatprep.subr.mxu0 0.0
    %3794 = vmatpush1.msra.mxu0 0.0
    %3795 = vmatprep.subr.mxu0 0.0
    %3796 = vmatpush1.msra.mxu0 0.0
    %3797 = vmatprep.subr.mxu0 0.0
    %3798 = vmatpush1.msra.mxu0 0.0
    %3799 = vmatprep.subr.mxu0 0.0
    %3800 = vmatpush1.msra.mxu0 0.0
    %3801 = vmatprep.subr.mxu0 0.0
    %3802 = vmatpush1.msra.mxu0 0.0
    %3803 = vmatprep.subr.mxu0 0.0
    %3804 = vmatpush1.msra.mxu0 0.0
    %3805 = vmatprep.subr.mxu0 0.0
    %3806 = vmatpush1.msra.mxu0 0.0
    %3807 = vmatprep.subr.mxu0 0.0
    %3808 = vmatpush1.msra.mxu0 0.0
    %3809 = vmatprep.subr.mxu0 0.0
    %3810 = vmatpush1.msra.mxu0 0.0
    %3811 = vmatprep.subr.mxu0 0.0
    %3812 = vmatpush1.msra.mxu0 %v130
    %3813 = vmatprep.subr.mxu0 0.0
    %3814 = vmatpush1.msra.mxu0 %v129
    %3815 = vmatprep.subr.mxu0 0.0
    %3816 = vmatpush1.msra.mxu0 %v128
    %3817 = vmatprep.subr.mxu0 0.0
    %3818 = vmatpush1.msra.mxu0 %v127
    %3819 = vmatprep.subr.mxu0 0.0
    %3820 = vmatpush2.msra.mxu0 0.0
    %3821 = vmatprep.subr.mxu0 0.0
    %3822 = vmatpush2.msra.mxu0 0.0
    %3823 = vmatprep.subr.mxu0 0.0
    %3824 = vmatpush2.msra.mxu0 0.0
    %3825 = vmatprep.subr.mxu0 0.0
    %3826 = vmatpush2.msra.mxu0 0.0
    %3827 = vmatprep.subr.mxu0 0.0
    %3828 = vmatpush2.msra.mxu0 0.0
    %3829 = vmatprep.subr.mxu0 0.0
    %3830 = vmatpush2.msra.mxu0 0.0
    %3831 = vmatprep.subr.mxu0 0.0
    %3832 = vmatpush2.msra.mxu0 0.0
    %3833 = vmatprep.subr.mxu0 0.0
    %3834 = vmatpush2.msra.mxu0 0.0
    %3835 = vmatprep.subr.mxu0 0.0
    %3836 = vmatpush2.msra.mxu0 0.0
    %3837 = vmatprep.subr.mxu0 0.0
    %3838 = vmatpush2.msra.mxu0 0.0
    %3839 = vmatprep.subr.mxu0 0.0
    %3840 = vmatpush2.msra.mxu0 0.0
    %3841 = vmatprep.subr.mxu0 0.0
    %3842 = vmatpush2.msra.mxu0 0.0
    %3843 = vmatprep.subr.mxu0 0.0
    %3844 = vmatpush2.msra.mxu0 0.0
    %3845 = vmatprep.subr.mxu0 0.0
    %3846 = vmatpush2.msra.mxu0 0.0
    %3847 = vmatprep.subr.mxu0 0.0
    %3848 = vmatpush2.msra.mxu0 0.0
    %3849 = vmatprep.subr.mxu0 0.0
    %3850 = vmatpush2.msra.mxu0 0.0
    %3851 = vmatprep.mubr.f32.mxu0 0.0
    %3852 = vmatmul.mubr.f32.gmra.mxu0 %v3785
    %v3853 = vpop.f32.mrf.mxu0
    %v3854 = vadd.f32 %v3234, %v3853
    %v3855 = vpop.f32.mrf.mxu0
    %3856 = vdwg.mxu0
    %3858 = vrot.lane.b32.xlu0 %v3685, 32
    %v3859 = vpop.permute.xlu0 %3858
    %v3860 = vsel %vm221, %v3859, 0
    %3862 = vmatprep.subr.mxu0 0.0
    %3863 = vmatpush1.msra.mxu0 0.0
    %3864 = vmatprep.subr.mxu0 0.0
    %3865 = vmatpush1.msra.mxu0 0.0
    %3866 = vmatprep.subr.mxu0 0.0
    %3867 = vmatpush1.msra.mxu0 0.0
    %3868 = vmatprep.subr.mxu0 0.0
    %3869 = vmatpush1.msra.mxu0 0.0
    %3870 = vmatprep.subr.mxu0 0.0
    %3871 = vmatpush1.msra.mxu0 0.0
    %3872 = vmatprep.subr.mxu0 0.0
    %3873 = vmatpush1.msra.mxu0 0.0
    %3874 = vmatprep.subr.mxu0 0.0
    %3875 = vmatpush1.msra.mxu0 0.0
    %3876 = vmatprep.subr.mxu0 0.0
    %3877 = vmatpush1.msra.mxu0 0.0
    %3878 = vmatprep.subr.mxu0 0.0
    %3879 = vmatpush1.msra.mxu0 0.0
    %3880 = vmatprep.subr.mxu0 0.0
    %3881 = vmatpush1.msra.mxu0 0.0
    %3882 = vmatprep.subr.mxu0 0.0
    %3883 = vmatpush1.msra.mxu0 0.0
    %3884 = vmatprep.subr.mxu0 0.0
    %3885 = vmatpush1.msra.mxu0 0.0
    %3886 = vmatprep.subr.mxu0 0.0
    %3887 = vmatpush1.msra.mxu0 %v134
    %3888 = vmatprep.subr.mxu0 0.0
    %3889 = vmatpush1.msra.mxu0 %v133
    %3890 = vmatprep.subr.mxu0 0.0
    %3891 = vmatpush1.msra.mxu0 %v132
    %3892 = vmatprep.subr.mxu0 0.0
    %3893 = vmatpush1.msra.mxu0 %v131
    %3894 = vmatprep.subr.mxu0 0.0
    %3895 = vmatpush2.msra.mxu0 0.0
    %3896 = vmatprep.subr.mxu0 0.0
    %3897 = vmatpush2.msra.mxu0 0.0
    %3898 = vmatprep.subr.mxu0 0.0
    %3899 = vmatpush2.msra.mxu0 0.0
    %3900 = vmatprep.subr.mxu0 0.0
    %3901 = vmatpush2.msra.mxu0 0.0
    %3902 = vmatprep.subr.mxu0 0.0
    %3903 = vmatpush2.msra.mxu0 0.0
    %3904 = vmatprep.subr.mxu0 0.0
    %3905 = vmatpush2.msra.mxu0 0.0
    %3906 = vmatprep.subr.mxu0 0.0
    %3907 = vmatpush2.msra.mxu0 0.0
    %3908 = vmatprep.subr.mxu0 0.0
    %3909 = vmatpush2.msra.mxu0 0.0
    %3910 = vmatprep.subr.mxu0 0.0
    %3911 = vmatpush2.msra.mxu0 0.0
    %3912 = vmatprep.subr.mxu0 0.0
    %3913 = vmatpush2.msra.mxu0 0.0
    %3914 = vmatprep.subr.mxu0 0.0
    %3915 = vmatpush2.msra.mxu0 0.0
    %3916 = vmatprep.subr.mxu0 0.0
    %3917 = vmatpush2.msra.mxu0 0.0
    %3918 = vmatprep.subr.mxu0 0.0
    %3919 = vmatpush2.msra.mxu0 0.0
    %3920 = vmatprep.subr.mxu0 0.0
    %3921 = vmatpush2.msra.mxu0 0.0
    %3922 = vmatprep.subr.mxu0 0.0
    %3923 = vmatpush2.msra.mxu0 0.0
    %3924 = vmatprep.subr.mxu0 0.0
    %3925 = vmatpush2.msra.mxu0 0.0
    %3926 = vmatprep.mubr.f32.mxu0 0.0
    %3927 = vmatmul.mubr.f32.gmra.mxu0 %v3860
    %v3928 = vpop.f32.mrf.mxu0
    %v3929 = vadd.f32 0.0, %v3928
    %v3930 = vpop.f32.mrf.mxu0
    %3931 = vdwg.mxu0
    %v3932 = vadd.f32 %v3854, %v3929
    %v3933 = vxor.u32 %v3932, 2147483648
    %v3934 = vmul.f32 %v3933, 1.442695
    %v3935 = vpow.pop %v3934
    %v3936 = vadd.f32 %v3935, 1.0
    %v3937 = vrcp.pop %v3936
    %v3938 = vmul.f32 1.0, %v3937
    %v3939 = vtanh.pop %v3932
    %v3940 = vsel %vm307, %v3939, %v3938
    %v3941 = vmul.f32 %v3940, %v3679
    %3943 = vrot.lane.b32.xlu0 %v3940, 64
    %v3944 = vpop.permute.xlu0 %3943
    %v3946 = vmul.f32 %v3940, %v3944
    %3948 = vrot.lane.b32.xlu0 %v3946, 32
    %v3949 = vpop.permute.xlu0 %3948
    %v3951 = vadd.f32 %v3941, %v3949
    %v3952 = vtanh.pop %v3951
    %3954 = vrot.lane.b32.xlu0 %v3952, 64
    %v3955 = vpop.permute.xlu0 %3954
    %v3957 = vmul.f32 %v3940, %v3955
    %3958 = vmatprep.subr.mxu0 0.0
    %3959 = vmatpush1.msra.mxu0 0.0
    %3960 = vmatprep.subr.mxu0 0.0
    %3961 = vmatpush1.msra.mxu0 0.0
    %3962 = vmatprep.subr.mxu0 0.0
    %3963 = vmatpush1.msra.mxu0 0.0
    %3964 = vmatprep.subr.mxu0 0.0
    %3965 = vmatpush1.msra.mxu0 0.0
    %3966 = vmatprep.subr.mxu0 0.0
    %3967 = vmatpush1.msra.mxu0 0.0
    %3968 = vmatprep.subr.mxu0 0.0
    %3969 = vmatpush1.msra.mxu0 0.0
    %3970 = vmatprep.subr.mxu0 0.0
    %3971 = vmatpush1.msra.mxu0 0.0
    %3972 = vmatprep.subr.mxu0 0.0
    %3973 = vmatpush1.msra.mxu0 0.0
    %3974 = vmatprep.subr.mxu0 0.0
    %3975 = vmatpush1.msra.mxu0 0.0
    %3976 = vmatprep.subr.mxu0 0.0
    %3977 = vmatpush1.msra.mxu0 0.0
    %3978 = vmatprep.subr.mxu0 0.0
    %3979 = vmatpush1.msra.mxu0 0.0
    %3980 = vmatprep.subr.mxu0 0.0
    %3981 = vmatpush1.msra.mxu0 0.0
    %3982 = vmatprep.subr.mxu0 0.0
    %3983 = vmatpush1.msra.mxu0 %v125
    %3984 = vmatprep.subr.mxu0 0.0
    %3985 = vmatpush1.msra.mxu0 %v124
    %3986 = vmatprep.subr.mxu0 0.0
    %3987 = vmatpush1.msra.mxu0 %v123
    %3988 = vmatprep.subr.mxu0 0.0
    %3989 = vmatpush1.msra.mxu0 %v122
    %3990 = vmatprep.subr.mxu0 0.0
    %3991 = vmatpush2.msra.mxu0 0.0
    %3992 = vmatprep.subr.mxu0 0.0
    %3993 = vmatpush2.msra.mxu0 0.0
    %3994 = vmatprep.subr.mxu0 0.0
    %3995 = vmatpush2.msra.mxu0 0.0
    %3996 = vmatprep.subr.mxu0 0.0
    %3997 = vmatpush2.msra.mxu0 0.0
    %3998 = vmatprep.subr.mxu0 0.0
    %3999 = vmatpush2.msra.mxu0 0.0
    %4000 = vmatprep.subr.mxu0 0.0
    %4001 = vmatpush2.msra.mxu0 0.0
    %4002 = vmatprep.subr.mxu0 0.0
    %4003 = vmatpush2.msra.mxu0 0.0
    %4004 = vmatprep.subr.mxu0 0.0
    %4005 = vmatpush2.msra.mxu0 0.0
    %4006 = vmatprep.subr.mxu0 0.0
    %4007 = vmatpush2.msra.mxu0 0.0
    %4008 = vmatprep.subr.mxu0 0.0
    %4009 = vmatpush2.msra.mxu0 0.0
    %4010 = vmatprep.subr.mxu0 0.0
    %4011 = vmatpush2.msra.mxu0 0.0
    %4012 = vmatprep.subr.mxu0 0.0
    %4013 = vmatpush2.msra.mxu0 0.0
    %4014 = vmatprep.subr.mxu0 0.0
    %4015 = vmatpush2.msra.mxu0 0.0
    %4016 = vmatprep.subr.mxu0 0.0
    %4017 = vmatpush2.msra.mxu0 0.0
    %4018 = vmatprep.subr.mxu0 0.0
    %4019 = vmatpush2.msra.mxu0 0.0
    %4020 = vmatprep.subr.mxu0 0.0
    %4021 = vmatpush2.msra.mxu0 0.0
    %4022 = vmatprep.mubr.f32.mxu0 0.0
    %4023 = vmatmul.mubr.f32.gmra.mxu0 %v3785
    %v4024 = vpop.f32.mrf.mxu0
    %v4025 = vadd.f32 0.0, %v4024
    %v4026 = vpop.f32.mrf.mxu0
    %4027 = vdwg.mxu0
    %v4028 = vadd.f32 %v3118, %v4025
    %v4029 = vxor.u32 %v4028, 2147483648
    %v4030 = vmul.f32 %v4029, 1.442695
    %v4031 = vpow.pop %v4030
    %v4032 = vadd.f32 %v4031, 1.0
    %v4033 = vrcp.pop %v4032
    %v4034 = vmul.f32 1.0, %v4033
    %v4035 = vtanh.pop %v4028
    %v4036 = vsel %vm307, %v4035, %v4034
    %v4037 = vmul.f32 %v4036, %v3775
    %4039 = vrot.lane.b32.xlu0 %v4036, 64
    %v4040 = vpop.permute.xlu0 %4039
    %v4042 = vmul.f32 %v4036, %v4040
    %4044 = vrot.lane.b32.xlu0 %v4042, 32
    %v4045 = vpop.permute.xlu0 %4044
    %v4047 = vadd.f32 %v4037, %v4045
    %v4048 = vtanh.pop %v4047
    %4050 = vrot.lane.b32.xlu0 %v4048, 64
    %v4051 = vpop.permute.xlu0 %4050
    %v4053 = vmul.f32 %v4036, %v4051
    %4055 = vrot.lane.b32.xlu0 %v4053, 32
    %v4056 = vpop.permute.xlu0 %4055
    %v4057 = vsel %vm221, %v4056, 0
    %4059 = vmatprep.subr.mxu0 0.0
    %4060 = vmatpush1.msra.mxu0 0.0
    %4061 = vmatprep.subr.mxu0 0.0
    %4062 = vmatpush1.msra.mxu0 0.0
    %4063 = vmatprep.subr.mxu0 0.0
    %4064 = vmatpush1.msra.mxu0 0.0
    %4065 = vmatprep.subr.mxu0 0.0
    %4066 = vmatpush1.msra.mxu0 0.0
    %4067 = vmatprep.subr.mxu0 0.0
    %4068 = vmatpush1.msra.mxu0 0.0
    %4069 = vmatprep.subr.mxu0 0.0
    %4070 = vmatpush1.msra.mxu0 0.0
    %4071 = vmatprep.subr.mxu0 0.0
    %4072 = vmatpush1.msra.mxu0 0.0
    %4073 = vmatprep.subr.mxu0 0.0
    %4074 = vmatpush1.msra.mxu0 0.0
    %4075 = vmatprep.subr.mxu0 0.0
    %4076 = vmatpush1.msra.mxu0 0.0
    %4077 = vmatprep.subr.mxu0 0.0
    %4078 = vmatpush1.msra.mxu0 0.0
    %4079 = vmatprep.subr.mxu0 0.0
    %4080 = vmatpush1.msra.mxu0 0.0
    %4081 = vmatprep.subr.mxu0 0.0
    %4082 = vmatpush1.msra.mxu0 0.0
    %4083 = vmatprep.subr.mxu0 0.0
    %4084 = vmatpush1.msra.mxu0 %v130
    %4085 = vmatprep.subr.mxu0 0.0
    %4086 = vmatpush1.msra.mxu0 %v129
    %4087 = vmatprep.subr.mxu0 0.0
    %4088 = vmatpush1.msra.mxu0 %v128
    %4089 = vmatprep.subr.mxu0 0.0
    %4090 = vmatpush1.msra.mxu0 %v127
    %4091 = vmatprep.subr.mxu0 0.0
    %4092 = vmatpush2.msra.mxu0 0.0
    %4093 = vmatprep.subr.mxu0 0.0
    %4094 = vmatpush2.msra.mxu0 0.0
    %4095 = vmatprep.subr.mxu0 0.0
    %4096 = vmatpush2.msra.mxu0 0.0
    %4097 = vmatprep.subr.mxu0 0.0
    %4098 = vmatpush2.msra.mxu0 0.0
    %4099 = vmatprep.subr.mxu0 0.0
    %4100 = vmatpush2.msra.mxu0 0.0
    %4101 = vmatprep.subr.mxu0 0.0
    %4102 = vmatpush2.msra.mxu0 0.0
    %4103 = vmatprep.subr.mxu0 0.0
    %4104 = vmatpush2.msra.mxu0 0.0
    %4105 = vmatprep.subr.mxu0 0.0
    %4106 = vmatpush2.msra.mxu0 0.0
    %4107 = vmatprep.subr.mxu0 0.0
    %4108 = vmatpush2.msra.mxu0 0.0
    %4109 = vmatprep.subr.mxu0 0.0
    %4110 = vmatpush2.msra.mxu0 0.0
    %4111 = vmatprep.subr.mxu0 0.0
    %4112 = vmatpush2.msra.mxu0 0.0
    %4113 = vmatprep.subr.mxu0 0.0
    %4114 = vmatpush2.msra.mxu0 0.0
    %4115 = vmatprep.subr.mxu0 0.0
    %4116 = vmatpush2.msra.mxu0 0.0
    %4117 = vmatprep.subr.mxu0 0.0
    %4118 = vmatpush2.msra.mxu0 0.0
    %4119 = vmatprep.subr.mxu0 0.0
    %4120 = vmatpush2.msra.mxu0 0.0
    %4121 = vmatprep.subr.mxu0 0.0
    %4122 = vmatpush2.msra.mxu0 0.0
    %4123 = vmatprep.mubr.f32.mxu0 0.0
    %4124 = vmatmul.mubr.f32.gmra.mxu0 %v4057
    %v4125 = vpop.f32.mrf.mxu0
    %v4126 = vadd.f32 %v3234, %v4125
    %v4127 = vpop.f32.mrf.mxu0
    %4128 = vdwg.mxu0
    %4130 = vrot.lane.b32.xlu0 %v3957, 32
    %v4131 = vpop.permute.xlu0 %4130
    %v4132 = vsel %vm221, %v4131, 0
    %4134 = vmatprep.subr.mxu0 0.0
    %4135 = vmatpush1.msra.mxu0 0.0
    %4136 = vmatprep.subr.mxu0 0.0
    %4137 = vmatpush1.msra.mxu0 0.0
    %4138 = vmatprep.subr.mxu0 0.0
    %4139 = vmatpush1.msra.mxu0 0.0
    %4140 = vmatprep.subr.mxu0 0.0
    %4141 = vmatpush1.msra.mxu0 0.0
    %4142 = vmatprep.subr.mxu0 0.0
    %4143 = vmatpush1.msra.mxu0 0.0
    %4144 = vmatprep.subr.mxu0 0.0
    %4145 = vmatpush1.msra.mxu0 0.0
    %4146 = vmatprep.subr.mxu0 0.0
    %4147 = vmatpush1.msra.mxu0 0.0
    %4148 = vmatprep.subr.mxu0 0.0
    %4149 = vmatpush1.msra.mxu0 0.0
    %4150 = vmatprep.subr.mxu0 0.0
    %4151 = vmatpush1.msra.mxu0 0.0
    %4152 = vmatprep.subr.mxu0 0.0
    %4153 = vmatpush1.msra.mxu0 0.0
    %4154 = vmatprep.subr.mxu0 0.0
    %4155 = vmatpush1.msra.mxu0 0.0
    %4156 = vmatprep.subr.mxu0 0.0
    %4157 = vmatpush1.msra.mxu0 0.0
    %4158 = vmatprep.subr.mxu0 0.0
    %4159 = vmatpush1.msra.mxu0 %v134
    %4160 = vmatprep.subr.mxu0 0.0
    %4161 = vmatpush1.msra.mxu0 %v133
    %4162 = vmatprep.subr.mxu0 0.0
    %4163 = vmatpush1.msra.mxu0 %v132
    %4164 = vmatprep.subr.mxu0 0.0
    %4165 = vmatpush1.msra.mxu0 %v131
    %4166 = vmatprep.subr.mxu0 0.0
    %4167 = vmatpush2.msra.mxu0 0.0
    %4168 = vmatprep.subr.mxu0 0.0
    %4169 = vmatpush2.msra.mxu0 0.0
    %4170 = vmatprep.subr.mxu0 0.0
    %4171 = vmatpush2.msra.mxu0 0.0
    %4172 = vmatprep.subr.mxu0 0.0
    %4173 = vmatpush2.msra.mxu0 0.0
    %4174 = vmatprep.subr.mxu0 0.0
    %4175 = vmatpush2.msra.mxu0 0.0
    %4176 = vmatprep.subr.mxu0 0.0
    %4177 = vmatpush2.msra.mxu0 0.0
    %4178 = vmatprep.subr.mxu0 0.0
    %4179 = vmatpush2.msra.mxu0 0.0
    %4180 = vmatprep.subr.mxu0 0.0
    %4181 = vmatpush2.msra.mxu0 0.0
    %4182 = vmatprep.subr.mxu0 0.0
    %4183 = vmatpush2.msra.mxu0 0.0
    %4184 = vmatprep.subr.mxu0 0.0
    %4185 = vmatpush2.msra.mxu0 0.0
    %4186 = vmatprep.subr.mxu0 0.0
    %4187 = vmatpush2.msra.mxu0 0.0
    %4188 = vmatprep.subr.mxu0 0.0
    %4189 = vmatpush2.msra.mxu0 0.0
    %4190 = vmatprep.subr.mxu0 0.0
    %4191 = vmatpush2.msra.mxu0 0.0
    %4192 = vmatprep.subr.mxu0 0.0
    %4193 = vmatpush2.msra.mxu0 0.0
    %4194 = vmatprep.subr.mxu0 0.0
    %4195 = vmatpush2.msra.mxu0 0.0
    %4196 = vmatprep.subr.mxu0 0.0
    %4197 = vmatpush2.msra.mxu0 0.0
    %4198 = vmatprep.mubr.f32.mxu0 0.0
    %4199 = vmatmul.mubr.f32.gmra.mxu0 %v4132
    %v4200 = vpop.f32.mrf.mxu0
    %v4201 = vadd.f32 0.0, %v4200
    %v4202 = vpop.f32.mrf.mxu0
    %4203 = vdwg.mxu0
    %v4204 = vadd.f32 %v4126, %v4201
    %v4205 = vxor.u32 %v4204, 2147483648
    %v4206 = vmul.f32 %v4205, 1.442695
    %v4207 = vpow.pop %v4206
    %v4208 = vadd.f32 %v4207, 1.0
    %v4209 = vrcp.pop %v4208
    %v4210 = vmul.f32 1.0, %v4209
    %v4211 = vtanh.pop %v4204
    %v4212 = vsel %vm307, %v4211, %v4210
    %v4213 = vmul.f32 %v4212, %v3951
    %4215 = vrot.lane.b32.xlu0 %v4212, 64
    %v4216 = vpop.permute.xlu0 %4215
    %v4218 = vmul.f32 %v4212, %v4216
    %4220 = vrot.lane.b32.xlu0 %v4218, 32
    %v4221 = vpop.permute.xlu0 %4220
    %v4223 = vadd.f32 %v4213, %v4221
    %v4224 = vtanh.pop %v4223
    %4226 = vrot.lane.b32.xlu0 %v4224, 64
    %v4227 = vpop.permute.xlu0 %4226
    %v4229 = vmul.f32 %v4212, %v4227
    %4230 = vmatprep.subr.mxu0 0.0
    %4231 = vmatpush1.msra.mxu0 0.0
    %4232 = vmatprep.subr.mxu0 0.0
    %4233 = vmatpush1.msra.mxu0 0.0
    %4234 = vmatprep.subr.mxu0 0.0
    %4235 = vmatpush1.msra.mxu0 0.0
    %4236 = vmatprep.subr.mxu0 0.0
    %4237 = vmatpush1.msra.mxu0 0.0
    %4238 = vmatprep.subr.mxu0 0.0
    %4239 = vmatpush1.msra.mxu0 0.0
    %4240 = vmatprep.subr.mxu0 0.0
    %4241 = vmatpush1.msra.mxu0 0.0
    %4242 = vmatprep.subr.mxu0 0.0
    %4243 = vmatpush1.msra.mxu0 0.0
    %4244 = vmatprep.subr.mxu0 0.0
    %4245 = vmatpush1.msra.mxu0 0.0
    %4246 = vmatprep.subr.mxu0 0.0
    %4247 = vmatpush1.msra.mxu0 0.0
    %4248 = vmatprep.subr.mxu0 0.0
    %4249 = vmatpush1.msra.mxu0 0.0
    %4250 = vmatprep.subr.mxu0 0.0
    %4251 = vmatpush1.msra.mxu0 0.0
    %4252 = vmatprep.subr.mxu0 0.0
    %4253 = vmatpush1.msra.mxu0 0.0
    %4254 = vmatprep.subr.mxu0 0.0
    %4255 = vmatpush1.msra.mxu0 %v125
    %4256 = vmatprep.subr.mxu0 0.0
    %4257 = vmatpush1.msra.mxu0 %v124
    %4258 = vmatprep.subr.mxu0 0.0
    %4259 = vmatpush1.msra.mxu0 %v123
    %4260 = vmatprep.subr.mxu0 0.0
    %4261 = vmatpush1.msra.mxu0 %v122
    %4262 = vmatprep.subr.mxu0 0.0
    %4263 = vmatpush2.msra.mxu0 0.0
    %4264 = vmatprep.subr.mxu0 0.0
    %4265 = vmatpush2.msra.mxu0 0.0
    %4266 = vmatprep.subr.mxu0 0.0
    %4267 = vmatpush2.msra.mxu0 0.0
    %4268 = vmatprep.subr.mxu0 0.0
    %4269 = vmatpush2.msra.mxu0 0.0
    %4270 = vmatprep.subr.mxu0 0.0
    %4271 = vmatpush2.msra.mxu0 0.0
    %4272 = vmatprep.subr.mxu0 0.0
    %4273 = vmatpush2.msra.mxu0 0.0
    %4274 = vmatprep.subr.mxu0 0.0
    %4275 = vmatpush2.msra.mxu0 0.0
    %4276 = vmatprep.subr.mxu0 0.0
    %4277 = vmatpush2.msra.mxu0 0.0
    %4278 = vmatprep.subr.mxu0 0.0
    %4279 = vmatpush2.msra.mxu0 0.0
    %4280 = vmatprep.subr.mxu0 0.0
    %4281 = vmatpush2.msra.mxu0 0.0
    %4282 = vmatprep.subr.mxu0 0.0
    %4283 = vmatpush2.msra.mxu0 0.0
    %4284 = vmatprep.subr.mxu0 0.0
    %4285 = vmatpush2.msra.mxu0 0.0
    %4286 = vmatprep.subr.mxu0 0.0
    %4287 = vmatpush2.msra.mxu0 0.0
    %4288 = vmatprep.subr.mxu0 0.0
    %4289 = vmatpush2.msra.mxu0 0.0
    %4290 = vmatprep.subr.mxu0 0.0
    %4291 = vmatpush2.msra.mxu0 0.0
    %4292 = vmatprep.subr.mxu0 0.0
    %4293 = vmatpush2.msra.mxu0 0.0
    %4294 = vmatprep.mubr.f32.mxu0 0.0
    %4295 = vmatmul.mubr.f32.gmra.mxu0 %v4057
    %v4296 = vpop.f32.mrf.mxu0
    %v4297 = vadd.f32 0.0, %v4296
    %v4298 = vpop.f32.mrf.mxu0
    %4299 = vdwg.mxu0
    %v4300 = vadd.f32 %v3118, %v4297
    %v4301 = vxor.u32 %v4300, 2147483648
    %v4302 = vmul.f32 %v4301, 1.442695
    %v4303 = vpow.pop %v4302
    %v4304 = vadd.f32 %v4303, 1.0
    %v4305 = vrcp.pop %v4304
    %v4306 = vmul.f32 1.0, %v4305
    %v4307 = vtanh.pop %v4300
    %v4308 = vsel %vm307, %v4307, %v4306
    %v4309 = vmul.f32 %v4308, %v4047
    %4311 = vrot.lane.b32.xlu0 %v4308, 64
    %v4312 = vpop.permute.xlu0 %4311
    %v4314 = vmul.f32 %v4308, %v4312
    %4316 = vrot.lane.b32.xlu0 %v4314, 32
    %v4317 = vpop.permute.xlu0 %4316
    %v4319 = vadd.f32 %v4309, %v4317
    %v4320 = vtanh.pop %v4319
    %4322 = vrot.lane.b32.xlu0 %v4320, 64
    %v4323 = vpop.permute.xlu0 %4322
    %v4325 = vmul.f32 %v4308, %v4323
    %4327 = vrot.lane.b32.xlu0 %v4325, 32
    %v4328 = vpop.permute.xlu0 %4327
    %v4329 = vsel %vm221, %v4328, 0
    %4331 = vmatprep.subr.mxu0 0.0
    %4332 = vmatpush1.msra.mxu0 0.0
    %4333 = vmatprep.subr.mxu0 0.0
    %4334 = vmatpush1.msra.mxu0 0.0
    %4335 = vmatprep.subr.mxu0 0.0
    %4336 = vmatpush1.msra.mxu0 0.0
    %4337 = vmatprep.subr.mxu0 0.0
    %4338 = vmatpush1.msra.mxu0 0.0
    %4339 = vmatprep.subr.mxu0 0.0
    %4340 = vmatpush1.msra.mxu0 0.0
    %4341 = vmatprep.subr.mxu0 0.0
    %4342 = vmatpush1.msra.mxu0 0.0
    %4343 = vmatprep.subr.mxu0 0.0
    %4344 = vmatpush1.msra.mxu0 0.0
    %4345 = vmatprep.subr.mxu0 0.0
    %4346 = vmatpush1.msra.mxu0 0.0
    %4347 = vmatprep.subr.mxu0 0.0
    %4348 = vmatpush1.msra.mxu0 0.0
    %4349 = vmatprep.subr.mxu0 0.0
    %4350 = vmatpush1.msra.mxu0 0.0
    %4351 = vmatprep.subr.mxu0 0.0
    %4352 = vmatpush1.msra.mxu0 0.0
    %4353 = vmatprep.subr.mxu0 0.0
    %4354 = vmatpush1.msra.mxu0 0.0
    %4355 = vmatprep.subr.mxu0 0.0
    %4356 = vmatpush1.msra.mxu0 %v130
    %4357 = vmatprep.subr.mxu0 0.0
    %4358 = vmatpush1.msra.mxu0 %v129
    %4359 = vmatprep.subr.mxu0 0.0
    %4360 = vmatpush1.msra.mxu0 %v128
    %4361 = vmatprep.subr.mxu0 0.0
    %4362 = vmatpush1.msra.mxu0 %v127
    %4363 = vmatprep.subr.mxu0 0.0
    %4364 = vmatpush2.msra.mxu0 0.0
    %4365 = vmatprep.subr.mxu0 0.0
    %4366 = vmatpush2.msra.mxu0 0.0
    %4367 = vmatprep.subr.mxu0 0.0
    %4368 = vmatpush2.msra.mxu0 0.0
    %4369 = vmatprep.subr.mxu0 0.0
    %4370 = vmatpush2.msra.mxu0 0.0
    %4371 = vmatprep.subr.mxu0 0.0
    %4372 = vmatpush2.msra.mxu0 0.0
    %4373 = vmatprep.subr.mxu0 0.0
    %4374 = vmatpush2.msra.mxu0 0.0
    %4375 = vmatprep.subr.mxu0 0.0
    %4376 = vmatpush2.msra.mxu0 0.0
    %4377 = vmatprep.subr.mxu0 0.0
    %4378 = vmatpush2.msra.mxu0 0.0
    %4379 = vmatprep.subr.mxu0 0.0
    %4380 = vmatpush2.msra.mxu0 0.0
    %4381 = vmatprep.subr.mxu0 0.0
    %4382 = vmatpush2.msra.mxu0 0.0
    %4383 = vmatprep.subr.mxu0 0.0
    %4384 = vmatpush2.msra.mxu0 0.0
    %4385 = vmatprep.subr.mxu0 0.0
    %4386 = vmatpush2.msra.mxu0 0.0
    %4387 = vmatprep.subr.mxu0 0.0
    %4388 = vmatpush2.msra.mxu0 0.0
    %4389 = vmatprep.subr.mxu0 0.0
    %4390 = vmatpush2.msra.mxu0 0.0
    %4391 = vmatprep.subr.mxu0 0.0
    %4392 = vmatpush2.msra.mxu0 0.0
    %4393 = vmatprep.subr.mxu0 0.0
    %4394 = vmatpush2.msra.mxu0 0.0
    %4395 = vmatprep.mubr.f32.mxu0 0.0
    %4396 = vmatmul.mubr.f32.gmra.mxu0 %v4329
    %v4397 = vpop.f32.mrf.mxu0
    %v4398 = vadd.f32 %v3234, %v4397
    %v4399 = vpop.f32.mrf.mxu0
    %4400 = vdwg.mxu0
    %4402 = vrot.lane.b32.xlu0 %v4229, 32
    %v4403 = vpop.permute.xlu0 %4402
    %v4404 = vsel %vm221, %v4403, 0
    %4406 = vmatprep.subr.mxu0 0.0
    %4407 = vmatpush1.msra.mxu0 0.0
    %4408 = vmatprep.subr.mxu0 0.0
    %4409 = vmatpush1.msra.mxu0 0.0
    %4410 = vmatprep.subr.mxu0 0.0
    %4411 = vmatpush1.msra.mxu0 0.0
    %4412 = vmatprep.subr.mxu0 0.0
    %4413 = vmatpush1.msra.mxu0 0.0
    %4414 = vmatprep.subr.mxu0 0.0
    %4415 = vmatpush1.msra.mxu0 0.0
    %4416 = vmatprep.subr.mxu0 0.0
    %4417 = vmatpush1.msra.mxu0 0.0
    %4418 = vmatprep.subr.mxu0 0.0
    %4419 = vmatpush1.msra.mxu0 0.0
    %4420 = vmatprep.subr.mxu0 0.0
    %4421 = vmatpush1.msra.mxu0 0.0
    %4422 = vmatprep.subr.mxu0 0.0
    %4423 = vmatpush1.msra.mxu0 0.0
    %4424 = vmatprep.subr.mxu0 0.0
    %4425 = vmatpush1.msra.mxu0 0.0
    %4426 = vmatprep.subr.mxu0 0.0
    %4427 = vmatpush1.msra.mxu0 0.0
    %4428 = vmatprep.subr.mxu0 0.0
    %4429 = vmatpush1.msra.mxu0 0.0
    %4430 = vmatprep.subr.mxu0 0.0
    %4431 = vmatpush1.msra.mxu0 %v134
    %4432 = vmatprep.subr.mxu0 0.0
    %4433 = vmatpush1.msra.mxu0 %v133
    %4434 = vmatprep.subr.mxu0 0.0
    %4435 = vmatpush1.msra.mxu0 %v132
    %4436 = vmatprep.subr.mxu0 0.0
    %4437 = vmatpush1.msra.mxu0 %v131
    %4438 = vmatprep.subr.mxu0 0.0
    %4439 = vmatpush2.msra.mxu0 0.0
    %4440 = vmatprep.subr.mxu0 0.0
    %4441 = vmatpush2.msra.mxu0 0.0
    %4442 = vmatprep.subr.mxu0 0.0
    %4443 = vmatpush2.msra.mxu0 0.0
    %4444 = vmatprep.subr.mxu0 0.0
    %4445 = vmatpush2.msra.mxu0 0.0
    %4446 = vmatprep.subr.mxu0 0.0
    %4447 = vmatpush2.msra.mxu0 0.0
    %4448 = vmatprep.subr.mxu0 0.0
    %4449 = vmatpush2.msra.mxu0 0.0
    %4450 = vmatprep.subr.mxu0 0.0
    %4451 = vmatpush2.msra.mxu0 0.0
    %4452 = vmatprep.subr.mxu0 0.0
    %4453 = vmatpush2.msra.mxu0 0.0
    %4454 = vmatprep.subr.mxu0 0.0
    %4455 = vmatpush2.msra.mxu0 0.0
    %4456 = vmatprep.subr.mxu0 0.0
    %4457 = vmatpush2.msra.mxu0 0.0
    %4458 = vmatprep.subr.mxu0 0.0
    %4459 = vmatpush2.msra.mxu0 0.0
    %4460 = vmatprep.subr.mxu0 0.0
    %4461 = vmatpush2.msra.mxu0 0.0
    %4462 = vmatprep.subr.mxu0 0.0
    %4463 = vmatpush2.msra.mxu0 0.0
    %4464 = vmatprep.subr.mxu0 0.0
    %4465 = vmatpush2.msra.mxu0 0.0
    %4466 = vmatprep.subr.mxu0 0.0
    %4467 = vmatpush2.msra.mxu0 0.0
    %4468 = vmatprep.subr.mxu0 0.0
    %4469 = vmatpush2.msra.mxu0 0.0
    %4470 = vmatprep.mubr.f32.mxu0 0.0
    %4471 = vmatmul.mubr.f32.gmra.mxu0 %v4404
    %v4472 = vpop.f32.mrf.mxu0
    %v4473 = vadd.f32 0.0, %v4472
    %v4474 = vpop.f32.mrf.mxu0
    %4475 = vdwg.mxu0
    %v4476 = vadd.f32 %v4398, %v4473
    %v4477 = vxor.u32 %v4476, 2147483648
    %v4478 = vmul.f32 %v4477, 1.442695
    %v4479 = vpow.pop %v4478
    %v4480 = vadd.f32 %v4479, 1.0
    %v4481 = vrcp.pop %v4480
    %v4482 = vmul.f32 1.0, %v4481
    %v4483 = vtanh.pop %v4476
    %v4484 = vsel %vm307, %v4483, %v4482
    %v4485 = vmul.f32 %v4484, %v4223
    %4487 = vrot.lane.b32.xlu0 %v4484, 64
    %v4488 = vpop.permute.xlu0 %4487
    %v4490 = vmul.f32 %v4484, %v4488
    %4492 = vrot.lane.b32.xlu0 %v4490, 32
    %v4493 = vpop.permute.xlu0 %4492
    %v4495 = vadd.f32 %v4485, %v4493
    %v4496 = vtanh.pop %v4495
    %4498 = vrot.lane.b32.xlu0 %v4496, 64
    %v4499 = vpop.permute.xlu0 %4498
    %v4501 = vmul.f32 %v4484, %v4499
    %4502 = vmatprep.subr.mxu0 0.0
    %4503 = vmatpush1.msra.mxu0 0.0
    %4504 = vmatprep.subr.mxu0 0.0
    %4505 = vmatpush1.msra.mxu0 0.0
    %4506 = vmatprep.subr.mxu0 0.0
    %4507 = vmatpush1.msra.mxu0 0.0
    %4508 = vmatprep.subr.mxu0 0.0
    %4509 = vmatpush1.msra.mxu0 0.0
    %4510 = vmatprep.subr.mxu0 0.0
    %4511 = vmatpush1.msra.mxu0 0.0
    %4512 = vmatprep.subr.mxu0 0.0
    %4513 = vmatpush1.msra.mxu0 0.0
    %4514 = vmatprep.subr.mxu0 0.0
    %4515 = vmatpush1.msra.mxu0 0.0
    %4516 = vmatprep.subr.mxu0 0.0
    %4517 = vmatpush1.msra.mxu0 0.0
    %4518 = vmatprep.subr.mxu0 0.0
    %4519 = vmatpush1.msra.mxu0 0.0
    %4520 = vmatprep.subr.mxu0 0.0
    %4521 = vmatpush1.msra.mxu0 0.0
    %4522 = vmatprep.subr.mxu0 0.0
    %4523 = vmatpush1.msra.mxu0 0.0
    %4524 = vmatprep.subr.mxu0 0.0
    %4525 = vmatpush1.msra.mxu0 0.0
    %4526 = vmatprep.subr.mxu0 0.0
    %4527 = vmatpush1.msra.mxu0 %v125
    %4528 = vmatprep.subr.mxu0 0.0
    %4529 = vmatpush1.msra.mxu0 %v124
    %4530 = vmatprep.subr.mxu0 0.0
    %4531 = vmatpush1.msra.mxu0 %v123
    %4532 = vmatprep.subr.mxu0 0.0
    %4533 = vmatpush1.msra.mxu0 %v122
    %4534 = vmatprep.subr.mxu0 0.0
    %4535 = vmatpush2.msra.mxu0 0.0
    %4536 = vmatprep.subr.mxu0 0.0
    %4537 = vmatpush2.msra.mxu0 0.0
    %4538 = vmatprep.subr.mxu0 0.0
    %4539 = vmatpush2.msra.mxu0 0.0
    %4540 = vmatprep.subr.mxu0 0.0
    %4541 = vmatpush2.msra.mxu0 0.0
    %4542 = vmatprep.subr.mxu0 0.0
    %4543 = vmatpush2.msra.mxu0 0.0
    %4544 = vmatprep.subr.mxu0 0.0
    %4545 = vmatpush2.msra.mxu0 0.0
    %4546 = vmatprep.subr.mxu0 0.0
    %4547 = vmatpush2.msra.mxu0 0.0
    %4548 = vmatprep.subr.mxu0 0.0
    %4549 = vmatpush2.msra.mxu0 0.0
    %4550 = vmatprep.subr.mxu0 0.0
    %4551 = vmatpush2.msra.mxu0 0.0
    %4552 = vmatprep.subr.mxu0 0.0
    %4553 = vmatpush2.msra.mxu0 0.0
    %4554 = vmatprep.subr.mxu0 0.0
    %4555 = vmatpush2.msra.mxu0 0.0
    %4556 = vmatprep.subr.mxu0 0.0
    %4557 = vmatpush2.msra.mxu0 0.0
    %4558 = vmatprep.subr.mxu0 0.0
    %4559 = vmatpush2.msra.mxu0 0.0
    %4560 = vmatprep.subr.mxu0 0.0
    %4561 = vmatpush2.msra.mxu0 0.0
    %4562 = vmatprep.subr.mxu0 0.0
    %4563 = vmatpush2.msra.mxu0 0.0
    %4564 = vmatprep.subr.mxu0 0.0
    %4565 = vmatpush2.msra.mxu0 0.0
    %4566 = vmatprep.mubr.f32.mxu0 0.0
    %4567 = vmatmul.mubr.f32.gmra.mxu0 %v4329
    %v4568 = vpop.f32.mrf.mxu0
    %v4569 = vadd.f32 0.0, %v4568
    %v4570 = vpop.f32.mrf.mxu0
    %4571 = vdwg.mxu0
    %v4572 = vadd.f32 %v3118, %v4569
    %v4573 = vxor.u32 %v4572, 2147483648
    %v4574 = vmul.f32 %v4573, 1.442695
    %v4575 = vpow.pop %v4574
    %v4576 = vadd.f32 %v4575, 1.0
    %v4577 = vrcp.pop %v4576
    %v4578 = vmul.f32 1.0, %v4577
    %v4579 = vtanh.pop %v4572
    %v4580 = vsel %vm307, %v4579, %v4578
    %v4581 = vmul.f32 %v4580, %v4319
    %4583 = vrot.lane.b32.xlu0 %v4580, 64
    %v4584 = vpop.permute.xlu0 %4583
    %v4586 = vmul.f32 %v4580, %v4584
    %4588 = vrot.lane.b32.xlu0 %v4586, 32
    %v4589 = vpop.permute.xlu0 %4588
    %v4591 = vadd.f32 %v4581, %v4589
    %v4592 = vtanh.pop %v4591
    %4594 = vrot.lane.b32.xlu0 %v4592, 64
    %v4595 = vpop.permute.xlu0 %4594
    %v4597 = vmul.f32 %v4580, %v4595
    %4599 = vrot.lane.b32.xlu0 %v4597, 32
    %v4600 = vpop.permute.xlu0 %4599
    %v4601 = vsel %vm221, %v4600, 0
    %4603 = vmatprep.subr.mxu0 0.0
    %4604 = vmatpush1.msra.mxu0 0.0
    %4605 = vmatprep.subr.mxu0 0.0
    %4606 = vmatpush1.msra.mxu0 0.0
    %4607 = vmatprep.subr.mxu0 0.0
    %4608 = vmatpush1.msra.mxu0 0.0
    %4609 = vmatprep.subr.mxu0 0.0
    %4610 = vmatpush1.msra.mxu0 0.0
    %4611 = vmatprep.subr.mxu0 0.0
    %4612 = vmatpush1.msra.mxu0 0.0
    %4613 = vmatprep.subr.mxu0 0.0
    %4614 = vmatpush1.msra.mxu0 0.0
    %4615 = vmatprep.subr.mxu0 0.0
    %4616 = vmatpush1.msra.mxu0 0.0
    %4617 = vmatprep.subr.mxu0 0.0
    %4618 = vmatpush1.msra.mxu0 0.0
    %4619 = vmatprep.subr.mxu0 0.0
    %4620 = vmatpush1.msra.mxu0 0.0
    %4621 = vmatprep.subr.mxu0 0.0
    %4622 = vmatpush1.msra.mxu0 0.0
    %4623 = vmatprep.subr.mxu0 0.0
    %4624 = vmatpush1.msra.mxu0 0.0
    %4625 = vmatprep.subr.mxu0 0.0
    %4626 = vmatpush1.msra.mxu0 0.0
    %4627 = vmatprep.subr.mxu0 0.0
    %4628 = vmatpush1.msra.mxu0 %v130
    %4629 = vmatprep.subr.mxu0 0.0
    %4630 = vmatpush1.msra.mxu0 %v129
    %4631 = vmatprep.subr.mxu0 0.0
    %4632 = vmatpush1.msra.mxu0 %v128
    %4633 = vmatprep.subr.mxu0 0.0
    %4634 = vmatpush1.msra.mxu0 %v127
    %4635 = vmatprep.subr.mxu0 0.0
    %4636 = vmatpush2.msra.mxu0 0.0
    %4637 = vmatprep.subr.mxu0 0.0
    %4638 = vmatpush2.msra.mxu0 0.0
    %4639 = vmatprep.subr.mxu0 0.0
    %4640 = vmatpush2.msra.mxu0 0.0
    %4641 = vmatprep.subr.mxu0 0.0
    %4642 = vmatpush2.msra.mxu0 0.0
    %4643 = vmatprep.subr.mxu0 0.0
    %4644 = vmatpush2.msra.mxu0 0.0
    %4645 = vmatprep.subr.mxu0 0.0
    %4646 = vmatpush2.msra.mxu0 0.0
    %4647 = vmatprep.subr.mxu0 0.0
    %4648 = vmatpush2.msra.mxu0 0.0
    %4649 = vmatprep.subr.mxu0 0.0
    %4650 = vmatpush2.msra.mxu0 0.0
    %4651 = vmatprep.subr.mxu0 0.0
    %4652 = vmatpush2.msra.mxu0 0.0
    %4653 = vmatprep.subr.mxu0 0.0
    %4654 = vmatpush2.msra.mxu0 0.0
    %4655 = vmatprep.subr.mxu0 0.0
    %4656 = vmatpush2.msra.mxu0 0.0
    %4657 = vmatprep.subr.mxu0 0.0
    %4658 = vmatpush2.msra.mxu0 0.0
    %4659 = vmatprep.subr.mxu0 0.0
    %4660 = vmatpush2.msra.mxu0 0.0
    %4661 = vmatprep.subr.mxu0 0.0
    %4662 = vmatpush2.msra.mxu0 0.0
    %4663 = vmatprep.subr.mxu0 0.0
    %4664 = vmatpush2.msra.mxu0 0.0
    %4665 = vmatprep.subr.mxu0 0.0
    %4666 = vmatpush2.msra.mxu0 0.0
    %4667 = vmatprep.mubr.f32.mxu0 0.0
    %4668 = vmatmul.mubr.f32.gmra.mxu0 %v4601
    %v4669 = vpop.f32.mrf.mxu0
    %v4670 = vadd.f32 %v3234, %v4669
    %v4671 = vpop.f32.mrf.mxu0
    %4672 = vdwg.mxu0
    %4674 = vrot.lane.b32.xlu0 %v4501, 32
    %v4675 = vpop.permute.xlu0 %4674
    %v4676 = vsel %vm221, %v4675, 0
    %4678 = vmatprep.subr.mxu0 0.0
    %4679 = vmatpush1.msra.mxu0 0.0
    %4680 = vmatprep.subr.mxu0 0.0
    %4681 = vmatpush1.msra.mxu0 0.0
    %4682 = vmatprep.subr.mxu0 0.0
    %4683 = vmatpush1.msra.mxu0 0.0
    %4684 = vmatprep.subr.mxu0 0.0
    %4685 = vmatpush1.msra.mxu0 0.0
    %4686 = vmatprep.subr.mxu0 0.0
    %4687 = vmatpush1.msra.mxu0 0.0
    %4688 = vmatprep.subr.mxu0 0.0
    %4689 = vmatpush1.msra.mxu0 0.0
    %4690 = vmatprep.subr.mxu0 0.0
    %4691 = vmatpush1.msra.mxu0 0.0
    %4692 = vmatprep.subr.mxu0 0.0
    %4693 = vmatpush1.msra.mxu0 0.0
    %4694 = vmatprep.subr.mxu0 0.0
    %4695 = vmatpush1.msra.mxu0 0.0
    %4696 = vmatprep.subr.mxu0 0.0
    %4697 = vmatpush1.msra.mxu0 0.0
    %4698 = vmatprep.subr.mxu0 0.0
    %4699 = vmatpush1.msra.mxu0 0.0
    %4700 = vmatprep.subr.mxu0 0.0
    %4701 = vmatpush1.msra.mxu0 0.0
    %4702 = vmatprep.subr.mxu0 0.0
    %4703 = vmatpush1.msra.mxu0 %v134
    %4704 = vmatprep.subr.mxu0 0.0
    %4705 = vmatpush1.msra.mxu0 %v133
    %4706 = vmatprep.subr.mxu0 0.0
    %4707 = vmatpush1.msra.mxu0 %v132
    %4708 = vmatprep.subr.mxu0 0.0
    %4709 = vmatpush1.msra.mxu0 %v131
    %4710 = vmatprep.subr.mxu0 0.0
    %4711 = vmatpush2.msra.mxu0 0.0
    %4712 = vmatprep.subr.mxu0 0.0
    %4713 = vmatpush2.msra.mxu0 0.0
    %4714 = vmatprep.subr.mxu0 0.0
    %4715 = vmatpush2.msra.mxu0 0.0
    %4716 = vmatprep.subr.mxu0 0.0
    %4717 = vmatpush2.msra.mxu0 0.0
    %4718 = vmatprep.subr.mxu0 0.0
    %4719 = vmatpush2.msra.mxu0 0.0
    %4720 = vmatprep.subr.mxu0 0.0
    %4721 = vmatpush2.msra.mxu0 0.0
    %4722 = vmatprep.subr.mxu0 0.0
    %4723 = vmatpush2.msra.mxu0 0.0
    %4724 = vmatprep.subr.mxu0 0.0
    %4725 = vmatpush2.msra.mxu0 0.0
    %4726 = vmatprep.subr.mxu0 0.0
    %4727 = vmatpush2.msra.mxu0 0.0
    %4728 = vmatprep.subr.mxu0 0.0
    %4729 = vmatpush2.msra.mxu0 0.0
    %4730 = vmatprep.subr.mxu0 0.0
    %4731 = vmatpush2.msra.mxu0 0.0
    %4732 = vmatprep.subr.mxu0 0.0
    %4733 = vmatpush2.msra.mxu0 0.0
    %4734 = vmatprep.subr.mxu0 0.0
    %4735 = vmatpush2.msra.mxu0 0.0
    %4736 = vmatprep.subr.mxu0 0.0
    %4737 = vmatpush2.msra.mxu0 0.0
    %4738 = vmatprep.subr.mxu0 0.0
    %4739 = vmatpush2.msra.mxu0 0.0
    %4740 = vmatprep.subr.mxu0 0.0
    %4741 = vmatpush2.msra.mxu0 0.0
    %4742 = vmatprep.mubr.f32.mxu0 0.0
    %4743 = vmatmul.mubr.f32.gmra.mxu0 %v4676
    %v4744 = vpop.f32.mrf.mxu0
    %v4745 = vadd.f32 0.0, %v4744
    %v4746 = vpop.f32.mrf.mxu0
    %4747 = vdwg.mxu0
    %v4748 = vadd.f32 %v4670, %v4745
    %v4749 = vxor.u32 %v4748, 2147483648
    %v4750 = vmul.f32 %v4749, 1.442695
    %v4751 = vpow.pop %v4750
    %v4752 = vadd.f32 %v4751, 1.0
    %v4753 = vrcp.pop %v4752
    %v4754 = vmul.f32 1.0, %v4753
    %v4755 = vtanh.pop %v4748
    %v4756 = vsel %vm307, %v4755, %v4754
    %v4757 = vmul.f32 %v4756, %v4495
    %4759 = vrot.lane.b32.xlu0 %v4756, 64
    %v4760 = vpop.permute.xlu0 %4759
    %v4762 = vmul.f32 %v4756, %v4760
    %4764 = vrot.lane.b32.xlu0 %v4762, 32
    %v4765 = vpop.permute.xlu0 %4764
    %v4767 = vadd.f32 %v4757, %v4765
    %v4768 = vtanh.pop %v4767
    %4770 = vrot.lane.b32.xlu0 %v4768, 64
    %v4771 = vpop.permute.xlu0 %4770
    %v4773 = vmul.f32 %v4756, %v4771
    %4774 = vmatprep.subr.mxu0 0.0
    %4775 = vmatpush1.msra.mxu0 0.0
    %4776 = vmatprep.subr.mxu0 0.0
    %4777 = vmatpush1.msra.mxu0 0.0
    %4778 = vmatprep.subr.mxu0 0.0
    %4779 = vmatpush1.msra.mxu0 0.0
    %4780 = vmatprep.subr.mxu0 0.0
    %4781 = vmatpush1.msra.mxu0 0.0
    %4782 = vmatprep.subr.mxu0 0.0
    %4783 = vmatpush1.msra.mxu0 0.0
    %4784 = vmatprep.subr.mxu0 0.0
    %4785 = vmatpush1.msra.mxu0 0.0
    %4786 = vmatprep.subr.mxu0 0.0
    %4787 = vmatpush1.msra.mxu0 0.0
    %4788 = vmatprep.subr.mxu0 0.0
    %4789 = vmatpush1.msra.mxu0 0.0
    %4790 = vmatprep.subr.mxu0 0.0
    %4791 = vmatpush1.msra.mxu0 0.0
    %4792 = vmatprep.subr.mxu0 0.0
    %4793 = vmatpush1.msra.mxu0 0.0
    %4794 = vmatprep.subr.mxu0 0.0
    %4795 = vmatpush1.msra.mxu0 0.0
    %4796 = vmatprep.subr.mxu0 0.0
    %4797 = vmatpush1.msra.mxu0 0.0
    %4798 = vmatprep.subr.mxu0 0.0
    %4799 = vmatpush1.msra.mxu0 %v125
    %4800 = vmatprep.subr.mxu0 0.0
    %4801 = vmatpush1.msra.mxu0 %v124
    %4802 = vmatprep.subr.mxu0 0.0
    %4803 = vmatpush1.msra.mxu0 %v123
    %4804 = vmatprep.subr.mxu0 0.0
    %4805 = vmatpush1.msra.mxu0 %v122
    %4806 = vmatprep.subr.mxu0 0.0
    %4807 = vmatpush2.msra.mxu0 0.0
    %4808 = vmatprep.subr.mxu0 0.0
    %4809 = vmatpush2.msra.mxu0 0.0
    %4810 = vmatprep.subr.mxu0 0.0
    %4811 = vmatpush2.msra.mxu0 0.0
    %4812 = vmatprep.subr.mxu0 0.0
    %4813 = vmatpush2.msra.mxu0 0.0
    %4814 = vmatprep.subr.mxu0 0.0
    %4815 = vmatpush2.msra.mxu0 0.0
    %4816 = vmatprep.subr.mxu0 0.0
    %4817 = vmatpush2.msra.mxu0 0.0
    %4818 = vmatprep.subr.mxu0 0.0
    %4819 = vmatpush2.msra.mxu0 0.0
    %4820 = vmatprep.subr.mxu0 0.0
    %4821 = vmatpush2.msra.mxu0 0.0
    %4822 = vmatprep.subr.mxu0 0.0
    %4823 = vmatpush2.msra.mxu0 0.0
    %4824 = vmatprep.subr.mxu0 0.0
    %4825 = vmatpush2.msra.mxu0 0.0
    %4826 = vmatprep.subr.mxu0 0.0
    %4827 = vmatpush2.msra.mxu0 0.0
    %4828 = vmatprep.subr.mxu0 0.0
    %4829 = vmatpush2.msra.mxu0 0.0
    %4830 = vmatprep.subr.mxu0 0.0
    %4831 = vmatpush2.msra.mxu0 0.0
    %4832 = vmatprep.subr.mxu0 0.0
    %4833 = vmatpush2.msra.mxu0 0.0
    %4834 = vmatprep.subr.mxu0 0.0
    %4835 = vmatpush2.msra.mxu0 0.0
    %4836 = vmatprep.subr.mxu0 0.0
    %4837 = vmatpush2.msra.mxu0 0.0
    %4838 = vmatprep.mubr.f32.mxu0 0.0
    %4839 = vmatmul.mubr.f32.gmra.mxu0 %v4601
    %v4840 = vpop.f32.mrf.mxu0
    %v4841 = vadd.f32 0.0, %v4840
    %v4842 = vpop.f32.mrf.mxu0
    %4843 = vdwg.mxu0
    %v4844 = vadd.f32 %v3118, %v4841
    %v4845 = vxor.u32 %v4844, 2147483648
    %v4846 = vmul.f32 %v4845, 1.442695
    %v4847 = vpow.pop %v4846
    %v4848 = vadd.f32 %v4847, 1.0
    %v4849 = vrcp.pop %v4848
    %v4850 = vmul.f32 1.0, %v4849
    %v4851 = vtanh.pop %v4844
    %v4852 = vsel %vm307, %v4851, %v4850
    %v4853 = vmul.f32 %v4852, %v4591
    %4855 = vrot.lane.b32.xlu0 %v4852, 64
    %v4856 = vpop.permute.xlu0 %4855
    %v4858 = vmul.f32 %v4852, %v4856
    %4860 = vrot.lane.b32.xlu0 %v4858, 32
    %v4861 = vpop.permute.xlu0 %4860
    %v4863 = vadd.f32 %v4853, %v4861
    %v4864 = vtanh.pop %v4863
    %4866 = vrot.lane.b32.xlu0 %v4864, 64
    %v4867 = vpop.permute.xlu0 %4866
    %v4869 = vmul.f32 %v4852, %v4867
    %4871 = vrot.lane.b32.xlu0 %v4869, 32
    %v4872 = vpop.permute.xlu0 %4871
    %v4873 = vsel %vm221, %v4872, 0
    %4875 = vmatprep.subr.mxu0 0.0
    %4876 = vmatpush1.msra.mxu0 0.0
    %4877 = vmatprep.subr.mxu0 0.0
    %4878 = vmatpush1.msra.mxu0 0.0
    %4879 = vmatprep.subr.mxu0 0.0
    %4880 = vmatpush1.msra.mxu0 0.0
    %4881 = vmatprep.subr.mxu0 0.0
    %4882 = vmatpush1.msra.mxu0 0.0
    %4883 = vmatprep.subr.mxu0 0.0
    %4884 = vmatpush1.msra.mxu0 0.0
    %4885 = vmatprep.subr.mxu0 0.0
    %4886 = vmatpush1.msra.mxu0 0.0
    %4887 = vmatprep.subr.mxu0 0.0
    %4888 = vmatpush1.msra.mxu0 0.0
    %4889 = vmatprep.subr.mxu0 0.0
    %4890 = vmatpush1.msra.mxu0 0.0
    %4891 = vmatprep.subr.mxu0 0.0
    %4892 = vmatpush1.msra.mxu0 0.0
    %4893 = vmatprep.subr.mxu0 0.0
    %4894 = vmatpush1.msra.mxu0 0.0
    %4895 = vmatprep.subr.mxu0 0.0
    %4896 = vmatpush1.msra.mxu0 0.0
    %4897 = vmatprep.subr.mxu0 0.0
    %4898 = vmatpush1.msra.mxu0 0.0
    %4899 = vmatprep.subr.mxu0 0.0
    %4900 = vmatpush1.msra.mxu0 %v130
    %4901 = vmatprep.subr.mxu0 0.0
    %4902 = vmatpush1.msra.mxu0 %v129
    %4903 = vmatprep.subr.mxu0 0.0
    %4904 = vmatpush1.msra.mxu0 %v128
    %4905 = vmatprep.subr.mxu0 0.0
    %4906 = vmatpush1.msra.mxu0 %v127
    %4907 = vmatprep.subr.mxu0 0.0
    %4908 = vmatpush2.msra.mxu0 0.0
    %4909 = vmatprep.subr.mxu0 0.0
    %4910 = vmatpush2.msra.mxu0 0.0
    %4911 = vmatprep.subr.mxu0 0.0
    %4912 = vmatpush2.msra.mxu0 0.0
    %4913 = vmatprep.subr.mxu0 0.0
    %4914 = vmatpush2.msra.mxu0 0.0
    %4915 = vmatprep.subr.mxu0 0.0
    %4916 = vmatpush2.msra.mxu0 0.0
    %4917 = vmatprep.subr.mxu0 0.0
    %4918 = vmatpush2.msra.mxu0 0.0
    %4919 = vmatprep.subr.mxu0 0.0
    %4920 = vmatpush2.msra.mxu0 0.0
    %4921 = vmatprep.subr.mxu0 0.0
    %4922 = vmatpush2.msra.mxu0 0.0
    %4923 = vmatprep.subr.mxu0 0.0
    %4924 = vmatpush2.msra.mxu0 0.0
    %4925 = vmatprep.subr.mxu0 0.0
    %4926 = vmatpush2.msra.mxu0 0.0
    %4927 = vmatprep.subr.mxu0 0.0
    %4928 = vmatpush2.msra.mxu0 0.0
    %4929 = vmatprep.subr.mxu0 0.0
    %4930 = vmatpush2.msra.mxu0 0.0
    %4931 = vmatprep.subr.mxu0 0.0
    %4932 = vmatpush2.msra.mxu0 0.0
    %4933 = vmatprep.subr.mxu0 0.0
    %4934 = vmatpush2.msra.mxu0 0.0
    %4935 = vmatprep.subr.mxu0 0.0
    %4936 = vmatpush2.msra.mxu0 0.0
    %4937 = vmatprep.subr.mxu0 0.0
    %4938 = vmatpush2.msra.mxu0 0.0
    %4939 = vmatprep.mubr.f32.mxu0 0.0
    %4940 = vmatmul.mubr.f32.gmra.mxu0 %v4873
    %v4941 = vpop.f32.mrf.mxu0
    %v4942 = vadd.f32 %v3234, %v4941
    %v4943 = vpop.f32.mrf.mxu0
    %4944 = vdwg.mxu0
    %4946 = vrot.lane.b32.xlu0 %v4773, 32
    %v4947 = vpop.permute.xlu0 %4946
    %v4948 = vsel %vm221, %v4947, 0
    %4950 = vmatprep.subr.mxu0 0.0
    %4951 = vmatpush1.msra.mxu0 0.0
    %4952 = vmatprep.subr.mxu0 0.0
    %4953 = vmatpush1.msra.mxu0 0.0
    %4954 = vmatprep.subr.mxu0 0.0
    %4955 = vmatpush1.msra.mxu0 0.0
    %4956 = vmatprep.subr.mxu0 0.0
    %4957 = vmatpush1.msra.mxu0 0.0
    %4958 = vmatprep.subr.mxu0 0.0
    %4959 = vmatpush1.msra.mxu0 0.0
    %4960 = vmatprep.subr.mxu0 0.0
    %4961 = vmatpush1.msra.mxu0 0.0
    %4962 = vmatprep.subr.mxu0 0.0
    %4963 = vmatpush1.msra.mxu0 0.0
    %4964 = vmatprep.subr.mxu0 0.0
    %4965 = vmatpush1.msra.mxu0 0.0
    %4966 = vmatprep.subr.mxu0 0.0
    %4967 = vmatpush1.msra.mxu0 0.0
    %4968 = vmatprep.subr.mxu0 0.0
    %4969 = vmatpush1.msra.mxu0 0.0
    %4970 = vmatprep.subr.mxu0 0.0
    %4971 = vmatpush1.msra.mxu0 0.0
    %4972 = vmatprep.subr.mxu0 0.0
    %4973 = vmatpush1.msra.mxu0 0.0
    %4974 = vmatprep.subr.mxu0 0.0
    %4975 = vmatpush1.msra.mxu0 %v134
    %4976 = vmatprep.subr.mxu0 0.0
    %4977 = vmatpush1.msra.mxu0 %v133
    %4978 = vmatprep.subr.mxu0 0.0
    %4979 = vmatpush1.msra.mxu0 %v132
    %4980 = vmatprep.subr.mxu0 0.0
    %4981 = vmatpush1.msra.mxu0 %v131
    %4982 = vmatprep.subr.mxu0 0.0
    %4983 = vmatpush2.msra.mxu0 0.0
    %4984 = vmatprep.subr.mxu0 0.0
    %4985 = vmatpush2.msra.mxu0 0.0
    %4986 = vmatprep.subr.mxu0 0.0
    %4987 = vmatpush2.msra.mxu0 0.0
    %4988 = vmatprep.subr.mxu0 0.0
    %4989 = vmatpush2.msra.mxu0 0.0
    %4990 = vmatprep.subr.mxu0 0.0
    %4991 = vmatpush2.msra.mxu0 0.0
    %4992 = vmatprep.subr.mxu0 0.0
    %4993 = vmatpush2.msra.mxu0 0.0
    %4994 = vmatprep.subr.mxu0 0.0
    %4995 = vmatpush2.msra.mxu0 0.0
    %4996 = vmatprep.subr.mxu0 0.0
    %4997 = vmatpush2.msra.mxu0 0.0
    %4998 = vmatprep.subr.mxu0 0.0
    %4999 = vmatpush2.msra.mxu0 0.0
    %5000 = vmatprep.subr.mxu0 0.0
    %5001 = vmatpush2.msra.mxu0 0.0
    %5002 = vmatprep.subr.mxu0 0.0
    %5003 = vmatpush2.msra.mxu0 0.0
    %5004 = vmatprep.subr.mxu0 0.0
    %5005 = vmatpush2.msra.mxu0 0.0
    %5006 = vmatprep.subr.mxu0 0.0
    %5007 = vmatpush2.msra.mxu0 0.0
    %5008 = vmatprep.subr.mxu0 0.0
    %5009 = vmatpush2.msra.mxu0 0.0
    %5010 = vmatprep.subr.mxu0 0.0
    %5011 = vmatpush2.msra.mxu0 0.0
    %5012 = vmatprep.subr.mxu0 0.0
    %5013 = vmatpush2.msra.mxu0 0.0
    %5014 = vmatprep.mubr.f32.mxu0 0.0
    %5015 = vmatmul.mubr.f32.gmra.mxu0 %v4948
    %v5016 = vpop.f32.mrf.mxu0
    %v5017 = vadd.f32 0.0, %v5016
    %v5018 = vpop.f32.mrf.mxu0
    %5019 = vdwg.mxu0
    %v5020 = vadd.f32 %v4942, %v5017
    %v5021 = vxor.u32 %v5020, 2147483648
    %v5022 = vmul.f32 %v5021, 1.442695
    %v5023 = vpow.pop %v5022
    %v5024 = vadd.f32 %v5023, 1.0
    %v5025 = vrcp.pop %v5024
    %v5026 = vmul.f32 1.0, %v5025
    %v5027 = vtanh.pop %v5020
    %v5028 = vsel %vm307, %v5027, %v5026
    %v5029 = vmul.f32 %v5028, %v4767
    %5031 = vrot.lane.b32.xlu0 %v5028, 64
    %v5032 = vpop.permute.xlu0 %5031
    %v5034 = vmul.f32 %v5028, %v5032
    %5036 = vrot.lane.b32.xlu0 %v5034, 32
    %v5037 = vpop.permute.xlu0 %5036
    %v5039 = vadd.f32 %v5029, %v5037
    %v5040 = vtanh.pop %v5039
    %5042 = vrot.lane.b32.xlu0 %v5040, 64
    %v5043 = vpop.permute.xlu0 %5042
    %v5045 = vmul.f32 %v5028, %v5043
    %5046 = vmatprep.subr.mxu0 0.0
    %5047 = vmatpush1.msra.mxu0 0.0
    %5048 = vmatprep.subr.mxu0 0.0
    %5049 = vmatpush1.msra.mxu0 0.0
    %5050 = vmatprep.subr.mxu0 0.0
    %5051 = vmatpush1.msra.mxu0 0.0
    %5052 = vmatprep.subr.mxu0 0.0
    %5053 = vmatpush1.msra.mxu0 0.0
    %5054 = vmatprep.subr.mxu0 0.0
    %5055 = vmatpush1.msra.mxu0 0.0
    %5056 = vmatprep.subr.mxu0 0.0
    %5057 = vmatpush1.msra.mxu0 0.0
    %5058 = vmatprep.subr.mxu0 0.0
    %5059 = vmatpush1.msra.mxu0 0.0
    %5060 = vmatprep.subr.mxu0 0.0
    %5061 = vmatpush1.msra.mxu0 0.0
    %5062 = vmatprep.subr.mxu0 0.0
    %5063 = vmatpush1.msra.mxu0 0.0
    %5064 = vmatprep.subr.mxu0 0.0
    %5065 = vmatpush1.msra.mxu0 0.0
    %5066 = vmatprep.subr.mxu0 0.0
    %5067 = vmatpush1.msra.mxu0 0.0
    %5068 = vmatprep.subr.mxu0 0.0
    %5069 = vmatpush1.msra.mxu0 0.0
    %5070 = vmatprep.subr.mxu0 0.0
    %5071 = vmatpush1.msra.mxu0 %v125
    %5072 = vmatprep.subr.mxu0 0.0
    %5073 = vmatpush1.msra.mxu0 %v124
    %5074 = vmatprep.subr.mxu0 0.0
    %5075 = vmatpush1.msra.mxu0 %v123
    %5076 = vmatprep.subr.mxu0 0.0
    %5077 = vmatpush1.msra.mxu0 %v122
    %5078 = vmatprep.subr.mxu0 0.0
    %5079 = vmatpush2.msra.mxu0 0.0
    %5080 = vmatprep.subr.mxu0 0.0
    %5081 = vmatpush2.msra.mxu0 0.0
    %5082 = vmatprep.subr.mxu0 0.0
    %5083 = vmatpush2.msra.mxu0 0.0
    %5084 = vmatprep.subr.mxu0 0.0
    %5085 = vmatpush2.msra.mxu0 0.0
    %5086 = vmatprep.subr.mxu0 0.0
    %5087 = vmatpush2.msra.mxu0 0.0
    %5088 = vmatprep.subr.mxu0 0.0
    %5089 = vmatpush2.msra.mxu0 0.0
    %5090 = vmatprep.subr.mxu0 0.0
    %5091 = vmatpush2.msra.mxu0 0.0
    %5092 = vmatprep.subr.mxu0 0.0
    %5093 = vmatpush2.msra.mxu0 0.0
    %5094 = vmatprep.subr.mxu0 0.0
    %5095 = vmatpush2.msra.mxu0 0.0
    %5096 = vmatprep.subr.mxu0 0.0
    %5097 = vmatpush2.msra.mxu0 0.0
    %5098 = vmatprep.subr.mxu0 0.0
    %5099 = vmatpush2.msra.mxu0 0.0
    %5100 = vmatprep.subr.mxu0 0.0
    %5101 = vmatpush2.msra.mxu0 0.0
    %5102 = vmatprep.subr.mxu0 0.0
    %5103 = vmatpush2.msra.mxu0 0.0
    %5104 = vmatprep.subr.mxu0 0.0
    %5105 = vmatpush2.msra.mxu0 0.0
    %5106 = vmatprep.subr.mxu0 0.0
    %5107 = vmatpush2.msra.mxu0 0.0
    %5108 = vmatprep.subr.mxu0 0.0
    %5109 = vmatpush2.msra.mxu0 0.0
    %5110 = vmatprep.mubr.f32.mxu0 0.0
    %5111 = vmatmul.mubr.f32.gmra.mxu0 %v4873
    %v5112 = vpop.f32.mrf.mxu0
    %v5113 = vadd.f32 0.0, %v5112
    %v5114 = vpop.f32.mrf.mxu0
    %5115 = vdwg.mxu0
    %v5116 = vadd.f32 %v3118, %v5113
    %v5117 = vxor.u32 %v5116, 2147483648
    %v5118 = vmul.f32 %v5117, 1.442695
    %v5119 = vpow.pop %v5118
    %v5120 = vadd.f32 %v5119, 1.0
    %v5121 = vrcp.pop %v5120
    %v5122 = vmul.f32 1.0, %v5121
    %v5123 = vtanh.pop %v5116
    %v5124 = vsel %vm307, %v5123, %v5122
    %v5125 = vmul.f32 %v5124, %v4863
    %5127 = vrot.lane.b32.xlu0 %v5124, 64
    %v5128 = vpop.permute.xlu0 %5127
    %v5130 = vmul.f32 %v5124, %v5128
    %5132 = vrot.lane.b32.xlu0 %v5130, 32
    %v5133 = vpop.permute.xlu0 %5132
    %v5135 = vadd.f32 %v5125, %v5133
    %v5136 = vtanh.pop %v5135
    %5138 = vrot.lane.b32.xlu0 %v5136, 64
    %v5139 = vpop.permute.xlu0 %5138
    %v5141 = vmul.f32 %v5124, %v5139
    %5143 = vrot.lane.b32.xlu0 %v5141, 32
    %v5144 = vpop.permute.xlu0 %5143
    %v5145 = vsel %vm221, %v5144, 0
    %5147 = vmatprep.subr.mxu0 0.0
    %5148 = vmatpush1.msra.mxu0 0.0
    %5149 = vmatprep.subr.mxu0 0.0
    %5150 = vmatpush1.msra.mxu0 0.0
    %5151 = vmatprep.subr.mxu0 0.0
    %5152 = vmatpush1.msra.mxu0 0.0
    %5153 = vmatprep.subr.mxu0 0.0
    %5154 = vmatpush1.msra.mxu0 0.0
    %5155 = vmatprep.subr.mxu0 0.0
    %5156 = vmatpush1.msra.mxu0 0.0
    %5157 = vmatprep.subr.mxu0 0.0
    %5158 = vmatpush1.msra.mxu0 0.0
    %5159 = vmatprep.subr.mxu0 0.0
    %5160 = vmatpush1.msra.mxu0 0.0
    %5161 = vmatprep.subr.mxu0 0.0
    %5162 = vmatpush1.msra.mxu0 0.0
    %5163 = vmatprep.subr.mxu0 0.0
    %5164 = vmatpush1.msra.mxu0 0.0
    %5165 = vmatprep.subr.mxu0 0.0
    %5166 = vmatpush1.msra.mxu0 0.0
    %5167 = vmatprep.subr.mxu0 0.0
    %5168 = vmatpush1.msra.mxu0 0.0
    %5169 = vmatprep.subr.mxu0 0.0
    %5170 = vmatpush1.msra.mxu0 0.0
    %5171 = vmatprep.subr.mxu0 0.0
    %5172 = vmatpush1.msra.mxu0 %v130
    %5173 = vmatprep.subr.mxu0 0.0
    %5174 = vmatpush1.msra.mxu0 %v129
    %5175 = vmatprep.subr.mxu0 0.0
    %5176 = vmatpush1.msra.mxu0 %v128
    %5177 = vmatprep.subr.mxu0 0.0
    %5178 = vmatpush1.msra.mxu0 %v127
    %5179 = vmatprep.subr.mxu0 0.0
    %5180 = vmatpush2.msra.mxu0 0.0
    %5181 = vmatprep.subr.mxu0 0.0
    %5182 = vmatpush2.msra.mxu0 0.0
    %5183 = vmatprep.subr.mxu0 0.0
    %5184 = vmatpush2.msra.mxu0 0.0
    %5185 = vmatprep.subr.mxu0 0.0
    %5186 = vmatpush2.msra.mxu0 0.0
    %5187 = vmatprep.subr.mxu0 0.0
    %5188 = vmatpush2.msra.mxu0 0.0
    %5189 = vmatprep.subr.mxu0 0.0
    %5190 = vmatpush2.msra.mxu0 0.0
    %5191 = vmatprep.subr.mxu0 0.0
    %5192 = vmatpush2.msra.mxu0 0.0
    %5193 = vmatprep.subr.mxu0 0.0
    %5194 = vmatpush2.msra.mxu0 0.0
    %5195 = vmatprep.subr.mxu0 0.0
    %5196 = vmatpush2.msra.mxu0 0.0
    %5197 = vmatprep.subr.mxu0 0.0
    %5198 = vmatpush2.msra.mxu0 0.0
    %5199 = vmatprep.subr.mxu0 0.0
    %5200 = vmatpush2.msra.mxu0 0.0
    %5201 = vmatprep.subr.mxu0 0.0
    %5202 = vmatpush2.msra.mxu0 0.0
    %5203 = vmatprep.subr.mxu0 0.0
    %5204 = vmatpush2.msra.mxu0 0.0
    %5205 = vmatprep.subr.mxu0 0.0
    %5206 = vmatpush2.msra.mxu0 0.0
    %5207 = vmatprep.subr.mxu0 0.0
    %5208 = vmatpush2.msra.mxu0 0.0
    %5209 = vmatprep.subr.mxu0 0.0
    %5210 = vmatpush2.msra.mxu0 0.0
    %5211 = vmatprep.mubr.f32.mxu0 0.0
    %5212 = vmatmul.mubr.f32.gmra.mxu0 %v5145
    %v5213 = vpop.f32.mrf.mxu0
    %v5214 = vadd.f32 %v3234, %v5213
    %v5215 = vpop.f32.mrf.mxu0
    %5216 = vdwg.mxu0
    %5218 = vrot.lane.b32.xlu0 %v5045, 32
    %v5219 = vpop.permute.xlu0 %5218
    %v5220 = vsel %vm221, %v5219, 0
    %5222 = vmatprep.subr.mxu0 0.0
    %5223 = vmatpush1.msra.mxu0 0.0
    %5224 = vmatprep.subr.mxu0 0.0
    %5225 = vmatpush1.msra.mxu0 0.0
    %5226 = vmatprep.subr.mxu0 0.0
    %5227 = vmatpush1.msra.mxu0 0.0
    %5228 = vmatprep.subr.mxu0 0.0
    %5229 = vmatpush1.msra.mxu0 0.0
    %5230 = vmatprep.subr.mxu0 0.0
    %5231 = vmatpush1.msra.mxu0 0.0
    %5232 = vmatprep.subr.mxu0 0.0
    %5233 = vmatpush1.msra.mxu0 0.0
    %5234 = vmatprep.subr.mxu0 0.0
    %5235 = vmatpush1.msra.mxu0 0.0
    %5236 = vmatprep.subr.mxu0 0.0
    %5237 = vmatpush1.msra.mxu0 0.0
    %5238 = vmatprep.subr.mxu0 0.0
    %5239 = vmatpush1.msra.mxu0 0.0
    %5240 = vmatprep.subr.mxu0 0.0
    %5241 = vmatpush1.msra.mxu0 0.0
    %5242 = vmatprep.subr.mxu0 0.0
    %5243 = vmatpush1.msra.mxu0 0.0
    %5244 = vmatprep.subr.mxu0 0.0
    %5245 = vmatpush1.msra.mxu0 0.0
    %5246 = vmatprep.subr.mxu0 0.0
    %5247 = vmatpush1.msra.mxu0 %v134
    %5248 = vmatprep.subr.mxu0 0.0
    %5249 = vmatpush1.msra.mxu0 %v133
    %5250 = vmatprep.subr.mxu0 0.0
    %5251 = vmatpush1.msra.mxu0 %v132
    %5252 = vmatprep.subr.mxu0 0.0
    %5253 = vmatpush1.msra.mxu0 %v131
    %5254 = vmatprep.subr.mxu0 0.0
    %5255 = vmatpush2.msra.mxu0 0.0
    %5256 = vmatprep.subr.mxu0 0.0
    %5257 = vmatpush2.msra.mxu0 0.0
    %5258 = vmatprep.subr.mxu0 0.0
    %5259 = vmatpush2.msra.mxu0 0.0
    %5260 = vmatprep.subr.mxu0 0.0
    %5261 = vmatpush2.msra.mxu0 0.0
    %5262 = vmatprep.subr.mxu0 0.0
    %5263 = vmatpush2.msra.mxu0 0.0
    %5264 = vmatprep.subr.mxu0 0.0
    %5265 = vmatpush2.msra.mxu0 0.0
    %5266 = vmatprep.subr.mxu0 0.0
    %5267 = vmatpush2.msra.mxu0 0.0
    %5268 = vmatprep.subr.mxu0 0.0
    %5269 = vmatpush2.msra.mxu0 0.0
    %5270 = vmatprep.subr.mxu0 0.0
    %5271 = vmatpush2.msra.mxu0 0.0
    %5272 = vmatprep.subr.mxu0 0.0
    %5273 = vmatpush2.msra.mxu0 0.0
    %5274 = vmatprep.subr.mxu0 0.0
    %5275 = vmatpush2.msra.mxu0 0.0
    %5276 = vmatprep.subr.mxu0 0.0
    %5277 = vmatpush2.msra.mxu0 0.0
    %5278 = vmatprep.subr.mxu0 0.0
    %5279 = vmatpush2.msra.mxu0 0.0
    %5280 = vmatprep.subr.mxu0 0.0
    %5281 = vmatpush2.msra.mxu0 0.0
    %5282 = vmatprep.subr.mxu0 0.0
    %5283 = vmatpush2.msra.mxu0 0.0
    %5284 = vmatprep.subr.mxu0 0.0
    %5285 = vmatpush2.msra.mxu0 0.0
    %5286 = vmatprep.mubr.f32.mxu0 0.0
    %5287 = vmatmul.mubr.f32.gmra.mxu0 %v5220
    %v5288 = vpop.f32.mrf.mxu0
    %v5289 = vadd.f32 0.0, %v5288
    %v5290 = vpop.f32.mrf.mxu0
    %5291 = vdwg.mxu0
    %v5292 = vadd.f32 %v5214, %v5289
    %v5293 = vxor.u32 %v5292, 2147483648
    %v5294 = vmul.f32 %v5293, 1.442695
    %v5295 = vpow.pop %v5294
    %v5296 = vadd.f32 %v5295, 1.0
    %v5297 = vrcp.pop %v5296
    %v5298 = vmul.f32 1.0, %v5297
    %v5299 = vtanh.pop %v5292
    %v5300 = vsel %vm307, %v5299, %v5298
    %v5301 = vmul.f32 %v5300, %v5039
    %5303 = vrot.lane.b32.xlu0 %v5300, 64
    %v5304 = vpop.permute.xlu0 %5303
    %v5306 = vmul.f32 %v5300, %v5304
    %5308 = vrot.lane.b32.xlu0 %v5306, 32
    %v5309 = vpop.permute.xlu0 %5308
    %v5311 = vadd.f32 %v5301, %v5309
    %v5312 = vtanh.pop %v5311
    %5314 = vrot.lane.b32.xlu0 %v5312, 64
    %v5315 = vpop.permute.xlu0 %5314
    %v5317 = vmul.f32 %v5300, %v5315
    %v5318 = vtanh.pop %v5317
    %v5319 = vld [vmem:[%s18] sm:$0xff]
    %v5320 = vld [vmem:[%s18 + $0x8] sm:$0xff]
    %v5321 = vld [vmem:[%s18 + $0x10] sm:$0xff]
    %v5322 = vld [vmem:[%s18 + $0x18] sm:$0xff]
    %v5323 = vld [vmem:[%s19] sm:$0x1]
    %v5325 = vlaneseq
    %v5326 = vshrl.u32 %v5325, 7
    %v5327 = vsub.s32 0, %v5326
    %v5328 = vrot.slane %v5323, %v5327
    %5331 = vrot.lane.b32.xlu0 %v5318, 32
    %v5332 = vpop.permute.xlu0 %5331
    %v5333 = vsel %vm221, %v5332, 0
    %5335 = vmatprep.subr.mxu0 0.0
    %5336 = vmatpush1.msra.mxu0 0.0
    %5337 = vmatprep.subr.mxu0 0.0
    %5338 = vmatpush1.msra.mxu0 0.0
    %5339 = vmatprep.subr.mxu0 0.0
    %5340 = vmatpush1.msra.mxu0 0.0
    %5341 = vmatprep.subr.mxu0 0.0
    %5342 = vmatpush1.msra.mxu0 0.0
    %5343 = vmatprep.subr.mxu0 0.0
    %5344 = vmatpush1.msra.mxu0 0.0
    %5345 = vmatprep.subr.mxu0 0.0
    %5346 = vmatpush1.msra.mxu0 0.0
    %5347 = vmatprep.subr.mxu0 0.0
    %5348 = vmatpush1.msra.mxu0 0.0
    %5349 = vmatprep.subr.mxu0 0.0
    %5350 = vmatpush1.msra.mxu0 0.0
    %5351 = vmatprep.subr.mxu0 0.0
    %5352 = vmatpush1.msra.mxu0 0.0
    %5353 = vmatprep.subr.mxu0 0.0
    %5354 = vmatpush1.msra.mxu0 0.0
    %5355 = vmatprep.subr.mxu0 0.0
    %5356 = vmatpush1.msra.mxu0 0.0
    %5357 = vmatprep.subr.mxu0 0.0
    %5358 = vmatpush1.msra.mxu0 0.0
    %5359 = vmatprep.subr.mxu0 0.0
    %5360 = vmatpush1.msra.mxu0 %v5322
    %5361 = vmatprep.subr.mxu0 0.0
    %5362 = vmatpush1.msra.mxu0 %v5321
    %5363 = vmatprep.subr.mxu0 0.0
    %5364 = vmatpush1.msra.mxu0 %v5320
    %5365 = vmatprep.subr.mxu0 0.0
    %5366 = vmatpush1.msra.mxu0 %v5319
    %5367 = vmatprep.subr.mxu0 0.0
    %5368 = vmatpush2.msra.mxu0 0.0
    %5369 = vmatprep.subr.mxu0 0.0
    %5370 = vmatpush2.msra.mxu0 0.0
    %5371 = vmatprep.subr.mxu0 0.0
    %5372 = vmatpush2.msra.mxu0 0.0
    %5373 = vmatprep.subr.mxu0 0.0
    %5374 = vmatpush2.msra.mxu0 0.0
    %5375 = vmatprep.subr.mxu0 0.0
    %5376 = vmatpush2.msra.mxu0 0.0
    %5377 = vmatprep.subr.mxu0 0.0
    %5378 = vmatpush2.msra.mxu0 0.0
    %5379 = vmatprep.subr.mxu0 0.0
    %5380 = vmatpush2.msra.mxu0 0.0
    %5381 = vmatprep.subr.mxu0 0.0
    %5382 = vmatpush2.msra.mxu0 0.0
    %5383 = vmatprep.subr.mxu0 0.0
    %5384 = vmatpush2.msra.mxu0 0.0
    %5385 = vmatprep.subr.mxu0 0.0
    %5386 = vmatpush2.msra.mxu0 0.0
    %5387 = vmatprep.subr.mxu0 0.0
    %5388 = vmatpush2.msra.mxu0 0.0
    %5389 = vmatprep.subr.mxu0 0.0
    %5390 = vmatpush2.msra.mxu0 0.0
    %5391 = vmatprep.subr.mxu0 0.0
    %5392 = vmatpush2.msra.mxu0 0.0
    %5393 = vmatprep.subr.mxu0 0.0
    %5394 = vmatpush2.msra.mxu0 0.0
    %5395 = vmatprep.subr.mxu0 0.0
    %5396 = vmatpush2.msra.mxu0 0.0
    %5397 = vmatprep.subr.mxu0 0.0
    %5398 = vmatpush2.msra.mxu0 0.0
    %5399 = vmatprep.mubr.f32.mxu0 0.0
    %5400 = vmatmul.mubr.f32.gmra.mxu0 %v5333
    %v5401 = vpop.f32.mrf.mxu0
    %v5402 = vadd.f32 %v5328, %v5401
    %v5403 = vpop.f32.mrf.mxu0
    %5404 = vdwg.mxu0
    %v5405 = vld [vmem:[%s20] sm:$0xff]
    %v5406 = vld [vmem:[%s21] sm:$0x1]
    %v5408 = vlaneseq
    %v5409 = vshrl.u32 %v5408, 7
    %v5410 = vsub.s32 0, %v5409
    %v5411 = vrot.slane %v5406, %v5410
    %v5414 = vsel %vm3047, %v5402, 0
    %5416 = vmatprep.subr.mxu0 0.0
    %5417 = vmatpush1.msra.mxu0 0.0
    %5418 = vmatprep.subr.mxu0 0.0
    %5419 = vmatpush1.msra.mxu0 0.0
    %5420 = vmatprep.subr.mxu0 0.0
    %5421 = vmatpush1.msra.mxu0 0.0
    %5422 = vmatprep.subr.mxu0 0.0
    %5423 = vmatpush1.msra.mxu0 0.0
    %5424 = vmatprep.subr.mxu0 0.0
    %5425 = vmatpush1.msra.mxu0 0.0
    %5426 = vmatprep.subr.mxu0 0.0
    %5427 = vmatpush1.msra.mxu0 0.0
    %5428 = vmatprep.subr.mxu0 0.0
    %5429 = vmatpush1.msra.mxu0 0.0
    %5430 = vmatprep.subr.mxu0 0.0
    %5431 = vmatpush1.msra.mxu0 0.0
    %5432 = vmatprep.subr.mxu0 0.0
    %5433 = vmatpush1.msra.mxu0 0.0
    %5434 = vmatprep.subr.mxu0 0.0
    %5435 = vmatpush1.msra.mxu0 0.0
    %5436 = vmatprep.subr.mxu0 0.0
    %5437 = vmatpush1.msra.mxu0 0.0
    %5438 = vmatprep.subr.mxu0 0.0
    %5439 = vmatpush1.msra.mxu0 0.0
    %5440 = vmatprep.subr.mxu0 0.0
    %5441 = vmatpush1.msra.mxu0 0.0
    %5442 = vmatprep.subr.mxu0 0.0
    %5443 = vmatpush1.msra.mxu0 0.0
    %5444 = vmatprep.subr.mxu0 0.0
    %5445 = vmatpush1.msra.mxu0 0.0
    %5446 = vmatprep.subr.mxu0 0.0
    %5447 = vmatpush1.msra.mxu0 %v5405
    %5448 = vmatprep.subr.mxu0 0.0
    %5449 = vmatpush2.msra.mxu0 0.0
    %5450 = vmatprep.subr.mxu0 0.0
    %5451 = vmatpush2.msra.mxu0 0.0
    %5452 = vmatprep.subr.mxu0 0.0
    %5453 = vmatpush2.msra.mxu0 0.0
    %5454 = vmatprep.subr.mxu0 0.0
    %5455 = vmatpush2.msra.mxu0 0.0
    %5456 = vmatprep.subr.mxu0 0.0
    %5457 = vmatpush2.msra.mxu0 0.0
    %5458 = vmatprep.subr.mxu0 0.0
    %5459 = vmatpush2.msra.mxu0 0.0
    %5460 = vmatprep.subr.mxu0 0.0
    %5461 = vmatpush2.msra.mxu0 0.0
    %5462 = vmatprep.subr.mxu0 0.0
    %5463 = vmatpush2.msra.mxu0 0.0
    %5464 = vmatprep.subr.mxu0 0.0
    %5465 = vmatpush2.msra.mxu0 0.0
    %5466 = vmatprep.subr.mxu0 0.0
    %5467 = vmatpush2.msra.mxu0 0.0
    %5468 = vmatprep.subr.mxu0 0.0
    %5469 = vmatpush2.msra.mxu0 0.0
    %5470 = vmatprep.subr.mxu0 0.0
    %5471 = vmatpush2.msra.mxu0 0.0
    %5472 = vmatprep.subr.mxu0 0.0
    %5473 = vmatpush2.msra.mxu0 0.0
    %5474 = vmatprep.subr.mxu0 0.0
    %5475 = vmatpush2.msra.mxu0 0.0
    %5476 = vmatprep.subr.mxu0 0.0
    %5477 = vmatpush2.msra.mxu0 0.0
    %5478 = vmatprep.subr.mxu0 0.0
    %5479 = vmatpush2.msra.mxu0 0.0
    %5480 = vmatprep.mubr.f32.mxu0 0.0
    %5481 = vmatmul.mubr.f32.gmra.mxu0 %v5414
    %v5482 = vpop.f32.mrf.mxu0
    %v5483 = vadd.f32 %v5411, %v5482
    %v5484 = vpop.f32.mrf.mxu0
    %5485 = vdwg.mxu0
    %v5486 = vmax.f32 %v5483, 0.0
    %v5487 = vld [vmem:[%s22] sm:$0xff]
    %v5488 = vld [vmem:[%s22 + $0x8] sm:$0xff]
    %v5489 = vld [vmem:[%s23] sm:$0x1]
    %v5491 = vlaneseq
    %v5492 = vshrl.u32 %v5491, 7
    %v5493 = vsub.s32 0, %v5492
    %v5494 = vrot.slane %v5489, %v5493
    %vm5496 = vcmask 130048
    %v5498 = vsel %vm5496, %v5486, 0
    %5500 = vmatprep.subr.mxu0 0.0
    %5501 = vmatpush1.msra.mxu0 0.0
    %5502 = vmatprep.subr.mxu0 0.0
    %5503 = vmatpush1.msra.mxu0 0.0
    %5504 = vmatprep.subr.mxu0 0.0
    %5505 = vmatpush1.msra.mxu0 0.0
    %5506 = vmatprep.subr.mxu0 0.0
    %5507 = vmatpush1.msra.mxu0 0.0
    %5508 = vmatprep.subr.mxu0 0.0
    %5509 = vmatpush1.msra.mxu0 0.0
    %5510 = vmatprep.subr.mxu0 0.0
    %5511 = vmatpush1.msra.mxu0 0.0
    %5512 = vmatprep.subr.mxu0 0.0
    %5513 = vmatpush1.msra.mxu0 0.0
    %5514 = vmatprep.subr.mxu0 0.0
    %5515 = vmatpush1.msra.mxu0 0.0
    %5516 = vmatprep.subr.mxu0 0.0
    %5517 = vmatpush1.msra.mxu0 0.0
    %5518 = vmatprep.subr.mxu0 0.0
    %5519 = vmatpush1.msra.mxu0 0.0
    %5520 = vmatprep.subr.mxu0 0.0
    %5521 = vmatpush1.msra.mxu0 0.0
    %5522 = vmatprep.subr.mxu0 0.0
    %5523 = vmatpush1.msra.mxu0 0.0
    %5524 = vmatprep.subr.mxu0 0.0
    %5525 = vmatpush1.msra.mxu0 0.0
    %5526 = vmatprep.subr.mxu0 0.0
    %5527 = vmatpush1.msra.mxu0 0.0
    %5528 = vmatprep.subr.mxu0 0.0
    %5529 = vmatpush1.msra.mxu0 %v5488
    %5530 = vmatprep.subr.mxu0 0.0
    %5531 = vmatpush1.msra.mxu0 %v5487
    %5532 = vmatprep.subr.mxu0 0.0
    %5533 = vmatpush2.msra.mxu0 0.0
    %5534 = vmatprep.subr.mxu0 0.0
    %5535 = vmatpush2.msra.mxu0 0.0
    %5536 = vmatprep.subr.mxu0 0.0
    %5537 = vmatpush2.msra.mxu0 0.0
    %5538 = vmatprep.subr.mxu0 0.0
    %5539 = vmatpush2.msra.mxu0 0.0
    %5540 = vmatprep.subr.mxu0 0.0
    %5541 = vmatpush2.msra.mxu0 0.0
    %5542 = vmatprep.subr.mxu0 0.0
    %5543 = vmatpush2.msra.mxu0 0.0
    %5544 = vmatprep.subr.mxu0 0.0
    %5545 = vmatpush2.msra.mxu0 0.0
    %5546 = vmatprep.subr.mxu0 0.0
    %5547 = vmatpush2.msra.mxu0 0.0
    %5548 = vmatprep.subr.mxu0 0.0
    %5549 = vmatpush2.msra.mxu0 0.0
    %5550 = vmatprep.subr.mxu0 0.0
    %5551 = vmatpush2.msra.mxu0 0.0
    %5552 = vmatprep.subr.mxu0 0.0
    %5553 = vmatpush2.msra.mxu0 0.0
    %5554 = vmatprep.subr.mxu0 0.0
    %5555 = vmatpush2.msra.mxu0 0.0
    %5556 = vmatprep.subr.mxu0 0.0
    %5557 = vmatpush2.msra.mxu0 0.0
    %5558 = vmatprep.subr.mxu0 0.0
    %5559 = vmatpush2.msra.mxu0 0.0
    %5560 = vmatprep.subr.mxu0 0.0
    %5561 = vmatpush2.msra.mxu0 0.0
    %5562 = vmatprep.subr.mxu0 0.0
    %5563 = vmatpush2.msra.mxu0 0.0
    %5564 = vmatprep.mubr.f32.mxu0 0.0
    %5565 = vmatmul.mubr.f32.gmra.mxu0 %v5498
    %v5566 = vpop.f32.mrf.mxu0
    %v5567 = vadd.f32 %v5494, %v5566
    %v5568 = vpop.f32.mrf.mxu0
    %5569 = vdwg.mxu0
    %v5570 = vxor.u32 %v5567, 2147483648
    %v5571 = vmul.f32 %v5570, 1.442695
    %v5572 = vpow.pop %v5571
    %v5573 = vadd.f32 %v5572, 1.0
    %v5574 = vrcp.pop %v5573
    %v5575 = vmul.f32 1.0, %v5574
    %vm5576 = vcmask 254976
    %5577 = vst.msk [vmem:[%s24] sm:$0x3] %vm5576, %v5575
    // Predicated region
    $region106: #{div_lstm_vae_forward.1} parent=1 // pred_check
      _
    $region107: #{div_lstm_vae_forward.1} parent=1 // pred_check_branch
      %5579 = sbr.rel (0) target = $region109
    $region108: #{div_lstm_vae_forward.1} parent=1 // pred_region
      _
    $region109: #{div_lstm_vae_forward.1} parent=1 // pred_fallthru
      _
    // Predicated region
    $region110: #{div_lstm_vae_forward.1} parent=1 // pred_check
      _
    $region111: #{div_lstm_vae_forward.1} parent=1 // pred_check_branch
      %5581 = sbr.rel (0) target = $region113
    $region112: #{div_lstm_vae_forward.1} parent=1 // pred_region
      %s5583 = ssub.s32 32, 32
      %5584 = vsyncadd [#allocation4], %s5583
      %s5586 = sshll.u32 [#allocation7], 4
      %s5587 = int_to_ptr.vmem [resolvable:$true] %s5586
      %5589 = dma.vmem_to_hbm [thread:$0]  %s5587, 32, %s25, [#allocation4]
    $region113: #{div_lstm_vae_forward.1} parent=1 // pred_fallthru
      _
    // Predicated region
    $region114: #{div_lstm_vae_forward.1} parent=1 // pred_check
      _
    $region115: #{div_lstm_vae_forward.1} parent=1 // pred_check_branch
      %5591 = sbr.rel (0) target = $region117
    $region116: #{div_lstm_vae_forward.1} parent=1 // pred_region
      %s5593 = ssub.s32 32, 32
      %5594 = vsyncadd [#allocation9], %s5593
      %s5596 = sshll.u32 [#allocation8], 4
      %s5597 = int_to_ptr.vmem [resolvable:$true] %s5596
      %5599 = dma.vmem_to_hbm [thread:$0]  %s5597, 32, %s26, [#allocation9]
    $region117: #{div_lstm_vae_forward.1} parent=1 // pred_fallthru
      _
    // Predicated region
    $region118: #{div_lstm_vae_forward.1} parent=1 // pred_check
      _
    $region119: #{div_lstm_vae_forward.1} parent=1 // pred_check_branch
      %5601 = sbr.rel (0) target = $region121
    $region120: #{div_lstm_vae_forward.1} parent=1 // pred_region
      _
    $region121: #{div_lstm_vae_forward.1} parent=1 // pred_fallthru
      _
    // Predicated region
    $region122: #{div_lstm_vae_forward.1} parent=1 // pred_check
      _
    $region123: #{div_lstm_vae_forward.1} parent=1 // pred_check_branch
      %5603 = sbr.rel (0) target = $region125
    $region124: #{div_lstm_vae_forward.1} parent=1 // pred_region
      %5604 = dma.done [#allocation4], 32
    $region125: #{div_lstm_vae_forward.1} parent=1 // pred_fallthru
      _
    // Predicated region
    $region126: #{div_lstm_vae_forward.1} parent=1 // pred_check
      _
    $region127: #{div_lstm_vae_forward.1} parent=1 // pred_check_branch
      %5606 = sbr.rel (0) target = $region129
    $region128: #{div_lstm_vae_forward.1} parent=1 // pred_region
      %5607 = dma.done [#allocation9], 32
    $region129: #{div_lstm_vae_forward.1} parent=1 // pred_fallthru
      _
    %5608 = vsyncpa [#allocation3], 1
    %5609 = vsyncpa [#allocation6], 1
    %5610 = vsyncpa [#allocation4], 1
    %5611 = vsyncpa [#allocation9], 1

</llo_original>
